<compile_context>
chip_gen: v7x
topology: tpu7x:2x2x1
jax: 0.10.0
libtpu: 0.0.40
codegen_flags: <defaults>
</compile_context>

<pallas_src>
import math
import functools

import jax
import jax.numpy as jnp
from jax.experimental import pallas as pl
from jax.experimental.pallas import tpu as pltpu


# ----------------------- config (synthetic, deterministic) -----------------------
POS_ENCODING_FREQ = 8.0    # config.pos_encoding_freq
POS_ENCODING_BAND = 8      # config.pos_encoding_band
POS_INPUT_DIM = 4          # config.pos_input_dim
POS_ENCODING_BASE = 2.0    # config.pos_encoding_base


def _pe_kernel(x_ref, scales_ref, o_ref, *, dim, num_bands):
    # x_ref: (T, D), scales_ref: (1, B) f32, o_ref: (T, D*(2B+1))
    B = num_bands
    W = 2 * B + 1

    # Compute in f32 regardless of input dtype (v5e has no bf16 VPU/EUP path;
    # also avoids bf16 rounding of scales/pi). Cast only on the final stores.
    x = x_ref[...].astype(jnp.float32)           # (T, D)
    s = scales_ref[...]                          # (1, B) f32 band scales

    # One wide (T, D*B) angle tile so sin/cos each run once at D*B active
    # lanes instead of D narrow (T, B) transcendental calls.
    # Multiply order (x * s) * pi matches the reference exactly.
    ang = jnp.concatenate(
        [x[:, d:d + 1] * s for d in range(dim)], axis=-1
    ) * jnp.float32(math.pi)                     # (T, D*B)

    sin_all = jnp.sin(ang)                       # (T, D*B)
    cos_all = jnp.cos(ang)                       # (T, D*B)

    # Direct static-slice stores (no output concat). Per dim d the output
    # column group is [sin(B) | cos(B) | x_d].
    for d in range(dim):                         # static loop, D is small
        col = d * W
        o_ref[:, col:col + B] = sin_all[:, d * B:(d + 1) * B].astype(o_ref.dtype)
        o_ref[:, col + B:col + 2 * B] = cos_all[:, d * B:(d + 1) * B].astype(o_ref.dtype)
        o_ref[:, col + 2 * B:col + 2 * B + 1] = x[:, d:d + 1].astype(o_ref.dtype)


def positional_encoder(x,
                       *,
                       freq=POS_ENCODING_FREQ,
                       num_bands=POS_ENCODING_BAND,
                       dim=POS_INPUT_DIM,
                       base=POS_ENCODING_BASE,
                       tile_n=4096):
    """JAX/Pallas equivalent of PositionalEncoder.forward."""
    x = x[..., :dim]
    lead = x.shape[:-1]
    n_rows = int(math.prod(lead)) if lead else 1
    x2 = x.reshape(n_rows, dim)

    # torch.logspace(0, log(freq/2)/log(base), B, base=base)
    #   == base ** linspace(0, log_base(freq/2), B)
    # Kept in f32 even for bf16 inputs (angle constants stay full precision).
    exps = jnp.linspace(0.0, math.log(freq / 2.0) / math.log(base), num_bands,
                        dtype=jnp.float32)
    scales = (base ** exps).astype(jnp.float32).reshape(1, num_bands)

    out_dim = dim * (2 * num_bands + 1)

    # Big row tiles (sweep 2048-8192), clamped for small inputs. No padding:
    # Pallas masks the partial last block. For v7x keep the grid >= #cores
    # when n_rows is large; at tile_n<=8192 the double-buffered footprint
    # (~tile_n*288 B*2) fits every generation's default scoped VMEM.
    tile = min(tile_n, max(8, pl.cdiv(n_rows, 8) * 8))
    grid = (pl.cdiv(n_rows, tile),)

    kernel = functools.partial(_pe_kernel, dim=dim, num_bands=num_bands)

    out = pl.pallas_call(
        kernel,
        out_shape=jax.ShapeDtypeStruct((n_rows, out_dim), x2.dtype),
        grid_spec=pltpu.PrefetchScalarGridSpec(
            num_scalar_prefetch=0,
            grid=grid,
            in_specs=[
                pl.BlockSpec((tile, dim), lambda i: (i, 0)),
                pl.BlockSpec((1, num_bands), lambda i: (0, 0)),
            ],
            out_specs=pl.BlockSpec((tile, out_dim), lambda i: (i, 0)),
        ),
        compiler_params=pltpu.CompilerParams(
            dimension_semantics=("parallel",)),
    )(x2, scales)

    return out.reshape(*lead, out_dim)


def positional_encoder_ref(x, *, freq=POS_ENCODING_FREQ, num_bands=POS_ENCODING_BAND,
                           dim=POS_INPUT_DIM, base=POS_ENCODING_BASE):
    """Pure-JAX reference mirroring the torch code line by line."""
    x = x[..., :dim, None]
    orig_x = x
    exps = jnp.linspace(0.0, math.log(freq / 2.0) / math.log(base), num_bands,
                        dtype=jnp.float32)
    scales = base ** exps
    scales = scales.reshape((1,) * (x.ndim - 1) + (num_bands,))
    x = x * scales * jnp.pi
    x = jnp.concatenate([jnp.sin(x), jnp.cos(x)], axis=-1)
    x = jnp.concatenate([x, orig_x], axis=-1)
    return x.reshape(*x.shape[:-2], -1)


if __name__ == "__main__":
    key = jax.random.PRNGKey(0)
    # small input consistent with the module: batch=2, 128 points, pos_input_dim coords
    x = jax.random.normal(key, (2, 128, POS_INPUT_DIM), dtype=jnp.float32)

    out = positional_encoder(x)
    out = jax.block_until_ready(out)

    ref = positional_encoder_ref(x)
    assert out.shape == (2, 128, POS_INPUT_DIM * (2 * POS_ENCODING_BAND + 1)), out.shape
    assert jnp.allclose(out, ref, atol=1e-5, rtol=1e-5), float(jnp.max(jnp.abs(out - ref)))

    print("KERNEL_OK")
</pallas_src>

<mosaic_0001>
module attributes {stable_mosaic.version = 11 : i64} {
  func.func @_pe_kernel(%arg0: i32, %arg1: memref<256x4xf32, #tpu.memory_space<vmem>>, %arg2: memref<1x8xf32, #tpu.memory_space<vmem>>, %arg3: memref<256x68xf32, #tpu.memory_space<vmem>>) attributes {dimension_semantics = [#tpu.dimension_semantics<parallel>], iteration_bounds = array<i64: 1>, scalar_prefetch = 0 : i64, scratch_operands = 0 : i64, tpu.core_type = #tpu.core_type<tc>, window_params = [{transform_indices = @transform_0, window_bounds = array<i64: 256, 4>}, {pipeline_mode = #tpu.pipeline_mode<synchronous>, transform_indices = @transform_1, window_bounds = array<i64: 1, 8>}, {transform_indices = @transform_2, window_bounds = array<i64: 256, 68>}]} {
    %c0 = arith.constant 0 : index
    %c0_0 = arith.constant 0 : index
    %0 = vector.load %arg1[%c0, %c0_0] : memref<256x4xf32, #tpu.memory_space<vmem>>, vector<256x4xf32>
    %c0_1 = arith.constant 0 : index
    %c0_2 = arith.constant 0 : index
    %1 = vector.load %arg2[%c0_1, %c0_2] : memref<1x8xf32, #tpu.memory_space<vmem>>, vector<1x8xf32>
    %2 = vector.extract_strided_slice %0 {offsets = [0, 0], sizes = [256, 1], strides = [1, 1]} : vector<256x4xf32> to vector<256x1xf32>
    %3 = vector.broadcast %2 : vector<256x1xf32> to vector<256x8xf32>
    %4 = vector.broadcast %1 : vector<1x8xf32> to vector<256x8xf32>
    %5 = arith.mulf %3, %4 : vector<256x8xf32>
    %6 = vector.extract_strided_slice %0 {offsets = [0, 1], sizes = [256, 1], strides = [1, 1]} : vector<256x4xf32> to vector<256x1xf32>
    %7 = vector.broadcast %6 : vector<256x1xf32> to vector<256x8xf32>
    %8 = vector.broadcast %1 : vector<1x8xf32> to vector<256x8xf32>
    %9 = arith.mulf %7, %8 : vector<256x8xf32>
    %10 = vector.extract_strided_slice %0 {offsets = [0, 2], sizes = [256, 1], strides = [1, 1]} : vector<256x4xf32> to vector<256x1xf32>
    %11 = vector.broadcast %10 : vector<256x1xf32> to vector<256x8xf32>
    %12 = vector.broadcast %1 : vector<1x8xf32> to vector<256x8xf32>
    %13 = arith.mulf %11, %12 : vector<256x8xf32>
    %14 = vector.extract_strided_slice %0 {offsets = [0, 3], sizes = [256, 1], strides = [1, 1]} : vector<256x4xf32> to vector<256x1xf32>
    %15 = vector.broadcast %14 : vector<256x1xf32> to vector<256x8xf32>
    %16 = vector.broadcast %1 : vector<1x8xf32> to vector<256x8xf32>
    %17 = arith.mulf %15, %16 : vector<256x8xf32>
    %18 = tpu.concatenate %5, %9, %13, %17 in 1 : vector<256x8xf32>, vector<256x8xf32>, vector<256x8xf32>, vector<256x8xf32> -> vector<256x32xf32>
    %cst = arith.constant 3.14159274 : f32
    %19 = vector.broadcast %cst : f32 to vector<256x32xf32>
    %20 = arith.mulf %18, %19 : vector<256x32xf32>
    %21 = math.sin %20 : vector<256x32xf32>
    %22 = math.cos %20 : vector<256x32xf32>
    %23 = vector.extract_strided_slice %21 {offsets = [0, 0], sizes = [256, 8], strides = [1, 1]} : vector<256x32xf32> to vector<256x8xf32>
    %c0_3 = arith.constant 0 : index
    %c0_4 = arith.constant 0 : index
    %24 = vector.load %arg3[%c0_3, %c0_4] : memref<256x68xf32, #tpu.memory_space<vmem>>, vector<256x8xf32>
    tpu.vector_store %arg3[%c0_3, %c0_4], %23 {strides = array<i32>} : memref<256x68xf32, #tpu.memory_space<vmem>>, vector<256x8xf32>,
    %25 = vector.extract_strided_slice %22 {offsets = [0, 0], sizes = [256, 8], strides = [1, 1]} : vector<256x32xf32> to vector<256x8xf32>
    %c0_5 = arith.constant 0 : index
    %c8 = arith.constant 8 : index
    %26 = vector.load %arg3[%c0_5, %c8] : memref<256x68xf32, #tpu.memory_space<vmem>>, vector<256x8xf32>
    tpu.vector_store %arg3[%c0_5, %c8], %25 {strides = array<i32>} : memref<256x68xf32, #tpu.memory_space<vmem>>, vector<256x8xf32>,
    %27 = vector.extract_strided_slice %0 {offsets = [0, 0], sizes = [256, 1], strides = [1, 1]} : vector<256x4xf32> to vector<256x1xf32>
    %c0_6 = arith.constant 0 : index
    %c16 = arith.constant 16 : index
    %28 = vector.load %arg3[%c0_6, %c16] : memref<256x68xf32, #tpu.memory_space<vmem>>, vector<256x1xf32>
    tpu.vector_store %arg3[%c0_6, %c16], %27 {strides = array<i32>} : memref<256x68xf32, #tpu.memory_space<vmem>>, vector<256x1xf32>,
    %29 = vector.extract_strided_slice %21 {offsets = [0, 8], sizes = [256, 8], strides = [1, 1]} : vector<256x32xf32> to vector<256x8xf32>
    %c0_7 = arith.constant 0 : index
    %c17 = arith.constant 17 : index
    %30 = vector.load %arg3[%c0_7, %c17] : memref<256x68xf32, #tpu.memory_space<vmem>>, vector<256x8xf32>
    tpu.vector_store %arg3[%c0_7, %c17], %29 {strides = array<i32>} : memref<256x68xf32, #tpu.memory_space<vmem>>, vector<256x8xf32>,
    %31 = vector.extract_strided_slice %22 {offsets = [0, 8], sizes = [256, 8], strides = [1, 1]} : vector<256x32xf32> to vector<256x8xf32>
    %c0_8 = arith.constant 0 : index
    %c25 = arith.constant 25 : index
    %32 = vector.load %arg3[%c0_8, %c25] : memref<256x68xf32, #tpu.memory_space<vmem>>, vector<256x8xf32>
    tpu.vector_store %arg3[%c0_8, %c25], %31 {strides = array<i32>} : memref<256x68xf32, #tpu.memory_space<vmem>>, vector<256x8xf32>,
    %33 = vector.extract_strided_slice %0 {offsets = [0, 1], sizes = [256, 1], strides = [1, 1]} : vector<256x4xf32> to vector<256x1xf32>
    %c0_9 = arith.constant 0 : index
    %c33 = arith.constant 33 : index
    %34 = vector.load %arg3[%c0_9, %c33] : memref<256x68xf32, #tpu.memory_space<vmem>>, vector<256x1xf32>
    tpu.vector_store %arg3[%c0_9, %c33], %33 {strides = array<i32>} : memref<256x68xf32, #tpu.memory_space<vmem>>, vector<256x1xf32>,
    %35 = vector.extract_strided_slice %21 {offsets = [0, 16], sizes = [256, 8], strides = [1, 1]} : vector<256x32xf32> to vector<256x8xf32>
    %c0_10 = arith.constant 0 : index
    %c34 = arith.constant 34 : index
    %36 = vector.load %arg3[%c0_10, %c34] : memref<256x68xf32, #tpu.memory_space<vmem>>, vector<256x8xf32>
    tpu.vector_store %arg3[%c0_10, %c34], %35 {strides = array<i32>} : memref<256x68xf32, #tpu.memory_space<vmem>>, vector<256x8xf32>,
    %37 = vector.extract_strided_slice %22 {offsets = [0, 16], sizes = [256, 8], strides = [1, 1]} : vector<256x32xf32> to vector<256x8xf32>
    %c0_11 = arith.constant 0 : index
    %c42 = arith.constant 42 : index
    %38 = vector.load %arg3[%c0_11, %c42] : memref<256x68xf32, #tpu.memory_space<vmem>>, vector<256x8xf32>
    tpu.vector_store %arg3[%c0_11, %c42], %37 {strides = array<i32>} : memref<256x68xf32, #tpu.memory_space<vmem>>, vector<256x8xf32>,
    %39 = vector.extract_strided_slice %0 {offsets = [0, 2], sizes = [256, 1], strides = [1, 1]} : vector<256x4xf32> to vector<256x1xf32>
    %c0_12 = arith.constant 0 : index
    %c50 = arith.constant 50 : index
    %40 = vector.load %arg3[%c0_12, %c50] : memref<256x68xf32, #tpu.memory_space<vmem>>, vector<256x1xf32>
    tpu.vector_store %arg3[%c0_12, %c50], %39 {strides = array<i32>} : memref<256x68xf32, #tpu.memory_space<vmem>>, vector<256x1xf32>,
    %41 = vector.extract_strided_slice %21 {offsets = [0, 24], sizes = [256, 8], strides = [1, 1]} : vector<256x32xf32> to vector<256x8xf32>
    %c0_13 = arith.constant 0 : index
    %c51 = arith.constant 51 : index
    %42 = vector.load %arg3[%c0_13, %c51] : memref<256x68xf32, #tpu.memory_space<vmem>>, vector<256x8xf32>
    tpu.vector_store %arg3[%c0_13, %c51], %41 {strides = array<i32>} : memref<256x68xf32, #tpu.memory_space<vmem>>, vector<256x8xf32>,
    %43 = vector.extract_strided_slice %22 {offsets = [0, 24], sizes = [256, 8], strides = [1, 1]} : vector<256x32xf32> to vector<256x8xf32>
    %c0_14 = arith.constant 0 : index
    %c59 = arith.constant 59 : index
    %44 = vector.load %arg3[%c0_14, %c59] : memref<256x68xf32, #tpu.memory_space<vmem>>, vector<256x8xf32>
    tpu.vector_store %arg3[%c0_14, %c59], %43 {strides = array<i32>} : memref<256x68xf32, #tpu.memory_space<vmem>>, vector<256x8xf32>,
    %45 = vector.extract_strided_slice %0 {offsets = [0, 3], sizes = [256, 1], strides = [1, 1]} : vector<256x4xf32> to vector<256x1xf32>
    %c0_15 = arith.constant 0 : index
    %c67 = arith.constant 67 : index
    %46 = vector.load %arg3[%c0_15, %c67] : memref<256x68xf32, #tpu.memory_space<vmem>>, vector<256x1xf32>
    tpu.vector_store %arg3[%c0_15, %c67], %45 {strides = array<i32>} : memref<256x68xf32, #tpu.memory_space<vmem>>, vector<256x1xf32>,
    return
  }
  func.func @transform_0(%arg0: i32) -> (i32, i32) {
    %c0_i32 = arith.constant 0 : i32
    %c0_i32_0 = arith.constant 0 : i32
    return %arg0, %c0_i32 : i32, i32
  }
  func.func @transform_1(%arg0: i32) -> (i32, i32) {
    %c0_i32 = arith.constant 0 : i32
    %c0_i32_0 = arith.constant 0 : i32
    %c0_i32_1 = arith.constant 0 : i32
    return %c0_i32, %c0_i32_0 : i32, i32
  }
  func.func @transform_2(%arg0: i32) -> (i32, i32) {
    %c0_i32 = arith.constant 0 : i32
    %c0_i32_0 = arith.constant 0 : i32
    return %arg0, %c0_i32 : i32, i32
  }
}

</mosaic_0001>

<llo_original>
// kernel: tpu_custom_call.1
$region0: #{tpu_custom_call.1}
  #allocation0 [shape = 'u32[]', space=smem, size = 0x4, offset = 0x4, fixed_abs, tag = 'smem constant byte address 0x4 - core index']
  #allocation1 [shape = 'u32[144,128]{1,0:T(1,128)}', space=vmem, size = 0x12000, scoped, tag = 'internal scratch']
  %s0 = inlined_call_operand.vmem [shape: f32[256,4], index: 0, kind: input, shape index: {}]
  %s1 = inlined_call_operand.vmem [shape: f32[1,8], index: 1, kind: input, shape index: {}]
  %s2 = inlined_call_operand.vmem [shape: f32[256,68], index: 2, kind: output, shape index: {}]
  %s3 = sld [smem:[#allocation0]]
  $region18: #{tpu_custom_call.1} parent=0
    _
  %s5 = ssub.s32 1, %s3
  %s6 = scalar_select 0, %s5, %s3
  // Predicated region
  $region2: #{tpu_custom_call.1} parent=0 // pred_check
    _
  $region3: #{tpu_custom_call.1} parent=0 // pred_check_branch
    %8 = sbr.rel (0) target = $region5
  $region4: #{tpu_custom_call.1} parent=0 // pred_region
    _
  $region5: #{tpu_custom_call.1} parent=0 // pred_fallthru
    _
  // Predicated region
  $region6: #{tpu_custom_call.1} parent=0 // pred_check
    _
  $region7: #{tpu_custom_call.1} parent=0 // pred_check_branch
    %10 = sbr.rel (0) target = $region9
  $region8: #{tpu_custom_call.1} parent=0 // pred_region
    _
  $region9: #{tpu_custom_call.1} parent=0 // pred_fallthru
    _
  %v11 = vld [vmem:[%s0] sm:$0xff]
  %v12 = vld [vmem:[%s0 + $0x8] sm:$0xff]
  %v13 = vld [vmem:[%s0 + $0x10] sm:$0xff]
  %v14 = vld [vmem:[%s0 + $0x18] sm:$0xff]
  %v15 = vld [vmem:[%s0 + $0x20] sm:$0xff]
  %v16 = vld [vmem:[%s0 + $0x28] sm:$0xff]
  %v17 = vld [vmem:[%s0 + $0x30] sm:$0xff]
  %v18 = vld [vmem:[%s0 + $0x38] sm:$0xff]
  %v19 = vld [vmem:[%s0 + $0x40] sm:$0xff]
  %v20 = vld [vmem:[%s0 + $0x48] sm:$0xff]
  %v21 = vld [vmem:[%s0 + $0x50] sm:$0xff]
  %v22 = vld [vmem:[%s0 + $0x58] sm:$0xff]
  %v23 = vld [vmem:[%s0 + $0x60] sm:$0xff]
  %v24 = vld [vmem:[%s0 + $0x68] sm:$0xff]
  %v25 = vld [vmem:[%s0 + $0x70] sm:$0xff]
  %v26 = vld [vmem:[%s0 + $0x78] sm:$0xff]
  %v27 = vld [vmem:[%s0 + $0x80] sm:$0xff]
  %v28 = vld [vmem:[%s0 + $0x88] sm:$0xff]
  %v29 = vld [vmem:[%s0 + $0x90] sm:$0xff]
  %v30 = vld [vmem:[%s0 + $0x98] sm:$0xff]
  %v31 = vld [vmem:[%s0 + $0xa0] sm:$0xff]
  %v32 = vld [vmem:[%s0 + $0xa8] sm:$0xff]
  %v33 = vld [vmem:[%s0 + $0xb0] sm:$0xff]
  %v34 = vld [vmem:[%s0 + $0xb8] sm:$0xff]
  %v35 = vld [vmem:[%s0 + $0xc0] sm:$0xff]
  %v36 = vld [vmem:[%s0 + $0xc8] sm:$0xff]
  %v37 = vld [vmem:[%s0 + $0xd0] sm:$0xff]
  %v38 = vld [vmem:[%s0 + $0xd8] sm:$0xff]
  %v39 = vld [vmem:[%s0 + $0xe0] sm:$0xff]
  %v40 = vld [vmem:[%s0 + $0xe8] sm:$0xff]
  %v41 = vld [vmem:[%s0 + $0xf0] sm:$0xff]
  %v42 = vld [vmem:[%s0 + $0xf8] sm:$0xff]
  %v43 = vld [vmem:[%s1] sm:$0x1]
  %45 = vset.pattern.permute.xlu0 0
  %46 = vperm.xlu0 %45, %v11
  %v47 = vpop.permute.xlu0 %46
  %50 = vset.pattern.permute.xlu0 0
  %51 = vperm.xlu0 %50, %v12
  %v52 = vpop.permute.xlu0 %51
  %55 = vset.pattern.permute.xlu0 0
  %56 = vperm.xlu0 %55, %v13
  %v57 = vpop.permute.xlu0 %56
  %60 = vset.pattern.permute.xlu0 0
  %61 = vperm.xlu0 %60, %v14
  %v62 = vpop.permute.xlu0 %61
  %65 = vset.pattern.permute.xlu0 0
  %66 = vperm.xlu0 %65, %v15
  %v67 = vpop.permute.xlu0 %66
  %70 = vset.pattern.permute.xlu0 0
  %71 = vperm.xlu0 %70, %v16
  %v72 = vpop.permute.xlu0 %71
  %75 = vset.pattern.permute.xlu0 0
  %76 = vperm.xlu0 %75, %v17
  %v77 = vpop.permute.xlu0 %76
  %80 = vset.pattern.permute.xlu0 0
  %81 = vperm.xlu0 %80, %v18
  %v82 = vpop.permute.xlu0 %81
  %85 = vset.pattern.permute.xlu0 0
  %86 = vperm.xlu0 %85, %v19
  %v87 = vpop.permute.xlu0 %86
  %90 = vset.pattern.permute.xlu0 0
  %91 = vperm.xlu0 %90, %v20
  %v92 = vpop.permute.xlu0 %91
  %95 = vset.pattern.permute.xlu0 0
  %96 = vperm.xlu0 %95, %v21
  %v97 = vpop.permute.xlu0 %96
  %100 = vset.pattern.permute.xlu0 0
  %101 = vperm.xlu0 %100, %v22
  %v102 = vpop.permute.xlu0 %101
  %105 = vset.pattern.permute.xlu0 0
  %106 = vperm.xlu0 %105, %v23
  %v107 = vpop.permute.xlu0 %106
  %110 = vset.pattern.permute.xlu0 0
  %111 = vperm.xlu0 %110, %v24
  %v112 = vpop.permute.xlu0 %111
  %115 = vset.pattern.permute.xlu0 0
  %116 = vperm.xlu0 %115, %v25
  %v117 = vpop.permute.xlu0 %116
  %120 = vset.pattern.permute.xlu0 0
  %121 = vperm.xlu0 %120, %v26
  %v122 = vpop.permute.xlu0 %121
  %125 = vset.pattern.permute.xlu0 0
  %126 = vperm.xlu0 %125, %v27
  %v127 = vpop.permute.xlu0 %126
  %130 = vset.pattern.permute.xlu0 0
  %131 = vperm.xlu0 %130, %v28
  %v132 = vpop.permute.xlu0 %131
  %135 = vset.pattern.permute.xlu0 0
  %136 = vperm.xlu0 %135, %v29
  %v137 = vpop.permute.xlu0 %136
  %140 = vset.pattern.permute.xlu0 0
  %141 = vperm.xlu0 %140, %v30
  %v142 = vpop.permute.xlu0 %141
  %145 = vset.pattern.permute.xlu0 0
  %146 = vperm.xlu0 %145, %v31
  %v147 = vpop.permute.xlu0 %146
  %150 = vset.pattern.permute.xlu0 0
  %151 = vperm.xlu0 %150, %v32
  %v152 = vpop.permute.xlu0 %151
  %155 = vset.pattern.permute.xlu0 0
  %156 = vperm.xlu0 %155, %v33
  %v157 = vpop.permute.xlu0 %156
  %160 = vset.pattern.permute.xlu0 0
  %161 = vperm.xlu0 %160, %v34
  %v162 = vpop.permute.xlu0 %161
  %165 = vset.pattern.permute.xlu0 0
  %166 = vperm.xlu0 %165, %v35
  %v167 = vpop.permute.xlu0 %166
  %170 = vset.pattern.permute.xlu0 0
  %171 = vperm.xlu0 %170, %v36
  %v172 = vpop.permute.xlu0 %171
  %175 = vset.pattern.permute.xlu0 0
  %176 = vperm.xlu0 %175, %v37
  %v177 = vpop.permute.xlu0 %176
  %180 = vset.pattern.permute.xlu0 0
  %181 = vperm.xlu0 %180, %v38
  %v182 = vpop.permute.xlu0 %181
  %185 = vset.pattern.permute.xlu0 0
  %186 = vperm.xlu0 %185, %v39
  %v187 = vpop.permute.xlu0 %186
  %190 = vset.pattern.permute.xlu0 0
  %191 = vperm.xlu0 %190, %v40
  %v192 = vpop.permute.xlu0 %191
  %195 = vset.pattern.permute.xlu0 0
  %196 = vperm.xlu0 %195, %v41
  %v197 = vpop.permute.xlu0 %196
  %200 = vset.pattern.permute.xlu0 0
  %201 = vperm.xlu0 %200, %v42
  %v202 = vpop.permute.xlu0 %201
  %v205 = vlaneseq
  %v206 = vshrl.u32 %v205, 7
  %v207 = vsub.s32 0, %v206
  %v208 = vrot.slane %v43, %v207
  %v210 = vmul.f32 %v47, %v208
  %v211 = vmul.f32 %v52, %v208
  %v212 = vmul.f32 %v57, %v208
  %v213 = vmul.f32 %v62, %v208
  %v214 = vmul.f32 %v67, %v208
  %v215 = vmul.f32 %v72, %v208
  %v216 = vmul.f32 %v77, %v208
  %v217 = vmul.f32 %v82, %v208
  %v218 = vmul.f32 %v87, %v208
  %v219 = vmul.f32 %v92, %v208
  %v220 = vmul.f32 %v97, %v208
  %v221 = vmul.f32 %v102, %v208
  %v222 = vmul.f32 %v107, %v208
  %v223 = vmul.f32 %v112, %v208
  %v224 = vmul.f32 %v117, %v208
  %v225 = vmul.f32 %v122, %v208
  %v226 = vmul.f32 %v127, %v208
  %v227 = vmul.f32 %v132, %v208
  %v228 = vmul.f32 %v137, %v208
  %v229 = vmul.f32 %v142, %v208
  %v230 = vmul.f32 %v147, %v208
  %v231 = vmul.f32 %v152, %v208
  %v232 = vmul.f32 %v157, %v208
  %v233 = vmul.f32 %v162, %v208
  %v234 = vmul.f32 %v167, %v208
  %v235 = vmul.f32 %v172, %v208
  %v236 = vmul.f32 %v177, %v208
  %v237 = vmul.f32 %v182, %v208
  %v238 = vmul.f32 %v187, %v208
  %v239 = vmul.f32 %v192, %v208
  %v240 = vmul.f32 %v197, %v208
  %v241 = vmul.f32 %v202, %v208
  %242 = vset.pattern.permute.xlu0 1
  %243 = vperm.xlu0 %242, %v11
  %v244 = vpop.permute.xlu0 %243
  %246 = vset.pattern.permute.xlu0 1
  %247 = vperm.xlu0 %246, %v12
  %v248 = vpop.permute.xlu0 %247
  %250 = vset.pattern.permute.xlu0 1
  %251 = vperm.xlu0 %250, %v13
  %v252 = vpop.permute.xlu0 %251
  %254 = vset.pattern.permute.xlu0 1
  %255 = vperm.xlu0 %254, %v14
  %v256 = vpop.permute.xlu0 %255
  %258 = vset.pattern.permute.xlu0 1
  %259 = vperm.xlu0 %258, %v15
  %v260 = vpop.permute.xlu0 %259
  %262 = vset.pattern.permute.xlu0 1
  %263 = vperm.xlu0 %262, %v16
  %v264 = vpop.permute.xlu0 %263
  %266 = vset.pattern.permute.xlu0 1
  %267 = vperm.xlu0 %266, %v17
  %v268 = vpop.permute.xlu0 %267
  %270 = vset.pattern.permute.xlu0 1
  %271 = vperm.xlu0 %270, %v18
  %v272 = vpop.permute.xlu0 %271
  %274 = vset.pattern.permute.xlu0 1
  %275 = vperm.xlu0 %274, %v19
  %v276 = vpop.permute.xlu0 %275
  %278 = vset.pattern.permute.xlu0 1
  %279 = vperm.xlu0 %278, %v20
  %v280 = vpop.permute.xlu0 %279
  %282 = vset.pattern.permute.xlu0 1
  %283 = vperm.xlu0 %282, %v21
  %v284 = vpop.permute.xlu0 %283
  %286 = vset.pattern.permute.xlu0 1
  %287 = vperm.xlu0 %286, %v22
  %v288 = vpop.permute.xlu0 %287
  %290 = vset.pattern.permute.xlu0 1
  %291 = vperm.xlu0 %290, %v23
  %v292 = vpop.permute.xlu0 %291
  %294 = vset.pattern.permute.xlu0 1
  %295 = vperm.xlu0 %294, %v24
  %v296 = vpop.permute.xlu0 %295
  %298 = vset.pattern.permute.xlu0 1
  %299 = vperm.xlu0 %298, %v25
  %v300 = vpop.permute.xlu0 %299
  %302 = vset.pattern.permute.xlu0 1
  %303 = vperm.xlu0 %302, %v26
  %v304 = vpop.permute.xlu0 %303
  %306 = vset.pattern.permute.xlu0 1
  %307 = vperm.xlu0 %306, %v27
  %v308 = vpop.permute.xlu0 %307
  %310 = vset.pattern.permute.xlu0 1
  %311 = vperm.xlu0 %310, %v28
  %v312 = vpop.permute.xlu0 %311
  %314 = vset.pattern.permute.xlu0 1
  %315 = vperm.xlu0 %314, %v29
  %v316 = vpop.permute.xlu0 %315
  %318 = vset.pattern.permute.xlu0 1
  %319 = vperm.xlu0 %318, %v30
  %v320 = vpop.permute.xlu0 %319
  %322 = vset.pattern.permute.xlu0 1
  %323 = vperm.xlu0 %322, %v31
  %v324 = vpop.permute.xlu0 %323
  %326 = vset.pattern.permute.xlu0 1
  %327 = vperm.xlu0 %326, %v32
  %v328 = vpop.permute.xlu0 %327
  %330 = vset.pattern.permute.xlu0 1
  %331 = vperm.xlu0 %330, %v33
  %v332 = vpop.permute.xlu0 %331
  %334 = vset.pattern.permute.xlu0 1
  %335 = vperm.xlu0 %334, %v34
  %v336 = vpop.permute.xlu0 %335
  %338 = vset.pattern.permute.xlu0 1
  %339 = vperm.xlu0 %338, %v35
  %v340 = vpop.permute.xlu0 %339
  %342 = vset.pattern.permute.xlu0 1
  %343 = vperm.xlu0 %342, %v36
  %v344 = vpop.permute.xlu0 %343
  %346 = vset.pattern.permute.xlu0 1
  %347 = vperm.xlu0 %346, %v37
  %v348 = vpop.permute.xlu0 %347
  %350 = vset.pattern.permute.xlu0 1
  %351 = vperm.xlu0 %350, %v38
  %v352 = vpop.permute.xlu0 %351
  %354 = vset.pattern.permute.xlu0 1
  %355 = vperm.xlu0 %354, %v39
  %v356 = vpop.permute.xlu0 %355
  %358 = vset.pattern.permute.xlu0 1
  %359 = vperm.xlu0 %358, %v40
  %v360 = vpop.permute.xlu0 %359
  %362 = vset.pattern.permute.xlu0 1
  %363 = vperm.xlu0 %362, %v41
  %v364 = vpop.permute.xlu0 %363
  %366 = vset.pattern.permute.xlu0 1
  %367 = vperm.xlu0 %366, %v42
  %v368 = vpop.permute.xlu0 %367
  %v370 = vmul.f32 %v244, %v208
  %v371 = vmul.f32 %v248, %v208
  %v372 = vmul.f32 %v252, %v208
  %v373 = vmul.f32 %v256, %v208
  %v374 = vmul.f32 %v260, %v208
  %v375 = vmul.f32 %v264, %v208
  %v376 = vmul.f32 %v268, %v208
  %v377 = vmul.f32 %v272, %v208
  %v378 = vmul.f32 %v276, %v208
  %v379 = vmul.f32 %v280, %v208
  %v380 = vmul.f32 %v284, %v208
  %v381 = vmul.f32 %v288, %v208
  %v382 = vmul.f32 %v292, %v208
  %v383 = vmul.f32 %v296, %v208
  %v384 = vmul.f32 %v300, %v208
  %v385 = vmul.f32 %v304, %v208
  %v386 = vmul.f32 %v308, %v208
  %v387 = vmul.f32 %v312, %v208
  %v388 = vmul.f32 %v316, %v208
  %v389 = vmul.f32 %v320, %v208
  %v390 = vmul.f32 %v324, %v208
  %v391 = vmul.f32 %v328, %v208
  %v392 = vmul.f32 %v332, %v208
  %v393 = vmul.f32 %v336, %v208
  %v394 = vmul.f32 %v340, %v208
  %v395 = vmul.f32 %v344, %v208
  %v396 = vmul.f32 %v348, %v208
  %v397 = vmul.f32 %v352, %v208
  %v398 = vmul.f32 %v356, %v208
  %v399 = vmul.f32 %v360, %v208
  %v400 = vmul.f32 %v364, %v208
  %v401 = vmul.f32 %v368, %v208
  %402 = vset.pattern.permute.xlu0 2
  %403 = vperm.xlu0 %402, %v11
  %v404 = vpop.permute.xlu0 %403
  %406 = vset.pattern.permute.xlu0 2
  %407 = vperm.xlu0 %406, %v12
  %v408 = vpop.permute.xlu0 %407
  %410 = vset.pattern.permute.xlu0 2
  %411 = vperm.xlu0 %410, %v13
  %v412 = vpop.permute.xlu0 %411
  %414 = vset.pattern.permute.xlu0 2
  %415 = vperm.xlu0 %414, %v14
  %v416 = vpop.permute.xlu0 %415
  %418 = vset.pattern.permute.xlu0 2
  %419 = vperm.xlu0 %418, %v15
  %v420 = vpop.permute.xlu0 %419
  %422 = vset.pattern.permute.xlu0 2
  %423 = vperm.xlu0 %422, %v16
  %v424 = vpop.permute.xlu0 %423
  %426 = vset.pattern.permute.xlu0 2
  %427 = vperm.xlu0 %426, %v17
  %v428 = vpop.permute.xlu0 %427
  %430 = vset.pattern.permute.xlu0 2
  %431 = vperm.xlu0 %430, %v18
  %v432 = vpop.permute.xlu0 %431
  %434 = vset.pattern.permute.xlu0 2
  %435 = vperm.xlu0 %434, %v19
  %v436 = vpop.permute.xlu0 %435
  %438 = vset.pattern.permute.xlu0 2
  %439 = vperm.xlu0 %438, %v20
  %v440 = vpop.permute.xlu0 %439
  %442 = vset.pattern.permute.xlu0 2
  %443 = vperm.xlu0 %442, %v21
  %v444 = vpop.permute.xlu0 %443
  %446 = vset.pattern.permute.xlu0 2
  %447 = vperm.xlu0 %446, %v22
  %v448 = vpop.permute.xlu0 %447
  %450 = vset.pattern.permute.xlu0 2
  %451 = vperm.xlu0 %450, %v23
  %v452 = vpop.permute.xlu0 %451
  %454 = vset.pattern.permute.xlu0 2
  %455 = vperm.xlu0 %454, %v24
  %v456 = vpop.permute.xlu0 %455
  %458 = vset.pattern.permute.xlu0 2
  %459 = vperm.xlu0 %458, %v25
  %v460 = vpop.permute.xlu0 %459
  %462 = vset.pattern.permute.xlu0 2
  %463 = vperm.xlu0 %462, %v26
  %v464 = vpop.permute.xlu0 %463
  %466 = vset.pattern.permute.xlu0 2
  %467 = vperm.xlu0 %466, %v27
  %v468 = vpop.permute.xlu0 %467
  %470 = vset.pattern.permute.xlu0 2
  %471 = vperm.xlu0 %470, %v28
  %v472 = vpop.permute.xlu0 %471
  %474 = vset.pattern.permute.xlu0 2
  %475 = vperm.xlu0 %474, %v29
  %v476 = vpop.permute.xlu0 %475
  %478 = vset.pattern.permute.xlu0 2
  %479 = vperm.xlu0 %478, %v30
  %v480 = vpop.permute.xlu0 %479
  %482 = vset.pattern.permute.xlu0 2
  %483 = vperm.xlu0 %482, %v31
  %v484 = vpop.permute.xlu0 %483
  %486 = vset.pattern.permute.xlu0 2
  %487 = vperm.xlu0 %486, %v32
  %v488 = vpop.permute.xlu0 %487
  %490 = vset.pattern.permute.xlu0 2
  %491 = vperm.xlu0 %490, %v33
  %v492 = vpop.permute.xlu0 %491
  %494 = vset.pattern.permute.xlu0 2
  %495 = vperm.xlu0 %494, %v34
  %v496 = vpop.permute.xlu0 %495
  %498 = vset.pattern.permute.xlu0 2
  %499 = vperm.xlu0 %498, %v35
  %v500 = vpop.permute.xlu0 %499
  %502 = vset.pattern.permute.xlu0 2
  %503 = vperm.xlu0 %502, %v36
  %v504 = vpop.permute.xlu0 %503
  %506 = vset.pattern.permute.xlu0 2
  %507 = vperm.xlu0 %506, %v37
  %v508 = vpop.permute.xlu0 %507
  %510 = vset.pattern.permute.xlu0 2
  %511 = vperm.xlu0 %510, %v38
  %v512 = vpop.permute.xlu0 %511
  %514 = vset.pattern.permute.xlu0 2
  %515 = vperm.xlu0 %514, %v39
  %v516 = vpop.permute.xlu0 %515
  %518 = vset.pattern.permute.xlu0 2
  %519 = vperm.xlu0 %518, %v40
  %v520 = vpop.permute.xlu0 %519
  %522 = vset.pattern.permute.xlu0 2
  %523 = vperm.xlu0 %522, %v41
  %v524 = vpop.permute.xlu0 %523
  %526 = vset.pattern.permute.xlu0 2
  %527 = vperm.xlu0 %526, %v42
  %v528 = vpop.permute.xlu0 %527
  %v530 = vmul.f32 %v404, %v208
  %v531 = vmul.f32 %v408, %v208
  %v532 = vmul.f32 %v412, %v208
  %v533 = vmul.f32 %v416, %v208
  %v534 = vmul.f32 %v420, %v208
  %v535 = vmul.f32 %v424, %v208
  %v536 = vmul.f32 %v428, %v208
  %v537 = vmul.f32 %v432, %v208
  %v538 = vmul.f32 %v436, %v208
  %v539 = vmul.f32 %v440, %v208
  %v540 = vmul.f32 %v444, %v208
  %v541 = vmul.f32 %v448, %v208
  %v542 = vmul.f32 %v452, %v208
  %v543 = vmul.f32 %v456, %v208
  %v544 = vmul.f32 %v460, %v208
  %v545 = vmul.f32 %v464, %v208
  %v546 = vmul.f32 %v468, %v208
  %v547 = vmul.f32 %v472, %v208
  %v548 = vmul.f32 %v476, %v208
  %v549 = vmul.f32 %v480, %v208
  %v550 = vmul.f32 %v484, %v208
  %v551 = vmul.f32 %v488, %v208
  %v552 = vmul.f32 %v492, %v208
  %v553 = vmul.f32 %v496, %v208
  %v554 = vmul.f32 %v500, %v208
  %v555 = vmul.f32 %v504, %v208
  %v556 = vmul.f32 %v508, %v208
  %v557 = vmul.f32 %v512, %v208
  %v558 = vmul.f32 %v516, %v208
  %v559 = vmul.f32 %v520, %v208
  %v560 = vmul.f32 %v524, %v208
  %v561 = vmul.f32 %v528, %v208
  %562 = vset.pattern.permute.xlu0 3
  %563 = vperm.xlu0 %562, %v11
  %v564 = vpop.permute.xlu0 %563
  %566 = vset.pattern.permute.xlu0 3
  %567 = vperm.xlu0 %566, %v12
  %v568 = vpop.permute.xlu0 %567
  %570 = vset.pattern.permute.xlu0 3
  %571 = vperm.xlu0 %570, %v13
  %v572 = vpop.permute.xlu0 %571
  %574 = vset.pattern.permute.xlu0 3
  %575 = vperm.xlu0 %574, %v14
  %v576 = vpop.permute.xlu0 %575
  %578 = vset.pattern.permute.xlu0 3
  %579 = vperm.xlu0 %578, %v15
  %v580 = vpop.permute.xlu0 %579
  %582 = vset.pattern.permute.xlu0 3
  %583 = vperm.xlu0 %582, %v16
  %v584 = vpop.permute.xlu0 %583
  %586 = vset.pattern.permute.xlu0 3
  %587 = vperm.xlu0 %586, %v17
  %v588 = vpop.permute.xlu0 %587
  %590 = vset.pattern.permute.xlu0 3
  %591 = vperm.xlu0 %590, %v18
  %v592 = vpop.permute.xlu0 %591
  %594 = vset.pattern.permute.xlu0 3
  %595 = vperm.xlu0 %594, %v19
  %v596 = vpop.permute.xlu0 %595
  %598 = vset.pattern.permute.xlu0 3
  %599 = vperm.xlu0 %598, %v20
  %v600 = vpop.permute.xlu0 %599
  %602 = vset.pattern.permute.xlu0 3
  %603 = vperm.xlu0 %602, %v21
  %v604 = vpop.permute.xlu0 %603
  %606 = vset.pattern.permute.xlu0 3
  %607 = vperm.xlu0 %606, %v22
  %v608 = vpop.permute.xlu0 %607
  %610 = vset.pattern.permute.xlu0 3
  %611 = vperm.xlu0 %610, %v23
  %v612 = vpop.permute.xlu0 %611
  %614 = vset.pattern.permute.xlu0 3
  %615 = vperm.xlu0 %614, %v24
  %v616 = vpop.permute.xlu0 %615
  %618 = vset.pattern.permute.xlu0 3
  %619 = vperm.xlu0 %618, %v25
  %v620 = vpop.permute.xlu0 %619
  %622 = vset.pattern.permute.xlu0 3
  %623 = vperm.xlu0 %622, %v26
  %v624 = vpop.permute.xlu0 %623
  %626 = vset.pattern.permute.xlu0 3
  %627 = vperm.xlu0 %626, %v27
  %v628 = vpop.permute.xlu0 %627
  %630 = vset.pattern.permute.xlu0 3
  %631 = vperm.xlu0 %630, %v28
  %v632 = vpop.permute.xlu0 %631
  %634 = vset.pattern.permute.xlu0 3
  %635 = vperm.xlu0 %634, %v29
  %v636 = vpop.permute.xlu0 %635
  %638 = vset.pattern.permute.xlu0 3
  %639 = vperm.xlu0 %638, %v30
  %v640 = vpop.permute.xlu0 %639
  %642 = vset.pattern.permute.xlu0 3
  %643 = vperm.xlu0 %642, %v31
  %v644 = vpop.permute.xlu0 %643
  %646 = vset.pattern.permute.xlu0 3
  %647 = vperm.xlu0 %646, %v32
  %v648 = vpop.permute.xlu0 %647
  %650 = vset.pattern.permute.xlu0 3
  %651 = vperm.xlu0 %650, %v33
  %v652 = vpop.permute.xlu0 %651
  %654 = vset.pattern.permute.xlu0 3
  %655 = vperm.xlu0 %654, %v34
  %v656 = vpop.permute.xlu0 %655
  %658 = vset.pattern.permute.xlu0 3
  %659 = vperm.xlu0 %658, %v35
  %v660 = vpop.permute.xlu0 %659
  %662 = vset.pattern.permute.xlu0 3
  %663 = vperm.xlu0 %662, %v36
  %v664 = vpop.permute.xlu0 %663
  %666 = vset.pattern.permute.xlu0 3
  %667 = vperm.xlu0 %666, %v37
  %v668 = vpop.permute.xlu0 %667
  %670 = vset.pattern.permute.xlu0 3
  %671 = vperm.xlu0 %670, %v38
  %v672 = vpop.permute.xlu0 %671
  %674 = vset.pattern.permute.xlu0 3
  %675 = vperm.xlu0 %674, %v39
  %v676 = vpop.permute.xlu0 %675
  %678 = vset.pattern.permute.xlu0 3
  %679 = vperm.xlu0 %678, %v40
  %v680 = vpop.permute.xlu0 %679
  %682 = vset.pattern.permute.xlu0 3
  %683 = vperm.xlu0 %682, %v41
  %v684 = vpop.permute.xlu0 %683
  %686 = vset.pattern.permute.xlu0 3
  %687 = vperm.xlu0 %686, %v42
  %v688 = vpop.permute.xlu0 %687
  %v690 = vmul.f32 %v564, %v208
  %v691 = vmul.f32 %v568, %v208
  %v692 = vmul.f32 %v572, %v208
  %v693 = vmul.f32 %v576, %v208
  %v694 = vmul.f32 %v580, %v208
  %v695 = vmul.f32 %v584, %v208
  %v696 = vmul.f32 %v588, %v208
  %v697 = vmul.f32 %v592, %v208
  %v698 = vmul.f32 %v596, %v208
  %v699 = vmul.f32 %v600, %v208
  %v700 = vmul.f32 %v604, %v208
  %v701 = vmul.f32 %v608, %v208
  %v702 = vmul.f32 %v612, %v208
  %v703 = vmul.f32 %v616, %v208
  %v704 = vmul.f32 %v620, %v208
  %v705 = vmul.f32 %v624, %v208
  %v706 = vmul.f32 %v628, %v208
  %v707 = vmul.f32 %v632, %v208
  %v708 = vmul.f32 %v636, %v208
  %v709 = vmul.f32 %v640, %v208
  %v710 = vmul.f32 %v644, %v208
  %v711 = vmul.f32 %v648, %v208
  %v712 = vmul.f32 %v652, %v208
  %v713 = vmul.f32 %v656, %v208
  %v714 = vmul.f32 %v660, %v208
  %v715 = vmul.f32 %v664, %v208
  %v716 = vmul.f32 %v668, %v208
  %v717 = vmul.f32 %v672, %v208
  %v718 = vmul.f32 %v676, %v208
  %v719 = vmul.f32 %v680, %v208
  %v720 = vmul.f32 %v684, %v208
  %v721 = vmul.f32 %v688, %v208
  %754 = vrot.lane.b32.xlu0 %v370, 8
  %v755 = vpop.permute.xlu0 %754
  %756 = vrot.lane.b32.xlu0 %v371, 8
  %v757 = vpop.permute.xlu0 %756
  %758 = vrot.lane.b32.xlu0 %v372, 8
  %v759 = vpop.permute.xlu0 %758
  %760 = vrot.lane.b32.xlu0 %v373, 8
  %v761 = vpop.permute.xlu0 %760
  %762 = vrot.lane.b32.xlu0 %v374, 8
  %v763 = vpop.permute.xlu0 %762
  %764 = vrot.lane.b32.xlu0 %v375, 8
  %v765 = vpop.permute.xlu0 %764
  %766 = vrot.lane.b32.xlu0 %v376, 8
  %v767 = vpop.permute.xlu0 %766
  %768 = vrot.lane.b32.xlu0 %v377, 8
  %v769 = vpop.permute.xlu0 %768
  %770 = vrot.lane.b32.xlu0 %v378, 8
  %v771 = vpop.permute.xlu0 %770
  %772 = vrot.lane.b32.xlu0 %v379, 8
  %v773 = vpop.permute.xlu0 %772
  %774 = vrot.lane.b32.xlu0 %v380, 8
  %v775 = vpop.permute.xlu0 %774
  %776 = vrot.lane.b32.xlu0 %v381, 8
  %v777 = vpop.permute.xlu0 %776
  %778 = vrot.lane.b32.xlu0 %v382, 8
  %v779 = vpop.permute.xlu0 %778
  %780 = vrot.lane.b32.xlu0 %v383, 8
  %v781 = vpop.permute.xlu0 %780
  %782 = vrot.lane.b32.xlu0 %v384, 8
  %v783 = vpop.permute.xlu0 %782
  %784 = vrot.lane.b32.xlu0 %v385, 8
  %v785 = vpop.permute.xlu0 %784
  %786 = vrot.lane.b32.xlu0 %v386, 8
  %v787 = vpop.permute.xlu0 %786
  %788 = vrot.lane.b32.xlu0 %v387, 8
  %v789 = vpop.permute.xlu0 %788
  %790 = vrot.lane.b32.xlu0 %v388, 8
  %v791 = vpop.permute.xlu0 %790
  %792 = vrot.lane.b32.xlu0 %v389, 8
  %v793 = vpop.permute.xlu0 %792
  %794 = vrot.lane.b32.xlu0 %v390, 8
  %v795 = vpop.permute.xlu0 %794
  %796 = vrot.lane.b32.xlu0 %v391, 8
  %v797 = vpop.permute.xlu0 %796
  %798 = vrot.lane.b32.xlu0 %v392, 8
  %v799 = vpop.permute.xlu0 %798
  %800 = vrot.lane.b32.xlu0 %v393, 8
  %v801 = vpop.permute.xlu0 %800
  %802 = vrot.lane.b32.xlu0 %v394, 8
  %v803 = vpop.permute.xlu0 %802
  %804 = vrot.lane.b32.xlu0 %v395, 8
  %v805 = vpop.permute.xlu0 %804
  %806 = vrot.lane.b32.xlu0 %v396, 8
  %v807 = vpop.permute.xlu0 %806
  %808 = vrot.lane.b32.xlu0 %v397, 8
  %v809 = vpop.permute.xlu0 %808
  %810 = vrot.lane.b32.xlu0 %v398, 8
  %v811 = vpop.permute.xlu0 %810
  %812 = vrot.lane.b32.xlu0 %v399, 8
  %v813 = vpop.permute.xlu0 %812
  %814 = vrot.lane.b32.xlu0 %v400, 8
  %v815 = vpop.permute.xlu0 %814
  %816 = vrot.lane.b32.xlu0 %v401, 8
  %v817 = vpop.permute.xlu0 %816
  %882 = vrot.lane.b32.xlu0 %v530, 16
  %v883 = vpop.permute.xlu0 %882
  %884 = vrot.lane.b32.xlu0 %v531, 16
  %v885 = vpop.permute.xlu0 %884
  %886 = vrot.lane.b32.xlu0 %v532, 16
  %v887 = vpop.permute.xlu0 %886
  %888 = vrot.lane.b32.xlu0 %v533, 16
  %v889 = vpop.permute.xlu0 %888
  %890 = vrot.lane.b32.xlu0 %v534, 16
  %v891 = vpop.permute.xlu0 %890
  %892 = vrot.lane.b32.xlu0 %v535, 16
  %v893 = vpop.permute.xlu0 %892
  %894 = vrot.lane.b32.xlu0 %v536, 16
  %v895 = vpop.permute.xlu0 %894
  %896 = vrot.lane.b32.xlu0 %v537, 16
  %v897 = vpop.permute.xlu0 %896
  %898 = vrot.lane.b32.xlu0 %v538, 16
  %v899 = vpop.permute.xlu0 %898
  %900 = vrot.lane.b32.xlu0 %v539, 16
  %v901 = vpop.permute.xlu0 %900
  %902 = vrot.lane.b32.xlu0 %v540, 16
  %v903 = vpop.permute.xlu0 %902
  %904 = vrot.lane.b32.xlu0 %v541, 16
  %v905 = vpop.permute.xlu0 %904
  %906 = vrot.lane.b32.xlu0 %v542, 16
  %v907 = vpop.permute.xlu0 %906
  %908 = vrot.lane.b32.xlu0 %v543, 16
  %v909 = vpop.permute.xlu0 %908
  %910 = vrot.lane.b32.xlu0 %v544, 16
  %v911 = vpop.permute.xlu0 %910
  %912 = vrot.lane.b32.xlu0 %v545, 16
  %v913 = vpop.permute.xlu0 %912
  %914 = vrot.lane.b32.xlu0 %v546, 16
  %v915 = vpop.permute.xlu0 %914
  %916 = vrot.lane.b32.xlu0 %v547, 16
  %v917 = vpop.permute.xlu0 %916
  %918 = vrot.lane.b32.xlu0 %v548, 16
  %v919 = vpop.permute.xlu0 %918
  %920 = vrot.lane.b32.xlu0 %v549, 16
  %v921 = vpop.permute.xlu0 %920
  %922 = vrot.lane.b32.xlu0 %v550, 16
  %v923 = vpop.permute.xlu0 %922
  %924 = vrot.lane.b32.xlu0 %v551, 16
  %v925 = vpop.permute.xlu0 %924
  %926 = vrot.lane.b32.xlu0 %v552, 16
  %v927 = vpop.permute.xlu0 %926
  %928 = vrot.lane.b32.xlu0 %v553, 16
  %v929 = vpop.permute.xlu0 %928
  %930 = vrot.lane.b32.xlu0 %v554, 16
  %v931 = vpop.permute.xlu0 %930
  %932 = vrot.lane.b32.xlu0 %v555, 16
  %v933 = vpop.permute.xlu0 %932
  %934 = vrot.lane.b32.xlu0 %v556, 16
  %v935 = vpop.permute.xlu0 %934
  %936 = vrot.lane.b32.xlu0 %v557, 16
  %v937 = vpop.permute.xlu0 %936
  %938 = vrot.lane.b32.xlu0 %v558, 16
  %v939 = vpop.permute.xlu0 %938
  %940 = vrot.lane.b32.xlu0 %v559, 16
  %v941 = vpop.permute.xlu0 %940
  %942 = vrot.lane.b32.xlu0 %v560, 16
  %v943 = vpop.permute.xlu0 %942
  %944 = vrot.lane.b32.xlu0 %v561, 16
  %v945 = vpop.permute.xlu0 %944
  %1010 = vrot.lane.b32.xlu0 %v690, 24
  %v1011 = vpop.permute.xlu0 %1010
  %1012 = vrot.lane.b32.xlu0 %v691, 24
  %v1013 = vpop.permute.xlu0 %1012
  %1014 = vrot.lane.b32.xlu0 %v692, 24
  %v1015 = vpop.permute.xlu0 %1014
  %1016 = vrot.lane.b32.xlu0 %v693, 24
  %v1017 = vpop.permute.xlu0 %1016
  %1018 = vrot.lane.b32.xlu0 %v694, 24
  %v1019 = vpop.permute.xlu0 %1018
  %1020 = vrot.lane.b32.xlu0 %v695, 24
  %v1021 = vpop.permute.xlu0 %1020
  %1022 = vrot.lane.b32.xlu0 %v696, 24
  %v1023 = vpop.permute.xlu0 %1022
  %1024 = vrot.lane.b32.xlu0 %v697, 24
  %v1025 = vpop.permute.xlu0 %1024
  %1026 = vrot.lane.b32.xlu0 %v698, 24
  %v1027 = vpop.permute.xlu0 %1026
  %1028 = vrot.lane.b32.xlu0 %v699, 24
  %v1029 = vpop.permute.xlu0 %1028
  %1030 = vrot.lane.b32.xlu0 %v700, 24
  %v1031 = vpop.permute.xlu0 %1030
  %1032 = vrot.lane.b32.xlu0 %v701, 24
  %v1033 = vpop.permute.xlu0 %1032
  %1034 = vrot.lane.b32.xlu0 %v702, 24
  %v1035 = vpop.permute.xlu0 %1034
  %1036 = vrot.lane.b32.xlu0 %v703, 24
  %v1037 = vpop.permute.xlu0 %1036
  %1038 = vrot.lane.b32.xlu0 %v704, 24
  %v1039 = vpop.permute.xlu0 %1038
  %1040 = vrot.lane.b32.xlu0 %v705, 24
  %v1041 = vpop.permute.xlu0 %1040
  %1042 = vrot.lane.b32.xlu0 %v706, 24
  %v1043 = vpop.permute.xlu0 %1042
  %1044 = vrot.lane.b32.xlu0 %v707, 24
  %v1045 = vpop.permute.xlu0 %1044
  %1046 = vrot.lane.b32.xlu0 %v708, 24
  %v1047 = vpop.permute.xlu0 %1046
  %1048 = vrot.lane.b32.xlu0 %v709, 24
  %v1049 = vpop.permute.xlu0 %1048
  %1050 = vrot.lane.b32.xlu0 %v710, 24
  %v1051 = vpop.permute.xlu0 %1050
  %1052 = vrot.lane.b32.xlu0 %v711, 24
  %v1053 = vpop.permute.xlu0 %1052
  %1054 = vrot.lane.b32.xlu0 %v712, 24
  %v1055 = vpop.permute.xlu0 %1054
  %1056 = vrot.lane.b32.xlu0 %v713, 24
  %v1057 = vpop.permute.xlu0 %1056
  %1058 = vrot.lane.b32.xlu0 %v714, 24
  %v1059 = vpop.permute.xlu0 %1058
  %1060 = vrot.lane.b32.xlu0 %v715, 24
  %v1061 = vpop.permute.xlu0 %1060
  %1062 = vrot.lane.b32.xlu0 %v716, 24
  %v1063 = vpop.permute.xlu0 %1062
  %1064 = vrot.lane.b32.xlu0 %v717, 24
  %v1065 = vpop.permute.xlu0 %1064
  %1066 = vrot.lane.b32.xlu0 %v718, 24
  %v1067 = vpop.permute.xlu0 %1066
  %1068 = vrot.lane.b32.xlu0 %v719, 24
  %v1069 = vpop.permute.xlu0 %1068
  %1070 = vrot.lane.b32.xlu0 %v720, 24
  %v1071 = vpop.permute.xlu0 %1070
  %1072 = vrot.lane.b32.xlu0 %v721, 24
  %v1073 = vpop.permute.xlu0 %1072
  %vm1106 = vcmask 64512
  %v1107 = vsel %vm1106, %v210, %v755
  %v1108 = vsel %vm1106, %v211, %v757
  %v1109 = vsel %vm1106, %v212, %v759
  %v1110 = vsel %vm1106, %v213, %v761
  %v1111 = vsel %vm1106, %v214, %v763
  %v1112 = vsel %vm1106, %v215, %v765
  %v1113 = vsel %vm1106, %v216, %v767
  %v1114 = vsel %vm1106, %v217, %v769
  %v1115 = vsel %vm1106, %v218, %v771
  %v1116 = vsel %vm1106, %v219, %v773
  %v1117 = vsel %vm1106, %v220, %v775
  %v1118 = vsel %vm1106, %v221, %v777
  %v1119 = vsel %vm1106, %v222, %v779
  %v1120 = vsel %vm1106, %v223, %v781
  %v1121 = vsel %vm1106, %v224, %v783
  %v1122 = vsel %vm1106, %v225, %v785
  %v1123 = vsel %vm1106, %v226, %v787
  %v1124 = vsel %vm1106, %v227, %v789
  %v1125 = vsel %vm1106, %v228, %v791
  %v1126 = vsel %vm1106, %v229, %v793
  %v1127 = vsel %vm1106, %v230, %v795
  %v1128 = vsel %vm1106, %v231, %v797
  %v1129 = vsel %vm1106, %v232, %v799
  %v1130 = vsel %vm1106, %v233, %v801
  %v1131 = vsel %vm1106, %v234, %v803
  %v1132 = vsel %vm1106, %v235, %v805
  %v1133 = vsel %vm1106, %v236, %v807
  %v1134 = vsel %vm1106, %v237, %v809
  %v1135 = vsel %vm1106, %v238, %v811
  %v1136 = vsel %vm1106, %v239, %v813
  %v1137 = vsel %vm1106, %v240, %v815
  %v1138 = vsel %vm1106, %v241, %v817
  %vm1139 = vcmask 130048
  %v1140 = vsel %vm1139, %v1107, %v883
  %v1141 = vsel %vm1139, %v1108, %v885
  %v1142 = vsel %vm1139, %v1109, %v887
  %v1143 = vsel %vm1139, %v1110, %v889
  %v1144 = vsel %vm1139, %v1111, %v891
  %v1145 = vsel %vm1139, %v1112, %v893
  %v1146 = vsel %vm1139, %v1113, %v895
  %v1147 = vsel %vm1139, %v1114, %v897
  %v1148 = vsel %vm1139, %v1115, %v899
  %v1149 = vsel %vm1139, %v1116, %v901
  %v1150 = vsel %vm1139, %v1117, %v903
  %v1151 = vsel %vm1139, %v1118, %v905
  %v1152 = vsel %vm1139, %v1119, %v907
  %v1153 = vsel %vm1139, %v1120, %v909
  %v1154 = vsel %vm1139, %v1121, %v911
  %v1155 = vsel %vm1139, %v1122, %v913
  %v1156 = vsel %vm1139, %v1123, %v915
  %v1157 = vsel %vm1139, %v1124, %v917
  %v1158 = vsel %vm1139, %v1125, %v919
  %v1159 = vsel %vm1139, %v1126, %v921
  %v1160 = vsel %vm1139, %v1127, %v923
  %v1161 = vsel %vm1139, %v1128, %v925
  %v1162 = vsel %vm1139, %v1129, %v927
  %v1163 = vsel %vm1139, %v1130, %v929
  %v1164 = vsel %vm1139, %v1131, %v931
  %v1165 = vsel %vm1139, %v1132, %v933
  %v1166 = vsel %vm1139, %v1133, %v935
  %v1167 = vsel %vm1139, %v1134, %v937
  %v1168 = vsel %vm1139, %v1135, %v939
  %v1169 = vsel %vm1139, %v1136, %v941
  %v1170 = vsel %vm1139, %v1137, %v943
  %v1171 = vsel %vm1139, %v1138, %v945
  %vm1172 = vcmask 195584
  %v1173 = vsel %vm1172, %v1140, %v1011
  %v1174 = vsel %vm1172, %v1141, %v1013
  %v1175 = vsel %vm1172, %v1142, %v1015
  %v1176 = vsel %vm1172, %v1143, %v1017
  %v1177 = vsel %vm1172, %v1144, %v1019
  %v1178 = vsel %vm1172, %v1145, %v1021
  %v1179 = vsel %vm1172, %v1146, %v1023
  %v1180 = vsel %vm1172, %v1147, %v1025
  %v1181 = vsel %vm1172, %v1148, %v1027
  %v1182 = vsel %vm1172, %v1149, %v1029
  %v1183 = vsel %vm1172, %v1150, %v1031
  %v1184 = vsel %vm1172, %v1151, %v1033
  %v1185 = vsel %vm1172, %v1152, %v1035
  %v1186 = vsel %vm1172, %v1153, %v1037
  %v1187 = vsel %vm1172, %v1154, %v1039
  %v1188 = vsel %vm1172, %v1155, %v1041
  %v1189 = vsel %vm1172, %v1156, %v1043
  %v1190 = vsel %vm1172, %v1157, %v1045
  %v1191 = vsel %vm1172, %v1158, %v1047
  %v1192 = vsel %vm1172, %v1159, %v1049
  %v1193 = vsel %vm1172, %v1160, %v1051
  %v1194 = vsel %vm1172, %v1161, %v1053
  %v1195 = vsel %vm1172, %v1162, %v1055
  %v1196 = vsel %vm1172, %v1163, %v1057
  %v1197 = vsel %vm1172, %v1164, %v1059
  %v1198 = vsel %vm1172, %v1165, %v1061
  %v1199 = vsel %vm1172, %v1166, %v1063
  %v1200 = vsel %vm1172, %v1167, %v1065
  %v1201 = vsel %vm1172, %v1168, %v1067
  %v1202 = vsel %vm1172, %v1169, %v1069
  %v1203 = vsel %vm1172, %v1170, %v1071
  %v1204 = vsel %vm1172, %v1171, %v1073
  %v1205 = vmul.f32 %v1173, 3.1415927
  %v1206 = vmul.f32 %v1174, 3.1415927
  %v1207 = vmul.f32 %v1175, 3.1415927
  %v1208 = vmul.f32 %v1176, 3.1415927
  %v1209 = vmul.f32 %v1177, 3.1415927
  %v1210 = vmul.f32 %v1178, 3.1415927
  %v1211 = vmul.f32 %v1179, 3.1415927
  %v1212 = vmul.f32 %v1180, 3.1415927
  %v1213 = vmul.f32 %v1181, 3.1415927
  %v1214 = vmul.f32 %v1182, 3.1415927
  %v1215 = vmul.f32 %v1183, 3.1415927
  %v1216 = vmul.f32 %v1184, 3.1415927
  %v1217 = vmul.f32 %v1185, 3.1415927
  %v1218 = vmul.f32 %v1186, 3.1415927
  %v1219 = vmul.f32 %v1187, 3.1415927
  %v1220 = vmul.f32 %v1188, 3.1415927
  %v1221 = vmul.f32 %v1189, 3.1415927
  %v1222 = vmul.f32 %v1190, 3.1415927
  %v1223 = vmul.f32 %v1191, 3.1415927
  %v1224 = vmul.f32 %v1192, 3.1415927
  %v1225 = vmul.f32 %v1193, 3.1415927
  %v1226 = vmul.f32 %v1194, 3.1415927
  %v1227 = vmul.f32 %v1195, 3.1415927
  %v1228 = vmul.f32 %v1196, 3.1415927
  %v1229 = vmul.f32 %v1197, 3.1415927
  %v1230 = vmul.f32 %v1198, 3.1415927
  %v1231 = vmul.f32 %v1199, 3.1415927
  %v1232 = vmul.f32 %v1200, 3.1415927
  %v1233 = vmul.f32 %v1201, 3.1415927
  %v1234 = vmul.f32 %v1202, 3.1415927
  %v1235 = vmul.f32 %v1203, 3.1415927
  %v1236 = vmul.f32 %v1204, 3.1415927
  %v1237 = vand.u32 2147483647, %v1205
  %vm1238 = vcmp.le.f32.partialorder %v1237, 0.7853982
  %vm1239 = vcmp.lt.s32.totalorder %v1205, 0
  %v1240 = vand.u32 %v1205, 2139095040
  %v1241 = vshrl.u32 %v1240, 23
  %v1242 = vsub.s32 %v1241, 127
  %v1243 = vand.u32 2147483647, %v1205
  %v1244 = vand.u32 %v1243, 8388607
  %v1245 = vor.u32 %v1244, 8388608
  %v1246 = vsub.s32 0, %v1245
  %v1247 = vadd.s32 %v1242, 1
  %vm1248 = vcmp.gt.s32.totalorder %v1247, 0
  %v1249 = vsel %vm1248, %v1247, 0
  %v1250 = vshrl.u32 %v1249, 5
  %v1251 = vand.u32 %v1249, 31
  %v1252 = vsub.s32 32, %v1251
  %v1253 = vshrl.u32 683565275, %v1252
  %v1254 = vshll.u32 683565275, %v1251
  %v1255 = vshrl.u32 2475754826, %v1252
  %v1256 = vor.u32 %v1254, %v1255
  %v1257 = vshll.u32 2475754826, %v1251
  %v1258 = vshrl.u32 2131351028, %v1252
  %v1259 = vor.u32 %v1257, %v1258
  %v1260 = vshll.u32 2131351028, %v1251
  %v1261 = vshrl.u32 2102212464, %v1252
  %v1262 = vor.u32 %v1260, %v1261
  %v1263 = vshll.u32 2102212464, %v1251
  %v1264 = vshrl.u32 920167782, %v1252
  %v1265 = vor.u32 %v1263, %v1264
  %v1266 = vshll.u32 920167782, %v1251
  %v1267 = vshrl.u32 1326507024, %v1252
  %v1268 = vor.u32 %v1266, %v1267
  %vm1269 = vcmp.lt.s32.totalorder %v1250, 1
  %vm1270 = vcmp.lt.s32.totalorder %v1250, 2
  %vm1271 = vcmp.lt.s32.totalorder %v1250, 3
  %vm1272 = vcmp.lt.s32.totalorder %v1250, 4
  %v1273 = vsel %vm1269, %v1253, %v1256
  %v1274 = vsel %vm1272, %v1262, 2102212464
  %v1275 = vsel %vm1271, %v1259, %v1274
  %v1276 = vsel %vm1270, %v1273, %v1275
  %v1277 = vsel %vm1269, %v1256, %v1259
  %v1278 = vsel %vm1272, %v1265, 920167782
  %v1279 = vsel %vm1271, %v1262, %v1278
  %v1280 = vsel %vm1270, %v1277, %v1279
  %v1281 = vsel %vm1269, %v1259, %v1262
  %v1282 = vsel %vm1272, %v1268, 1326507024
  %v1283 = vsel %vm1271, %v1265, %v1282
  %v1284 = vsel %vm1270, %v1281, %v1283
  %v1285 = vshll.u32 %v1245, 8
  %v1286 = vmul.u32.u64.compose %v1285, %v1284
  %v1287 = vextract.low.u32 %v1286
  %v1288 = vextract.high.u32 %v1286
  %v1289 = vmul.u32.u64.compose %v1285, %v1280
  %v1290 = vextract.low.u32 %v1289
  %v1291 = vextract.high.u32 %v1289
  %v1292 = vmul.u32 %v1285, %v1276
  %v1293 = vadd.s32 %v1288, %v1290
  %vm1294 = vc.u32 %v1288, %v1290
  %v1295 = vadd.s32 %v1291, 1
  %v1296 = vsel %vm1294, %v1295, %v1291
  %v1297 = vadd.s32 %v1292, %v1296
  %v1298 = vadd.s32 %v1297, 536870912
  %v1299 = vshrl.u32 %v1298, 30
  %v1300 = vshll.u32 %v1299, 30
  %v1301 = vsub.s32 %v1297, %v1300
  %vm1302 = vcmp.lt.s32.totalorder %v1301, 0
  %v1303 = vsub.s32 0, %v1301
  %v1304 = vsel %vm1302, %v1303, %v1301
  %v1305 = vclz %v1304
  %v1306 = vsub.s32 %v1305, 2
  %vm1307 = vcmp.gt.s32.totalorder 0, %v1306
  %v1308 = vsel %vm1307, 0, %v1306
  %v1309 = vsub.s32 32, %v1308
  %v1310 = vshll.u32 %v1301, %v1308
  %v1311 = vshrl.u32 %v1293, %v1309
  %v1312 = vor.u32 %v1310, %v1311
  %v1313 = vsub.s32 4294967266, %v1308
  %v1314 = vadd.s32 %v1313, 127
  %v1315 = vshll.u32 %v1314, 23
  %v1316 = vor.u32 4788187, %v1315
  %v1317 = vand.u32 2147483647, %v1316
  %v1319 = vcvt.s32.f32 %v1312
  %v1320 = vmul.f32 %v1319, %v1317
  %v1321 = vxor.u32 %v1320, 2147483648
  %v1322 = vsel %vm1239, %v1321, %v1320
  %v1323 = vsub.s32 4, %v1299
  %v1324 = vsel %vm1239, %v1323, %v1299
  %v1325 = vsel %vm1238, %v1205, %v1322
  %v1326 = vsel %vm1238, 0, %v1324
  %v1327 = vcosq.f32.pop %v1325
  %v1328 = vsinq.f32.pop %v1325
  %vm1329 = vweird.f32 %v1205
  %v1330 = vadd.s32 %v1326, 3
  %v1331 = vand.u32 %v1330, 3
  %vm1332 = vcmp.lt.s32.totalorder %v1331, 2
  %vm1333 = vcmp.eq.s32.totalorder %v1331, 0
  %v1334 = vxor.u32 %v1328, 2147483648
  %v1335 = vsel %vm1333, %v1327, %v1334
  %vm1336 = vcmp.eq.s32.totalorder %v1331, 2
  %v1337 = vxor.u32 %v1327, 2147483648
  %v1338 = vsel %vm1336, %v1337, %v1328
  %v1339 = vsel %vm1332, %v1335, %v1338
  %v1340 = vsel %vm1329, nan, %v1339
  %v1341 = vand.u32 2147483647, %v1206
  %vm1342 = vcmp.le.f32.partialorder %v1341, 0.7853982
  %vm1343 = vcmp.lt.s32.totalorder %v1206, 0
  %v1344 = vand.u32 %v1206, 2139095040
  %v1345 = vshrl.u32 %v1344, 23
  %v1346 = vsub.s32 %v1345, 127
  %v1347 = vand.u32 2147483647, %v1206
  %v1348 = vand.u32 %v1347, 8388607
  %v1349 = vor.u32 %v1348, 8388608
  %v1350 = vsub.s32 0, %v1349
  %v1351 = vadd.s32 %v1346, 1
  %vm1352 = vcmp.gt.s32.totalorder %v1351, 0
  %v1353 = vsel %vm1352, %v1351, 0
  %v1354 = vshrl.u32 %v1353, 5
  %v1355 = vand.u32 %v1353, 31
  %v1356 = vsub.s32 32, %v1355
  %v1357 = vshrl.u32 683565275, %v1356
  %v1358 = vshll.u32 683565275, %v1355
  %v1359 = vshrl.u32 2475754826, %v1356
  %v1360 = vor.u32 %v1358, %v1359
  %v1361 = vshll.u32 2475754826, %v1355
  %v1362 = vshrl.u32 2131351028, %v1356
  %v1363 = vor.u32 %v1361, %v1362
  %v1364 = vshll.u32 2131351028, %v1355
  %v1365 = vshrl.u32 2102212464, %v1356
  %v1366 = vor.u32 %v1364, %v1365
  %v1367 = vshll.u32 2102212464, %v1355
  %v1368 = vshrl.u32 920167782, %v1356
  %v1369 = vor.u32 %v1367, %v1368
  %v1370 = vshll.u32 920167782, %v1355
  %v1371 = vshrl.u32 1326507024, %v1356
  %v1372 = vor.u32 %v1370, %v1371
  %vm1373 = vcmp.lt.s32.totalorder %v1354, 1
  %vm1374 = vcmp.lt.s32.totalorder %v1354, 2
  %vm1375 = vcmp.lt.s32.totalorder %v1354, 3
  %vm1376 = vcmp.lt.s32.totalorder %v1354, 4
  %v1377 = vsel %vm1373, %v1357, %v1360
  %v1378 = vsel %vm1376, %v1366, 2102212464
  %v1379 = vsel %vm1375, %v1363, %v1378
  %v1380 = vsel %vm1374, %v1377, %v1379
  %v1381 = vsel %vm1373, %v1360, %v1363
  %v1382 = vsel %vm1376, %v1369, 920167782
  %v1383 = vsel %vm1375, %v1366, %v1382
  %v1384 = vsel %vm1374, %v1381, %v1383
  %v1385 = vsel %vm1373, %v1363, %v1366
  %v1386 = vsel %vm1376, %v1372, 1326507024
  %v1387 = vsel %vm1375, %v1369, %v1386
  %v1388 = vsel %vm1374, %v1385, %v1387
  %v1389 = vshll.u32 %v1349, 8
  %v1390 = vmul.u32.u64.compose %v1389, %v1388
  %v1391 = vextract.low.u32 %v1390
  %v1392 = vextract.high.u32 %v1390
  %v1393 = vmul.u32.u64.compose %v1389, %v1384
  %v1394 = vextract.low.u32 %v1393
  %v1395 = vextract.high.u32 %v1393
  %v1396 = vmul.u32 %v1389, %v1380
  %v1397 = vadd.s32 %v1392, %v1394
  %vm1398 = vc.u32 %v1392, %v1394
  %v1399 = vadd.s32 %v1395, 1
  %v1400 = vsel %vm1398, %v1399, %v1395
  %v1401 = vadd.s32 %v1396, %v1400
  %v1402 = vadd.s32 %v1401, 536870912
  %v1403 = vshrl.u32 %v1402, 30
  %v1404 = vshll.u32 %v1403, 30
  %v1405 = vsub.s32 %v1401, %v1404
  %vm1406 = vcmp.lt.s32.totalorder %v1405, 0
  %v1407 = vsub.s32 0, %v1405
  %v1408 = vsel %vm1406, %v1407, %v1405
  %v1409 = vclz %v1408
  %v1410 = vsub.s32 %v1409, 2
  %vm1411 = vcmp.gt.s32.totalorder 0, %v1410
  %v1412 = vsel %vm1411, 0, %v1410
  %v1413 = vsub.s32 32, %v1412
  %v1414 = vshll.u32 %v1405, %v1412
  %v1415 = vshrl.u32 %v1397, %v1413
  %v1416 = vor.u32 %v1414, %v1415
  %v1417 = vsub.s32 4294967266, %v1412
  %v1418 = vadd.s32 %v1417, 127
  %v1419 = vshll.u32 %v1418, 23
  %v1420 = vor.u32 4788187, %v1419
  %v1421 = vand.u32 2147483647, %v1420
  %v1423 = vcvt.s32.f32 %v1416
  %v1424 = vmul.f32 %v1423, %v1421
  %v1425 = vxor.u32 %v1424, 2147483648
  %v1426 = vsel %vm1343, %v1425, %v1424
  %v1427 = vsub.s32 4, %v1403
  %v1428 = vsel %vm1343, %v1427, %v1403
  %v1429 = vsel %vm1342, %v1206, %v1426
  %v1430 = vsel %vm1342, 0, %v1428
  %v1431 = vcosq.f32.pop %v1429
  %v1432 = vsinq.f32.pop %v1429
  %vm1433 = vweird.f32 %v1206
  %v1434 = vadd.s32 %v1430, 3
  %v1435 = vand.u32 %v1434, 3
  %vm1436 = vcmp.lt.s32.totalorder %v1435, 2
  %vm1437 = vcmp.eq.s32.totalorder %v1435, 0
  %v1438 = vxor.u32 %v1432, 2147483648
  %v1439 = vsel %vm1437, %v1431, %v1438
  %vm1440 = vcmp.eq.s32.totalorder %v1435, 2
  %v1441 = vxor.u32 %v1431, 2147483648
  %v1442 = vsel %vm1440, %v1441, %v1432
  %v1443 = vsel %vm1436, %v1439, %v1442
  %v1444 = vsel %vm1433, nan, %v1443
  %v1445 = vand.u32 2147483647, %v1207
  %vm1446 = vcmp.le.f32.partialorder %v1445, 0.7853982
  %vm1447 = vcmp.lt.s32.totalorder %v1207, 0
  %v1448 = vand.u32 %v1207, 2139095040
  %v1449 = vshrl.u32 %v1448, 23
  %v1450 = vsub.s32 %v1449, 127
  %v1451 = vand.u32 2147483647, %v1207
  %v1452 = vand.u32 %v1451, 8388607
  %v1453 = vor.u32 %v1452, 8388608
  %v1454 = vsub.s32 0, %v1453
  %v1455 = vadd.s32 %v1450, 1
  %vm1456 = vcmp.gt.s32.totalorder %v1455, 0
  %v1457 = vsel %vm1456, %v1455, 0
  %v1458 = vshrl.u32 %v1457, 5
  %v1459 = vand.u32 %v1457, 31
  %v1460 = vsub.s32 32, %v1459
  %v1461 = vshrl.u32 683565275, %v1460
  %v1462 = vshll.u32 683565275, %v1459
  %v1463 = vshrl.u32 2475754826, %v1460
  %v1464 = vor.u32 %v1462, %v1463
  %v1465 = vshll.u32 2475754826, %v1459
  %v1466 = vshrl.u32 2131351028, %v1460
  %v1467 = vor.u32 %v1465, %v1466
  %v1468 = vshll.u32 2131351028, %v1459
  %v1469 = vshrl.u32 2102212464, %v1460
  %v1470 = vor.u32 %v1468, %v1469
  %v1471 = vshll.u32 2102212464, %v1459
  %v1472 = vshrl.u32 920167782, %v1460
  %v1473 = vor.u32 %v1471, %v1472
  %v1474 = vshll.u32 920167782, %v1459
  %v1475 = vshrl.u32 1326507024, %v1460
  %v1476 = vor.u32 %v1474, %v1475
  %vm1477 = vcmp.lt.s32.totalorder %v1458, 1
  %vm1478 = vcmp.lt.s32.totalorder %v1458, 2
  %vm1479 = vcmp.lt.s32.totalorder %v1458, 3
  %vm1480 = vcmp.lt.s32.totalorder %v1458, 4
  %v1481 = vsel %vm1477, %v1461, %v1464
  %v1482 = vsel %vm1480, %v1470, 2102212464
  %v1483 = vsel %vm1479, %v1467, %v1482
  %v1484 = vsel %vm1478, %v1481, %v1483
  %v1485 = vsel %vm1477, %v1464, %v1467
  %v1486 = vsel %vm1480, %v1473, 920167782
  %v1487 = vsel %vm1479, %v1470, %v1486
  %v1488 = vsel %vm1478, %v1485, %v1487
  %v1489 = vsel %vm1477, %v1467, %v1470
  %v1490 = vsel %vm1480, %v1476, 1326507024
  %v1491 = vsel %vm1479, %v1473, %v1490
  %v1492 = vsel %vm1478, %v1489, %v1491
  %v1493 = vshll.u32 %v1453, 8
  %v1494 = vmul.u32.u64.compose %v1493, %v1492
  %v1495 = vextract.low.u32 %v1494
  %v1496 = vextract.high.u32 %v1494
  %v1497 = vmul.u32.u64.compose %v1493, %v1488
  %v1498 = vextract.low.u32 %v1497
  %v1499 = vextract.high.u32 %v1497
  %v1500 = vmul.u32 %v1493, %v1484
  %v1501 = vadd.s32 %v1496, %v1498
  %vm1502 = vc.u32 %v1496, %v1498
  %v1503 = vadd.s32 %v1499, 1
  %v1504 = vsel %vm1502, %v1503, %v1499
  %v1505 = vadd.s32 %v1500, %v1504
  %v1506 = vadd.s32 %v1505, 536870912
  %v1507 = vshrl.u32 %v1506, 30
  %v1508 = vshll.u32 %v1507, 30
  %v1509 = vsub.s32 %v1505, %v1508
  %vm1510 = vcmp.lt.s32.totalorder %v1509, 0
  %v1511 = vsub.s32 0, %v1509
  %v1512 = vsel %vm1510, %v1511, %v1509
  %v1513 = vclz %v1512
  %v1514 = vsub.s32 %v1513, 2
  %vm1515 = vcmp.gt.s32.totalorder 0, %v1514
  %v1516 = vsel %vm1515, 0, %v1514
  %v1517 = vsub.s32 32, %v1516
  %v1518 = vshll.u32 %v1509, %v1516
  %v1519 = vshrl.u32 %v1501, %v1517
  %v1520 = vor.u32 %v1518, %v1519
  %v1521 = vsub.s32 4294967266, %v1516
  %v1522 = vadd.s32 %v1521, 127
  %v1523 = vshll.u32 %v1522, 23
  %v1524 = vor.u32 4788187, %v1523
  %v1525 = vand.u32 2147483647, %v1524
  %v1527 = vcvt.s32.f32 %v1520
  %v1528 = vmul.f32 %v1527, %v1525
  %v1529 = vxor.u32 %v1528, 2147483648
  %v1530 = vsel %vm1447, %v1529, %v1528
  %v1531 = vsub.s32 4, %v1507
  %v1532 = vsel %vm1447, %v1531, %v1507
  %v1533 = vsel %vm1446, %v1207, %v1530
  %v1534 = vsel %vm1446, 0, %v1532
  %v1535 = vcosq.f32.pop %v1533
  %v1536 = vsinq.f32.pop %v1533
  %vm1537 = vweird.f32 %v1207
  %v1538 = vadd.s32 %v1534, 3
  %v1539 = vand.u32 %v1538, 3
  %vm1540 = vcmp.lt.s32.totalorder %v1539, 2
  %vm1541 = vcmp.eq.s32.totalorder %v1539, 0
  %v1542 = vxor.u32 %v1536, 2147483648
  %v1543 = vsel %vm1541, %v1535, %v1542
  %vm1544 = vcmp.eq.s32.totalorder %v1539, 2
  %v1545 = vxor.u32 %v1535, 2147483648
  %v1546 = vsel %vm1544, %v1545, %v1536
  %v1547 = vsel %vm1540, %v1543, %v1546
  %v1548 = vsel %vm1537, nan, %v1547
  %v1549 = vand.u32 2147483647, %v1208
  %vm1550 = vcmp.le.f32.partialorder %v1549, 0.7853982
  %vm1551 = vcmp.lt.s32.totalorder %v1208, 0
  %v1552 = vand.u32 %v1208, 2139095040
  %v1553 = vshrl.u32 %v1552, 23
  %v1554 = vsub.s32 %v1553, 127
  %v1555 = vand.u32 2147483647, %v1208
  %v1556 = vand.u32 %v1555, 8388607
  %v1557 = vor.u32 %v1556, 8388608
  %v1558 = vsub.s32 0, %v1557
  %v1559 = vadd.s32 %v1554, 1
  %vm1560 = vcmp.gt.s32.totalorder %v1559, 0
  %v1561 = vsel %vm1560, %v1559, 0
  %v1562 = vshrl.u32 %v1561, 5
  %v1563 = vand.u32 %v1561, 31
  %v1564 = vsub.s32 32, %v1563
  %v1565 = vshrl.u32 683565275, %v1564
  %v1566 = vshll.u32 683565275, %v1563
  %v1567 = vshrl.u32 2475754826, %v1564
  %v1568 = vor.u32 %v1566, %v1567
  %v1569 = vshll.u32 2475754826, %v1563
  %v1570 = vshrl.u32 2131351028, %v1564
  %v1571 = vor.u32 %v1569, %v1570
  %v1572 = vshll.u32 2131351028, %v1563
  %v1573 = vshrl.u32 2102212464, %v1564
  %v1574 = vor.u32 %v1572, %v1573
  %v1575 = vshll.u32 2102212464, %v1563
  %v1576 = vshrl.u32 920167782, %v1564
  %v1577 = vor.u32 %v1575, %v1576
  %v1578 = vshll.u32 920167782, %v1563
  %v1579 = vshrl.u32 1326507024, %v1564
  %v1580 = vor.u32 %v1578, %v1579
  %vm1581 = vcmp.lt.s32.totalorder %v1562, 1
  %vm1582 = vcmp.lt.s32.totalorder %v1562, 2
  %vm1583 = vcmp.lt.s32.totalorder %v1562, 3
  %vm1584 = vcmp.lt.s32.totalorder %v1562, 4
  %v1585 = vsel %vm1581, %v1565, %v1568
  %v1586 = vsel %vm1584, %v1574, 2102212464
  %v1587 = vsel %vm1583, %v1571, %v1586
  %v1588 = vsel %vm1582, %v1585, %v1587
  %v1589 = vsel %vm1581, %v1568, %v1571
  %v1590 = vsel %vm1584, %v1577, 920167782
  %v1591 = vsel %vm1583, %v1574, %v1590
  %v1592 = vsel %vm1582, %v1589, %v1591
  %v1593 = vsel %vm1581, %v1571, %v1574
  %v1594 = vsel %vm1584, %v1580, 1326507024
  %v1595 = vsel %vm1583, %v1577, %v1594
  %v1596 = vsel %vm1582, %v1593, %v1595
  %v1597 = vshll.u32 %v1557, 8
  %v1598 = vmul.u32.u64.compose %v1597, %v1596
  %v1599 = vextract.low.u32 %v1598
  %v1600 = vextract.high.u32 %v1598
  %v1601 = vmul.u32.u64.compose %v1597, %v1592
  %v1602 = vextract.low.u32 %v1601
  %v1603 = vextract.high.u32 %v1601
  %v1604 = vmul.u32 %v1597, %v1588
  %v1605 = vadd.s32 %v1600, %v1602
  %vm1606 = vc.u32 %v1600, %v1602
  %v1607 = vadd.s32 %v1603, 1
  %v1608 = vsel %vm1606, %v1607, %v1603
  %v1609 = vadd.s32 %v1604, %v1608
  %v1610 = vadd.s32 %v1609, 536870912
  %v1611 = vshrl.u32 %v1610, 30
  %v1612 = vshll.u32 %v1611, 30
  %v1613 = vsub.s32 %v1609, %v1612
  %vm1614 = vcmp.lt.s32.totalorder %v1613, 0
  %v1615 = vsub.s32 0, %v1613
  %v1616 = vsel %vm1614, %v1615, %v1613
  %v1617 = vclz %v1616
  %v1618 = vsub.s32 %v1617, 2
  %vm1619 = vcmp.gt.s32.totalorder 0, %v1618
  %v1620 = vsel %vm1619, 0, %v1618
  %v1621 = vsub.s32 32, %v1620
  %v1622 = vshll.u32 %v1613, %v1620
  %v1623 = vshrl.u32 %v1605, %v1621
  %v1624 = vor.u32 %v1622, %v1623
  %v1625 = vsub.s32 4294967266, %v1620
  %v1626 = vadd.s32 %v1625, 127
  %v1627 = vshll.u32 %v1626, 23
  %v1628 = vor.u32 4788187, %v1627
  %v1629 = vand.u32 2147483647, %v1628
  %v1631 = vcvt.s32.f32 %v1624
  %v1632 = vmul.f32 %v1631, %v1629
  %v1633 = vxor.u32 %v1632, 2147483648
  %v1634 = vsel %vm1551, %v1633, %v1632
  %v1635 = vsub.s32 4, %v1611
  %v1636 = vsel %vm1551, %v1635, %v1611
  %v1637 = vsel %vm1550, %v1208, %v1634
  %v1638 = vsel %vm1550, 0, %v1636
  %v1639 = vcosq.f32.pop %v1637
  %v1640 = vsinq.f32.pop %v1637
  %vm1641 = vweird.f32 %v1208
  %v1642 = vadd.s32 %v1638, 3
  %v1643 = vand.u32 %v1642, 3
  %vm1644 = vcmp.lt.s32.totalorder %v1643, 2
  %vm1645 = vcmp.eq.s32.totalorder %v1643, 0
  %v1646 = vxor.u32 %v1640, 2147483648
  %v1647 = vsel %vm1645, %v1639, %v1646
  %vm1648 = vcmp.eq.s32.totalorder %v1643, 2
  %v1649 = vxor.u32 %v1639, 2147483648
  %v1650 = vsel %vm1648, %v1649, %v1640
  %v1651 = vsel %vm1644, %v1647, %v1650
  %v1652 = vsel %vm1641, nan, %v1651
  %v1653 = vand.u32 2147483647, %v1209
  %vm1654 = vcmp.le.f32.partialorder %v1653, 0.7853982
  %vm1655 = vcmp.lt.s32.totalorder %v1209, 0
  %v1656 = vand.u32 %v1209, 2139095040
  %v1657 = vshrl.u32 %v1656, 23
  %v1658 = vsub.s32 %v1657, 127
  %v1659 = vand.u32 2147483647, %v1209
  %v1660 = vand.u32 %v1659, 8388607
  %v1661 = vor.u32 %v1660, 8388608
  %v1662 = vsub.s32 0, %v1661
  %v1663 = vadd.s32 %v1658, 1
  %vm1664 = vcmp.gt.s32.totalorder %v1663, 0
  %v1665 = vsel %vm1664, %v1663, 0
  %v1666 = vshrl.u32 %v1665, 5
  %v1667 = vand.u32 %v1665, 31
  %v1668 = vsub.s32 32, %v1667
  %v1669 = vshrl.u32 683565275, %v1668
  %v1670 = vshll.u32 683565275, %v1667
  %v1671 = vshrl.u32 2475754826, %v1668
  %v1672 = vor.u32 %v1670, %v1671
  %v1673 = vshll.u32 2475754826, %v1667
  %v1674 = vshrl.u32 2131351028, %v1668
  %v1675 = vor.u32 %v1673, %v1674
  %v1676 = vshll.u32 2131351028, %v1667
  %v1677 = vshrl.u32 2102212464, %v1668
  %v1678 = vor.u32 %v1676, %v1677
  %v1679 = vshll.u32 2102212464, %v1667
  %v1680 = vshrl.u32 920167782, %v1668
  %v1681 = vor.u32 %v1679, %v1680
  %v1682 = vshll.u32 920167782, %v1667
  %v1683 = vshrl.u32 1326507024, %v1668
  %v1684 = vor.u32 %v1682, %v1683
  %vm1685 = vcmp.lt.s32.totalorder %v1666, 1
  %vm1686 = vcmp.lt.s32.totalorder %v1666, 2
  %vm1687 = vcmp.lt.s32.totalorder %v1666, 3
  %vm1688 = vcmp.lt.s32.totalorder %v1666, 4
  %v1689 = vsel %vm1685, %v1669, %v1672
  %v1690 = vsel %vm1688, %v1678, 2102212464
  %v1691 = vsel %vm1687, %v1675, %v1690
  %v1692 = vsel %vm1686, %v1689, %v1691
  %v1693 = vsel %vm1685, %v1672, %v1675
  %v1694 = vsel %vm1688, %v1681, 920167782
  %v1695 = vsel %vm1687, %v1678, %v1694
  %v1696 = vsel %vm1686, %v1693, %v1695
  %v1697 = vsel %vm1685, %v1675, %v1678
  %v1698 = vsel %vm1688, %v1684, 1326507024
  %v1699 = vsel %vm1687, %v1681, %v1698
  %v1700 = vsel %vm1686, %v1697, %v1699
  %v1701 = vshll.u32 %v1661, 8
  %v1702 = vmul.u32.u64.compose %v1701, %v1700
  %v1703 = vextract.low.u32 %v1702
  %v1704 = vextract.high.u32 %v1702
  %v1705 = vmul.u32.u64.compose %v1701, %v1696
  %v1706 = vextract.low.u32 %v1705
  %v1707 = vextract.high.u32 %v1705
  %v1708 = vmul.u32 %v1701, %v1692
  %v1709 = vadd.s32 %v1704, %v1706
  %vm1710 = vc.u32 %v1704, %v1706
  %v1711 = vadd.s32 %v1707, 1
  %v1712 = vsel %vm1710, %v1711, %v1707
  %v1713 = vadd.s32 %v1708, %v1712
  %v1714 = vadd.s32 %v1713, 536870912
  %v1715 = vshrl.u32 %v1714, 30
  %v1716 = vshll.u32 %v1715, 30
  %v1717 = vsub.s32 %v1713, %v1716
  %vm1718 = vcmp.lt.s32.totalorder %v1717, 0
  %v1719 = vsub.s32 0, %v1717
  %v1720 = vsel %vm1718, %v1719, %v1717
  %v1721 = vclz %v1720
  %v1722 = vsub.s32 %v1721, 2
  %vm1723 = vcmp.gt.s32.totalorder 0, %v1722
  %v1724 = vsel %vm1723, 0, %v1722
  %v1725 = vsub.s32 32, %v1724
  %v1726 = vshll.u32 %v1717, %v1724
  %v1727 = vshrl.u32 %v1709, %v1725
  %v1728 = vor.u32 %v1726, %v1727
  %v1729 = vsub.s32 4294967266, %v1724
  %v1730 = vadd.s32 %v1729, 127
  %v1731 = vshll.u32 %v1730, 23
  %v1732 = vor.u32 4788187, %v1731
  %v1733 = vand.u32 2147483647, %v1732
  %v1735 = vcvt.s32.f32 %v1728
  %v1736 = vmul.f32 %v1735, %v1733
  %v1737 = vxor.u32 %v1736, 2147483648
  %v1738 = vsel %vm1655, %v1737, %v1736
  %v1739 = vsub.s32 4, %v1715
  %v1740 = vsel %vm1655, %v1739, %v1715
  %v1741 = vsel %vm1654, %v1209, %v1738
  %v1742 = vsel %vm1654, 0, %v1740
  %v1743 = vcosq.f32.pop %v1741
  %v1744 = vsinq.f32.pop %v1741
  %vm1745 = vweird.f32 %v1209
  %v1746 = vadd.s32 %v1742, 3
  %v1747 = vand.u32 %v1746, 3
  %vm1748 = vcmp.lt.s32.totalorder %v1747, 2
  %vm1749 = vcmp.eq.s32.totalorder %v1747, 0
  %v1750 = vxor.u32 %v1744, 2147483648
  %v1751 = vsel %vm1749, %v1743, %v1750
  %vm1752 = vcmp.eq.s32.totalorder %v1747, 2
  %v1753 = vxor.u32 %v1743, 2147483648
  %v1754 = vsel %vm1752, %v1753, %v1744
  %v1755 = vsel %vm1748, %v1751, %v1754
  %v1756 = vsel %vm1745, nan, %v1755
  %v1757 = vand.u32 2147483647, %v1210
  %vm1758 = vcmp.le.f32.partialorder %v1757, 0.7853982
  %vm1759 = vcmp.lt.s32.totalorder %v1210, 0
  %v1760 = vand.u32 %v1210, 2139095040
  %v1761 = vshrl.u32 %v1760, 23
  %v1762 = vsub.s32 %v1761, 127
  %v1763 = vand.u32 2147483647, %v1210
  %v1764 = vand.u32 %v1763, 8388607
  %v1765 = vor.u32 %v1764, 8388608
  %v1766 = vsub.s32 0, %v1765
  %v1767 = vadd.s32 %v1762, 1
  %vm1768 = vcmp.gt.s32.totalorder %v1767, 0
  %v1769 = vsel %vm1768, %v1767, 0
  %v1770 = vshrl.u32 %v1769, 5
  %v1771 = vand.u32 %v1769, 31
  %v1772 = vsub.s32 32, %v1771
  %v1773 = vshrl.u32 683565275, %v1772
  %v1774 = vshll.u32 683565275, %v1771
  %v1775 = vshrl.u32 2475754826, %v1772
  %v1776 = vor.u32 %v1774, %v1775
  %v1777 = vshll.u32 2475754826, %v1771
  %v1778 = vshrl.u32 2131351028, %v1772
  %v1779 = vor.u32 %v1777, %v1778
  %v1780 = vshll.u32 2131351028, %v1771
  %v1781 = vshrl.u32 2102212464, %v1772
  %v1782 = vor.u32 %v1780, %v1781
  %v1783 = vshll.u32 2102212464, %v1771
  %v1784 = vshrl.u32 920167782, %v1772
  %v1785 = vor.u32 %v1783, %v1784
  %v1786 = vshll.u32 920167782, %v1771
  %v1787 = vshrl.u32 1326507024, %v1772
  %v1788 = vor.u32 %v1786, %v1787
  %vm1789 = vcmp.lt.s32.totalorder %v1770, 1
  %vm1790 = vcmp.lt.s32.totalorder %v1770, 2
  %vm1791 = vcmp.lt.s32.totalorder %v1770, 3
  %vm1792 = vcmp.lt.s32.totalorder %v1770, 4
  %v1793 = vsel %vm1789, %v1773, %v1776
  %v1794 = vsel %vm1792, %v1782, 2102212464
  %v1795 = vsel %vm1791, %v1779, %v1794
  %v1796 = vsel %vm1790, %v1793, %v1795
  %v1797 = vsel %vm1789, %v1776, %v1779
  %v1798 = vsel %vm1792, %v1785, 920167782
  %v1799 = vsel %vm1791, %v1782, %v1798
  %v1800 = vsel %vm1790, %v1797, %v1799
  %v1801 = vsel %vm1789, %v1779, %v1782
  %v1802 = vsel %vm1792, %v1788, 1326507024
  %v1803 = vsel %vm1791, %v1785, %v1802
  %v1804 = vsel %vm1790, %v1801, %v1803
  %v1805 = vshll.u32 %v1765, 8
  %v1806 = vmul.u32.u64.compose %v1805, %v1804
  %v1807 = vextract.low.u32 %v1806
  %v1808 = vextract.high.u32 %v1806
  %v1809 = vmul.u32.u64.compose %v1805, %v1800
  %v1810 = vextract.low.u32 %v1809
  %v1811 = vextract.high.u32 %v1809
  %v1812 = vmul.u32 %v1805, %v1796
  %v1813 = vadd.s32 %v1808, %v1810
  %vm1814 = vc.u32 %v1808, %v1810
  %v1815 = vadd.s32 %v1811, 1
  %v1816 = vsel %vm1814, %v1815, %v1811
  %v1817 = vadd.s32 %v1812, %v1816
  %v1818 = vadd.s32 %v1817, 536870912
  %v1819 = vshrl.u32 %v1818, 30
  %v1820 = vshll.u32 %v1819, 30
  %v1821 = vsub.s32 %v1817, %v1820
  %vm1822 = vcmp.lt.s32.totalorder %v1821, 0
  %v1823 = vsub.s32 0, %v1821
  %v1824 = vsel %vm1822, %v1823, %v1821
  %v1825 = vclz %v1824
  %v1826 = vsub.s32 %v1825, 2
  %vm1827 = vcmp.gt.s32.totalorder 0, %v1826
  %v1828 = vsel %vm1827, 0, %v1826
  %v1829 = vsub.s32 32, %v1828
  %v1830 = vshll.u32 %v1821, %v1828
  %v1831 = vshrl.u32 %v1813, %v1829
  %v1832 = vor.u32 %v1830, %v1831
  %v1833 = vsub.s32 4294967266, %v1828
  %v1834 = vadd.s32 %v1833, 127
  %v1835 = vshll.u32 %v1834, 23
  %v1836 = vor.u32 4788187, %v1835
  %v1837 = vand.u32 2147483647, %v1836
  %v1839 = vcvt.s32.f32 %v1832
  %v1840 = vmul.f32 %v1839, %v1837
  %v1841 = vxor.u32 %v1840, 2147483648
  %v1842 = vsel %vm1759, %v1841, %v1840
  %v1843 = vsub.s32 4, %v1819
  %v1844 = vsel %vm1759, %v1843, %v1819
  %v1845 = vsel %vm1758, %v1210, %v1842
  %v1846 = vsel %vm1758, 0, %v1844
  %v1847 = vcosq.f32.pop %v1845
  %v1848 = vsinq.f32.pop %v1845
  %vm1849 = vweird.f32 %v1210
  %v1850 = vadd.s32 %v1846, 3
  %v1851 = vand.u32 %v1850, 3
  %vm1852 = vcmp.lt.s32.totalorder %v1851, 2
  %vm1853 = vcmp.eq.s32.totalorder %v1851, 0
  %v1854 = vxor.u32 %v1848, 2147483648
  %v1855 = vsel %vm1853, %v1847, %v1854
  %vm1856 = vcmp.eq.s32.totalorder %v1851, 2
  %v1857 = vxor.u32 %v1847, 2147483648
  %v1858 = vsel %vm1856, %v1857, %v1848
  %v1859 = vsel %vm1852, %v1855, %v1858
  %v1860 = vsel %vm1849, nan, %v1859
  %v1861 = vand.u32 2147483647, %v1211
  %vm1862 = vcmp.le.f32.partialorder %v1861, 0.7853982
  %vm1863 = vcmp.lt.s32.totalorder %v1211, 0
  %v1864 = vand.u32 %v1211, 2139095040
  %v1865 = vshrl.u32 %v1864, 23
  %v1866 = vsub.s32 %v1865, 127
  %v1867 = vand.u32 2147483647, %v1211
  %v1868 = vand.u32 %v1867, 8388607
  %v1869 = vor.u32 %v1868, 8388608
  %v1870 = vsub.s32 0, %v1869
  %v1871 = vadd.s32 %v1866, 1
  %vm1872 = vcmp.gt.s32.totalorder %v1871, 0
  %v1873 = vsel %vm1872, %v1871, 0
  %v1874 = vshrl.u32 %v1873, 5
  %v1875 = vand.u32 %v1873, 31
  %v1876 = vsub.s32 32, %v1875
  %v1877 = vshrl.u32 683565275, %v1876
  %v1878 = vshll.u32 683565275, %v1875
  %v1879 = vshrl.u32 2475754826, %v1876
  %v1880 = vor.u32 %v1878, %v1879
  %v1881 = vshll.u32 2475754826, %v1875
  %v1882 = vshrl.u32 2131351028, %v1876
  %v1883 = vor.u32 %v1881, %v1882
  %v1884 = vshll.u32 2131351028, %v1875
  %v1885 = vshrl.u32 2102212464, %v1876
  %v1886 = vor.u32 %v1884, %v1885
  %v1887 = vshll.u32 2102212464, %v1875
  %v1888 = vshrl.u32 920167782, %v1876
  %v1889 = vor.u32 %v1887, %v1888
  %v1890 = vshll.u32 920167782, %v1875
  %v1891 = vshrl.u32 1326507024, %v1876
  %v1892 = vor.u32 %v1890, %v1891
  %vm1893 = vcmp.lt.s32.totalorder %v1874, 1
  %vm1894 = vcmp.lt.s32.totalorder %v1874, 2
  %vm1895 = vcmp.lt.s32.totalorder %v1874, 3
  %vm1896 = vcmp.lt.s32.totalorder %v1874, 4
  %v1897 = vsel %vm1893, %v1877, %v1880
  %v1898 = vsel %vm1896, %v1886, 2102212464
  %v1899 = vsel %vm1895, %v1883, %v1898
  %v1900 = vsel %vm1894, %v1897, %v1899
  %v1901 = vsel %vm1893, %v1880, %v1883
  %v1902 = vsel %vm1896, %v1889, 920167782
  %v1903 = vsel %vm1895, %v1886, %v1902
  %v1904 = vsel %vm1894, %v1901, %v1903
  %v1905 = vsel %vm1893, %v1883, %v1886
  %v1906 = vsel %vm1896, %v1892, 1326507024
  %v1907 = vsel %vm1895, %v1889, %v1906
  %v1908 = vsel %vm1894, %v1905, %v1907
  %v1909 = vshll.u32 %v1869, 8
  %v1910 = vmul.u32.u64.compose %v1909, %v1908
  %v1911 = vextract.low.u32 %v1910
  %v1912 = vextract.high.u32 %v1910
  %v1913 = vmul.u32.u64.compose %v1909, %v1904
  %v1914 = vextract.low.u32 %v1913
  %v1915 = vextract.high.u32 %v1913
  %v1916 = vmul.u32 %v1909, %v1900
  %v1917 = vadd.s32 %v1912, %v1914
  %vm1918 = vc.u32 %v1912, %v1914
  %v1919 = vadd.s32 %v1915, 1
  %v1920 = vsel %vm1918, %v1919, %v1915
  %v1921 = vadd.s32 %v1916, %v1920
  %v1922 = vadd.s32 %v1921, 536870912
  %v1923 = vshrl.u32 %v1922, 30
  %v1924 = vshll.u32 %v1923, 30
  %v1925 = vsub.s32 %v1921, %v1924
  %vm1926 = vcmp.lt.s32.totalorder %v1925, 0
  %v1927 = vsub.s32 0, %v1925
  %v1928 = vsel %vm1926, %v1927, %v1925
  %v1929 = vclz %v1928
  %v1930 = vsub.s32 %v1929, 2
  %vm1931 = vcmp.gt.s32.totalorder 0, %v1930
  %v1932 = vsel %vm1931, 0, %v1930
  %v1933 = vsub.s32 32, %v1932
  %v1934 = vshll.u32 %v1925, %v1932
  %v1935 = vshrl.u32 %v1917, %v1933
  %v1936 = vor.u32 %v1934, %v1935
  %v1937 = vsub.s32 4294967266, %v1932
  %v1938 = vadd.s32 %v1937, 127
  %v1939 = vshll.u32 %v1938, 23
  %v1940 = vor.u32 4788187, %v1939
  %v1941 = vand.u32 2147483647, %v1940
  %v1943 = vcvt.s32.f32 %v1936
  %v1944 = vmul.f32 %v1943, %v1941
  %v1945 = vxor.u32 %v1944, 2147483648
  %v1946 = vsel %vm1863, %v1945, %v1944
  %v1947 = vsub.s32 4, %v1923
  %v1948 = vsel %vm1863, %v1947, %v1923
  %v1949 = vsel %vm1862, %v1211, %v1946
  %v1950 = vsel %vm1862, 0, %v1948
  %v1951 = vcosq.f32.pop %v1949
  %v1952 = vsinq.f32.pop %v1949
  %vm1953 = vweird.f32 %v1211
  %v1954 = vadd.s32 %v1950, 3
  %v1955 = vand.u32 %v1954, 3
  %vm1956 = vcmp.lt.s32.totalorder %v1955, 2
  %vm1957 = vcmp.eq.s32.totalorder %v1955, 0
  %v1958 = vxor.u32 %v1952, 2147483648
  %v1959 = vsel %vm1957, %v1951, %v1958
  %vm1960 = vcmp.eq.s32.totalorder %v1955, 2
  %v1961 = vxor.u32 %v1951, 2147483648
  %v1962 = vsel %vm1960, %v1961, %v1952
  %v1963 = vsel %vm1956, %v1959, %v1962
  %v1964 = vsel %vm1953, nan, %v1963
  %v1965 = vand.u32 2147483647, %v1212
  %vm1966 = vcmp.le.f32.partialorder %v1965, 0.7853982
  %vm1967 = vcmp.lt.s32.totalorder %v1212, 0
  %v1968 = vand.u32 %v1212, 2139095040
  %v1969 = vshrl.u32 %v1968, 23
  %v1970 = vsub.s32 %v1969, 127
  %v1971 = vand.u32 2147483647, %v1212
  %v1972 = vand.u32 %v1971, 8388607
  %v1973 = vor.u32 %v1972, 8388608
  %v1974 = vsub.s32 0, %v1973
  %v1975 = vadd.s32 %v1970, 1
  %vm1976 = vcmp.gt.s32.totalorder %v1975, 0
  %v1977 = vsel %vm1976, %v1975, 0
  %v1978 = vshrl.u32 %v1977, 5
  %v1979 = vand.u32 %v1977, 31
  %v1980 = vsub.s32 32, %v1979
  %v1981 = vshrl.u32 683565275, %v1980
  %v1982 = vshll.u32 683565275, %v1979
  %v1983 = vshrl.u32 2475754826, %v1980
  %v1984 = vor.u32 %v1982, %v1983
  %v1985 = vshll.u32 2475754826, %v1979
  %v1986 = vshrl.u32 2131351028, %v1980
  %v1987 = vor.u32 %v1985, %v1986
  %v1988 = vshll.u32 2131351028, %v1979
  %v1989 = vshrl.u32 2102212464, %v1980
  %v1990 = vor.u32 %v1988, %v1989
  %v1991 = vshll.u32 2102212464, %v1979
  %v1992 = vshrl.u32 920167782, %v1980
  %v1993 = vor.u32 %v1991, %v1992
  %v1994 = vshll.u32 920167782, %v1979
  %v1995 = vshrl.u32 1326507024, %v1980
  %v1996 = vor.u32 %v1994, %v1995
  %vm1997 = vcmp.lt.s32.totalorder %v1978, 1
  %vm1998 = vcmp.lt.s32.totalorder %v1978, 2
  %vm1999 = vcmp.lt.s32.totalorder %v1978, 3
  %vm2000 = vcmp.lt.s32.totalorder %v1978, 4
  %v2001 = vsel %vm1997, %v1981, %v1984
  %v2002 = vsel %vm2000, %v1990, 2102212464
  %v2003 = vsel %vm1999, %v1987, %v2002
  %v2004 = vsel %vm1998, %v2001, %v2003
  %v2005 = vsel %vm1997, %v1984, %v1987
  %v2006 = vsel %vm2000, %v1993, 920167782
  %v2007 = vsel %vm1999, %v1990, %v2006
  %v2008 = vsel %vm1998, %v2005, %v2007
  %v2009 = vsel %vm1997, %v1987, %v1990
  %v2010 = vsel %vm2000, %v1996, 1326507024
  %v2011 = vsel %vm1999, %v1993, %v2010
  %v2012 = vsel %vm1998, %v2009, %v2011
  %v2013 = vshll.u32 %v1973, 8
  %v2014 = vmul.u32.u64.compose %v2013, %v2012
  %v2015 = vextract.low.u32 %v2014
  %v2016 = vextract.high.u32 %v2014
  %v2017 = vmul.u32.u64.compose %v2013, %v2008
  %v2018 = vextract.low.u32 %v2017
  %v2019 = vextract.high.u32 %v2017
  %v2020 = vmul.u32 %v2013, %v2004
  %v2021 = vadd.s32 %v2016, %v2018
  %vm2022 = vc.u32 %v2016, %v2018
  %v2023 = vadd.s32 %v2019, 1
  %v2024 = vsel %vm2022, %v2023, %v2019
  %v2025 = vadd.s32 %v2020, %v2024
  %v2026 = vadd.s32 %v2025, 536870912
  %v2027 = vshrl.u32 %v2026, 30
  %v2028 = vshll.u32 %v2027, 30
  %v2029 = vsub.s32 %v2025, %v2028
  %vm2030 = vcmp.lt.s32.totalorder %v2029, 0
  %v2031 = vsub.s32 0, %v2029
  %v2032 = vsel %vm2030, %v2031, %v2029
  %v2033 = vclz %v2032
  %v2034 = vsub.s32 %v2033, 2
  %vm2035 = vcmp.gt.s32.totalorder 0, %v2034
  %v2036 = vsel %vm2035, 0, %v2034
  %v2037 = vsub.s32 32, %v2036
  %v2038 = vshll.u32 %v2029, %v2036
  %v2039 = vshrl.u32 %v2021, %v2037
  %v2040 = vor.u32 %v2038, %v2039
  %v2041 = vsub.s32 4294967266, %v2036
  %v2042 = vadd.s32 %v2041, 127
  %v2043 = vshll.u32 %v2042, 23
  %v2044 = vor.u32 4788187, %v2043
  %v2045 = vand.u32 2147483647, %v2044
  %v2047 = vcvt.s32.f32 %v2040
  %v2048 = vmul.f32 %v2047, %v2045
  %v2049 = vxor.u32 %v2048, 2147483648
  %v2050 = vsel %vm1967, %v2049, %v2048
  %v2051 = vsub.s32 4, %v2027
  %v2052 = vsel %vm1967, %v2051, %v2027
  %v2053 = vsel %vm1966, %v1212, %v2050
  %v2054 = vsel %vm1966, 0, %v2052
  %v2055 = vcosq.f32.pop %v2053
  %v2056 = vsinq.f32.pop %v2053
  %vm2057 = vweird.f32 %v1212
  %v2058 = vadd.s32 %v2054, 3
  %v2059 = vand.u32 %v2058, 3
  %vm2060 = vcmp.lt.s32.totalorder %v2059, 2
  %vm2061 = vcmp.eq.s32.totalorder %v2059, 0
  %v2062 = vxor.u32 %v2056, 2147483648
  %v2063 = vsel %vm2061, %v2055, %v2062
  %vm2064 = vcmp.eq.s32.totalorder %v2059, 2
  %v2065 = vxor.u32 %v2055, 2147483648
  %v2066 = vsel %vm2064, %v2065, %v2056
  %v2067 = vsel %vm2060, %v2063, %v2066
  %v2068 = vsel %vm2057, nan, %v2067
  %v2069 = vand.u32 2147483647, %v1213
  %vm2070 = vcmp.le.f32.partialorder %v2069, 0.7853982
  %vm2071 = vcmp.lt.s32.totalorder %v1213, 0
  %v2072 = vand.u32 %v1213, 2139095040
  %v2073 = vshrl.u32 %v2072, 23
  %v2074 = vsub.s32 %v2073, 127
  %v2075 = vand.u32 2147483647, %v1213
  %v2076 = vand.u32 %v2075, 8388607
  %v2077 = vor.u32 %v2076, 8388608
  %v2078 = vsub.s32 0, %v2077
  %v2079 = vadd.s32 %v2074, 1
  %vm2080 = vcmp.gt.s32.totalorder %v2079, 0
  %v2081 = vsel %vm2080, %v2079, 0
  %v2082 = vshrl.u32 %v2081, 5
  %v2083 = vand.u32 %v2081, 31
  %v2084 = vsub.s32 32, %v2083
  %v2085 = vshrl.u32 683565275, %v2084
  %v2086 = vshll.u32 683565275, %v2083
  %v2087 = vshrl.u32 2475754826, %v2084
  %v2088 = vor.u32 %v2086, %v2087
  %v2089 = vshll.u32 2475754826, %v2083
  %v2090 = vshrl.u32 2131351028, %v2084
  %v2091 = vor.u32 %v2089, %v2090
  %v2092 = vshll.u32 2131351028, %v2083
  %v2093 = vshrl.u32 2102212464, %v2084
  %v2094 = vor.u32 %v2092, %v2093
  %v2095 = vshll.u32 2102212464, %v2083
  %v2096 = vshrl.u32 920167782, %v2084
  %v2097 = vor.u32 %v2095, %v2096
  %v2098 = vshll.u32 920167782, %v2083
  %v2099 = vshrl.u32 1326507024, %v2084
  %v2100 = vor.u32 %v2098, %v2099
  %vm2101 = vcmp.lt.s32.totalorder %v2082, 1
  %vm2102 = vcmp.lt.s32.totalorder %v2082, 2
  %vm2103 = vcmp.lt.s32.totalorder %v2082, 3
  %vm2104 = vcmp.lt.s32.totalorder %v2082, 4
  %v2105 = vsel %vm2101, %v2085, %v2088
  %v2106 = vsel %vm2104, %v2094, 2102212464
  %v2107 = vsel %vm2103, %v2091, %v2106
  %v2108 = vsel %vm2102, %v2105, %v2107
  %v2109 = vsel %vm2101, %v2088, %v2091
  %v2110 = vsel %vm2104, %v2097, 920167782
  %v2111 = vsel %vm2103, %v2094, %v2110
  %v2112 = vsel %vm2102, %v2109, %v2111
  %v2113 = vsel %vm2101, %v2091, %v2094
  %v2114 = vsel %vm2104, %v2100, 1326507024
  %v2115 = vsel %vm2103, %v2097, %v2114
  %v2116 = vsel %vm2102, %v2113, %v2115
  %v2117 = vshll.u32 %v2077, 8
  %v2118 = vmul.u32.u64.compose %v2117, %v2116
  %v2119 = vextract.low.u32 %v2118
  %v2120 = vextract.high.u32 %v2118
  %v2121 = vmul.u32.u64.compose %v2117, %v2112
  %v2122 = vextract.low.u32 %v2121
  %v2123 = vextract.high.u32 %v2121
  %v2124 = vmul.u32 %v2117, %v2108
  %v2125 = vadd.s32 %v2120, %v2122
  %vm2126 = vc.u32 %v2120, %v2122
  %v2127 = vadd.s32 %v2123, 1
  %v2128 = vsel %vm2126, %v2127, %v2123
  %v2129 = vadd.s32 %v2124, %v2128
  %v2130 = vadd.s32 %v2129, 536870912
  %v2131 = vshrl.u32 %v2130, 30
  %v2132 = vshll.u32 %v2131, 30
  %v2133 = vsub.s32 %v2129, %v2132
  %vm2134 = vcmp.lt.s32.totalorder %v2133, 0
  %v2135 = vsub.s32 0, %v2133
  %v2136 = vsel %vm2134, %v2135, %v2133
  %v2137 = vclz %v2136
  %v2138 = vsub.s32 %v2137, 2
  %vm2139 = vcmp.gt.s32.totalorder 0, %v2138
  %v2140 = vsel %vm2139, 0, %v2138
  %v2141 = vsub.s32 32, %v2140
  %v2142 = vshll.u32 %v2133, %v2140
  %v2143 = vshrl.u32 %v2125, %v2141
  %v2144 = vor.u32 %v2142, %v2143
  %v2145 = vsub.s32 4294967266, %v2140
  %v2146 = vadd.s32 %v2145, 127
  %v2147 = vshll.u32 %v2146, 23
  %v2148 = vor.u32 4788187, %v2147
  %v2149 = vand.u32 2147483647, %v2148
  %v2151 = vcvt.s32.f32 %v2144
  %v2152 = vmul.f32 %v2151, %v2149
  %v2153 = vxor.u32 %v2152, 2147483648
  %v2154 = vsel %vm2071, %v2153, %v2152
  %v2155 = vsub.s32 4, %v2131
  %v2156 = vsel %vm2071, %v2155, %v2131
  %v2157 = vsel %vm2070, %v1213, %v2154
  %v2158 = vsel %vm2070, 0, %v2156
  %v2159 = vcosq.f32.pop %v2157
  %v2160 = vsinq.f32.pop %v2157
  %vm2161 = vweird.f32 %v1213
  %v2162 = vadd.s32 %v2158, 3
  %v2163 = vand.u32 %v2162, 3
  %vm2164 = vcmp.lt.s32.totalorder %v2163, 2
  %vm2165 = vcmp.eq.s32.totalorder %v2163, 0
  %v2166 = vxor.u32 %v2160, 2147483648
  %v2167 = vsel %vm2165, %v2159, %v2166
  %vm2168 = vcmp.eq.s32.totalorder %v2163, 2
  %v2169 = vxor.u32 %v2159, 2147483648
  %v2170 = vsel %vm2168, %v2169, %v2160
  %v2171 = vsel %vm2164, %v2167, %v2170
  %v2172 = vsel %vm2161, nan, %v2171
  %v2173 = vand.u32 2147483647, %v1214
  %vm2174 = vcmp.le.f32.partialorder %v2173, 0.7853982
  %vm2175 = vcmp.lt.s32.totalorder %v1214, 0
  %v2176 = vand.u32 %v1214, 2139095040
  %v2177 = vshrl.u32 %v2176, 23
  %v2178 = vsub.s32 %v2177, 127
  %v2179 = vand.u32 2147483647, %v1214
  %v2180 = vand.u32 %v2179, 8388607
  %v2181 = vor.u32 %v2180, 8388608
  %v2182 = vsub.s32 0, %v2181
  %v2183 = vadd.s32 %v2178, 1
  %vm2184 = vcmp.gt.s32.totalorder %v2183, 0
  %v2185 = vsel %vm2184, %v2183, 0
  %v2186 = vshrl.u32 %v2185, 5
  %v2187 = vand.u32 %v2185, 31
  %v2188 = vsub.s32 32, %v2187
  %v2189 = vshrl.u32 683565275, %v2188
  %v2190 = vshll.u32 683565275, %v2187
  %v2191 = vshrl.u32 2475754826, %v2188
  %v2192 = vor.u32 %v2190, %v2191
  %v2193 = vshll.u32 2475754826, %v2187
  %v2194 = vshrl.u32 2131351028, %v2188
  %v2195 = vor.u32 %v2193, %v2194
  %v2196 = vshll.u32 2131351028, %v2187
  %v2197 = vshrl.u32 2102212464, %v2188
  %v2198 = vor.u32 %v2196, %v2197
  %v2199 = vshll.u32 2102212464, %v2187
  %v2200 = vshrl.u32 920167782, %v2188
  %v2201 = vor.u32 %v2199, %v2200
  %v2202 = vshll.u32 920167782, %v2187
  %v2203 = vshrl.u32 1326507024, %v2188
  %v2204 = vor.u32 %v2202, %v2203
  %vm2205 = vcmp.lt.s32.totalorder %v2186, 1
  %vm2206 = vcmp.lt.s32.totalorder %v2186, 2
  %vm2207 = vcmp.lt.s32.totalorder %v2186, 3
  %vm2208 = vcmp.lt.s32.totalorder %v2186, 4
  %v2209 = vsel %vm2205, %v2189, %v2192
  %v2210 = vsel %vm2208, %v2198, 2102212464
  %v2211 = vsel %vm2207, %v2195, %v2210
  %v2212 = vsel %vm2206, %v2209, %v2211
  %v2213 = vsel %vm2205, %v2192, %v2195
  %v2214 = vsel %vm2208, %v2201, 920167782
  %v2215 = vsel %vm2207, %v2198, %v2214
  %v2216 = vsel %vm2206, %v2213, %v2215
  %v2217 = vsel %vm2205, %v2195, %v2198
  %v2218 = vsel %vm2208, %v2204, 1326507024
  %v2219 = vsel %vm2207, %v2201, %v2218
  %v2220 = vsel %vm2206, %v2217, %v2219
  %v2221 = vshll.u32 %v2181, 8
  %v2222 = vmul.u32.u64.compose %v2221, %v2220
  %v2223 = vextract.low.u32 %v2222
  %v2224 = vextract.high.u32 %v2222
  %v2225 = vmul.u32.u64.compose %v2221, %v2216
  %v2226 = vextract.low.u32 %v2225
  %v2227 = vextract.high.u32 %v2225
  %v2228 = vmul.u32 %v2221, %v2212
  %v2229 = vadd.s32 %v2224, %v2226
  %vm2230 = vc.u32 %v2224, %v2226
  %v2231 = vadd.s32 %v2227, 1
  %v2232 = vsel %vm2230, %v2231, %v2227
  %v2233 = vadd.s32 %v2228, %v2232
  %v2234 = vadd.s32 %v2233, 536870912
  %v2235 = vshrl.u32 %v2234, 30
  %v2236 = vshll.u32 %v2235, 30
  %v2237 = vsub.s32 %v2233, %v2236
  %vm2238 = vcmp.lt.s32.totalorder %v2237, 0
  %v2239 = vsub.s32 0, %v2237
  %v2240 = vsel %vm2238, %v2239, %v2237
  %v2241 = vclz %v2240
  %v2242 = vsub.s32 %v2241, 2
  %vm2243 = vcmp.gt.s32.totalorder 0, %v2242
  %v2244 = vsel %vm2243, 0, %v2242
  %v2245 = vsub.s32 32, %v2244
  %v2246 = vshll.u32 %v2237, %v2244
  %v2247 = vshrl.u32 %v2229, %v2245
  %v2248 = vor.u32 %v2246, %v2247
  %v2249 = vsub.s32 4294967266, %v2244
  %v2250 = vadd.s32 %v2249, 127
  %v2251 = vshll.u32 %v2250, 23
  %v2252 = vor.u32 4788187, %v2251
  %v2253 = vand.u32 2147483647, %v2252
  %v2255 = vcvt.s32.f32 %v2248
  %v2256 = vmul.f32 %v2255, %v2253
  %v2257 = vxor.u32 %v2256, 2147483648
  %v2258 = vsel %vm2175, %v2257, %v2256
  %v2259 = vsub.s32 4, %v2235
  %v2260 = vsel %vm2175, %v2259, %v2235
  %v2261 = vsel %vm2174, %v1214, %v2258
  %v2262 = vsel %vm2174, 0, %v2260
  %v2263 = vcosq.f32.pop %v2261
  %v2264 = vsinq.f32.pop %v2261
  %vm2265 = vweird.f32 %v1214
  %v2266 = vadd.s32 %v2262, 3
  %v2267 = vand.u32 %v2266, 3
  %vm2268 = vcmp.lt.s32.totalorder %v2267, 2
  %vm2269 = vcmp.eq.s32.totalorder %v2267, 0
  %v2270 = vxor.u32 %v2264, 2147483648
  %v2271 = vsel %vm2269, %v2263, %v2270
  %vm2272 = vcmp.eq.s32.totalorder %v2267, 2
  %v2273 = vxor.u32 %v2263, 2147483648
  %v2274 = vsel %vm2272, %v2273, %v2264
  %v2275 = vsel %vm2268, %v2271, %v2274
  %v2276 = vsel %vm2265, nan, %v2275
  %v2277 = vand.u32 2147483647, %v1215
  %vm2278 = vcmp.le.f32.partialorder %v2277, 0.7853982
  %vm2279 = vcmp.lt.s32.totalorder %v1215, 0
  %v2280 = vand.u32 %v1215, 2139095040
  %v2281 = vshrl.u32 %v2280, 23
  %v2282 = vsub.s32 %v2281, 127
  %v2283 = vand.u32 2147483647, %v1215
  %v2284 = vand.u32 %v2283, 8388607
  %v2285 = vor.u32 %v2284, 8388608
  %v2286 = vsub.s32 0, %v2285
  %v2287 = vadd.s32 %v2282, 1
  %vm2288 = vcmp.gt.s32.totalorder %v2287, 0
  %v2289 = vsel %vm2288, %v2287, 0
  %v2290 = vshrl.u32 %v2289, 5
  %v2291 = vand.u32 %v2289, 31
  %v2292 = vsub.s32 32, %v2291
  %v2293 = vshrl.u32 683565275, %v2292
  %v2294 = vshll.u32 683565275, %v2291
  %v2295 = vshrl.u32 2475754826, %v2292
  %v2296 = vor.u32 %v2294, %v2295
  %v2297 = vshll.u32 2475754826, %v2291
  %v2298 = vshrl.u32 2131351028, %v2292
  %v2299 = vor.u32 %v2297, %v2298
  %v2300 = vshll.u32 2131351028, %v2291
  %v2301 = vshrl.u32 2102212464, %v2292
  %v2302 = vor.u32 %v2300, %v2301
  %v2303 = vshll.u32 2102212464, %v2291
  %v2304 = vshrl.u32 920167782, %v2292
  %v2305 = vor.u32 %v2303, %v2304
  %v2306 = vshll.u32 920167782, %v2291
  %v2307 = vshrl.u32 1326507024, %v2292
  %v2308 = vor.u32 %v2306, %v2307
  %vm2309 = vcmp.lt.s32.totalorder %v2290, 1
  %vm2310 = vcmp.lt.s32.totalorder %v2290, 2
  %vm2311 = vcmp.lt.s32.totalorder %v2290, 3
  %vm2312 = vcmp.lt.s32.totalorder %v2290, 4
  %v2313 = vsel %vm2309, %v2293, %v2296
  %v2314 = vsel %vm2312, %v2302, 2102212464
  %v2315 = vsel %vm2311, %v2299, %v2314
  %v2316 = vsel %vm2310, %v2313, %v2315
  %v2317 = vsel %vm2309, %v2296, %v2299
  %v2318 = vsel %vm2312, %v2305, 920167782
  %v2319 = vsel %vm2311, %v2302, %v2318
  %v2320 = vsel %vm2310, %v2317, %v2319
  %v2321 = vsel %vm2309, %v2299, %v2302
  %v2322 = vsel %vm2312, %v2308, 1326507024
  %v2323 = vsel %vm2311, %v2305, %v2322
  %v2324 = vsel %vm2310, %v2321, %v2323
  %v2325 = vshll.u32 %v2285, 8
  %v2326 = vmul.u32.u64.compose %v2325, %v2324
  %v2327 = vextract.low.u32 %v2326
  %v2328 = vextract.high.u32 %v2326
  %v2329 = vmul.u32.u64.compose %v2325, %v2320
  %v2330 = vextract.low.u32 %v2329
  %v2331 = vextract.high.u32 %v2329
  %v2332 = vmul.u32 %v2325, %v2316
  %v2333 = vadd.s32 %v2328, %v2330
  %vm2334 = vc.u32 %v2328, %v2330
  %v2335 = vadd.s32 %v2331, 1
  %v2336 = vsel %vm2334, %v2335, %v2331
  %v2337 = vadd.s32 %v2332, %v2336
  %v2338 = vadd.s32 %v2337, 536870912
  %v2339 = vshrl.u32 %v2338, 30
  %v2340 = vshll.u32 %v2339, 30
  %v2341 = vsub.s32 %v2337, %v2340
  %vm2342 = vcmp.lt.s32.totalorder %v2341, 0
  %v2343 = vsub.s32 0, %v2341
  %v2344 = vsel %vm2342, %v2343, %v2341
  %v2345 = vclz %v2344
  %v2346 = vsub.s32 %v2345, 2
  %vm2347 = vcmp.gt.s32.totalorder 0, %v2346
  %v2348 = vsel %vm2347, 0, %v2346
  %v2349 = vsub.s32 32, %v2348
  %v2350 = vshll.u32 %v2341, %v2348
  %v2351 = vshrl.u32 %v2333, %v2349
  %v2352 = vor.u32 %v2350, %v2351
  %v2353 = vsub.s32 4294967266, %v2348
  %v2354 = vadd.s32 %v2353, 127
  %v2355 = vshll.u32 %v2354, 23
  %v2356 = vor.u32 4788187, %v2355
  %v2357 = vand.u32 2147483647, %v2356
  %v2359 = vcvt.s32.f32 %v2352
  %v2360 = vmul.f32 %v2359, %v2357
  %v2361 = vxor.u32 %v2360, 2147483648
  %v2362 = vsel %vm2279, %v2361, %v2360
  %v2363 = vsub.s32 4, %v2339
  %v2364 = vsel %vm2279, %v2363, %v2339
  %v2365 = vsel %vm2278, %v1215, %v2362
  %v2366 = vsel %vm2278, 0, %v2364
  %v2367 = vcosq.f32.pop %v2365
  %v2368 = vsinq.f32.pop %v2365
  %vm2369 = vweird.f32 %v1215
  %v2370 = vadd.s32 %v2366, 3
  %v2371 = vand.u32 %v2370, 3
  %vm2372 = vcmp.lt.s32.totalorder %v2371, 2
  %vm2373 = vcmp.eq.s32.totalorder %v2371, 0
  %v2374 = vxor.u32 %v2368, 2147483648
  %v2375 = vsel %vm2373, %v2367, %v2374
  %vm2376 = vcmp.eq.s32.totalorder %v2371, 2
  %v2377 = vxor.u32 %v2367, 2147483648
  %v2378 = vsel %vm2376, %v2377, %v2368
  %v2379 = vsel %vm2372, %v2375, %v2378
  %v2380 = vsel %vm2369, nan, %v2379
  %v2381 = vand.u32 2147483647, %v1216
  %vm2382 = vcmp.le.f32.partialorder %v2381, 0.7853982
  %vm2383 = vcmp.lt.s32.totalorder %v1216, 0
  %v2384 = vand.u32 %v1216, 2139095040
  %v2385 = vshrl.u32 %v2384, 23
  %v2386 = vsub.s32 %v2385, 127
  %v2387 = vand.u32 2147483647, %v1216
  %v2388 = vand.u32 %v2387, 8388607
  %v2389 = vor.u32 %v2388, 8388608
  %v2390 = vsub.s32 0, %v2389
  %v2391 = vadd.s32 %v2386, 1
  %vm2392 = vcmp.gt.s32.totalorder %v2391, 0
  %v2393 = vsel %vm2392, %v2391, 0
  %v2394 = vshrl.u32 %v2393, 5
  %v2395 = vand.u32 %v2393, 31
  %v2396 = vsub.s32 32, %v2395
  %v2397 = vshrl.u32 683565275, %v2396
  %v2398 = vshll.u32 683565275, %v2395
  %v2399 = vshrl.u32 2475754826, %v2396
  %v2400 = vor.u32 %v2398, %v2399
  %v2401 = vshll.u32 2475754826, %v2395
  %v2402 = vshrl.u32 2131351028, %v2396
  %v2403 = vor.u32 %v2401, %v2402
  %v2404 = vshll.u32 2131351028, %v2395
  %v2405 = vshrl.u32 2102212464, %v2396
  %v2406 = vor.u32 %v2404, %v2405
  %v2407 = vshll.u32 2102212464, %v2395
  %v2408 = vshrl.u32 920167782, %v2396
  %v2409 = vor.u32 %v2407, %v2408
  %v2410 = vshll.u32 920167782, %v2395
  %v2411 = vshrl.u32 1326507024, %v2396
  %v2412 = vor.u32 %v2410, %v2411
  %vm2413 = vcmp.lt.s32.totalorder %v2394, 1
  %vm2414 = vcmp.lt.s32.totalorder %v2394, 2
  %vm2415 = vcmp.lt.s32.totalorder %v2394, 3
  %vm2416 = vcmp.lt.s32.totalorder %v2394, 4
  %v2417 = vsel %vm2413, %v2397, %v2400
  %v2418 = vsel %vm2416, %v2406, 2102212464
  %v2419 = vsel %vm2415, %v2403, %v2418
  %v2420 = vsel %vm2414, %v2417, %v2419
  %v2421 = vsel %vm2413, %v2400, %v2403
  %v2422 = vsel %vm2416, %v2409, 920167782
  %v2423 = vsel %vm2415, %v2406, %v2422
  %v2424 = vsel %vm2414, %v2421, %v2423
  %v2425 = vsel %vm2413, %v2403, %v2406
  %v2426 = vsel %vm2416, %v2412, 1326507024
  %v2427 = vsel %vm2415, %v2409, %v2426
  %v2428 = vsel %vm2414, %v2425, %v2427
  %v2429 = vshll.u32 %v2389, 8
  %v2430 = vmul.u32.u64.compose %v2429, %v2428
  %v2431 = vextract.low.u32 %v2430
  %v2432 = vextract.high.u32 %v2430
  %v2433 = vmul.u32.u64.compose %v2429, %v2424
  %v2434 = vextract.low.u32 %v2433
  %v2435 = vextract.high.u32 %v2433
  %v2436 = vmul.u32 %v2429, %v2420
  %v2437 = vadd.s32 %v2432, %v2434
  %vm2438 = vc.u32 %v2432, %v2434
  %v2439 = vadd.s32 %v2435, 1
  %v2440 = vsel %vm2438, %v2439, %v2435
  %v2441 = vadd.s32 %v2436, %v2440
  %v2442 = vadd.s32 %v2441, 536870912
  %v2443 = vshrl.u32 %v2442, 30
  %v2444 = vshll.u32 %v2443, 30
  %v2445 = vsub.s32 %v2441, %v2444
  %vm2446 = vcmp.lt.s32.totalorder %v2445, 0
  %v2447 = vsub.s32 0, %v2445
  %v2448 = vsel %vm2446, %v2447, %v2445
  %v2449 = vclz %v2448
  %v2450 = vsub.s32 %v2449, 2
  %vm2451 = vcmp.gt.s32.totalorder 0, %v2450
  %v2452 = vsel %vm2451, 0, %v2450
  %v2453 = vsub.s32 32, %v2452
  %v2454 = vshll.u32 %v2445, %v2452
  %v2455 = vshrl.u32 %v2437, %v2453
  %v2456 = vor.u32 %v2454, %v2455
  %v2457 = vsub.s32 4294967266, %v2452
  %v2458 = vadd.s32 %v2457, 127
  %v2459 = vshll.u32 %v2458, 23
  %v2460 = vor.u32 4788187, %v2459
  %v2461 = vand.u32 2147483647, %v2460
  %v2463 = vcvt.s32.f32 %v2456
  %v2464 = vmul.f32 %v2463, %v2461
  %v2465 = vxor.u32 %v2464, 2147483648
  %v2466 = vsel %vm2383, %v2465, %v2464
  %v2467 = vsub.s32 4, %v2443
  %v2468 = vsel %vm2383, %v2467, %v2443
  %v2469 = vsel %vm2382, %v1216, %v2466
  %v2470 = vsel %vm2382, 0, %v2468
  %v2471 = vcosq.f32.pop %v2469
  %v2472 = vsinq.f32.pop %v2469
  %vm2473 = vweird.f32 %v1216
  %v2474 = vadd.s32 %v2470, 3
  %v2475 = vand.u32 %v2474, 3
  %vm2476 = vcmp.lt.s32.totalorder %v2475, 2
  %vm2477 = vcmp.eq.s32.totalorder %v2475, 0
  %v2478 = vxor.u32 %v2472, 2147483648
  %v2479 = vsel %vm2477, %v2471, %v2478
  %vm2480 = vcmp.eq.s32.totalorder %v2475, 2
  %v2481 = vxor.u32 %v2471, 2147483648
  %v2482 = vsel %vm2480, %v2481, %v2472
  %v2483 = vsel %vm2476, %v2479, %v2482
  %v2484 = vsel %vm2473, nan, %v2483
  %v2485 = vand.u32 2147483647, %v1217
  %vm2486 = vcmp.le.f32.partialorder %v2485, 0.7853982
  %vm2487 = vcmp.lt.s32.totalorder %v1217, 0
  %v2488 = vand.u32 %v1217, 2139095040
  %v2489 = vshrl.u32 %v2488, 23
  %v2490 = vsub.s32 %v2489, 127
  %v2491 = vand.u32 2147483647, %v1217
  %v2492 = vand.u32 %v2491, 8388607
  %v2493 = vor.u32 %v2492, 8388608
  %v2494 = vsub.s32 0, %v2493
  %v2495 = vadd.s32 %v2490, 1
  %vm2496 = vcmp.gt.s32.totalorder %v2495, 0
  %v2497 = vsel %vm2496, %v2495, 0
  %v2498 = vshrl.u32 %v2497, 5
  %v2499 = vand.u32 %v2497, 31
  %v2500 = vsub.s32 32, %v2499
  %v2501 = vshrl.u32 683565275, %v2500
  %v2502 = vshll.u32 683565275, %v2499
  %v2503 = vshrl.u32 2475754826, %v2500
  %v2504 = vor.u32 %v2502, %v2503
  %v2505 = vshll.u32 2475754826, %v2499
  %v2506 = vshrl.u32 2131351028, %v2500
  %v2507 = vor.u32 %v2505, %v2506
  %v2508 = vshll.u32 2131351028, %v2499
  %v2509 = vshrl.u32 2102212464, %v2500
  %v2510 = vor.u32 %v2508, %v2509
  %v2511 = vshll.u32 2102212464, %v2499
  %v2512 = vshrl.u32 920167782, %v2500
  %v2513 = vor.u32 %v2511, %v2512
  %v2514 = vshll.u32 920167782, %v2499
  %v2515 = vshrl.u32 1326507024, %v2500
  %v2516 = vor.u32 %v2514, %v2515
  %vm2517 = vcmp.lt.s32.totalorder %v2498, 1
  %vm2518 = vcmp.lt.s32.totalorder %v2498, 2
  %vm2519 = vcmp.lt.s32.totalorder %v2498, 3
  %vm2520 = vcmp.lt.s32.totalorder %v2498, 4
  %v2521 = vsel %vm2517, %v2501, %v2504
  %v2522 = vsel %vm2520, %v2510, 2102212464
  %v2523 = vsel %vm2519, %v2507, %v2522
  %v2524 = vsel %vm2518, %v2521, %v2523
  %v2525 = vsel %vm2517, %v2504, %v2507
  %v2526 = vsel %vm2520, %v2513, 920167782
  %v2527 = vsel %vm2519, %v2510, %v2526
  %v2528 = vsel %vm2518, %v2525, %v2527
  %v2529 = vsel %vm2517, %v2507, %v2510
  %v2530 = vsel %vm2520, %v2516, 1326507024
  %v2531 = vsel %vm2519, %v2513, %v2530
  %v2532 = vsel %vm2518, %v2529, %v2531
  %v2533 = vshll.u32 %v2493, 8
  %v2534 = vmul.u32.u64.compose %v2533, %v2532
  %v2535 = vextract.low.u32 %v2534
  %v2536 = vextract.high.u32 %v2534
  %v2537 = vmul.u32.u64.compose %v2533, %v2528
  %v2538 = vextract.low.u32 %v2537
  %v2539 = vextract.high.u32 %v2537
  %v2540 = vmul.u32 %v2533, %v2524
  %v2541 = vadd.s32 %v2536, %v2538
  %vm2542 = vc.u32 %v2536, %v2538
  %v2543 = vadd.s32 %v2539, 1
  %v2544 = vsel %vm2542, %v2543, %v2539
  %v2545 = vadd.s32 %v2540, %v2544
  %v2546 = vadd.s32 %v2545, 536870912
  %v2547 = vshrl.u32 %v2546, 30
  %v2548 = vshll.u32 %v2547, 30
  %v2549 = vsub.s32 %v2545, %v2548
  %vm2550 = vcmp.lt.s32.totalorder %v2549, 0
  %v2551 = vsub.s32 0, %v2549
  %v2552 = vsel %vm2550, %v2551, %v2549
  %v2553 = vclz %v2552
  %v2554 = vsub.s32 %v2553, 2
  %vm2555 = vcmp.gt.s32.totalorder 0, %v2554
  %v2556 = vsel %vm2555, 0, %v2554
  %v2557 = vsub.s32 32, %v2556
  %v2558 = vshll.u32 %v2549, %v2556
  %v2559 = vshrl.u32 %v2541, %v2557
  %v2560 = vor.u32 %v2558, %v2559
  %v2561 = vsub.s32 4294967266, %v2556
  %v2562 = vadd.s32 %v2561, 127
  %v2563 = vshll.u32 %v2562, 23
  %v2564 = vor.u32 4788187, %v2563
  %v2565 = vand.u32 2147483647, %v2564
  %v2567 = vcvt.s32.f32 %v2560
  %v2568 = vmul.f32 %v2567, %v2565
  %v2569 = vxor.u32 %v2568, 2147483648
  %v2570 = vsel %vm2487, %v2569, %v2568
  %v2571 = vsub.s32 4, %v2547
  %v2572 = vsel %vm2487, %v2571, %v2547
  %v2573 = vsel %vm2486, %v1217, %v2570
  %v2574 = vsel %vm2486, 0, %v2572
  %v2575 = vcosq.f32.pop %v2573
  %v2576 = vsinq.f32.pop %v2573
  %vm2577 = vweird.f32 %v1217
  %v2578 = vadd.s32 %v2574, 3
  %v2579 = vand.u32 %v2578, 3
  %vm2580 = vcmp.lt.s32.totalorder %v2579, 2
  %vm2581 = vcmp.eq.s32.totalorder %v2579, 0
  %v2582 = vxor.u32 %v2576, 2147483648
  %v2583 = vsel %vm2581, %v2575, %v2582
  %vm2584 = vcmp.eq.s32.totalorder %v2579, 2
  %v2585 = vxor.u32 %v2575, 2147483648
  %v2586 = vsel %vm2584, %v2585, %v2576
  %v2587 = vsel %vm2580, %v2583, %v2586
  %v2588 = vsel %vm2577, nan, %v2587
  %v2589 = vand.u32 2147483647, %v1218
  %vm2590 = vcmp.le.f32.partialorder %v2589, 0.7853982
  %vm2591 = vcmp.lt.s32.totalorder %v1218, 0
  %v2592 = vand.u32 %v1218, 2139095040
  %v2593 = vshrl.u32 %v2592, 23
  %v2594 = vsub.s32 %v2593, 127
  %v2595 = vand.u32 2147483647, %v1218
  %v2596 = vand.u32 %v2595, 8388607
  %v2597 = vor.u32 %v2596, 8388608
  %v2598 = vsub.s32 0, %v2597
  %v2599 = vadd.s32 %v2594, 1
  %vm2600 = vcmp.gt.s32.totalorder %v2599, 0
  %v2601 = vsel %vm2600, %v2599, 0
  %v2602 = vshrl.u32 %v2601, 5
  %v2603 = vand.u32 %v2601, 31
  %v2604 = vsub.s32 32, %v2603
  %v2605 = vshrl.u32 683565275, %v2604
  %v2606 = vshll.u32 683565275, %v2603
  %v2607 = vshrl.u32 2475754826, %v2604
  %v2608 = vor.u32 %v2606, %v2607
  %v2609 = vshll.u32 2475754826, %v2603
  %v2610 = vshrl.u32 2131351028, %v2604
  %v2611 = vor.u32 %v2609, %v2610
  %v2612 = vshll.u32 2131351028, %v2603
  %v2613 = vshrl.u32 2102212464, %v2604
  %v2614 = vor.u32 %v2612, %v2613
  %v2615 = vshll.u32 2102212464, %v2603
  %v2616 = vshrl.u32 920167782, %v2604
  %v2617 = vor.u32 %v2615, %v2616
  %v2618 = vshll.u32 920167782, %v2603
  %v2619 = vshrl.u32 1326507024, %v2604
  %v2620 = vor.u32 %v2618, %v2619
  %vm2621 = vcmp.lt.s32.totalorder %v2602, 1
  %vm2622 = vcmp.lt.s32.totalorder %v2602, 2
  %vm2623 = vcmp.lt.s32.totalorder %v2602, 3
  %vm2624 = vcmp.lt.s32.totalorder %v2602, 4
  %v2625 = vsel %vm2621, %v2605, %v2608
  %v2626 = vsel %vm2624, %v2614, 2102212464
  %v2627 = vsel %vm2623, %v2611, %v2626
  %v2628 = vsel %vm2622, %v2625, %v2627
  %v2629 = vsel %vm2621, %v2608, %v2611
  %v2630 = vsel %vm2624, %v2617, 920167782
  %v2631 = vsel %vm2623, %v2614, %v2630
  %v2632 = vsel %vm2622, %v2629, %v2631
  %v2633 = vsel %vm2621, %v2611, %v2614
  %v2634 = vsel %vm2624, %v2620, 1326507024
  %v2635 = vsel %vm2623, %v2617, %v2634
  %v2636 = vsel %vm2622, %v2633, %v2635
  %v2637 = vshll.u32 %v2597, 8
  %v2638 = vmul.u32.u64.compose %v2637, %v2636
  %v2639 = vextract.low.u32 %v2638
  %v2640 = vextract.high.u32 %v2638
  %v2641 = vmul.u32.u64.compose %v2637, %v2632
  %v2642 = vextract.low.u32 %v2641
  %v2643 = vextract.high.u32 %v2641
  %v2644 = vmul.u32 %v2637, %v2628
  %v2645 = vadd.s32 %v2640, %v2642
  %vm2646 = vc.u32 %v2640, %v2642
  %v2647 = vadd.s32 %v2643, 1
  %v2648 = vsel %vm2646, %v2647, %v2643
  %v2649 = vadd.s32 %v2644, %v2648
  %v2650 = vadd.s32 %v2649, 536870912
  %v2651 = vshrl.u32 %v2650, 30
  %v2652 = vshll.u32 %v2651, 30
  %v2653 = vsub.s32 %v2649, %v2652
  %vm2654 = vcmp.lt.s32.totalorder %v2653, 0
  %v2655 = vsub.s32 0, %v2653
  %v2656 = vsel %vm2654, %v2655, %v2653
  %v2657 = vclz %v2656
  %v2658 = vsub.s32 %v2657, 2
  %vm2659 = vcmp.gt.s32.totalorder 0, %v2658
  %v2660 = vsel %vm2659, 0, %v2658
  %v2661 = vsub.s32 32, %v2660
  %v2662 = vshll.u32 %v2653, %v2660
  %v2663 = vshrl.u32 %v2645, %v2661
  %v2664 = vor.u32 %v2662, %v2663
  %v2665 = vsub.s32 4294967266, %v2660
  %v2666 = vadd.s32 %v2665, 127
  %v2667 = vshll.u32 %v2666, 23
  %v2668 = vor.u32 4788187, %v2667
  %v2669 = vand.u32 2147483647, %v2668
  %v2671 = vcvt.s32.f32 %v2664
  %v2672 = vmul.f32 %v2671, %v2669
  %v2673 = vxor.u32 %v2672, 2147483648
  %v2674 = vsel %vm2591, %v2673, %v2672
  %v2675 = vsub.s32 4, %v2651
  %v2676 = vsel %vm2591, %v2675, %v2651
  %v2677 = vsel %vm2590, %v1218, %v2674
  %v2678 = vsel %vm2590, 0, %v2676
  %v2679 = vcosq.f32.pop %v2677
  %v2680 = vsinq.f32.pop %v2677
  %vm2681 = vweird.f32 %v1218
  %v2682 = vadd.s32 %v2678, 3
  %v2683 = vand.u32 %v2682, 3
  %vm2684 = vcmp.lt.s32.totalorder %v2683, 2
  %vm2685 = vcmp.eq.s32.totalorder %v2683, 0
  %v2686 = vxor.u32 %v2680, 2147483648
  %v2687 = vsel %vm2685, %v2679, %v2686
  %vm2688 = vcmp.eq.s32.totalorder %v2683, 2
  %v2689 = vxor.u32 %v2679, 2147483648
  %v2690 = vsel %vm2688, %v2689, %v2680
  %v2691 = vsel %vm2684, %v2687, %v2690
  %v2692 = vsel %vm2681, nan, %v2691
  %v2693 = vand.u32 2147483647, %v1219
  %vm2694 = vcmp.le.f32.partialorder %v2693, 0.7853982
  %vm2695 = vcmp.lt.s32.totalorder %v1219, 0
  %v2696 = vand.u32 %v1219, 2139095040
  %v2697 = vshrl.u32 %v2696, 23
  %v2698 = vsub.s32 %v2697, 127
  %v2699 = vand.u32 2147483647, %v1219
  %v2700 = vand.u32 %v2699, 8388607
  %v2701 = vor.u32 %v2700, 8388608
  %v2702 = vsub.s32 0, %v2701
  %v2703 = vadd.s32 %v2698, 1
  %vm2704 = vcmp.gt.s32.totalorder %v2703, 0
  %v2705 = vsel %vm2704, %v2703, 0
  %v2706 = vshrl.u32 %v2705, 5
  %v2707 = vand.u32 %v2705, 31
  %v2708 = vsub.s32 32, %v2707
  %v2709 = vshrl.u32 683565275, %v2708
  %v2710 = vshll.u32 683565275, %v2707
  %v2711 = vshrl.u32 2475754826, %v2708
  %v2712 = vor.u32 %v2710, %v2711
  %v2713 = vshll.u32 2475754826, %v2707
  %v2714 = vshrl.u32 2131351028, %v2708
  %v2715 = vor.u32 %v2713, %v2714
  %v2716 = vshll.u32 2131351028, %v2707
  %v2717 = vshrl.u32 2102212464, %v2708
  %v2718 = vor.u32 %v2716, %v2717
  %v2719 = vshll.u32 2102212464, %v2707
  %v2720 = vshrl.u32 920167782, %v2708
  %v2721 = vor.u32 %v2719, %v2720
  %v2722 = vshll.u32 920167782, %v2707
  %v2723 = vshrl.u32 1326507024, %v2708
  %v2724 = vor.u32 %v2722, %v2723
  %vm2725 = vcmp.lt.s32.totalorder %v2706, 1
  %vm2726 = vcmp.lt.s32.totalorder %v2706, 2
  %vm2727 = vcmp.lt.s32.totalorder %v2706, 3
  %vm2728 = vcmp.lt.s32.totalorder %v2706, 4
  %v2729 = vsel %vm2725, %v2709, %v2712
  %v2730 = vsel %vm2728, %v2718, 2102212464
  %v2731 = vsel %vm2727, %v2715, %v2730
  %v2732 = vsel %vm2726, %v2729, %v2731
  %v2733 = vsel %vm2725, %v2712, %v2715
  %v2734 = vsel %vm2728, %v2721, 920167782
  %v2735 = vsel %vm2727, %v2718, %v2734
  %v2736 = vsel %vm2726, %v2733, %v2735
  %v2737 = vsel %vm2725, %v2715, %v2718
  %v2738 = vsel %vm2728, %v2724, 1326507024
  %v2739 = vsel %vm2727, %v2721, %v2738
  %v2740 = vsel %vm2726, %v2737, %v2739
  %v2741 = vshll.u32 %v2701, 8
  %v2742 = vmul.u32.u64.compose %v2741, %v2740
  %v2743 = vextract.low.u32 %v2742
  %v2744 = vextract.high.u32 %v2742
  %v2745 = vmul.u32.u64.compose %v2741, %v2736
  %v2746 = vextract.low.u32 %v2745
  %v2747 = vextract.high.u32 %v2745
  %v2748 = vmul.u32 %v2741, %v2732
  %v2749 = vadd.s32 %v2744, %v2746
  %vm2750 = vc.u32 %v2744, %v2746
  %v2751 = vadd.s32 %v2747, 1
  %v2752 = vsel %vm2750, %v2751, %v2747
  %v2753 = vadd.s32 %v2748, %v2752
  %v2754 = vadd.s32 %v2753, 536870912
  %v2755 = vshrl.u32 %v2754, 30
  %v2756 = vshll.u32 %v2755, 30
  %v2757 = vsub.s32 %v2753, %v2756
  %vm2758 = vcmp.lt.s32.totalorder %v2757, 0
  %v2759 = vsub.s32 0, %v2757
  %v2760 = vsel %vm2758, %v2759, %v2757
  %v2761 = vclz %v2760
  %v2762 = vsub.s32 %v2761, 2
  %vm2763 = vcmp.gt.s32.totalorder 0, %v2762
  %v2764 = vsel %vm2763, 0, %v2762
  %v2765 = vsub.s32 32, %v2764
  %v2766 = vshll.u32 %v2757, %v2764
  %v2767 = vshrl.u32 %v2749, %v2765
  %v2768 = vor.u32 %v2766, %v2767
  %v2769 = vsub.s32 4294967266, %v2764
  %v2770 = vadd.s32 %v2769, 127
  %v2771 = vshll.u32 %v2770, 23
  %v2772 = vor.u32 4788187, %v2771
  %v2773 = vand.u32 2147483647, %v2772
  %v2775 = vcvt.s32.f32 %v2768
  %v2776 = vmul.f32 %v2775, %v2773
  %v2777 = vxor.u32 %v2776, 2147483648
  %v2778 = vsel %vm2695, %v2777, %v2776
  %v2779 = vsub.s32 4, %v2755
  %v2780 = vsel %vm2695, %v2779, %v2755
  %v2781 = vsel %vm2694, %v1219, %v2778
  %v2782 = vsel %vm2694, 0, %v2780
  %v2783 = vcosq.f32.pop %v2781
  %v2784 = vsinq.f32.pop %v2781
  %vm2785 = vweird.f32 %v1219
  %v2786 = vadd.s32 %v2782, 3
  %v2787 = vand.u32 %v2786, 3
  %vm2788 = vcmp.lt.s32.totalorder %v2787, 2
  %vm2789 = vcmp.eq.s32.totalorder %v2787, 0
  %v2790 = vxor.u32 %v2784, 2147483648
  %v2791 = vsel %vm2789, %v2783, %v2790
  %vm2792 = vcmp.eq.s32.totalorder %v2787, 2
  %v2793 = vxor.u32 %v2783, 2147483648
  %v2794 = vsel %vm2792, %v2793, %v2784
  %v2795 = vsel %vm2788, %v2791, %v2794
  %v2796 = vsel %vm2785, nan, %v2795
  %v2797 = vand.u32 2147483647, %v1220
  %vm2798 = vcmp.le.f32.partialorder %v2797, 0.7853982
  %vm2799 = vcmp.lt.s32.totalorder %v1220, 0
  %v2800 = vand.u32 %v1220, 2139095040
  %v2801 = vshrl.u32 %v2800, 23
  %v2802 = vsub.s32 %v2801, 127
  %v2803 = vand.u32 2147483647, %v1220
  %v2804 = vand.u32 %v2803, 8388607
  %v2805 = vor.u32 %v2804, 8388608
  %v2806 = vsub.s32 0, %v2805
  %v2807 = vadd.s32 %v2802, 1
  %vm2808 = vcmp.gt.s32.totalorder %v2807, 0
  %v2809 = vsel %vm2808, %v2807, 0
  %v2810 = vshrl.u32 %v2809, 5
  %v2811 = vand.u32 %v2809, 31
  %v2812 = vsub.s32 32, %v2811
  %v2813 = vshrl.u32 683565275, %v2812
  %v2814 = vshll.u32 683565275, %v2811
  %v2815 = vshrl.u32 2475754826, %v2812
  %v2816 = vor.u32 %v2814, %v2815
  %v2817 = vshll.u32 2475754826, %v2811
  %v2818 = vshrl.u32 2131351028, %v2812
  %v2819 = vor.u32 %v2817, %v2818
  %v2820 = vshll.u32 2131351028, %v2811
  %v2821 = vshrl.u32 2102212464, %v2812
  %v2822 = vor.u32 %v2820, %v2821
  %v2823 = vshll.u32 2102212464, %v2811
  %v2824 = vshrl.u32 920167782, %v2812
  %v2825 = vor.u32 %v2823, %v2824
  %v2826 = vshll.u32 920167782, %v2811
  %v2827 = vshrl.u32 1326507024, %v2812
  %v2828 = vor.u32 %v2826, %v2827
  %vm2829 = vcmp.lt.s32.totalorder %v2810, 1
  %vm2830 = vcmp.lt.s32.totalorder %v2810, 2
  %vm2831 = vcmp.lt.s32.totalorder %v2810, 3
  %vm2832 = vcmp.lt.s32.totalorder %v2810, 4
  %v2833 = vsel %vm2829, %v2813, %v2816
  %v2834 = vsel %vm2832, %v2822, 2102212464
  %v2835 = vsel %vm2831, %v2819, %v2834
  %v2836 = vsel %vm2830, %v2833, %v2835
  %v2837 = vsel %vm2829, %v2816, %v2819
  %v2838 = vsel %vm2832, %v2825, 920167782
  %v2839 = vsel %vm2831, %v2822, %v2838
  %v2840 = vsel %vm2830, %v2837, %v2839
  %v2841 = vsel %vm2829, %v2819, %v2822
  %v2842 = vsel %vm2832, %v2828, 1326507024
  %v2843 = vsel %vm2831, %v2825, %v2842
  %v2844 = vsel %vm2830, %v2841, %v2843
  %v2845 = vshll.u32 %v2805, 8
  %v2846 = vmul.u32.u64.compose %v2845, %v2844
  %v2847 = vextract.low.u32 %v2846
  %v2848 = vextract.high.u32 %v2846
  %v2849 = vmul.u32.u64.compose %v2845, %v2840
  %v2850 = vextract.low.u32 %v2849
  %v2851 = vextract.high.u32 %v2849
  %v2852 = vmul.u32 %v2845, %v2836
  %v2853 = vadd.s32 %v2848, %v2850
  %vm2854 = vc.u32 %v2848, %v2850
  %v2855 = vadd.s32 %v2851, 1
  %v2856 = vsel %vm2854, %v2855, %v2851
  %v2857 = vadd.s32 %v2852, %v2856
  %v2858 = vadd.s32 %v2857, 536870912
  %v2859 = vshrl.u32 %v2858, 30
  %v2860 = vshll.u32 %v2859, 30
  %v2861 = vsub.s32 %v2857, %v2860
  %vm2862 = vcmp.lt.s32.totalorder %v2861, 0
  %v2863 = vsub.s32 0, %v2861
  %v2864 = vsel %vm2862, %v2863, %v2861
  %v2865 = vclz %v2864
  %v2866 = vsub.s32 %v2865, 2
  %vm2867 = vcmp.gt.s32.totalorder 0, %v2866
  %v2868 = vsel %vm2867, 0, %v2866
  %v2869 = vsub.s32 32, %v2868
  %v2870 = vshll.u32 %v2861, %v2868
  %v2871 = vshrl.u32 %v2853, %v2869
  %v2872 = vor.u32 %v2870, %v2871
  %v2873 = vsub.s32 4294967266, %v2868
  %v2874 = vadd.s32 %v2873, 127
  %v2875 = vshll.u32 %v2874, 23
  %v2876 = vor.u32 4788187, %v2875
  %v2877 = vand.u32 2147483647, %v2876
  %v2879 = vcvt.s32.f32 %v2872
  %v2880 = vmul.f32 %v2879, %v2877
  %v2881 = vxor.u32 %v2880, 2147483648
  %v2882 = vsel %vm2799, %v2881, %v2880
  %v2883 = vsub.s32 4, %v2859
  %v2884 = vsel %vm2799, %v2883, %v2859
  %v2885 = vsel %vm2798, %v1220, %v2882
  %v2886 = vsel %vm2798, 0, %v2884
  %v2887 = vcosq.f32.pop %v2885
  %v2888 = vsinq.f32.pop %v2885
  %vm2889 = vweird.f32 %v1220
  %v2890 = vadd.s32 %v2886, 3
  %v2891 = vand.u32 %v2890, 3
  %vm2892 = vcmp.lt.s32.totalorder %v2891, 2
  %vm2893 = vcmp.eq.s32.totalorder %v2891, 0
  %v2894 = vxor.u32 %v2888, 2147483648
  %v2895 = vsel %vm2893, %v2887, %v2894
  %vm2896 = vcmp.eq.s32.totalorder %v2891, 2
  %v2897 = vxor.u32 %v2887, 2147483648
  %v2898 = vsel %vm2896, %v2897, %v2888
  %v2899 = vsel %vm2892, %v2895, %v2898
  %v2900 = vsel %vm2889, nan, %v2899
  %v2901 = vand.u32 2147483647, %v1221
  %vm2902 = vcmp.le.f32.partialorder %v2901, 0.7853982
  %vm2903 = vcmp.lt.s32.totalorder %v1221, 0
  %v2904 = vand.u32 %v1221, 2139095040
  %v2905 = vshrl.u32 %v2904, 23
  %v2906 = vsub.s32 %v2905, 127
  %v2907 = vand.u32 2147483647, %v1221
  %v2908 = vand.u32 %v2907, 8388607
  %v2909 = vor.u32 %v2908, 8388608
  %v2910 = vsub.s32 0, %v2909
  %v2911 = vadd.s32 %v2906, 1
  %vm2912 = vcmp.gt.s32.totalorder %v2911, 0
  %v2913 = vsel %vm2912, %v2911, 0
  %v2914 = vshrl.u32 %v2913, 5
  %v2915 = vand.u32 %v2913, 31
  %v2916 = vsub.s32 32, %v2915
  %v2917 = vshrl.u32 683565275, %v2916
  %v2918 = vshll.u32 683565275, %v2915
  %v2919 = vshrl.u32 2475754826, %v2916
  %v2920 = vor.u32 %v2918, %v2919
  %v2921 = vshll.u32 2475754826, %v2915
  %v2922 = vshrl.u32 2131351028, %v2916
  %v2923 = vor.u32 %v2921, %v2922
  %v2924 = vshll.u32 2131351028, %v2915
  %v2925 = vshrl.u32 2102212464, %v2916
  %v2926 = vor.u32 %v2924, %v2925
  %v2927 = vshll.u32 2102212464, %v2915
  %v2928 = vshrl.u32 920167782, %v2916
  %v2929 = vor.u32 %v2927, %v2928
  %v2930 = vshll.u32 920167782, %v2915
  %v2931 = vshrl.u32 1326507024, %v2916
  %v2932 = vor.u32 %v2930, %v2931
  %vm2933 = vcmp.lt.s32.totalorder %v2914, 1
  %vm2934 = vcmp.lt.s32.totalorder %v2914, 2
  %vm2935 = vcmp.lt.s32.totalorder %v2914, 3
  %vm2936 = vcmp.lt.s32.totalorder %v2914, 4
  %v2937 = vsel %vm2933, %v2917, %v2920
  %v2938 = vsel %vm2936, %v2926, 2102212464
  %v2939 = vsel %vm2935, %v2923, %v2938
  %v2940 = vsel %vm2934, %v2937, %v2939
  %v2941 = vsel %vm2933, %v2920, %v2923
  %v2942 = vsel %vm2936, %v2929, 920167782
  %v2943 = vsel %vm2935, %v2926, %v2942
  %v2944 = vsel %vm2934, %v2941, %v2943
  %v2945 = vsel %vm2933, %v2923, %v2926
  %v2946 = vsel %vm2936, %v2932, 1326507024
  %v2947 = vsel %vm2935, %v2929, %v2946
  %v2948 = vsel %vm2934, %v2945, %v2947
  %v2949 = vshll.u32 %v2909, 8
  %v2950 = vmul.u32.u64.compose %v2949, %v2948
  %v2951 = vextract.low.u32 %v2950
  %v2952 = vextract.high.u32 %v2950
  %v2953 = vmul.u32.u64.compose %v2949, %v2944
  %v2954 = vextract.low.u32 %v2953
  %v2955 = vextract.high.u32 %v2953
  %v2956 = vmul.u32 %v2949, %v2940
  %v2957 = vadd.s32 %v2952, %v2954
  %vm2958 = vc.u32 %v2952, %v2954
  %v2959 = vadd.s32 %v2955, 1
  %v2960 = vsel %vm2958, %v2959, %v2955
  %v2961 = vadd.s32 %v2956, %v2960
  %v2962 = vadd.s32 %v2961, 536870912
  %v2963 = vshrl.u32 %v2962, 30
  %v2964 = vshll.u32 %v2963, 30
  %v2965 = vsub.s32 %v2961, %v2964
  %vm2966 = vcmp.lt.s32.totalorder %v2965, 0
  %v2967 = vsub.s32 0, %v2965
  %v2968 = vsel %vm2966, %v2967, %v2965
  %v2969 = vclz %v2968
  %v2970 = vsub.s32 %v2969, 2
  %vm2971 = vcmp.gt.s32.totalorder 0, %v2970
  %v2972 = vsel %vm2971, 0, %v2970
  %v2973 = vsub.s32 32, %v2972
  %v2974 = vshll.u32 %v2965, %v2972
  %v2975 = vshrl.u32 %v2957, %v2973
  %v2976 = vor.u32 %v2974, %v2975
  %v2977 = vsub.s32 4294967266, %v2972
  %v2978 = vadd.s32 %v2977, 127
  %v2979 = vshll.u32 %v2978, 23
  %v2980 = vor.u32 4788187, %v2979
  %v2981 = vand.u32 2147483647, %v2980
  %v2983 = vcvt.s32.f32 %v2976
  %v2984 = vmul.f32 %v2983, %v2981
  %v2985 = vxor.u32 %v2984, 2147483648
  %v2986 = vsel %vm2903, %v2985, %v2984
  %v2987 = vsub.s32 4, %v2963
  %v2988 = vsel %vm2903, %v2987, %v2963
  %v2989 = vsel %vm2902, %v1221, %v2986
  %v2990 = vsel %vm2902, 0, %v2988
  %v2991 = vcosq.f32.pop %v2989
  %v2992 = vsinq.f32.pop %v2989
  %vm2993 = vweird.f32 %v1221
  %v2994 = vadd.s32 %v2990, 3
  %v2995 = vand.u32 %v2994, 3
  %vm2996 = vcmp.lt.s32.totalorder %v2995, 2
  %vm2997 = vcmp.eq.s32.totalorder %v2995, 0
  %v2998 = vxor.u32 %v2992, 2147483648
  %v2999 = vsel %vm2997, %v2991, %v2998
  %vm3000 = vcmp.eq.s32.totalorder %v2995, 2
  %v3001 = vxor.u32 %v2991, 2147483648
  %v3002 = vsel %vm3000, %v3001, %v2992
  %v3003 = vsel %vm2996, %v2999, %v3002
  %v3004 = vsel %vm2993, nan, %v3003
  %v3005 = vand.u32 2147483647, %v1222
  %vm3006 = vcmp.le.f32.partialorder %v3005, 0.7853982
  %vm3007 = vcmp.lt.s32.totalorder %v1222, 0
  %v3008 = vand.u32 %v1222, 2139095040
  %v3009 = vshrl.u32 %v3008, 23
  %v3010 = vsub.s32 %v3009, 127
  %v3011 = vand.u32 2147483647, %v1222
  %v3012 = vand.u32 %v3011, 8388607
  %v3013 = vor.u32 %v3012, 8388608
  %v3014 = vsub.s32 0, %v3013
  %v3015 = vadd.s32 %v3010, 1
  %vm3016 = vcmp.gt.s32.totalorder %v3015, 0
  %v3017 = vsel %vm3016, %v3015, 0
  %v3018 = vshrl.u32 %v3017, 5
  %v3019 = vand.u32 %v3017, 31
  %v3020 = vsub.s32 32, %v3019
  %v3021 = vshrl.u32 683565275, %v3020
  %v3022 = vshll.u32 683565275, %v3019
  %v3023 = vshrl.u32 2475754826, %v3020
  %v3024 = vor.u32 %v3022, %v3023
  %v3025 = vshll.u32 2475754826, %v3019
  %v3026 = vshrl.u32 2131351028, %v3020
  %v3027 = vor.u32 %v3025, %v3026
  %v3028 = vshll.u32 2131351028, %v3019
  %v3029 = vshrl.u32 2102212464, %v3020
  %v3030 = vor.u32 %v3028, %v3029
  %v3031 = vshll.u32 2102212464, %v3019
  %v3032 = vshrl.u32 920167782, %v3020
  %v3033 = vor.u32 %v3031, %v3032
  %v3034 = vshll.u32 920167782, %v3019
  %v3035 = vshrl.u32 1326507024, %v3020
  %v3036 = vor.u32 %v3034, %v3035
  %vm3037 = vcmp.lt.s32.totalorder %v3018, 1
  %vm3038 = vcmp.lt.s32.totalorder %v3018, 2
  %vm3039 = vcmp.lt.s32.totalorder %v3018, 3
  %vm3040 = vcmp.lt.s32.totalorder %v3018, 4
  %v3041 = vsel %vm3037, %v3021, %v3024
  %v3042 = vsel %vm3040, %v3030, 2102212464
  %v3043 = vsel %vm3039, %v3027, %v3042
  %v3044 = vsel %vm3038, %v3041, %v3043
  %v3045 = vsel %vm3037, %v3024, %v3027
  %v3046 = vsel %vm3040, %v3033, 920167782
  %v3047 = vsel %vm3039, %v3030, %v3046
  %v3048 = vsel %vm3038, %v3045, %v3047
  %v3049 = vsel %vm3037, %v3027, %v3030
  %v3050 = vsel %vm3040, %v3036, 1326507024
  %v3051 = vsel %vm3039, %v3033, %v3050
  %v3052 = vsel %vm3038, %v3049, %v3051
  %v3053 = vshll.u32 %v3013, 8
  %v3054 = vmul.u32.u64.compose %v3053, %v3052
  %v3055 = vextract.low.u32 %v3054
  %v3056 = vextract.high.u32 %v3054
  %v3057 = vmul.u32.u64.compose %v3053, %v3048
  %v3058 = vextract.low.u32 %v3057
  %v3059 = vextract.high.u32 %v3057
  %v3060 = vmul.u32 %v3053, %v3044
  %v3061 = vadd.s32 %v3056, %v3058
  %vm3062 = vc.u32 %v3056, %v3058
  %v3063 = vadd.s32 %v3059, 1
  %v3064 = vsel %vm3062, %v3063, %v3059
  %v3065 = vadd.s32 %v3060, %v3064
  %v3066 = vadd.s32 %v3065, 536870912
  %v3067 = vshrl.u32 %v3066, 30
  %v3068 = vshll.u32 %v3067, 30
  %v3069 = vsub.s32 %v3065, %v3068
  %vm3070 = vcmp.lt.s32.totalorder %v3069, 0
  %v3071 = vsub.s32 0, %v3069
  %v3072 = vsel %vm3070, %v3071, %v3069
  %v3073 = vclz %v3072
  %v3074 = vsub.s32 %v3073, 2
  %vm3075 = vcmp.gt.s32.totalorder 0, %v3074
  %v3076 = vsel %vm3075, 0, %v3074
  %v3077 = vsub.s32 32, %v3076
  %v3078 = vshll.u32 %v3069, %v3076
  %v3079 = vshrl.u32 %v3061, %v3077
  %v3080 = vor.u32 %v3078, %v3079
  %v3081 = vsub.s32 4294967266, %v3076
  %v3082 = vadd.s32 %v3081, 127
  %v3083 = vshll.u32 %v3082, 23
  %v3084 = vor.u32 4788187, %v3083
  %v3085 = vand.u32 2147483647, %v3084
  %v3087 = vcvt.s32.f32 %v3080
  %v3088 = vmul.f32 %v3087, %v3085
  %v3089 = vxor.u32 %v3088, 2147483648
  %v3090 = vsel %vm3007, %v3089, %v3088
  %v3091 = vsub.s32 4, %v3067
  %v3092 = vsel %vm3007, %v3091, %v3067
  %v3093 = vsel %vm3006, %v1222, %v3090
  %v3094 = vsel %vm3006, 0, %v3092
  %v3095 = vcosq.f32.pop %v3093
  %v3096 = vsinq.f32.pop %v3093
  %vm3097 = vweird.f32 %v1222
  %v3098 = vadd.s32 %v3094, 3
  %v3099 = vand.u32 %v3098, 3
  %vm3100 = vcmp.lt.s32.totalorder %v3099, 2
  %vm3101 = vcmp.eq.s32.totalorder %v3099, 0
  %v3102 = vxor.u32 %v3096, 2147483648
  %v3103 = vsel %vm3101, %v3095, %v3102
  %vm3104 = vcmp.eq.s32.totalorder %v3099, 2
  %v3105 = vxor.u32 %v3095, 2147483648
  %v3106 = vsel %vm3104, %v3105, %v3096
  %v3107 = vsel %vm3100, %v3103, %v3106
  %v3108 = vsel %vm3097, nan, %v3107
  %v3109 = vand.u32 2147483647, %v1223
  %vm3110 = vcmp.le.f32.partialorder %v3109, 0.7853982
  %vm3111 = vcmp.lt.s32.totalorder %v1223, 0
  %v3112 = vand.u32 %v1223, 2139095040
  %v3113 = vshrl.u32 %v3112, 23
  %v3114 = vsub.s32 %v3113, 127
  %v3115 = vand.u32 2147483647, %v1223
  %v3116 = vand.u32 %v3115, 8388607
  %v3117 = vor.u32 %v3116, 8388608
  %v3118 = vsub.s32 0, %v3117
  %v3119 = vadd.s32 %v3114, 1
  %vm3120 = vcmp.gt.s32.totalorder %v3119, 0
  %v3121 = vsel %vm3120, %v3119, 0
  %v3122 = vshrl.u32 %v3121, 5
  %v3123 = vand.u32 %v3121, 31
  %v3124 = vsub.s32 32, %v3123
  %v3125 = vshrl.u32 683565275, %v3124
  %v3126 = vshll.u32 683565275, %v3123
  %v3127 = vshrl.u32 2475754826, %v3124
  %v3128 = vor.u32 %v3126, %v3127
  %v3129 = vshll.u32 2475754826, %v3123
  %v3130 = vshrl.u32 2131351028, %v3124
  %v3131 = vor.u32 %v3129, %v3130
  %v3132 = vshll.u32 2131351028, %v3123
  %v3133 = vshrl.u32 2102212464, %v3124
  %v3134 = vor.u32 %v3132, %v3133
  %v3135 = vshll.u32 2102212464, %v3123
  %v3136 = vshrl.u32 920167782, %v3124
  %v3137 = vor.u32 %v3135, %v3136
  %v3138 = vshll.u32 920167782, %v3123
  %v3139 = vshrl.u32 1326507024, %v3124
  %v3140 = vor.u32 %v3138, %v3139
  %vm3141 = vcmp.lt.s32.totalorder %v3122, 1
  %vm3142 = vcmp.lt.s32.totalorder %v3122, 2
  %vm3143 = vcmp.lt.s32.totalorder %v3122, 3
  %vm3144 = vcmp.lt.s32.totalorder %v3122, 4
  %v3145 = vsel %vm3141, %v3125, %v3128
  %v3146 = vsel %vm3144, %v3134, 2102212464
  %v3147 = vsel %vm3143, %v3131, %v3146
  %v3148 = vsel %vm3142, %v3145, %v3147
  %v3149 = vsel %vm3141, %v3128, %v3131
  %v3150 = vsel %vm3144, %v3137, 920167782
  %v3151 = vsel %vm3143, %v3134, %v3150
  %v3152 = vsel %vm3142, %v3149, %v3151
  %v3153 = vsel %vm3141, %v3131, %v3134
  %v3154 = vsel %vm3144, %v3140, 1326507024
  %v3155 = vsel %vm3143, %v3137, %v3154
  %v3156 = vsel %vm3142, %v3153, %v3155
  %v3157 = vshll.u32 %v3117, 8
  %v3158 = vmul.u32.u64.compose %v3157, %v3156
  %v3159 = vextract.low.u32 %v3158
  %v3160 = vextract.high.u32 %v3158
  %v3161 = vmul.u32.u64.compose %v3157, %v3152
  %v3162 = vextract.low.u32 %v3161
  %v3163 = vextract.high.u32 %v3161
  %v3164 = vmul.u32 %v3157, %v3148
  %v3165 = vadd.s32 %v3160, %v3162
  %vm3166 = vc.u32 %v3160, %v3162
  %v3167 = vadd.s32 %v3163, 1
  %v3168 = vsel %vm3166, %v3167, %v3163
  %v3169 = vadd.s32 %v3164, %v3168
  %v3170 = vadd.s32 %v3169, 536870912
  %v3171 = vshrl.u32 %v3170, 30
  %v3172 = vshll.u32 %v3171, 30
  %v3173 = vsub.s32 %v3169, %v3172
  %vm3174 = vcmp.lt.s32.totalorder %v3173, 0
  %v3175 = vsub.s32 0, %v3173
  %v3176 = vsel %vm3174, %v3175, %v3173
  %v3177 = vclz %v3176
  %v3178 = vsub.s32 %v3177, 2
  %vm3179 = vcmp.gt.s32.totalorder 0, %v3178
  %v3180 = vsel %vm3179, 0, %v3178
  %v3181 = vsub.s32 32, %v3180
  %v3182 = vshll.u32 %v3173, %v3180
  %v3183 = vshrl.u32 %v3165, %v3181
  %v3184 = vor.u32 %v3182, %v3183
  %v3185 = vsub.s32 4294967266, %v3180
  %v3186 = vadd.s32 %v3185, 127
  %v3187 = vshll.u32 %v3186, 23
  %v3188 = vor.u32 4788187, %v3187
  %v3189 = vand.u32 2147483647, %v3188
  %v3191 = vcvt.s32.f32 %v3184
  %v3192 = vmul.f32 %v3191, %v3189
  %v3193 = vxor.u32 %v3192, 2147483648
  %v3194 = vsel %vm3111, %v3193, %v3192
  %v3195 = vsub.s32 4, %v3171
  %v3196 = vsel %vm3111, %v3195, %v3171
  %v3197 = vsel %vm3110, %v1223, %v3194
  %v3198 = vsel %vm3110, 0, %v3196
  %v3199 = vcosq.f32.pop %v3197
  %v3200 = vsinq.f32.pop %v3197
  %vm3201 = vweird.f32 %v1223
  %v3202 = vadd.s32 %v3198, 3
  %v3203 = vand.u32 %v3202, 3
  %vm3204 = vcmp.lt.s32.totalorder %v3203, 2
  %vm3205 = vcmp.eq.s32.totalorder %v3203, 0
  %v3206 = vxor.u32 %v3200, 2147483648
  %v3207 = vsel %vm3205, %v3199, %v3206
  %vm3208 = vcmp.eq.s32.totalorder %v3203, 2
  %v3209 = vxor.u32 %v3199, 2147483648
  %v3210 = vsel %vm3208, %v3209, %v3200
  %v3211 = vsel %vm3204, %v3207, %v3210
  %v3212 = vsel %vm3201, nan, %v3211
  %v3213 = vand.u32 2147483647, %v1224
  %vm3214 = vcmp.le.f32.partialorder %v3213, 0.7853982
  %vm3215 = vcmp.lt.s32.totalorder %v1224, 0
  %v3216 = vand.u32 %v1224, 2139095040
  %v3217 = vshrl.u32 %v3216, 23
  %v3218 = vsub.s32 %v3217, 127
  %v3219 = vand.u32 2147483647, %v1224
  %v3220 = vand.u32 %v3219, 8388607
  %v3221 = vor.u32 %v3220, 8388608
  %v3222 = vsub.s32 0, %v3221
  %v3223 = vadd.s32 %v3218, 1
  %vm3224 = vcmp.gt.s32.totalorder %v3223, 0
  %v3225 = vsel %vm3224, %v3223, 0
  %v3226 = vshrl.u32 %v3225, 5
  %v3227 = vand.u32 %v3225, 31
  %v3228 = vsub.s32 32, %v3227
  %v3229 = vshrl.u32 683565275, %v3228
  %v3230 = vshll.u32 683565275, %v3227
  %v3231 = vshrl.u32 2475754826, %v3228
  %v3232 = vor.u32 %v3230, %v3231
  %v3233 = vshll.u32 2475754826, %v3227
  %v3234 = vshrl.u32 2131351028, %v3228
  %v3235 = vor.u32 %v3233, %v3234
  %v3236 = vshll.u32 2131351028, %v3227
  %v3237 = vshrl.u32 2102212464, %v3228
  %v3238 = vor.u32 %v3236, %v3237
  %v3239 = vshll.u32 2102212464, %v3227
  %v3240 = vshrl.u32 920167782, %v3228
  %v3241 = vor.u32 %v3239, %v3240
  %v3242 = vshll.u32 920167782, %v3227
  %v3243 = vshrl.u32 1326507024, %v3228
  %v3244 = vor.u32 %v3242, %v3243
  %vm3245 = vcmp.lt.s32.totalorder %v3226, 1
  %vm3246 = vcmp.lt.s32.totalorder %v3226, 2
  %vm3247 = vcmp.lt.s32.totalorder %v3226, 3
  %vm3248 = vcmp.lt.s32.totalorder %v3226, 4
  %v3249 = vsel %vm3245, %v3229, %v3232
  %v3250 = vsel %vm3248, %v3238, 2102212464
  %v3251 = vsel %vm3247, %v3235, %v3250
  %v3252 = vsel %vm3246, %v3249, %v3251
  %v3253 = vsel %vm3245, %v3232, %v3235
  %v3254 = vsel %vm3248, %v3241, 920167782
  %v3255 = vsel %vm3247, %v3238, %v3254
  %v3256 = vsel %vm3246, %v3253, %v3255
  %v3257 = vsel %vm3245, %v3235, %v3238
  %v3258 = vsel %vm3248, %v3244, 1326507024
  %v3259 = vsel %vm3247, %v3241, %v3258
  %v3260 = vsel %vm3246, %v3257, %v3259
  %v3261 = vshll.u32 %v3221, 8
  %v3262 = vmul.u32.u64.compose %v3261, %v3260
  %v3263 = vextract.low.u32 %v3262
  %v3264 = vextract.high.u32 %v3262
  %v3265 = vmul.u32.u64.compose %v3261, %v3256
  %v3266 = vextract.low.u32 %v3265
  %v3267 = vextract.high.u32 %v3265
  %v3268 = vmul.u32 %v3261, %v3252
  %v3269 = vadd.s32 %v3264, %v3266
  %vm3270 = vc.u32 %v3264, %v3266
  %v3271 = vadd.s32 %v3267, 1
  %v3272 = vsel %vm3270, %v3271, %v3267
  %v3273 = vadd.s32 %v3268, %v3272
  %v3274 = vadd.s32 %v3273, 536870912
  %v3275 = vshrl.u32 %v3274, 30
  %v3276 = vshll.u32 %v3275, 30
  %v3277 = vsub.s32 %v3273, %v3276
  %vm3278 = vcmp.lt.s32.totalorder %v3277, 0
  %v3279 = vsub.s32 0, %v3277
  %v3280 = vsel %vm3278, %v3279, %v3277
  %v3281 = vclz %v3280
  %v3282 = vsub.s32 %v3281, 2
  %vm3283 = vcmp.gt.s32.totalorder 0, %v3282
  %v3284 = vsel %vm3283, 0, %v3282
  %v3285 = vsub.s32 32, %v3284
  %v3286 = vshll.u32 %v3277, %v3284
  %v3287 = vshrl.u32 %v3269, %v3285
  %v3288 = vor.u32 %v3286, %v3287
  %v3289 = vsub.s32 4294967266, %v3284
  %v3290 = vadd.s32 %v3289, 127
  %v3291 = vshll.u32 %v3290, 23
  %v3292 = vor.u32 4788187, %v3291
  %v3293 = vand.u32 2147483647, %v3292
  %v3295 = vcvt.s32.f32 %v3288
  %v3296 = vmul.f32 %v3295, %v3293
  %v3297 = vxor.u32 %v3296, 2147483648
  %v3298 = vsel %vm3215, %v3297, %v3296
  %v3299 = vsub.s32 4, %v3275
  %v3300 = vsel %vm3215, %v3299, %v3275
  %v3301 = vsel %vm3214, %v1224, %v3298
  %v3302 = vsel %vm3214, 0, %v3300
  %v3303 = vcosq.f32.pop %v3301
  %v3304 = vsinq.f32.pop %v3301
  %vm3305 = vweird.f32 %v1224
  %v3306 = vadd.s32 %v3302, 3
  %v3307 = vand.u32 %v3306, 3
  %vm3308 = vcmp.lt.s32.totalorder %v3307, 2
  %vm3309 = vcmp.eq.s32.totalorder %v3307, 0
  %v3310 = vxor.u32 %v3304, 2147483648
  %v3311 = vsel %vm3309, %v3303, %v3310
  %vm3312 = vcmp.eq.s32.totalorder %v3307, 2
  %v3313 = vxor.u32 %v3303, 2147483648
  %v3314 = vsel %vm3312, %v3313, %v3304
  %v3315 = vsel %vm3308, %v3311, %v3314
  %v3316 = vsel %vm3305, nan, %v3315
  %v3317 = vand.u32 2147483647, %v1225
  %vm3318 = vcmp.le.f32.partialorder %v3317, 0.7853982
  %vm3319 = vcmp.lt.s32.totalorder %v1225, 0
  %v3320 = vand.u32 %v1225, 2139095040
  %v3321 = vshrl.u32 %v3320, 23
  %v3322 = vsub.s32 %v3321, 127
  %v3323 = vand.u32 2147483647, %v1225
  %v3324 = vand.u32 %v3323, 8388607
  %v3325 = vor.u32 %v3324, 8388608
  %v3326 = vsub.s32 0, %v3325
  %v3327 = vadd.s32 %v3322, 1
  %vm3328 = vcmp.gt.s32.totalorder %v3327, 0
  %v3329 = vsel %vm3328, %v3327, 0
  %v3330 = vshrl.u32 %v3329, 5
  %v3331 = vand.u32 %v3329, 31
  %v3332 = vsub.s32 32, %v3331
  %v3333 = vshrl.u32 683565275, %v3332
  %v3334 = vshll.u32 683565275, %v3331
  %v3335 = vshrl.u32 2475754826, %v3332
  %v3336 = vor.u32 %v3334, %v3335
  %v3337 = vshll.u32 2475754826, %v3331
  %v3338 = vshrl.u32 2131351028, %v3332
  %v3339 = vor.u32 %v3337, %v3338
  %v3340 = vshll.u32 2131351028, %v3331
  %v3341 = vshrl.u32 2102212464, %v3332
  %v3342 = vor.u32 %v3340, %v3341
  %v3343 = vshll.u32 2102212464, %v3331
  %v3344 = vshrl.u32 920167782, %v3332
  %v3345 = vor.u32 %v3343, %v3344
  %v3346 = vshll.u32 920167782, %v3331
  %v3347 = vshrl.u32 1326507024, %v3332
  %v3348 = vor.u32 %v3346, %v3347
  %vm3349 = vcmp.lt.s32.totalorder %v3330, 1
  %vm3350 = vcmp.lt.s32.totalorder %v3330, 2
  %vm3351 = vcmp.lt.s32.totalorder %v3330, 3
  %vm3352 = vcmp.lt.s32.totalorder %v3330, 4
  %v3353 = vsel %vm3349, %v3333, %v3336
  %v3354 = vsel %vm3352, %v3342, 2102212464
  %v3355 = vsel %vm3351, %v3339, %v3354
  %v3356 = vsel %vm3350, %v3353, %v3355
  %v3357 = vsel %vm3349, %v3336, %v3339
  %v3358 = vsel %vm3352, %v3345, 920167782
  %v3359 = vsel %vm3351, %v3342, %v3358
  %v3360 = vsel %vm3350, %v3357, %v3359
  %v3361 = vsel %vm3349, %v3339, %v3342
  %v3362 = vsel %vm3352, %v3348, 1326507024
  %v3363 = vsel %vm3351, %v3345, %v3362
  %v3364 = vsel %vm3350, %v3361, %v3363
  %v3365 = vshll.u32 %v3325, 8
  %v3366 = vmul.u32.u64.compose %v3365, %v3364
  %v3367 = vextract.low.u32 %v3366
  %v3368 = vextract.high.u32 %v3366
  %v3369 = vmul.u32.u64.compose %v3365, %v3360
  %v3370 = vextract.low.u32 %v3369
  %v3371 = vextract.high.u32 %v3369
  %v3372 = vmul.u32 %v3365, %v3356
  %v3373 = vadd.s32 %v3368, %v3370
  %vm3374 = vc.u32 %v3368, %v3370
  %v3375 = vadd.s32 %v3371, 1
  %v3376 = vsel %vm3374, %v3375, %v3371
  %v3377 = vadd.s32 %v3372, %v3376
  %v3378 = vadd.s32 %v3377, 536870912
  %v3379 = vshrl.u32 %v3378, 30
  %v3380 = vshll.u32 %v3379, 30
  %v3381 = vsub.s32 %v3377, %v3380
  %vm3382 = vcmp.lt.s32.totalorder %v3381, 0
  %v3383 = vsub.s32 0, %v3381
  %v3384 = vsel %vm3382, %v3383, %v3381
  %v3385 = vclz %v3384
  %v3386 = vsub.s32 %v3385, 2
  %vm3387 = vcmp.gt.s32.totalorder 0, %v3386
  %v3388 = vsel %vm3387, 0, %v3386
  %v3389 = vsub.s32 32, %v3388
  %v3390 = vshll.u32 %v3381, %v3388
  %v3391 = vshrl.u32 %v3373, %v3389
  %v3392 = vor.u32 %v3390, %v3391
  %v3393 = vsub.s32 4294967266, %v3388
  %v3394 = vadd.s32 %v3393, 127
  %v3395 = vshll.u32 %v3394, 23
  %v3396 = vor.u32 4788187, %v3395
  %v3397 = vand.u32 2147483647, %v3396
  %v3399 = vcvt.s32.f32 %v3392
  %v3400 = vmul.f32 %v3399, %v3397
  %v3401 = vxor.u32 %v3400, 2147483648
  %v3402 = vsel %vm3319, %v3401, %v3400
  %v3403 = vsub.s32 4, %v3379
  %v3404 = vsel %vm3319, %v3403, %v3379
  %v3405 = vsel %vm3318, %v1225, %v3402
  %v3406 = vsel %vm3318, 0, %v3404
  %v3407 = vcosq.f32.pop %v3405
  %v3408 = vsinq.f32.pop %v3405
  %vm3409 = vweird.f32 %v1225
  %v3410 = vadd.s32 %v3406, 3
  %v3411 = vand.u32 %v3410, 3
  %vm3412 = vcmp.lt.s32.totalorder %v3411, 2
  %vm3413 = vcmp.eq.s32.totalorder %v3411, 0
  %v3414 = vxor.u32 %v3408, 2147483648
  %v3415 = vsel %vm3413, %v3407, %v3414
  %vm3416 = vcmp.eq.s32.totalorder %v3411, 2
  %v3417 = vxor.u32 %v3407, 2147483648
  %v3418 = vsel %vm3416, %v3417, %v3408
  %v3419 = vsel %vm3412, %v3415, %v3418
  %v3420 = vsel %vm3409, nan, %v3419
  %v3421 = vand.u32 2147483647, %v1226
  %vm3422 = vcmp.le.f32.partialorder %v3421, 0.7853982
  %vm3423 = vcmp.lt.s32.totalorder %v1226, 0
  %v3424 = vand.u32 %v1226, 2139095040
  %v3425 = vshrl.u32 %v3424, 23
  %v3426 = vsub.s32 %v3425, 127
  %v3427 = vand.u32 2147483647, %v1226
  %v3428 = vand.u32 %v3427, 8388607
  %v3429 = vor.u32 %v3428, 8388608
  %v3430 = vsub.s32 0, %v3429
  %v3431 = vadd.s32 %v3426, 1
  %vm3432 = vcmp.gt.s32.totalorder %v3431, 0
  %v3433 = vsel %vm3432, %v3431, 0
  %v3434 = vshrl.u32 %v3433, 5
  %v3435 = vand.u32 %v3433, 31
  %v3436 = vsub.s32 32, %v3435
  %v3437 = vshrl.u32 683565275, %v3436
  %v3438 = vshll.u32 683565275, %v3435
  %v3439 = vshrl.u32 2475754826, %v3436
  %v3440 = vor.u32 %v3438, %v3439
  %v3441 = vshll.u32 2475754826, %v3435
  %v3442 = vshrl.u32 2131351028, %v3436
  %v3443 = vor.u32 %v3441, %v3442
  %v3444 = vshll.u32 2131351028, %v3435
  %v3445 = vshrl.u32 2102212464, %v3436
  %v3446 = vor.u32 %v3444, %v3445
  %v3447 = vshll.u32 2102212464, %v3435
  %v3448 = vshrl.u32 920167782, %v3436
  %v3449 = vor.u32 %v3447, %v3448
  %v3450 = vshll.u32 920167782, %v3435
  %v3451 = vshrl.u32 1326507024, %v3436
  %v3452 = vor.u32 %v3450, %v3451
  %vm3453 = vcmp.lt.s32.totalorder %v3434, 1
  %vm3454 = vcmp.lt.s32.totalorder %v3434, 2
  %vm3455 = vcmp.lt.s32.totalorder %v3434, 3
  %vm3456 = vcmp.lt.s32.totalorder %v3434, 4
  %v3457 = vsel %vm3453, %v3437, %v3440
  %v3458 = vsel %vm3456, %v3446, 2102212464
  %v3459 = vsel %vm3455, %v3443, %v3458
  %v3460 = vsel %vm3454, %v3457, %v3459
  %v3461 = vsel %vm3453, %v3440, %v3443
  %v3462 = vsel %vm3456, %v3449, 920167782
  %v3463 = vsel %vm3455, %v3446, %v3462
  %v3464 = vsel %vm3454, %v3461, %v3463
  %v3465 = vsel %vm3453, %v3443, %v3446
  %v3466 = vsel %vm3456, %v3452, 1326507024
  %v3467 = vsel %vm3455, %v3449, %v3466
  %v3468 = vsel %vm3454, %v3465, %v3467
  %v3469 = vshll.u32 %v3429, 8
  %v3470 = vmul.u32.u64.compose %v3469, %v3468
  %v3471 = vextract.low.u32 %v3470
  %v3472 = vextract.high.u32 %v3470
  %v3473 = vmul.u32.u64.compose %v3469, %v3464
  %v3474 = vextract.low.u32 %v3473
  %v3475 = vextract.high.u32 %v3473
  %v3476 = vmul.u32 %v3469, %v3460
  %v3477 = vadd.s32 %v3472, %v3474
  %vm3478 = vc.u32 %v3472, %v3474
  %v3479 = vadd.s32 %v3475, 1
  %v3480 = vsel %vm3478, %v3479, %v3475
  %v3481 = vadd.s32 %v3476, %v3480
  %v3482 = vadd.s32 %v3481, 536870912
  %v3483 = vshrl.u32 %v3482, 30
  %v3484 = vshll.u32 %v3483, 30
  %v3485 = vsub.s32 %v3481, %v3484
  %vm3486 = vcmp.lt.s32.totalorder %v3485, 0
  %v3487 = vsub.s32 0, %v3485
  %v3488 = vsel %vm3486, %v3487, %v3485
  %v3489 = vclz %v3488
  %v3490 = vsub.s32 %v3489, 2
  %vm3491 = vcmp.gt.s32.totalorder 0, %v3490
  %v3492 = vsel %vm3491, 0, %v3490
  %v3493 = vsub.s32 32, %v3492
  %v3494 = vshll.u32 %v3485, %v3492
  %v3495 = vshrl.u32 %v3477, %v3493
  %v3496 = vor.u32 %v3494, %v3495
  %v3497 = vsub.s32 4294967266, %v3492
  %v3498 = vadd.s32 %v3497, 127
  %v3499 = vshll.u32 %v3498, 23
  %v3500 = vor.u32 4788187, %v3499
  %v3501 = vand.u32 2147483647, %v3500
  %v3503 = vcvt.s32.f32 %v3496
  %v3504 = vmul.f32 %v3503, %v3501
  %v3505 = vxor.u32 %v3504, 2147483648
  %v3506 = vsel %vm3423, %v3505, %v3504
  %v3507 = vsub.s32 4, %v3483
  %v3508 = vsel %vm3423, %v3507, %v3483
  %v3509 = vsel %vm3422, %v1226, %v3506
  %v3510 = vsel %vm3422, 0, %v3508
  %v3511 = vcosq.f32.pop %v3509
  %v3512 = vsinq.f32.pop %v3509
  %vm3513 = vweird.f32 %v1226
  %v3514 = vadd.s32 %v3510, 3
  %v3515 = vand.u32 %v3514, 3
  %vm3516 = vcmp.lt.s32.totalorder %v3515, 2
  %vm3517 = vcmp.eq.s32.totalorder %v3515, 0
  %v3518 = vxor.u32 %v3512, 2147483648
  %v3519 = vsel %vm3517, %v3511, %v3518
  %vm3520 = vcmp.eq.s32.totalorder %v3515, 2
  %v3521 = vxor.u32 %v3511, 2147483648
  %v3522 = vsel %vm3520, %v3521, %v3512
  %v3523 = vsel %vm3516, %v3519, %v3522
  %v3524 = vsel %vm3513, nan, %v3523
  %v3525 = vand.u32 2147483647, %v1227
  %vm3526 = vcmp.le.f32.partialorder %v3525, 0.7853982
  %vm3527 = vcmp.lt.s32.totalorder %v1227, 0
  %v3528 = vand.u32 %v1227, 2139095040
  %v3529 = vshrl.u32 %v3528, 23
  %v3530 = vsub.s32 %v3529, 127
  %v3531 = vand.u32 2147483647, %v1227
  %v3532 = vand.u32 %v3531, 8388607
  %v3533 = vor.u32 %v3532, 8388608
  %v3534 = vsub.s32 0, %v3533
  %v3535 = vadd.s32 %v3530, 1
  %vm3536 = vcmp.gt.s32.totalorder %v3535, 0
  %v3537 = vsel %vm3536, %v3535, 0
  %v3538 = vshrl.u32 %v3537, 5
  %v3539 = vand.u32 %v3537, 31
  %v3540 = vsub.s32 32, %v3539
  %v3541 = vshrl.u32 683565275, %v3540
  %v3542 = vshll.u32 683565275, %v3539
  %v3543 = vshrl.u32 2475754826, %v3540
  %v3544 = vor.u32 %v3542, %v3543
  %v3545 = vshll.u32 2475754826, %v3539
  %v3546 = vshrl.u32 2131351028, %v3540
  %v3547 = vor.u32 %v3545, %v3546
  %v3548 = vshll.u32 2131351028, %v3539
  %v3549 = vshrl.u32 2102212464, %v3540
  %v3550 = vor.u32 %v3548, %v3549
  %v3551 = vshll.u32 2102212464, %v3539
  %v3552 = vshrl.u32 920167782, %v3540
  %v3553 = vor.u32 %v3551, %v3552
  %v3554 = vshll.u32 920167782, %v3539
  %v3555 = vshrl.u32 1326507024, %v3540
  %v3556 = vor.u32 %v3554, %v3555
  %vm3557 = vcmp.lt.s32.totalorder %v3538, 1
  %vm3558 = vcmp.lt.s32.totalorder %v3538, 2
  %vm3559 = vcmp.lt.s32.totalorder %v3538, 3
  %vm3560 = vcmp.lt.s32.totalorder %v3538, 4
  %v3561 = vsel %vm3557, %v3541, %v3544
  %v3562 = vsel %vm3560, %v3550, 2102212464
  %v3563 = vsel %vm3559, %v3547, %v3562
  %v3564 = vsel %vm3558, %v3561, %v3563
  %v3565 = vsel %vm3557, %v3544, %v3547
  %v3566 = vsel %vm3560, %v3553, 920167782
  %v3567 = vsel %vm3559, %v3550, %v3566
  %v3568 = vsel %vm3558, %v3565, %v3567
  %v3569 = vsel %vm3557, %v3547, %v3550
  %v3570 = vsel %vm3560, %v3556, 1326507024
  %v3571 = vsel %vm3559, %v3553, %v3570
  %v3572 = vsel %vm3558, %v3569, %v3571
  %v3573 = vshll.u32 %v3533, 8
  %v3574 = vmul.u32.u64.compose %v3573, %v3572
  %v3575 = vextract.low.u32 %v3574
  %v3576 = vextract.high.u32 %v3574
  %v3577 = vmul.u32.u64.compose %v3573, %v3568
  %v3578 = vextract.low.u32 %v3577
  %v3579 = vextract.high.u32 %v3577
  %v3580 = vmul.u32 %v3573, %v3564
  %v3581 = vadd.s32 %v3576, %v3578
  %vm3582 = vc.u32 %v3576, %v3578
  %v3583 = vadd.s32 %v3579, 1
  %v3584 = vsel %vm3582, %v3583, %v3579
  %v3585 = vadd.s32 %v3580, %v3584
  %v3586 = vadd.s32 %v3585, 536870912
  %v3587 = vshrl.u32 %v3586, 30
  %v3588 = vshll.u32 %v3587, 30
  %v3589 = vsub.s32 %v3585, %v3588
  %vm3590 = vcmp.lt.s32.totalorder %v3589, 0
  %v3591 = vsub.s32 0, %v3589
  %v3592 = vsel %vm3590, %v3591, %v3589
  %v3593 = vclz %v3592
  %v3594 = vsub.s32 %v3593, 2
  %vm3595 = vcmp.gt.s32.totalorder 0, %v3594
  %v3596 = vsel %vm3595, 0, %v3594
  %v3597 = vsub.s32 32, %v3596
  %v3598 = vshll.u32 %v3589, %v3596
  %v3599 = vshrl.u32 %v3581, %v3597
  %v3600 = vor.u32 %v3598, %v3599
  %v3601 = vsub.s32 4294967266, %v3596
  %v3602 = vadd.s32 %v3601, 127
  %v3603 = vshll.u32 %v3602, 23
  %v3604 = vor.u32 4788187, %v3603
  %v3605 = vand.u32 2147483647, %v3604
  %v3607 = vcvt.s32.f32 %v3600
  %v3608 = vmul.f32 %v3607, %v3605
  %v3609 = vxor.u32 %v3608, 2147483648
  %v3610 = vsel %vm3527, %v3609, %v3608
  %v3611 = vsub.s32 4, %v3587
  %v3612 = vsel %vm3527, %v3611, %v3587
  %v3613 = vsel %vm3526, %v1227, %v3610
  %v3614 = vsel %vm3526, 0, %v3612
  %v3615 = vcosq.f32.pop %v3613
  %v3616 = vsinq.f32.pop %v3613
  %vm3617 = vweird.f32 %v1227
  %v3618 = vadd.s32 %v3614, 3
  %v3619 = vand.u32 %v3618, 3
  %vm3620 = vcmp.lt.s32.totalorder %v3619, 2
  %vm3621 = vcmp.eq.s32.totalorder %v3619, 0
  %v3622 = vxor.u32 %v3616, 2147483648
  %v3623 = vsel %vm3621, %v3615, %v3622
  %vm3624 = vcmp.eq.s32.totalorder %v3619, 2
  %v3625 = vxor.u32 %v3615, 2147483648
  %v3626 = vsel %vm3624, %v3625, %v3616
  %v3627 = vsel %vm3620, %v3623, %v3626
  %v3628 = vsel %vm3617, nan, %v3627
  %v3629 = vand.u32 2147483647, %v1228
  %vm3630 = vcmp.le.f32.partialorder %v3629, 0.7853982
  %vm3631 = vcmp.lt.s32.totalorder %v1228, 0
  %v3632 = vand.u32 %v1228, 2139095040
  %v3633 = vshrl.u32 %v3632, 23
  %v3634 = vsub.s32 %v3633, 127
  %v3635 = vand.u32 2147483647, %v1228
  %v3636 = vand.u32 %v3635, 8388607
  %v3637 = vor.u32 %v3636, 8388608
  %v3638 = vsub.s32 0, %v3637
  %v3639 = vadd.s32 %v3634, 1
  %vm3640 = vcmp.gt.s32.totalorder %v3639, 0
  %v3641 = vsel %vm3640, %v3639, 0
  %v3642 = vshrl.u32 %v3641, 5
  %v3643 = vand.u32 %v3641, 31
  %v3644 = vsub.s32 32, %v3643
  %v3645 = vshrl.u32 683565275, %v3644
  %v3646 = vshll.u32 683565275, %v3643
  %v3647 = vshrl.u32 2475754826, %v3644
  %v3648 = vor.u32 %v3646, %v3647
  %v3649 = vshll.u32 2475754826, %v3643
  %v3650 = vshrl.u32 2131351028, %v3644
  %v3651 = vor.u32 %v3649, %v3650
  %v3652 = vshll.u32 2131351028, %v3643
  %v3653 = vshrl.u32 2102212464, %v3644
  %v3654 = vor.u32 %v3652, %v3653
  %v3655 = vshll.u32 2102212464, %v3643
  %v3656 = vshrl.u32 920167782, %v3644
  %v3657 = vor.u32 %v3655, %v3656
  %v3658 = vshll.u32 920167782, %v3643
  %v3659 = vshrl.u32 1326507024, %v3644
  %v3660 = vor.u32 %v3658, %v3659
  %vm3661 = vcmp.lt.s32.totalorder %v3642, 1
  %vm3662 = vcmp.lt.s32.totalorder %v3642, 2
  %vm3663 = vcmp.lt.s32.totalorder %v3642, 3
  %vm3664 = vcmp.lt.s32.totalorder %v3642, 4
  %v3665 = vsel %vm3661, %v3645, %v3648
  %v3666 = vsel %vm3664, %v3654, 2102212464
  %v3667 = vsel %vm3663, %v3651, %v3666
  %v3668 = vsel %vm3662, %v3665, %v3667
  %v3669 = vsel %vm3661, %v3648, %v3651
  %v3670 = vsel %vm3664, %v3657, 920167782
  %v3671 = vsel %vm3663, %v3654, %v3670
  %v3672 = vsel %vm3662, %v3669, %v3671
  %v3673 = vsel %vm3661, %v3651, %v3654
  %v3674 = vsel %vm3664, %v3660, 1326507024
  %v3675 = vsel %vm3663, %v3657, %v3674
  %v3676 = vsel %vm3662, %v3673, %v3675
  %v3677 = vshll.u32 %v3637, 8
  %v3678 = vmul.u32.u64.compose %v3677, %v3676
  %v3679 = vextract.low.u32 %v3678
  %v3680 = vextract.high.u32 %v3678
  %v3681 = vmul.u32.u64.compose %v3677, %v3672
  %v3682 = vextract.low.u32 %v3681
  %v3683 = vextract.high.u32 %v3681
  %v3684 = vmul.u32 %v3677, %v3668
  %v3685 = vadd.s32 %v3680, %v3682
  %vm3686 = vc.u32 %v3680, %v3682
  %v3687 = vadd.s32 %v3683, 1
  %v3688 = vsel %vm3686, %v3687, %v3683
  %v3689 = vadd.s32 %v3684, %v3688
  %v3690 = vadd.s32 %v3689, 536870912
  %v3691 = vshrl.u32 %v3690, 30
  %v3692 = vshll.u32 %v3691, 30
  %v3693 = vsub.s32 %v3689, %v3692
  %vm3694 = vcmp.lt.s32.totalorder %v3693, 0
  %v3695 = vsub.s32 0, %v3693
  %v3696 = vsel %vm3694, %v3695, %v3693
  %v3697 = vclz %v3696
  %v3698 = vsub.s32 %v3697, 2
  %vm3699 = vcmp.gt.s32.totalorder 0, %v3698
  %v3700 = vsel %vm3699, 0, %v3698
  %v3701 = vsub.s32 32, %v3700
  %v3702 = vshll.u32 %v3693, %v3700
  %v3703 = vshrl.u32 %v3685, %v3701
  %v3704 = vor.u32 %v3702, %v3703
  %v3705 = vsub.s32 4294967266, %v3700
  %v3706 = vadd.s32 %v3705, 127
  %v3707 = vshll.u32 %v3706, 23
  %v3708 = vor.u32 4788187, %v3707
  %v3709 = vand.u32 2147483647, %v3708
  %v3711 = vcvt.s32.f32 %v3704
  %v3712 = vmul.f32 %v3711, %v3709
  %v3713 = vxor.u32 %v3712, 2147483648
  %v3714 = vsel %vm3631, %v3713, %v3712
  %v3715 = vsub.s32 4, %v3691
  %v3716 = vsel %vm3631, %v3715, %v3691
  %v3717 = vsel %vm3630, %v1228, %v3714
  %v3718 = vsel %vm3630, 0, %v3716
  %v3719 = vcosq.f32.pop %v3717
  %v3720 = vsinq.f32.pop %v3717
  %vm3721 = vweird.f32 %v1228
  %v3722 = vadd.s32 %v3718, 3
  %v3723 = vand.u32 %v3722, 3
  %vm3724 = vcmp.lt.s32.totalorder %v3723, 2
  %vm3725 = vcmp.eq.s32.totalorder %v3723, 0
  %v3726 = vxor.u32 %v3720, 2147483648
  %v3727 = vsel %vm3725, %v3719, %v3726
  %vm3728 = vcmp.eq.s32.totalorder %v3723, 2
  %v3729 = vxor.u32 %v3719, 2147483648
  %v3730 = vsel %vm3728, %v3729, %v3720
  %v3731 = vsel %vm3724, %v3727, %v3730
  %v3732 = vsel %vm3721, nan, %v3731
  %v3733 = vand.u32 2147483647, %v1229
  %vm3734 = vcmp.le.f32.partialorder %v3733, 0.7853982
  %vm3735 = vcmp.lt.s32.totalorder %v1229, 0
  %v3736 = vand.u32 %v1229, 2139095040
  %v3737 = vshrl.u32 %v3736, 23
  %v3738 = vsub.s32 %v3737, 127
  %v3739 = vand.u32 2147483647, %v1229
  %v3740 = vand.u32 %v3739, 8388607
  %v3741 = vor.u32 %v3740, 8388608
  %v3742 = vsub.s32 0, %v3741
  %v3743 = vadd.s32 %v3738, 1
  %vm3744 = vcmp.gt.s32.totalorder %v3743, 0
  %v3745 = vsel %vm3744, %v3743, 0
  %v3746 = vshrl.u32 %v3745, 5
  %v3747 = vand.u32 %v3745, 31
  %v3748 = vsub.s32 32, %v3747
  %v3749 = vshrl.u32 683565275, %v3748
  %v3750 = vshll.u32 683565275, %v3747
  %v3751 = vshrl.u32 2475754826, %v3748
  %v3752 = vor.u32 %v3750, %v3751
  %v3753 = vshll.u32 2475754826, %v3747
  %v3754 = vshrl.u32 2131351028, %v3748
  %v3755 = vor.u32 %v3753, %v3754
  %v3756 = vshll.u32 2131351028, %v3747
  %v3757 = vshrl.u32 2102212464, %v3748
  %v3758 = vor.u32 %v3756, %v3757
  %v3759 = vshll.u32 2102212464, %v3747
  %v3760 = vshrl.u32 920167782, %v3748
  %v3761 = vor.u32 %v3759, %v3760
  %v3762 = vshll.u32 920167782, %v3747
  %v3763 = vshrl.u32 1326507024, %v3748
  %v3764 = vor.u32 %v3762, %v3763
  %vm3765 = vcmp.lt.s32.totalorder %v3746, 1
  %vm3766 = vcmp.lt.s32.totalorder %v3746, 2
  %vm3767 = vcmp.lt.s32.totalorder %v3746, 3
  %vm3768 = vcmp.lt.s32.totalorder %v3746, 4
  %v3769 = vsel %vm3765, %v3749, %v3752
  %v3770 = vsel %vm3768, %v3758, 2102212464
  %v3771 = vsel %vm3767, %v3755, %v3770
  %v3772 = vsel %vm3766, %v3769, %v3771
  %v3773 = vsel %vm3765, %v3752, %v3755
  %v3774 = vsel %vm3768, %v3761, 920167782
  %v3775 = vsel %vm3767, %v3758, %v3774
  %v3776 = vsel %vm3766, %v3773, %v3775
  %v3777 = vsel %vm3765, %v3755, %v3758
  %v3778 = vsel %vm3768, %v3764, 1326507024
  %v3779 = vsel %vm3767, %v3761, %v3778
  %v3780 = vsel %vm3766, %v3777, %v3779
  %v3781 = vshll.u32 %v3741, 8
  %v3782 = vmul.u32.u64.compose %v3781, %v3780
  %v3783 = vextract.low.u32 %v3782
  %v3784 = vextract.high.u32 %v3782
  %v3785 = vmul.u32.u64.compose %v3781, %v3776
  %v3786 = vextract.low.u32 %v3785
  %v3787 = vextract.high.u32 %v3785
  %v3788 = vmul.u32 %v3781, %v3772
  %v3789 = vadd.s32 %v3784, %v3786
  %vm3790 = vc.u32 %v3784, %v3786
  %v3791 = vadd.s32 %v3787, 1
  %v3792 = vsel %vm3790, %v3791, %v3787
  %v3793 = vadd.s32 %v3788, %v3792
  %v3794 = vadd.s32 %v3793, 536870912
  %v3795 = vshrl.u32 %v3794, 30
  %v3796 = vshll.u32 %v3795, 30
  %v3797 = vsub.s32 %v3793, %v3796
  %vm3798 = vcmp.lt.s32.totalorder %v3797, 0
  %v3799 = vsub.s32 0, %v3797
  %v3800 = vsel %vm3798, %v3799, %v3797
  %v3801 = vclz %v3800
  %v3802 = vsub.s32 %v3801, 2
  %vm3803 = vcmp.gt.s32.totalorder 0, %v3802
  %v3804 = vsel %vm3803, 0, %v3802
  %v3805 = vsub.s32 32, %v3804
  %v3806 = vshll.u32 %v3797, %v3804
  %v3807 = vshrl.u32 %v3789, %v3805
  %v3808 = vor.u32 %v3806, %v3807
  %v3809 = vsub.s32 4294967266, %v3804
  %v3810 = vadd.s32 %v3809, 127
  %v3811 = vshll.u32 %v3810, 23
  %v3812 = vor.u32 4788187, %v3811
  %v3813 = vand.u32 2147483647, %v3812
  %v3815 = vcvt.s32.f32 %v3808
  %v3816 = vmul.f32 %v3815, %v3813
  %v3817 = vxor.u32 %v3816, 2147483648
  %v3818 = vsel %vm3735, %v3817, %v3816
  %v3819 = vsub.s32 4, %v3795
  %v3820 = vsel %vm3735, %v3819, %v3795
  %v3821 = vsel %vm3734, %v1229, %v3818
  %v3822 = vsel %vm3734, 0, %v3820
  %v3823 = vcosq.f32.pop %v3821
  %v3824 = vsinq.f32.pop %v3821
  %vm3825 = vweird.f32 %v1229
  %v3826 = vadd.s32 %v3822, 3
  %v3827 = vand.u32 %v3826, 3
  %vm3828 = vcmp.lt.s32.totalorder %v3827, 2
  %vm3829 = vcmp.eq.s32.totalorder %v3827, 0
  %v3830 = vxor.u32 %v3824, 2147483648
  %v3831 = vsel %vm3829, %v3823, %v3830
  %vm3832 = vcmp.eq.s32.totalorder %v3827, 2
  %v3833 = vxor.u32 %v3823, 2147483648
  %v3834 = vsel %vm3832, %v3833, %v3824
  %v3835 = vsel %vm3828, %v3831, %v3834
  %v3836 = vsel %vm3825, nan, %v3835
  %v3837 = vand.u32 2147483647, %v1230
  %vm3838 = vcmp.le.f32.partialorder %v3837, 0.7853982
  %vm3839 = vcmp.lt.s32.totalorder %v1230, 0
  %v3840 = vand.u32 %v1230, 2139095040
  %v3841 = vshrl.u32 %v3840, 23
  %v3842 = vsub.s32 %v3841, 127
  %v3843 = vand.u32 2147483647, %v1230
  %v3844 = vand.u32 %v3843, 8388607
  %v3845 = vor.u32 %v3844, 8388608
  %v3846 = vsub.s32 0, %v3845
  %v3847 = vadd.s32 %v3842, 1
  %vm3848 = vcmp.gt.s32.totalorder %v3847, 0
  %v3849 = vsel %vm3848, %v3847, 0
  %v3850 = vshrl.u32 %v3849, 5
  %v3851 = vand.u32 %v3849, 31
  %v3852 = vsub.s32 32, %v3851
  %v3853 = vshrl.u32 683565275, %v3852
  %v3854 = vshll.u32 683565275, %v3851
  %v3855 = vshrl.u32 2475754826, %v3852
  %v3856 = vor.u32 %v3854, %v3855
  %v3857 = vshll.u32 2475754826, %v3851
  %v3858 = vshrl.u32 2131351028, %v3852
  %v3859 = vor.u32 %v3857, %v3858
  %v3860 = vshll.u32 2131351028, %v3851
  %v3861 = vshrl.u32 2102212464, %v3852
  %v3862 = vor.u32 %v3860, %v3861
  %v3863 = vshll.u32 2102212464, %v3851
  %v3864 = vshrl.u32 920167782, %v3852
  %v3865 = vor.u32 %v3863, %v3864
  %v3866 = vshll.u32 920167782, %v3851
  %v3867 = vshrl.u32 1326507024, %v3852
  %v3868 = vor.u32 %v3866, %v3867
  %vm3869 = vcmp.lt.s32.totalorder %v3850, 1
  %vm3870 = vcmp.lt.s32.totalorder %v3850, 2
  %vm3871 = vcmp.lt.s32.totalorder %v3850, 3
  %vm3872 = vcmp.lt.s32.totalorder %v3850, 4
  %v3873 = vsel %vm3869, %v3853, %v3856
  %v3874 = vsel %vm3872, %v3862, 2102212464
  %v3875 = vsel %vm3871, %v3859, %v3874
  %v3876 = vsel %vm3870, %v3873, %v3875
  %v3877 = vsel %vm3869, %v3856, %v3859
  %v3878 = vsel %vm3872, %v3865, 920167782
  %v3879 = vsel %vm3871, %v3862, %v3878
  %v3880 = vsel %vm3870, %v3877, %v3879
  %v3881 = vsel %vm3869, %v3859, %v3862
  %v3882 = vsel %vm3872, %v3868, 1326507024
  %v3883 = vsel %vm3871, %v3865, %v3882
  %v3884 = vsel %vm3870, %v3881, %v3883
  %v3885 = vshll.u32 %v3845, 8
  %v3886 = vmul.u32.u64.compose %v3885, %v3884
  %v3887 = vextract.low.u32 %v3886
  %v3888 = vextract.high.u32 %v3886
  %v3889 = vmul.u32.u64.compose %v3885, %v3880
  %v3890 = vextract.low.u32 %v3889
  %v3891 = vextract.high.u32 %v3889
  %v3892 = vmul.u32 %v3885, %v3876
  %v3893 = vadd.s32 %v3888, %v3890
  %vm3894 = vc.u32 %v3888, %v3890
  %v3895 = vadd.s32 %v3891, 1
  %v3896 = vsel %vm3894, %v3895, %v3891
  %v3897 = vadd.s32 %v3892, %v3896
  %v3898 = vadd.s32 %v3897, 536870912
  %v3899 = vshrl.u32 %v3898, 30
  %v3900 = vshll.u32 %v3899, 30
  %v3901 = vsub.s32 %v3897, %v3900
  %vm3902 = vcmp.lt.s32.totalorder %v3901, 0
  %v3903 = vsub.s32 0, %v3901
  %v3904 = vsel %vm3902, %v3903, %v3901
  %v3905 = vclz %v3904
  %v3906 = vsub.s32 %v3905, 2
  %vm3907 = vcmp.gt.s32.totalorder 0, %v3906
  %v3908 = vsel %vm3907, 0, %v3906
  %v3909 = vsub.s32 32, %v3908
  %v3910 = vshll.u32 %v3901, %v3908
  %v3911 = vshrl.u32 %v3893, %v3909
  %v3912 = vor.u32 %v3910, %v3911
  %v3913 = vsub.s32 4294967266, %v3908
  %v3914 = vadd.s32 %v3913, 127
  %v3915 = vshll.u32 %v3914, 23
  %v3916 = vor.u32 4788187, %v3915
  %v3917 = vand.u32 2147483647, %v3916
  %v3919 = vcvt.s32.f32 %v3912
  %v3920 = vmul.f32 %v3919, %v3917
  %v3921 = vxor.u32 %v3920, 2147483648
  %v3922 = vsel %vm3839, %v3921, %v3920
  %v3923 = vsub.s32 4, %v3899
  %v3924 = vsel %vm3839, %v3923, %v3899
  %v3925 = vsel %vm3838, %v1230, %v3922
  %v3926 = vsel %vm3838, 0, %v3924
  %v3927 = vcosq.f32.pop %v3925
  %v3928 = vsinq.f32.pop %v3925
  %vm3929 = vweird.f32 %v1230
  %v3930 = vadd.s32 %v3926, 3
  %v3931 = vand.u32 %v3930, 3
  %vm3932 = vcmp.lt.s32.totalorder %v3931, 2
  %vm3933 = vcmp.eq.s32.totalorder %v3931, 0
  %v3934 = vxor.u32 %v3928, 2147483648
  %v3935 = vsel %vm3933, %v3927, %v3934
  %vm3936 = vcmp.eq.s32.totalorder %v3931, 2
  %v3937 = vxor.u32 %v3927, 2147483648
  %v3938 = vsel %vm3936, %v3937, %v3928
  %v3939 = vsel %vm3932, %v3935, %v3938
  %v3940 = vsel %vm3929, nan, %v3939
  %v3941 = vand.u32 2147483647, %v1231
  %vm3942 = vcmp.le.f32.partialorder %v3941, 0.7853982
  %vm3943 = vcmp.lt.s32.totalorder %v1231, 0
  %v3944 = vand.u32 %v1231, 2139095040
  %v3945 = vshrl.u32 %v3944, 23
  %v3946 = vsub.s32 %v3945, 127
  %v3947 = vand.u32 2147483647, %v1231
  %v3948 = vand.u32 %v3947, 8388607
  %v3949 = vor.u32 %v3948, 8388608
  %v3950 = vsub.s32 0, %v3949
  %v3951 = vadd.s32 %v3946, 1
  %vm3952 = vcmp.gt.s32.totalorder %v3951, 0
  %v3953 = vsel %vm3952, %v3951, 0
  %v3954 = vshrl.u32 %v3953, 5
  %v3955 = vand.u32 %v3953, 31
  %v3956 = vsub.s32 32, %v3955
  %v3957 = vshrl.u32 683565275, %v3956
  %v3958 = vshll.u32 683565275, %v3955
  %v3959 = vshrl.u32 2475754826, %v3956
  %v3960 = vor.u32 %v3958, %v3959
  %v3961 = vshll.u32 2475754826, %v3955
  %v3962 = vshrl.u32 2131351028, %v3956
  %v3963 = vor.u32 %v3961, %v3962
  %v3964 = vshll.u32 2131351028, %v3955
  %v3965 = vshrl.u32 2102212464, %v3956
  %v3966 = vor.u32 %v3964, %v3965
  %v3967 = vshll.u32 2102212464, %v3955
  %v3968 = vshrl.u32 920167782, %v3956
  %v3969 = vor.u32 %v3967, %v3968
  %v3970 = vshll.u32 920167782, %v3955
  %v3971 = vshrl.u32 1326507024, %v3956
  %v3972 = vor.u32 %v3970, %v3971
  %vm3973 = vcmp.lt.s32.totalorder %v3954, 1
  %vm3974 = vcmp.lt.s32.totalorder %v3954, 2
  %vm3975 = vcmp.lt.s32.totalorder %v3954, 3
  %vm3976 = vcmp.lt.s32.totalorder %v3954, 4
  %v3977 = vsel %vm3973, %v3957, %v3960
  %v3978 = vsel %vm3976, %v3966, 2102212464
  %v3979 = vsel %vm3975, %v3963, %v3978
  %v3980 = vsel %vm3974, %v3977, %v3979
  %v3981 = vsel %vm3973, %v3960, %v3963
  %v3982 = vsel %vm3976, %v3969, 920167782
  %v3983 = vsel %vm3975, %v3966, %v3982
  %v3984 = vsel %vm3974, %v3981, %v3983
  %v3985 = vsel %vm3973, %v3963, %v3966
  %v3986 = vsel %vm3976, %v3972, 1326507024
  %v3987 = vsel %vm3975, %v3969, %v3986
  %v3988 = vsel %vm3974, %v3985, %v3987
  %v3989 = vshll.u32 %v3949, 8
  %v3990 = vmul.u32.u64.compose %v3989, %v3988
  %v3991 = vextract.low.u32 %v3990
  %v3992 = vextract.high.u32 %v3990
  %v3993 = vmul.u32.u64.compose %v3989, %v3984
  %v3994 = vextract.low.u32 %v3993
  %v3995 = vextract.high.u32 %v3993
  %v3996 = vmul.u32 %v3989, %v3980
  %v3997 = vadd.s32 %v3992, %v3994
  %vm3998 = vc.u32 %v3992, %v3994
  %v3999 = vadd.s32 %v3995, 1
  %v4000 = vsel %vm3998, %v3999, %v3995
  %v4001 = vadd.s32 %v3996, %v4000
  %v4002 = vadd.s32 %v4001, 536870912
  %v4003 = vshrl.u32 %v4002, 30
  %v4004 = vshll.u32 %v4003, 30
  %v4005 = vsub.s32 %v4001, %v4004
  %vm4006 = vcmp.lt.s32.totalorder %v4005, 0
  %v4007 = vsub.s32 0, %v4005
  %v4008 = vsel %vm4006, %v4007, %v4005
  %v4009 = vclz %v4008
  %v4010 = vsub.s32 %v4009, 2
  %vm4011 = vcmp.gt.s32.totalorder 0, %v4010
  %v4012 = vsel %vm4011, 0, %v4010
  %v4013 = vsub.s32 32, %v4012
  %v4014 = vshll.u32 %v4005, %v4012
  %v4015 = vshrl.u32 %v3997, %v4013
  %v4016 = vor.u32 %v4014, %v4015
  %v4017 = vsub.s32 4294967266, %v4012
  %v4018 = vadd.s32 %v4017, 127
  %v4019 = vshll.u32 %v4018, 23
  %v4020 = vor.u32 4788187, %v4019
  %v4021 = vand.u32 2147483647, %v4020
  %v4023 = vcvt.s32.f32 %v4016
  %v4024 = vmul.f32 %v4023, %v4021
  %v4025 = vxor.u32 %v4024, 2147483648
  %v4026 = vsel %vm3943, %v4025, %v4024
  %v4027 = vsub.s32 4, %v4003
  %v4028 = vsel %vm3943, %v4027, %v4003
  %v4029 = vsel %vm3942, %v1231, %v4026
  %v4030 = vsel %vm3942, 0, %v4028
  %v4031 = vcosq.f32.pop %v4029
  %v4032 = vsinq.f32.pop %v4029
  %vm4033 = vweird.f32 %v1231
  %v4034 = vadd.s32 %v4030, 3
  %v4035 = vand.u32 %v4034, 3
  %vm4036 = vcmp.lt.s32.totalorder %v4035, 2
  %vm4037 = vcmp.eq.s32.totalorder %v4035, 0
  %v4038 = vxor.u32 %v4032, 2147483648
  %v4039 = vsel %vm4037, %v4031, %v4038
  %vm4040 = vcmp.eq.s32.totalorder %v4035, 2
  %v4041 = vxor.u32 %v4031, 2147483648
  %v4042 = vsel %vm4040, %v4041, %v4032
  %v4043 = vsel %vm4036, %v4039, %v4042
  %v4044 = vsel %vm4033, nan, %v4043
  %v4045 = vand.u32 2147483647, %v1232
  %vm4046 = vcmp.le.f32.partialorder %v4045, 0.7853982
  %vm4047 = vcmp.lt.s32.totalorder %v1232, 0
  %v4048 = vand.u32 %v1232, 2139095040
  %v4049 = vshrl.u32 %v4048, 23
  %v4050 = vsub.s32 %v4049, 127
  %v4051 = vand.u32 2147483647, %v1232
  %v4052 = vand.u32 %v4051, 8388607
  %v4053 = vor.u32 %v4052, 8388608
  %v4054 = vsub.s32 0, %v4053
  %v4055 = vadd.s32 %v4050, 1
  %vm4056 = vcmp.gt.s32.totalorder %v4055, 0
  %v4057 = vsel %vm4056, %v4055, 0
  %v4058 = vshrl.u32 %v4057, 5
  %v4059 = vand.u32 %v4057, 31
  %v4060 = vsub.s32 32, %v4059
  %v4061 = vshrl.u32 683565275, %v4060
  %v4062 = vshll.u32 683565275, %v4059
  %v4063 = vshrl.u32 2475754826, %v4060
  %v4064 = vor.u32 %v4062, %v4063
  %v4065 = vshll.u32 2475754826, %v4059
  %v4066 = vshrl.u32 2131351028, %v4060
  %v4067 = vor.u32 %v4065, %v4066
  %v4068 = vshll.u32 2131351028, %v4059
  %v4069 = vshrl.u32 2102212464, %v4060
  %v4070 = vor.u32 %v4068, %v4069
  %v4071 = vshll.u32 2102212464, %v4059
  %v4072 = vshrl.u32 920167782, %v4060
  %v4073 = vor.u32 %v4071, %v4072
  %v4074 = vshll.u32 920167782, %v4059
  %v4075 = vshrl.u32 1326507024, %v4060
  %v4076 = vor.u32 %v4074, %v4075
  %vm4077 = vcmp.lt.s32.totalorder %v4058, 1
  %vm4078 = vcmp.lt.s32.totalorder %v4058, 2
  %vm4079 = vcmp.lt.s32.totalorder %v4058, 3
  %vm4080 = vcmp.lt.s32.totalorder %v4058, 4
  %v4081 = vsel %vm4077, %v4061, %v4064
  %v4082 = vsel %vm4080, %v4070, 2102212464
  %v4083 = vsel %vm4079, %v4067, %v4082
  %v4084 = vsel %vm4078, %v4081, %v4083
  %v4085 = vsel %vm4077, %v4064, %v4067
  %v4086 = vsel %vm4080, %v4073, 920167782
  %v4087 = vsel %vm4079, %v4070, %v4086
  %v4088 = vsel %vm4078, %v4085, %v4087
  %v4089 = vsel %vm4077, %v4067, %v4070
  %v4090 = vsel %vm4080, %v4076, 1326507024
  %v4091 = vsel %vm4079, %v4073, %v4090
  %v4092 = vsel %vm4078, %v4089, %v4091
  %v4093 = vshll.u32 %v4053, 8
  %v4094 = vmul.u32.u64.compose %v4093, %v4092
  %v4095 = vextract.low.u32 %v4094
  %v4096 = vextract.high.u32 %v4094
  %v4097 = vmul.u32.u64.compose %v4093, %v4088
  %v4098 = vextract.low.u32 %v4097
  %v4099 = vextract.high.u32 %v4097
  %v4100 = vmul.u32 %v4093, %v4084
  %v4101 = vadd.s32 %v4096, %v4098
  %vm4102 = vc.u32 %v4096, %v4098
  %v4103 = vadd.s32 %v4099, 1
  %v4104 = vsel %vm4102, %v4103, %v4099
  %v4105 = vadd.s32 %v4100, %v4104
  %v4106 = vadd.s32 %v4105, 536870912
  %v4107 = vshrl.u32 %v4106, 30
  %v4108 = vshll.u32 %v4107, 30
  %v4109 = vsub.s32 %v4105, %v4108
  %vm4110 = vcmp.lt.s32.totalorder %v4109, 0
  %v4111 = vsub.s32 0, %v4109
  %v4112 = vsel %vm4110, %v4111, %v4109
  %v4113 = vclz %v4112
  %v4114 = vsub.s32 %v4113, 2
  %vm4115 = vcmp.gt.s32.totalorder 0, %v4114
  %v4116 = vsel %vm4115, 0, %v4114
  %v4117 = vsub.s32 32, %v4116
  %v4118 = vshll.u32 %v4109, %v4116
  %v4119 = vshrl.u32 %v4101, %v4117
  %v4120 = vor.u32 %v4118, %v4119
  %v4121 = vsub.s32 4294967266, %v4116
  %v4122 = vadd.s32 %v4121, 127
  %v4123 = vshll.u32 %v4122, 23
  %v4124 = vor.u32 4788187, %v4123
  %v4125 = vand.u32 2147483647, %v4124
  %v4127 = vcvt.s32.f32 %v4120
  %v4128 = vmul.f32 %v4127, %v4125
  %v4129 = vxor.u32 %v4128, 2147483648
  %v4130 = vsel %vm4047, %v4129, %v4128
  %v4131 = vsub.s32 4, %v4107
  %v4132 = vsel %vm4047, %v4131, %v4107
  %v4133 = vsel %vm4046, %v1232, %v4130
  %v4134 = vsel %vm4046, 0, %v4132
  %v4135 = vcosq.f32.pop %v4133
  %v4136 = vsinq.f32.pop %v4133
  %vm4137 = vweird.f32 %v1232
  %v4138 = vadd.s32 %v4134, 3
  %v4139 = vand.u32 %v4138, 3
  %vm4140 = vcmp.lt.s32.totalorder %v4139, 2
  %vm4141 = vcmp.eq.s32.totalorder %v4139, 0
  %v4142 = vxor.u32 %v4136, 2147483648
  %v4143 = vsel %vm4141, %v4135, %v4142
  %vm4144 = vcmp.eq.s32.totalorder %v4139, 2
  %v4145 = vxor.u32 %v4135, 2147483648
  %v4146 = vsel %vm4144, %v4145, %v4136
  %v4147 = vsel %vm4140, %v4143, %v4146
  %v4148 = vsel %vm4137, nan, %v4147
  %v4149 = vand.u32 2147483647, %v1233
  %vm4150 = vcmp.le.f32.partialorder %v4149, 0.7853982
  %vm4151 = vcmp.lt.s32.totalorder %v1233, 0
  %v4152 = vand.u32 %v1233, 2139095040
  %v4153 = vshrl.u32 %v4152, 23
  %v4154 = vsub.s32 %v4153, 127
  %v4155 = vand.u32 2147483647, %v1233
  %v4156 = vand.u32 %v4155, 8388607
  %v4157 = vor.u32 %v4156, 8388608
  %v4158 = vsub.s32 0, %v4157
  %v4159 = vadd.s32 %v4154, 1
  %vm4160 = vcmp.gt.s32.totalorder %v4159, 0
  %v4161 = vsel %vm4160, %v4159, 0
  %v4162 = vshrl.u32 %v4161, 5
  %v4163 = vand.u32 %v4161, 31
  %v4164 = vsub.s32 32, %v4163
  %v4165 = vshrl.u32 683565275, %v4164
  %v4166 = vshll.u32 683565275, %v4163
  %v4167 = vshrl.u32 2475754826, %v4164
  %v4168 = vor.u32 %v4166, %v4167
  %v4169 = vshll.u32 2475754826, %v4163
  %v4170 = vshrl.u32 2131351028, %v4164
  %v4171 = vor.u32 %v4169, %v4170
  %v4172 = vshll.u32 2131351028, %v4163
  %v4173 = vshrl.u32 2102212464, %v4164
  %v4174 = vor.u32 %v4172, %v4173
  %v4175 = vshll.u32 2102212464, %v4163
  %v4176 = vshrl.u32 920167782, %v4164
  %v4177 = vor.u32 %v4175, %v4176
  %v4178 = vshll.u32 920167782, %v4163
  %v4179 = vshrl.u32 1326507024, %v4164
  %v4180 = vor.u32 %v4178, %v4179
  %vm4181 = vcmp.lt.s32.totalorder %v4162, 1
  %vm4182 = vcmp.lt.s32.totalorder %v4162, 2
  %vm4183 = vcmp.lt.s32.totalorder %v4162, 3
  %vm4184 = vcmp.lt.s32.totalorder %v4162, 4
  %v4185 = vsel %vm4181, %v4165, %v4168
  %v4186 = vsel %vm4184, %v4174, 2102212464
  %v4187 = vsel %vm4183, %v4171, %v4186
  %v4188 = vsel %vm4182, %v4185, %v4187
  %v4189 = vsel %vm4181, %v4168, %v4171
  %v4190 = vsel %vm4184, %v4177, 920167782
  %v4191 = vsel %vm4183, %v4174, %v4190
  %v4192 = vsel %vm4182, %v4189, %v4191
  %v4193 = vsel %vm4181, %v4171, %v4174
  %v4194 = vsel %vm4184, %v4180, 1326507024
  %v4195 = vsel %vm4183, %v4177, %v4194
  %v4196 = vsel %vm4182, %v4193, %v4195
  %v4197 = vshll.u32 %v4157, 8
  %v4198 = vmul.u32.u64.compose %v4197, %v4196
  %v4199 = vextract.low.u32 %v4198
  %v4200 = vextract.high.u32 %v4198
  %v4201 = vmul.u32.u64.compose %v4197, %v4192
  %v4202 = vextract.low.u32 %v4201
  %v4203 = vextract.high.u32 %v4201
  %v4204 = vmul.u32 %v4197, %v4188
  %v4205 = vadd.s32 %v4200, %v4202
  %vm4206 = vc.u32 %v4200, %v4202
  %v4207 = vadd.s32 %v4203, 1
  %v4208 = vsel %vm4206, %v4207, %v4203
  %v4209 = vadd.s32 %v4204, %v4208
  %v4210 = vadd.s32 %v4209, 536870912
  %v4211 = vshrl.u32 %v4210, 30
  %v4212 = vshll.u32 %v4211, 30
  %v4213 = vsub.s32 %v4209, %v4212
  %vm4214 = vcmp.lt.s32.totalorder %v4213, 0
  %v4215 = vsub.s32 0, %v4213
  %v4216 = vsel %vm4214, %v4215, %v4213
  %v4217 = vclz %v4216
  %v4218 = vsub.s32 %v4217, 2
  %vm4219 = vcmp.gt.s32.totalorder 0, %v4218
  %v4220 = vsel %vm4219, 0, %v4218
  %v4221 = vsub.s32 32, %v4220
  %v4222 = vshll.u32 %v4213, %v4220
  %v4223 = vshrl.u32 %v4205, %v4221
  %v4224 = vor.u32 %v4222, %v4223
  %v4225 = vsub.s32 4294967266, %v4220
  %v4226 = vadd.s32 %v4225, 127
  %v4227 = vshll.u32 %v4226, 23
  %v4228 = vor.u32 4788187, %v4227
  %v4229 = vand.u32 2147483647, %v4228
  %v4231 = vcvt.s32.f32 %v4224
  %v4232 = vmul.f32 %v4231, %v4229
  %v4233 = vxor.u32 %v4232, 2147483648
  %v4234 = vsel %vm4151, %v4233, %v4232
  %v4235 = vsub.s32 4, %v4211
  %v4236 = vsel %vm4151, %v4235, %v4211
  %v4237 = vsel %vm4150, %v1233, %v4234
  %v4238 = vsel %vm4150, 0, %v4236
  %v4239 = vcosq.f32.pop %v4237
  %v4240 = vsinq.f32.pop %v4237
  %vm4241 = vweird.f32 %v1233
  %v4242 = vadd.s32 %v4238, 3
  %v4243 = vand.u32 %v4242, 3
  %vm4244 = vcmp.lt.s32.totalorder %v4243, 2
  %vm4245 = vcmp.eq.s32.totalorder %v4243, 0
  %v4246 = vxor.u32 %v4240, 2147483648
  %v4247 = vsel %vm4245, %v4239, %v4246
  %vm4248 = vcmp.eq.s32.totalorder %v4243, 2
  %v4249 = vxor.u32 %v4239, 2147483648
  %v4250 = vsel %vm4248, %v4249, %v4240
  %v4251 = vsel %vm4244, %v4247, %v4250
  %v4252 = vsel %vm4241, nan, %v4251
  %v4253 = vand.u32 2147483647, %v1234
  %vm4254 = vcmp.le.f32.partialorder %v4253, 0.7853982
  %vm4255 = vcmp.lt.s32.totalorder %v1234, 0
  %v4256 = vand.u32 %v1234, 2139095040
  %v4257 = vshrl.u32 %v4256, 23
  %v4258 = vsub.s32 %v4257, 127
  %v4259 = vand.u32 2147483647, %v1234
  %v4260 = vand.u32 %v4259, 8388607
  %v4261 = vor.u32 %v4260, 8388608
  %v4262 = vsub.s32 0, %v4261
  %v4263 = vadd.s32 %v4258, 1
  %vm4264 = vcmp.gt.s32.totalorder %v4263, 0
  %v4265 = vsel %vm4264, %v4263, 0
  %v4266 = vshrl.u32 %v4265, 5
  %v4267 = vand.u32 %v4265, 31
  %v4268 = vsub.s32 32, %v4267
  %v4269 = vshrl.u32 683565275, %v4268
  %v4270 = vshll.u32 683565275, %v4267
  %v4271 = vshrl.u32 2475754826, %v4268
  %v4272 = vor.u32 %v4270, %v4271
  %v4273 = vshll.u32 2475754826, %v4267
  %v4274 = vshrl.u32 2131351028, %v4268
  %v4275 = vor.u32 %v4273, %v4274
  %v4276 = vshll.u32 2131351028, %v4267
  %v4277 = vshrl.u32 2102212464, %v4268
  %v4278 = vor.u32 %v4276, %v4277
  %v4279 = vshll.u32 2102212464, %v4267
  %v4280 = vshrl.u32 920167782, %v4268
  %v4281 = vor.u32 %v4279, %v4280
  %v4282 = vshll.u32 920167782, %v4267
  %v4283 = vshrl.u32 1326507024, %v4268
  %v4284 = vor.u32 %v4282, %v4283
  %vm4285 = vcmp.lt.s32.totalorder %v4266, 1
  %vm4286 = vcmp.lt.s32.totalorder %v4266, 2
  %vm4287 = vcmp.lt.s32.totalorder %v4266, 3
  %vm4288 = vcmp.lt.s32.totalorder %v4266, 4
  %v4289 = vsel %vm4285, %v4269, %v4272
  %v4290 = vsel %vm4288, %v4278, 2102212464
  %v4291 = vsel %vm4287, %v4275, %v4290
  %v4292 = vsel %vm4286, %v4289, %v4291
  %v4293 = vsel %vm4285, %v4272, %v4275
  %v4294 = vsel %vm4288, %v4281, 920167782
  %v4295 = vsel %vm4287, %v4278, %v4294
  %v4296 = vsel %vm4286, %v4293, %v4295
  %v4297 = vsel %vm4285, %v4275, %v4278
  %v4298 = vsel %vm4288, %v4284, 1326507024
  %v4299 = vsel %vm4287, %v4281, %v4298
  %v4300 = vsel %vm4286, %v4297, %v4299
  %v4301 = vshll.u32 %v4261, 8
  %v4302 = vmul.u32.u64.compose %v4301, %v4300
  %v4303 = vextract.low.u32 %v4302
  %v4304 = vextract.high.u32 %v4302
  %v4305 = vmul.u32.u64.compose %v4301, %v4296
  %v4306 = vextract.low.u32 %v4305
  %v4307 = vextract.high.u32 %v4305
  %v4308 = vmul.u32 %v4301, %v4292
  %v4309 = vadd.s32 %v4304, %v4306
  %vm4310 = vc.u32 %v4304, %v4306
  %v4311 = vadd.s32 %v4307, 1
  %v4312 = vsel %vm4310, %v4311, %v4307
  %v4313 = vadd.s32 %v4308, %v4312
  %v4314 = vadd.s32 %v4313, 536870912
  %v4315 = vshrl.u32 %v4314, 30
  %v4316 = vshll.u32 %v4315, 30
  %v4317 = vsub.s32 %v4313, %v4316
  %vm4318 = vcmp.lt.s32.totalorder %v4317, 0
  %v4319 = vsub.s32 0, %v4317
  %v4320 = vsel %vm4318, %v4319, %v4317
  %v4321 = vclz %v4320
  %v4322 = vsub.s32 %v4321, 2
  %vm4323 = vcmp.gt.s32.totalorder 0, %v4322
  %v4324 = vsel %vm4323, 0, %v4322
  %v4325 = vsub.s32 32, %v4324
  %v4326 = vshll.u32 %v4317, %v4324
  %v4327 = vshrl.u32 %v4309, %v4325
  %v4328 = vor.u32 %v4326, %v4327
  %v4329 = vsub.s32 4294967266, %v4324
  %v4330 = vadd.s32 %v4329, 127
  %v4331 = vshll.u32 %v4330, 23
  %v4332 = vor.u32 4788187, %v4331
  %v4333 = vand.u32 2147483647, %v4332
  %v4335 = vcvt.s32.f32 %v4328
  %v4336 = vmul.f32 %v4335, %v4333
  %v4337 = vxor.u32 %v4336, 2147483648
  %v4338 = vsel %vm4255, %v4337, %v4336
  %v4339 = vsub.s32 4, %v4315
  %v4340 = vsel %vm4255, %v4339, %v4315
  %v4341 = vsel %vm4254, %v1234, %v4338
  %v4342 = vsel %vm4254, 0, %v4340
  %v4343 = vcosq.f32.pop %v4341
  %v4344 = vsinq.f32.pop %v4341
  %vm4345 = vweird.f32 %v1234
  %v4346 = vadd.s32 %v4342, 3
  %v4347 = vand.u32 %v4346, 3
  %vm4348 = vcmp.lt.s32.totalorder %v4347, 2
  %vm4349 = vcmp.eq.s32.totalorder %v4347, 0
  %v4350 = vxor.u32 %v4344, 2147483648
  %v4351 = vsel %vm4349, %v4343, %v4350
  %vm4352 = vcmp.eq.s32.totalorder %v4347, 2
  %v4353 = vxor.u32 %v4343, 2147483648
  %v4354 = vsel %vm4352, %v4353, %v4344
  %v4355 = vsel %vm4348, %v4351, %v4354
  %v4356 = vsel %vm4345, nan, %v4355
  %v4357 = vand.u32 2147483647, %v1235
  %vm4358 = vcmp.le.f32.partialorder %v4357, 0.7853982
  %vm4359 = vcmp.lt.s32.totalorder %v1235, 0
  %v4360 = vand.u32 %v1235, 2139095040
  %v4361 = vshrl.u32 %v4360, 23
  %v4362 = vsub.s32 %v4361, 127
  %v4363 = vand.u32 2147483647, %v1235
  %v4364 = vand.u32 %v4363, 8388607
  %v4365 = vor.u32 %v4364, 8388608
  %v4366 = vsub.s32 0, %v4365
  %v4367 = vadd.s32 %v4362, 1
  %vm4368 = vcmp.gt.s32.totalorder %v4367, 0
  %v4369 = vsel %vm4368, %v4367, 0
  %v4370 = vshrl.u32 %v4369, 5
  %v4371 = vand.u32 %v4369, 31
  %v4372 = vsub.s32 32, %v4371
  %v4373 = vshrl.u32 683565275, %v4372
  %v4374 = vshll.u32 683565275, %v4371
  %v4375 = vshrl.u32 2475754826, %v4372
  %v4376 = vor.u32 %v4374, %v4375
  %v4377 = vshll.u32 2475754826, %v4371
  %v4378 = vshrl.u32 2131351028, %v4372
  %v4379 = vor.u32 %v4377, %v4378
  %v4380 = vshll.u32 2131351028, %v4371
  %v4381 = vshrl.u32 2102212464, %v4372
  %v4382 = vor.u32 %v4380, %v4381
  %v4383 = vshll.u32 2102212464, %v4371
  %v4384 = vshrl.u32 920167782, %v4372
  %v4385 = vor.u32 %v4383, %v4384
  %v4386 = vshll.u32 920167782, %v4371
  %v4387 = vshrl.u32 1326507024, %v4372
  %v4388 = vor.u32 %v4386, %v4387
  %vm4389 = vcmp.lt.s32.totalorder %v4370, 1
  %vm4390 = vcmp.lt.s32.totalorder %v4370, 2
  %vm4391 = vcmp.lt.s32.totalorder %v4370, 3
  %vm4392 = vcmp.lt.s32.totalorder %v4370, 4
  %v4393 = vsel %vm4389, %v4373, %v4376
  %v4394 = vsel %vm4392, %v4382, 2102212464
  %v4395 = vsel %vm4391, %v4379, %v4394
  %v4396 = vsel %vm4390, %v4393, %v4395
  %v4397 = vsel %vm4389, %v4376, %v4379
  %v4398 = vsel %vm4392, %v4385, 920167782
  %v4399 = vsel %vm4391, %v4382, %v4398
  %v4400 = vsel %vm4390, %v4397, %v4399
  %v4401 = vsel %vm4389, %v4379, %v4382
  %v4402 = vsel %vm4392, %v4388, 1326507024
  %v4403 = vsel %vm4391, %v4385, %v4402
  %v4404 = vsel %vm4390, %v4401, %v4403
  %v4405 = vshll.u32 %v4365, 8
  %v4406 = vmul.u32.u64.compose %v4405, %v4404
  %v4407 = vextract.low.u32 %v4406
  %v4408 = vextract.high.u32 %v4406
  %v4409 = vmul.u32.u64.compose %v4405, %v4400
  %v4410 = vextract.low.u32 %v4409
  %v4411 = vextract.high.u32 %v4409
  %v4412 = vmul.u32 %v4405, %v4396
  %v4413 = vadd.s32 %v4408, %v4410
  %vm4414 = vc.u32 %v4408, %v4410
  %v4415 = vadd.s32 %v4411, 1
  %v4416 = vsel %vm4414, %v4415, %v4411
  %v4417 = vadd.s32 %v4412, %v4416
  %v4418 = vadd.s32 %v4417, 536870912
  %v4419 = vshrl.u32 %v4418, 30
  %v4420 = vshll.u32 %v4419, 30
  %v4421 = vsub.s32 %v4417, %v4420
  %vm4422 = vcmp.lt.s32.totalorder %v4421, 0
  %v4423 = vsub.s32 0, %v4421
  %v4424 = vsel %vm4422, %v4423, %v4421
  %v4425 = vclz %v4424
  %v4426 = vsub.s32 %v4425, 2
  %vm4427 = vcmp.gt.s32.totalorder 0, %v4426
  %v4428 = vsel %vm4427, 0, %v4426
  %v4429 = vsub.s32 32, %v4428
  %v4430 = vshll.u32 %v4421, %v4428
  %v4431 = vshrl.u32 %v4413, %v4429
  %v4432 = vor.u32 %v4430, %v4431
  %v4433 = vsub.s32 4294967266, %v4428
  %v4434 = vadd.s32 %v4433, 127
  %v4435 = vshll.u32 %v4434, 23
  %v4436 = vor.u32 4788187, %v4435
  %v4437 = vand.u32 2147483647, %v4436
  %v4439 = vcvt.s32.f32 %v4432
  %v4440 = vmul.f32 %v4439, %v4437
  %v4441 = vxor.u32 %v4440, 2147483648
  %v4442 = vsel %vm4359, %v4441, %v4440
  %v4443 = vsub.s32 4, %v4419
  %v4444 = vsel %vm4359, %v4443, %v4419
  %v4445 = vsel %vm4358, %v1235, %v4442
  %v4446 = vsel %vm4358, 0, %v4444
  %v4447 = vcosq.f32.pop %v4445
  %v4448 = vsinq.f32.pop %v4445
  %vm4449 = vweird.f32 %v1235
  %v4450 = vadd.s32 %v4446, 3
  %v4451 = vand.u32 %v4450, 3
  %vm4452 = vcmp.lt.s32.totalorder %v4451, 2
  %vm4453 = vcmp.eq.s32.totalorder %v4451, 0
  %v4454 = vxor.u32 %v4448, 2147483648
  %v4455 = vsel %vm4453, %v4447, %v4454
  %vm4456 = vcmp.eq.s32.totalorder %v4451, 2
  %v4457 = vxor.u32 %v4447, 2147483648
  %v4458 = vsel %vm4456, %v4457, %v4448
  %v4459 = vsel %vm4452, %v4455, %v4458
  %v4460 = vsel %vm4449, nan, %v4459
  %v4461 = vand.u32 2147483647, %v1236
  %vm4462 = vcmp.le.f32.partialorder %v4461, 0.7853982
  %vm4463 = vcmp.lt.s32.totalorder %v1236, 0
  %v4464 = vand.u32 %v1236, 2139095040
  %v4465 = vshrl.u32 %v4464, 23
  %v4466 = vsub.s32 %v4465, 127
  %v4467 = vand.u32 2147483647, %v1236
  %v4468 = vand.u32 %v4467, 8388607
  %v4469 = vor.u32 %v4468, 8388608
  %v4470 = vsub.s32 0, %v4469
  %v4471 = vadd.s32 %v4466, 1
  %vm4472 = vcmp.gt.s32.totalorder %v4471, 0
  %v4473 = vsel %vm4472, %v4471, 0
  %v4474 = vshrl.u32 %v4473, 5
  %v4475 = vand.u32 %v4473, 31
  %v4476 = vsub.s32 32, %v4475
  %v4477 = vshrl.u32 683565275, %v4476
  %v4478 = vshll.u32 683565275, %v4475
  %v4479 = vshrl.u32 2475754826, %v4476
  %v4480 = vor.u32 %v4478, %v4479
  %v4481 = vshll.u32 2475754826, %v4475
  %v4482 = vshrl.u32 2131351028, %v4476
  %v4483 = vor.u32 %v4481, %v4482
  %v4484 = vshll.u32 2131351028, %v4475
  %v4485 = vshrl.u32 2102212464, %v4476
  %v4486 = vor.u32 %v4484, %v4485
  %v4487 = vshll.u32 2102212464, %v4475
  %v4488 = vshrl.u32 920167782, %v4476
  %v4489 = vor.u32 %v4487, %v4488
  %v4490 = vshll.u32 920167782, %v4475
  %v4491 = vshrl.u32 1326507024, %v4476
  %v4492 = vor.u32 %v4490, %v4491
  %vm4493 = vcmp.lt.s32.totalorder %v4474, 1
  %vm4494 = vcmp.lt.s32.totalorder %v4474, 2
  %vm4495 = vcmp.lt.s32.totalorder %v4474, 3
  %vm4496 = vcmp.lt.s32.totalorder %v4474, 4
  %v4497 = vsel %vm4493, %v4477, %v4480
  %v4498 = vsel %vm4496, %v4486, 2102212464
  %v4499 = vsel %vm4495, %v4483, %v4498
  %v4500 = vsel %vm4494, %v4497, %v4499
  %v4501 = vsel %vm4493, %v4480, %v4483
  %v4502 = vsel %vm4496, %v4489, 920167782
  %v4503 = vsel %vm4495, %v4486, %v4502
  %v4504 = vsel %vm4494, %v4501, %v4503
  %v4505 = vsel %vm4493, %v4483, %v4486
  %v4506 = vsel %vm4496, %v4492, 1326507024
  %v4507 = vsel %vm4495, %v4489, %v4506
  %v4508 = vsel %vm4494, %v4505, %v4507
  %v4509 = vshll.u32 %v4469, 8
  %v4510 = vmul.u32.u64.compose %v4509, %v4508
  %v4511 = vextract.low.u32 %v4510
  %v4512 = vextract.high.u32 %v4510
  %v4513 = vmul.u32.u64.compose %v4509, %v4504
  %v4514 = vextract.low.u32 %v4513
  %v4515 = vextract.high.u32 %v4513
  %v4516 = vmul.u32 %v4509, %v4500
  %v4517 = vadd.s32 %v4512, %v4514
  %vm4518 = vc.u32 %v4512, %v4514
  %v4519 = vadd.s32 %v4515, 1
  %v4520 = vsel %vm4518, %v4519, %v4515
  %v4521 = vadd.s32 %v4516, %v4520
  %v4522 = vadd.s32 %v4521, 536870912
  %v4523 = vshrl.u32 %v4522, 30
  %v4524 = vshll.u32 %v4523, 30
  %v4525 = vsub.s32 %v4521, %v4524
  %vm4526 = vcmp.lt.s32.totalorder %v4525, 0
  %v4527 = vsub.s32 0, %v4525
  %v4528 = vsel %vm4526, %v4527, %v4525
  %v4529 = vclz %v4528
  %v4530 = vsub.s32 %v4529, 2
  %vm4531 = vcmp.gt.s32.totalorder 0, %v4530
  %v4532 = vsel %vm4531, 0, %v4530
  %v4533 = vsub.s32 32, %v4532
  %v4534 = vshll.u32 %v4525, %v4532
  %v4535 = vshrl.u32 %v4517, %v4533
  %v4536 = vor.u32 %v4534, %v4535
  %v4537 = vsub.s32 4294967266, %v4532
  %v4538 = vadd.s32 %v4537, 127
  %v4539 = vshll.u32 %v4538, 23
  %v4540 = vor.u32 4788187, %v4539
  %v4541 = vand.u32 2147483647, %v4540
  %v4543 = vcvt.s32.f32 %v4536
  %v4544 = vmul.f32 %v4543, %v4541
  %v4545 = vxor.u32 %v4544, 2147483648
  %v4546 = vsel %vm4463, %v4545, %v4544
  %v4547 = vsub.s32 4, %v4523
  %v4548 = vsel %vm4463, %v4547, %v4523
  %v4549 = vsel %vm4462, %v1236, %v4546
  %v4550 = vsel %vm4462, 0, %v4548
  %v4551 = vcosq.f32.pop %v4549
  %v4552 = vsinq.f32.pop %v4549
  %vm4553 = vweird.f32 %v1236
  %v4554 = vadd.s32 %v4550, 3
  %v4555 = vand.u32 %v4554, 3
  %vm4556 = vcmp.lt.s32.totalorder %v4555, 2
  %vm4557 = vcmp.eq.s32.totalorder %v4555, 0
  %v4558 = vxor.u32 %v4552, 2147483648
  %v4559 = vsel %vm4557, %v4551, %v4558
  %vm4560 = vcmp.eq.s32.totalorder %v4555, 2
  %v4561 = vxor.u32 %v4551, 2147483648
  %v4562 = vsel %vm4560, %v4561, %v4552
  %v4563 = vsel %vm4556, %v4559, %v4562
  %v4564 = vsel %vm4553, nan, %v4563
  %v4565 = vand.u32 2147483647, %v1205
  %vm4566 = vcmp.le.f32.partialorder %v4565, 0.7853982
  %vm4567 = vcmp.lt.s32.totalorder %v1205, 0
  %v4568 = vand.u32 %v1205, 2139095040
  %v4569 = vshrl.u32 %v4568, 23
  %v4570 = vsub.s32 %v4569, 127
  %v4571 = vand.u32 2147483647, %v1205
  %v4572 = vand.u32 %v4571, 8388607
  %v4573 = vor.u32 %v4572, 8388608
  %v4574 = vsub.s32 0, %v4573
  %v4575 = vadd.s32 %v4570, 1
  %vm4576 = vcmp.gt.s32.totalorder %v4575, 0
  %v4577 = vsel %vm4576, %v4575, 0
  %v4578 = vshrl.u32 %v4577, 5
  %v4579 = vand.u32 %v4577, 31
  %v4580 = vsub.s32 32, %v4579
  %v4581 = vshrl.u32 683565275, %v4580
  %v4582 = vshll.u32 683565275, %v4579
  %v4583 = vshrl.u32 2475754826, %v4580
  %v4584 = vor.u32 %v4582, %v4583
  %v4585 = vshll.u32 2475754826, %v4579
  %v4586 = vshrl.u32 2131351028, %v4580
  %v4587 = vor.u32 %v4585, %v4586
  %v4588 = vshll.u32 2131351028, %v4579
  %v4589 = vshrl.u32 2102212464, %v4580
  %v4590 = vor.u32 %v4588, %v4589
  %v4591 = vshll.u32 2102212464, %v4579
  %v4592 = vshrl.u32 920167782, %v4580
  %v4593 = vor.u32 %v4591, %v4592
  %v4594 = vshll.u32 920167782, %v4579
  %v4595 = vshrl.u32 1326507024, %v4580
  %v4596 = vor.u32 %v4594, %v4595
  %vm4597 = vcmp.lt.s32.totalorder %v4578, 1
  %vm4598 = vcmp.lt.s32.totalorder %v4578, 2
  %vm4599 = vcmp.lt.s32.totalorder %v4578, 3
  %vm4600 = vcmp.lt.s32.totalorder %v4578, 4
  %v4601 = vsel %vm4597, %v4581, %v4584
  %v4602 = vsel %vm4600, %v4590, 2102212464
  %v4603 = vsel %vm4599, %v4587, %v4602
  %v4604 = vsel %vm4598, %v4601, %v4603
  %v4605 = vsel %vm4597, %v4584, %v4587
  %v4606 = vsel %vm4600, %v4593, 920167782
  %v4607 = vsel %vm4599, %v4590, %v4606
  %v4608 = vsel %vm4598, %v4605, %v4607
  %v4609 = vsel %vm4597, %v4587, %v4590
  %v4610 = vsel %vm4600, %v4596, 1326507024
  %v4611 = vsel %vm4599, %v4593, %v4610
  %v4612 = vsel %vm4598, %v4609, %v4611
  %v4613 = vshll.u32 %v4573, 8
  %v4614 = vmul.u32.u64.compose %v4613, %v4612
  %v4615 = vextract.low.u32 %v4614
  %v4616 = vextract.high.u32 %v4614
  %v4617 = vmul.u32.u64.compose %v4613, %v4608
  %v4618 = vextract.low.u32 %v4617
  %v4619 = vextract.high.u32 %v4617
  %v4620 = vmul.u32 %v4613, %v4604
  %v4621 = vadd.s32 %v4616, %v4618
  %vm4622 = vc.u32 %v4616, %v4618
  %v4623 = vadd.s32 %v4619, 1
  %v4624 = vsel %vm4622, %v4623, %v4619
  %v4625 = vadd.s32 %v4620, %v4624
  %v4626 = vadd.s32 %v4625, 536870912
  %v4627 = vshrl.u32 %v4626, 30
  %v4628 = vshll.u32 %v4627, 30
  %v4629 = vsub.s32 %v4625, %v4628
  %vm4630 = vcmp.lt.s32.totalorder %v4629, 0
  %v4631 = vsub.s32 0, %v4629
  %v4632 = vsel %vm4630, %v4631, %v4629
  %v4633 = vclz %v4632
  %v4634 = vsub.s32 %v4633, 2
  %vm4635 = vcmp.gt.s32.totalorder 0, %v4634
  %v4636 = vsel %vm4635, 0, %v4634
  %v4637 = vsub.s32 32, %v4636
  %v4638 = vshll.u32 %v4629, %v4636
  %v4639 = vshrl.u32 %v4621, %v4637
  %v4640 = vor.u32 %v4638, %v4639
  %v4641 = vsub.s32 4294967266, %v4636
  %v4642 = vadd.s32 %v4641, 127
  %v4643 = vshll.u32 %v4642, 23
  %v4644 = vor.u32 4788187, %v4643
  %v4645 = vand.u32 2147483647, %v4644
  %v4647 = vcvt.s32.f32 %v4640
  %v4648 = vmul.f32 %v4647, %v4645
  %v4649 = vxor.u32 %v4648, 2147483648
  %v4650 = vsel %vm4567, %v4649, %v4648
  %v4651 = vsub.s32 4, %v4627
  %v4652 = vsel %vm4567, %v4651, %v4627
  %v4653 = vsel %vm4566, %v1205, %v4650
  %v4654 = vsel %vm4566, 0, %v4652
  %v4655 = vcosq.f32.pop %v4653
  %v4656 = vsinq.f32.pop %v4653
  %vm4657 = vweird.f32 %v1205
  %v4658 = vand.u32 %v4654, 3
  %vm4659 = vcmp.lt.s32.totalorder %v4658, 2
  %vm4660 = vcmp.eq.s32.totalorder %v4658, 0
  %v4661 = vxor.u32 %v4656, 2147483648
  %v4662 = vsel %vm4660, %v4655, %v4661
  %vm4663 = vcmp.eq.s32.totalorder %v4658, 2
  %v4664 = vxor.u32 %v4655, 2147483648
  %v4665 = vsel %vm4663, %v4664, %v4656
  %v4666 = vsel %vm4659, %v4662, %v4665
  %v4667 = vsel %vm4657, nan, %v4666
  %v4668 = vand.u32 2147483647, %v1206
  %vm4669 = vcmp.le.f32.partialorder %v4668, 0.7853982
  %vm4670 = vcmp.lt.s32.totalorder %v1206, 0
  %v4671 = vand.u32 %v1206, 2139095040
  %v4672 = vshrl.u32 %v4671, 23
  %v4673 = vsub.s32 %v4672, 127
  %v4674 = vand.u32 2147483647, %v1206
  %v4675 = vand.u32 %v4674, 8388607
  %v4676 = vor.u32 %v4675, 8388608
  %v4677 = vsub.s32 0, %v4676
  %v4678 = vadd.s32 %v4673, 1
  %vm4679 = vcmp.gt.s32.totalorder %v4678, 0
  %v4680 = vsel %vm4679, %v4678, 0
  %v4681 = vshrl.u32 %v4680, 5
  %v4682 = vand.u32 %v4680, 31
  %v4683 = vsub.s32 32, %v4682
  %v4684 = vshrl.u32 683565275, %v4683
  %v4685 = vshll.u32 683565275, %v4682
  %v4686 = vshrl.u32 2475754826, %v4683
  %v4687 = vor.u32 %v4685, %v4686
  %v4688 = vshll.u32 2475754826, %v4682
  %v4689 = vshrl.u32 2131351028, %v4683
  %v4690 = vor.u32 %v4688, %v4689
  %v4691 = vshll.u32 2131351028, %v4682
  %v4692 = vshrl.u32 2102212464, %v4683
  %v4693 = vor.u32 %v4691, %v4692
  %v4694 = vshll.u32 2102212464, %v4682
  %v4695 = vshrl.u32 920167782, %v4683
  %v4696 = vor.u32 %v4694, %v4695
  %v4697 = vshll.u32 920167782, %v4682
  %v4698 = vshrl.u32 1326507024, %v4683
  %v4699 = vor.u32 %v4697, %v4698
  %vm4700 = vcmp.lt.s32.totalorder %v4681, 1
  %vm4701 = vcmp.lt.s32.totalorder %v4681, 2
  %vm4702 = vcmp.lt.s32.totalorder %v4681, 3
  %vm4703 = vcmp.lt.s32.totalorder %v4681, 4
  %v4704 = vsel %vm4700, %v4684, %v4687
  %v4705 = vsel %vm4703, %v4693, 2102212464
  %v4706 = vsel %vm4702, %v4690, %v4705
  %v4707 = vsel %vm4701, %v4704, %v4706
  %v4708 = vsel %vm4700, %v4687, %v4690
  %v4709 = vsel %vm4703, %v4696, 920167782
  %v4710 = vsel %vm4702, %v4693, %v4709
  %v4711 = vsel %vm4701, %v4708, %v4710
  %v4712 = vsel %vm4700, %v4690, %v4693
  %v4713 = vsel %vm4703, %v4699, 1326507024
  %v4714 = vsel %vm4702, %v4696, %v4713
  %v4715 = vsel %vm4701, %v4712, %v4714
  %v4716 = vshll.u32 %v4676, 8
  %v4717 = vmul.u32.u64.compose %v4716, %v4715
  %v4718 = vextract.low.u32 %v4717
  %v4719 = vextract.high.u32 %v4717
  %v4720 = vmul.u32.u64.compose %v4716, %v4711
  %v4721 = vextract.low.u32 %v4720
  %v4722 = vextract.high.u32 %v4720
  %v4723 = vmul.u32 %v4716, %v4707
  %v4724 = vadd.s32 %v4719, %v4721
  %vm4725 = vc.u32 %v4719, %v4721
  %v4726 = vadd.s32 %v4722, 1
  %v4727 = vsel %vm4725, %v4726, %v4722
  %v4728 = vadd.s32 %v4723, %v4727
  %v4729 = vadd.s32 %v4728, 536870912
  %v4730 = vshrl.u32 %v4729, 30
  %v4731 = vshll.u32 %v4730, 30
  %v4732 = vsub.s32 %v4728, %v4731
  %vm4733 = vcmp.lt.s32.totalorder %v4732, 0
  %v4734 = vsub.s32 0, %v4732
  %v4735 = vsel %vm4733, %v4734, %v4732
  %v4736 = vclz %v4735
  %v4737 = vsub.s32 %v4736, 2
  %vm4738 = vcmp.gt.s32.totalorder 0, %v4737
  %v4739 = vsel %vm4738, 0, %v4737
  %v4740 = vsub.s32 32, %v4739
  %v4741 = vshll.u32 %v4732, %v4739
  %v4742 = vshrl.u32 %v4724, %v4740
  %v4743 = vor.u32 %v4741, %v4742
  %v4744 = vsub.s32 4294967266, %v4739
  %v4745 = vadd.s32 %v4744, 127
  %v4746 = vshll.u32 %v4745, 23
  %v4747 = vor.u32 4788187, %v4746
  %v4748 = vand.u32 2147483647, %v4747
  %v4750 = vcvt.s32.f32 %v4743
  %v4751 = vmul.f32 %v4750, %v4748
  %v4752 = vxor.u32 %v4751, 2147483648
  %v4753 = vsel %vm4670, %v4752, %v4751
  %v4754 = vsub.s32 4, %v4730
  %v4755 = vsel %vm4670, %v4754, %v4730
  %v4756 = vsel %vm4669, %v1206, %v4753
  %v4757 = vsel %vm4669, 0, %v4755
  %v4758 = vcosq.f32.pop %v4756
  %v4759 = vsinq.f32.pop %v4756
  %vm4760 = vweird.f32 %v1206
  %v4761 = vand.u32 %v4757, 3
  %vm4762 = vcmp.lt.s32.totalorder %v4761, 2
  %vm4763 = vcmp.eq.s32.totalorder %v4761, 0
  %v4764 = vxor.u32 %v4759, 2147483648
  %v4765 = vsel %vm4763, %v4758, %v4764
  %vm4766 = vcmp.eq.s32.totalorder %v4761, 2
  %v4767 = vxor.u32 %v4758, 2147483648
  %v4768 = vsel %vm4766, %v4767, %v4759
  %v4769 = vsel %vm4762, %v4765, %v4768
  %v4770 = vsel %vm4760, nan, %v4769
  %v4771 = vand.u32 2147483647, %v1207
  %vm4772 = vcmp.le.f32.partialorder %v4771, 0.7853982
  %vm4773 = vcmp.lt.s32.totalorder %v1207, 0
  %v4774 = vand.u32 %v1207, 2139095040
  %v4775 = vshrl.u32 %v4774, 23
  %v4776 = vsub.s32 %v4775, 127
  %v4777 = vand.u32 2147483647, %v1207
  %v4778 = vand.u32 %v4777, 8388607
  %v4779 = vor.u32 %v4778, 8388608
  %v4780 = vsub.s32 0, %v4779
  %v4781 = vadd.s32 %v4776, 1
  %vm4782 = vcmp.gt.s32.totalorder %v4781, 0
  %v4783 = vsel %vm4782, %v4781, 0
  %v4784 = vshrl.u32 %v4783, 5
  %v4785 = vand.u32 %v4783, 31
  %v4786 = vsub.s32 32, %v4785
  %v4787 = vshrl.u32 683565275, %v4786
  %v4788 = vshll.u32 683565275, %v4785
  %v4789 = vshrl.u32 2475754826, %v4786
  %v4790 = vor.u32 %v4788, %v4789
  %v4791 = vshll.u32 2475754826, %v4785
  %v4792 = vshrl.u32 2131351028, %v4786
  %v4793 = vor.u32 %v4791, %v4792
  %v4794 = vshll.u32 2131351028, %v4785
  %v4795 = vshrl.u32 2102212464, %v4786
  %v4796 = vor.u32 %v4794, %v4795
  %v4797 = vshll.u32 2102212464, %v4785
  %v4798 = vshrl.u32 920167782, %v4786
  %v4799 = vor.u32 %v4797, %v4798
  %v4800 = vshll.u32 920167782, %v4785
  %v4801 = vshrl.u32 1326507024, %v4786
  %v4802 = vor.u32 %v4800, %v4801
  %vm4803 = vcmp.lt.s32.totalorder %v4784, 1
  %vm4804 = vcmp.lt.s32.totalorder %v4784, 2
  %vm4805 = vcmp.lt.s32.totalorder %v4784, 3
  %vm4806 = vcmp.lt.s32.totalorder %v4784, 4
  %v4807 = vsel %vm4803, %v4787, %v4790
  %v4808 = vsel %vm4806, %v4796, 2102212464
  %v4809 = vsel %vm4805, %v4793, %v4808
  %v4810 = vsel %vm4804, %v4807, %v4809
  %v4811 = vsel %vm4803, %v4790, %v4793
  %v4812 = vsel %vm4806, %v4799, 920167782
  %v4813 = vsel %vm4805, %v4796, %v4812
  %v4814 = vsel %vm4804, %v4811, %v4813
  %v4815 = vsel %vm4803, %v4793, %v4796
  %v4816 = vsel %vm4806, %v4802, 1326507024
  %v4817 = vsel %vm4805, %v4799, %v4816
  %v4818 = vsel %vm4804, %v4815, %v4817
  %v4819 = vshll.u32 %v4779, 8
  %v4820 = vmul.u32.u64.compose %v4819, %v4818
  %v4821 = vextract.low.u32 %v4820
  %v4822 = vextract.high.u32 %v4820
  %v4823 = vmul.u32.u64.compose %v4819, %v4814
  %v4824 = vextract.low.u32 %v4823
  %v4825 = vextract.high.u32 %v4823
  %v4826 = vmul.u32 %v4819, %v4810
  %v4827 = vadd.s32 %v4822, %v4824
  %vm4828 = vc.u32 %v4822, %v4824
  %v4829 = vadd.s32 %v4825, 1
  %v4830 = vsel %vm4828, %v4829, %v4825
  %v4831 = vadd.s32 %v4826, %v4830
  %v4832 = vadd.s32 %v4831, 536870912
  %v4833 = vshrl.u32 %v4832, 30
  %v4834 = vshll.u32 %v4833, 30
  %v4835 = vsub.s32 %v4831, %v4834
  %vm4836 = vcmp.lt.s32.totalorder %v4835, 0
  %v4837 = vsub.s32 0, %v4835
  %v4838 = vsel %vm4836, %v4837, %v4835
  %v4839 = vclz %v4838
  %v4840 = vsub.s32 %v4839, 2
  %vm4841 = vcmp.gt.s32.totalorder 0, %v4840
  %v4842 = vsel %vm4841, 0, %v4840
  %v4843 = vsub.s32 32, %v4842
  %v4844 = vshll.u32 %v4835, %v4842
  %v4845 = vshrl.u32 %v4827, %v4843
  %v4846 = vor.u32 %v4844, %v4845
  %v4847 = vsub.s32 4294967266, %v4842
  %v4848 = vadd.s32 %v4847, 127
  %v4849 = vshll.u32 %v4848, 23
  %v4850 = vor.u32 4788187, %v4849
  %v4851 = vand.u32 2147483647, %v4850
  %v4853 = vcvt.s32.f32 %v4846
  %v4854 = vmul.f32 %v4853, %v4851
  %v4855 = vxor.u32 %v4854, 2147483648
  %v4856 = vsel %vm4773, %v4855, %v4854
  %v4857 = vsub.s32 4, %v4833
  %v4858 = vsel %vm4773, %v4857, %v4833
  %v4859 = vsel %vm4772, %v1207, %v4856
  %v4860 = vsel %vm4772, 0, %v4858
  %v4861 = vcosq.f32.pop %v4859
  %v4862 = vsinq.f32.pop %v4859
  %vm4863 = vweird.f32 %v1207
  %v4864 = vand.u32 %v4860, 3
  %vm4865 = vcmp.lt.s32.totalorder %v4864, 2
  %vm4866 = vcmp.eq.s32.totalorder %v4864, 0
  %v4867 = vxor.u32 %v4862, 2147483648
  %v4868 = vsel %vm4866, %v4861, %v4867
  %vm4869 = vcmp.eq.s32.totalorder %v4864, 2
  %v4870 = vxor.u32 %v4861, 2147483648
  %v4871 = vsel %vm4869, %v4870, %v4862
  %v4872 = vsel %vm4865, %v4868, %v4871
  %v4873 = vsel %vm4863, nan, %v4872
  %v4874 = vand.u32 2147483647, %v1208
  %vm4875 = vcmp.le.f32.partialorder %v4874, 0.7853982
  %vm4876 = vcmp.lt.s32.totalorder %v1208, 0
  %v4877 = vand.u32 %v1208, 2139095040
  %v4878 = vshrl.u32 %v4877, 23
  %v4879 = vsub.s32 %v4878, 127
  %v4880 = vand.u32 2147483647, %v1208
  %v4881 = vand.u32 %v4880, 8388607
  %v4882 = vor.u32 %v4881, 8388608
  %v4883 = vsub.s32 0, %v4882
  %v4884 = vadd.s32 %v4879, 1
  %vm4885 = vcmp.gt.s32.totalorder %v4884, 0
  %v4886 = vsel %vm4885, %v4884, 0
  %v4887 = vshrl.u32 %v4886, 5
  %v4888 = vand.u32 %v4886, 31
  %v4889 = vsub.s32 32, %v4888
  %v4890 = vshrl.u32 683565275, %v4889
  %v4891 = vshll.u32 683565275, %v4888
  %v4892 = vshrl.u32 2475754826, %v4889
  %v4893 = vor.u32 %v4891, %v4892
  %v4894 = vshll.u32 2475754826, %v4888
  %v4895 = vshrl.u32 2131351028, %v4889
  %v4896 = vor.u32 %v4894, %v4895
  %v4897 = vshll.u32 2131351028, %v4888
  %v4898 = vshrl.u32 2102212464, %v4889
  %v4899 = vor.u32 %v4897, %v4898
  %v4900 = vshll.u32 2102212464, %v4888
  %v4901 = vshrl.u32 920167782, %v4889
  %v4902 = vor.u32 %v4900, %v4901
  %v4903 = vshll.u32 920167782, %v4888
  %v4904 = vshrl.u32 1326507024, %v4889
  %v4905 = vor.u32 %v4903, %v4904
  %vm4906 = vcmp.lt.s32.totalorder %v4887, 1
  %vm4907 = vcmp.lt.s32.totalorder %v4887, 2
  %vm4908 = vcmp.lt.s32.totalorder %v4887, 3
  %vm4909 = vcmp.lt.s32.totalorder %v4887, 4
  %v4910 = vsel %vm4906, %v4890, %v4893
  %v4911 = vsel %vm4909, %v4899, 2102212464
  %v4912 = vsel %vm4908, %v4896, %v4911
  %v4913 = vsel %vm4907, %v4910, %v4912
  %v4914 = vsel %vm4906, %v4893, %v4896
  %v4915 = vsel %vm4909, %v4902, 920167782
  %v4916 = vsel %vm4908, %v4899, %v4915
  %v4917 = vsel %vm4907, %v4914, %v4916
  %v4918 = vsel %vm4906, %v4896, %v4899
  %v4919 = vsel %vm4909, %v4905, 1326507024
  %v4920 = vsel %vm4908, %v4902, %v4919
  %v4921 = vsel %vm4907, %v4918, %v4920
  %v4922 = vshll.u32 %v4882, 8
  %v4923 = vmul.u32.u64.compose %v4922, %v4921
  %v4924 = vextract.low.u32 %v4923
  %v4925 = vextract.high.u32 %v4923
  %v4926 = vmul.u32.u64.compose %v4922, %v4917
  %v4927 = vextract.low.u32 %v4926
  %v4928 = vextract.high.u32 %v4926
  %v4929 = vmul.u32 %v4922, %v4913
  %v4930 = vadd.s32 %v4925, %v4927
  %vm4931 = vc.u32 %v4925, %v4927
  %v4932 = vadd.s32 %v4928, 1
  %v4933 = vsel %vm4931, %v4932, %v4928
  %v4934 = vadd.s32 %v4929, %v4933
  %v4935 = vadd.s32 %v4934, 536870912
  %v4936 = vshrl.u32 %v4935, 30
  %v4937 = vshll.u32 %v4936, 30
  %v4938 = vsub.s32 %v4934, %v4937
  %vm4939 = vcmp.lt.s32.totalorder %v4938, 0
  %v4940 = vsub.s32 0, %v4938
  %v4941 = vsel %vm4939, %v4940, %v4938
  %v4942 = vclz %v4941
  %v4943 = vsub.s32 %v4942, 2
  %vm4944 = vcmp.gt.s32.totalorder 0, %v4943
  %v4945 = vsel %vm4944, 0, %v4943
  %v4946 = vsub.s32 32, %v4945
  %v4947 = vshll.u32 %v4938, %v4945
  %v4948 = vshrl.u32 %v4930, %v4946
  %v4949 = vor.u32 %v4947, %v4948
  %v4950 = vsub.s32 4294967266, %v4945
  %v4951 = vadd.s32 %v4950, 127
  %v4952 = vshll.u32 %v4951, 23
  %v4953 = vor.u32 4788187, %v4952
  %v4954 = vand.u32 2147483647, %v4953
  %v4956 = vcvt.s32.f32 %v4949
  %v4957 = vmul.f32 %v4956, %v4954
  %v4958 = vxor.u32 %v4957, 2147483648
  %v4959 = vsel %vm4876, %v4958, %v4957
  %v4960 = vsub.s32 4, %v4936
  %v4961 = vsel %vm4876, %v4960, %v4936
  %v4962 = vsel %vm4875, %v1208, %v4959
  %v4963 = vsel %vm4875, 0, %v4961
  %v4964 = vcosq.f32.pop %v4962
  %v4965 = vsinq.f32.pop %v4962
  %vm4966 = vweird.f32 %v1208
  %v4967 = vand.u32 %v4963, 3
  %vm4968 = vcmp.lt.s32.totalorder %v4967, 2
  %vm4969 = vcmp.eq.s32.totalorder %v4967, 0
  %v4970 = vxor.u32 %v4965, 2147483648
  %v4971 = vsel %vm4969, %v4964, %v4970
  %vm4972 = vcmp.eq.s32.totalorder %v4967, 2
  %v4973 = vxor.u32 %v4964, 2147483648
  %v4974 = vsel %vm4972, %v4973, %v4965
  %v4975 = vsel %vm4968, %v4971, %v4974
  %v4976 = vsel %vm4966, nan, %v4975
  %v4977 = vand.u32 2147483647, %v1209
  %vm4978 = vcmp.le.f32.partialorder %v4977, 0.7853982
  %vm4979 = vcmp.lt.s32.totalorder %v1209, 0
  %v4980 = vand.u32 %v1209, 2139095040
  %v4981 = vshrl.u32 %v4980, 23
  %v4982 = vsub.s32 %v4981, 127
  %v4983 = vand.u32 2147483647, %v1209
  %v4984 = vand.u32 %v4983, 8388607
  %v4985 = vor.u32 %v4984, 8388608
  %v4986 = vsub.s32 0, %v4985
  %v4987 = vadd.s32 %v4982, 1
  %vm4988 = vcmp.gt.s32.totalorder %v4987, 0
  %v4989 = vsel %vm4988, %v4987, 0
  %v4990 = vshrl.u32 %v4989, 5
  %v4991 = vand.u32 %v4989, 31
  %v4992 = vsub.s32 32, %v4991
  %v4993 = vshrl.u32 683565275, %v4992
  %v4994 = vshll.u32 683565275, %v4991
  %v4995 = vshrl.u32 2475754826, %v4992
  %v4996 = vor.u32 %v4994, %v4995
  %v4997 = vshll.u32 2475754826, %v4991
  %v4998 = vshrl.u32 2131351028, %v4992
  %v4999 = vor.u32 %v4997, %v4998
  %v5000 = vshll.u32 2131351028, %v4991
  %v5001 = vshrl.u32 2102212464, %v4992
  %v5002 = vor.u32 %v5000, %v5001
  %v5003 = vshll.u32 2102212464, %v4991
  %v5004 = vshrl.u32 920167782, %v4992
  %v5005 = vor.u32 %v5003, %v5004
  %v5006 = vshll.u32 920167782, %v4991
  %v5007 = vshrl.u32 1326507024, %v4992
  %v5008 = vor.u32 %v5006, %v5007
  %vm5009 = vcmp.lt.s32.totalorder %v4990, 1
  %vm5010 = vcmp.lt.s32.totalorder %v4990, 2
  %vm5011 = vcmp.lt.s32.totalorder %v4990, 3
  %vm5012 = vcmp.lt.s32.totalorder %v4990, 4
  %v5013 = vsel %vm5009, %v4993, %v4996
  %v5014 = vsel %vm5012, %v5002, 2102212464
  %v5015 = vsel %vm5011, %v4999, %v5014
  %v5016 = vsel %vm5010, %v5013, %v5015
  %v5017 = vsel %vm5009, %v4996, %v4999
  %v5018 = vsel %vm5012, %v5005, 920167782
  %v5019 = vsel %vm5011, %v5002, %v5018
  %v5020 = vsel %vm5010, %v5017, %v5019
  %v5021 = vsel %vm5009, %v4999, %v5002
  %v5022 = vsel %vm5012, %v5008, 1326507024
  %v5023 = vsel %vm5011, %v5005, %v5022
  %v5024 = vsel %vm5010, %v5021, %v5023
  %v5025 = vshll.u32 %v4985, 8
  %v5026 = vmul.u32.u64.compose %v5025, %v5024
  %v5027 = vextract.low.u32 %v5026
  %v5028 = vextract.high.u32 %v5026
  %v5029 = vmul.u32.u64.compose %v5025, %v5020
  %v5030 = vextract.low.u32 %v5029
  %v5031 = vextract.high.u32 %v5029
  %v5032 = vmul.u32 %v5025, %v5016
  %v5033 = vadd.s32 %v5028, %v5030
  %vm5034 = vc.u32 %v5028, %v5030
  %v5035 = vadd.s32 %v5031, 1
  %v5036 = vsel %vm5034, %v5035, %v5031
  %v5037 = vadd.s32 %v5032, %v5036
  %v5038 = vadd.s32 %v5037, 536870912
  %v5039 = vshrl.u32 %v5038, 30
  %v5040 = vshll.u32 %v5039, 30
  %v5041 = vsub.s32 %v5037, %v5040
  %vm5042 = vcmp.lt.s32.totalorder %v5041, 0
  %v5043 = vsub.s32 0, %v5041
  %v5044 = vsel %vm5042, %v5043, %v5041
  %v5045 = vclz %v5044
  %v5046 = vsub.s32 %v5045, 2
  %vm5047 = vcmp.gt.s32.totalorder 0, %v5046
  %v5048 = vsel %vm5047, 0, %v5046
  %v5049 = vsub.s32 32, %v5048
  %v5050 = vshll.u32 %v5041, %v5048
  %v5051 = vshrl.u32 %v5033, %v5049
  %v5052 = vor.u32 %v5050, %v5051
  %v5053 = vsub.s32 4294967266, %v5048
  %v5054 = vadd.s32 %v5053, 127
  %v5055 = vshll.u32 %v5054, 23
  %v5056 = vor.u32 4788187, %v5055
  %v5057 = vand.u32 2147483647, %v5056
  %v5059 = vcvt.s32.f32 %v5052
  %v5060 = vmul.f32 %v5059, %v5057
  %v5061 = vxor.u32 %v5060, 2147483648
  %v5062 = vsel %vm4979, %v5061, %v5060
  %v5063 = vsub.s32 4, %v5039
  %v5064 = vsel %vm4979, %v5063, %v5039
  %v5065 = vsel %vm4978, %v1209, %v5062
  %v5066 = vsel %vm4978, 0, %v5064
  %v5067 = vcosq.f32.pop %v5065
  %v5068 = vsinq.f32.pop %v5065
  %vm5069 = vweird.f32 %v1209
  %v5070 = vand.u32 %v5066, 3
  %vm5071 = vcmp.lt.s32.totalorder %v5070, 2
  %vm5072 = vcmp.eq.s32.totalorder %v5070, 0
  %v5073 = vxor.u32 %v5068, 2147483648
  %v5074 = vsel %vm5072, %v5067, %v5073
  %vm5075 = vcmp.eq.s32.totalorder %v5070, 2
  %v5076 = vxor.u32 %v5067, 2147483648
  %v5077 = vsel %vm5075, %v5076, %v5068
  %v5078 = vsel %vm5071, %v5074, %v5077
  %v5079 = vsel %vm5069, nan, %v5078
  %v5080 = vand.u32 2147483647, %v1210
  %vm5081 = vcmp.le.f32.partialorder %v5080, 0.7853982
  %vm5082 = vcmp.lt.s32.totalorder %v1210, 0
  %v5083 = vand.u32 %v1210, 2139095040
  %v5084 = vshrl.u32 %v5083, 23
  %v5085 = vsub.s32 %v5084, 127
  %v5086 = vand.u32 2147483647, %v1210
  %v5087 = vand.u32 %v5086, 8388607
  %v5088 = vor.u32 %v5087, 8388608
  %v5089 = vsub.s32 0, %v5088
  %v5090 = vadd.s32 %v5085, 1
  %vm5091 = vcmp.gt.s32.totalorder %v5090, 0
  %v5092 = vsel %vm5091, %v5090, 0
  %v5093 = vshrl.u32 %v5092, 5
  %v5094 = vand.u32 %v5092, 31
  %v5095 = vsub.s32 32, %v5094
  %v5096 = vshrl.u32 683565275, %v5095
  %v5097 = vshll.u32 683565275, %v5094
  %v5098 = vshrl.u32 2475754826, %v5095
  %v5099 = vor.u32 %v5097, %v5098
  %v5100 = vshll.u32 2475754826, %v5094
  %v5101 = vshrl.u32 2131351028, %v5095
  %v5102 = vor.u32 %v5100, %v5101
  %v5103 = vshll.u32 2131351028, %v5094
  %v5104 = vshrl.u32 2102212464, %v5095
  %v5105 = vor.u32 %v5103, %v5104
  %v5106 = vshll.u32 2102212464, %v5094
  %v5107 = vshrl.u32 920167782, %v5095
  %v5108 = vor.u32 %v5106, %v5107
  %v5109 = vshll.u32 920167782, %v5094
  %v5110 = vshrl.u32 1326507024, %v5095
  %v5111 = vor.u32 %v5109, %v5110
  %vm5112 = vcmp.lt.s32.totalorder %v5093, 1
  %vm5113 = vcmp.lt.s32.totalorder %v5093, 2
  %vm5114 = vcmp.lt.s32.totalorder %v5093, 3
  %vm5115 = vcmp.lt.s32.totalorder %v5093, 4
  %v5116 = vsel %vm5112, %v5096, %v5099
  %v5117 = vsel %vm5115, %v5105, 2102212464
  %v5118 = vsel %vm5114, %v5102, %v5117
  %v5119 = vsel %vm5113, %v5116, %v5118
  %v5120 = vsel %vm5112, %v5099, %v5102
  %v5121 = vsel %vm5115, %v5108, 920167782
  %v5122 = vsel %vm5114, %v5105, %v5121
  %v5123 = vsel %vm5113, %v5120, %v5122
  %v5124 = vsel %vm5112, %v5102, %v5105
  %v5125 = vsel %vm5115, %v5111, 1326507024
  %v5126 = vsel %vm5114, %v5108, %v5125
  %v5127 = vsel %vm5113, %v5124, %v5126
  %v5128 = vshll.u32 %v5088, 8
  %v5129 = vmul.u32.u64.compose %v5128, %v5127
  %v5130 = vextract.low.u32 %v5129
  %v5131 = vextract.high.u32 %v5129
  %v5132 = vmul.u32.u64.compose %v5128, %v5123
  %v5133 = vextract.low.u32 %v5132
  %v5134 = vextract.high.u32 %v5132
  %v5135 = vmul.u32 %v5128, %v5119
  %v5136 = vadd.s32 %v5131, %v5133
  %vm5137 = vc.u32 %v5131, %v5133
  %v5138 = vadd.s32 %v5134, 1
  %v5139 = vsel %vm5137, %v5138, %v5134
  %v5140 = vadd.s32 %v5135, %v5139
  %v5141 = vadd.s32 %v5140, 536870912
  %v5142 = vshrl.u32 %v5141, 30
  %v5143 = vshll.u32 %v5142, 30
  %v5144 = vsub.s32 %v5140, %v5143
  %vm5145 = vcmp.lt.s32.totalorder %v5144, 0
  %v5146 = vsub.s32 0, %v5144
  %v5147 = vsel %vm5145, %v5146, %v5144
  %v5148 = vclz %v5147
  %v5149 = vsub.s32 %v5148, 2
  %vm5150 = vcmp.gt.s32.totalorder 0, %v5149
  %v5151 = vsel %vm5150, 0, %v5149
  %v5152 = vsub.s32 32, %v5151
  %v5153 = vshll.u32 %v5144, %v5151
  %v5154 = vshrl.u32 %v5136, %v5152
  %v5155 = vor.u32 %v5153, %v5154
  %v5156 = vsub.s32 4294967266, %v5151
  %v5157 = vadd.s32 %v5156, 127
  %v5158 = vshll.u32 %v5157, 23
  %v5159 = vor.u32 4788187, %v5158
  %v5160 = vand.u32 2147483647, %v5159
  %v5162 = vcvt.s32.f32 %v5155
  %v5163 = vmul.f32 %v5162, %v5160
  %v5164 = vxor.u32 %v5163, 2147483648
  %v5165 = vsel %vm5082, %v5164, %v5163
  %v5166 = vsub.s32 4, %v5142
  %v5167 = vsel %vm5082, %v5166, %v5142
  %v5168 = vsel %vm5081, %v1210, %v5165
  %v5169 = vsel %vm5081, 0, %v5167
  %v5170 = vcosq.f32.pop %v5168
  %v5171 = vsinq.f32.pop %v5168
  %vm5172 = vweird.f32 %v1210
  %v5173 = vand.u32 %v5169, 3
  %vm5174 = vcmp.lt.s32.totalorder %v5173, 2
  %vm5175 = vcmp.eq.s32.totalorder %v5173, 0
  %v5176 = vxor.u32 %v5171, 2147483648
  %v5177 = vsel %vm5175, %v5170, %v5176
  %vm5178 = vcmp.eq.s32.totalorder %v5173, 2
  %v5179 = vxor.u32 %v5170, 2147483648
  %v5180 = vsel %vm5178, %v5179, %v5171
  %v5181 = vsel %vm5174, %v5177, %v5180
  %v5182 = vsel %vm5172, nan, %v5181
  %v5183 = vand.u32 2147483647, %v1211
  %vm5184 = vcmp.le.f32.partialorder %v5183, 0.7853982
  %vm5185 = vcmp.lt.s32.totalorder %v1211, 0
  %v5186 = vand.u32 %v1211, 2139095040
  %v5187 = vshrl.u32 %v5186, 23
  %v5188 = vsub.s32 %v5187, 127
  %v5189 = vand.u32 2147483647, %v1211
  %v5190 = vand.u32 %v5189, 8388607
  %v5191 = vor.u32 %v5190, 8388608
  %v5192 = vsub.s32 0, %v5191
  %v5193 = vadd.s32 %v5188, 1
  %vm5194 = vcmp.gt.s32.totalorder %v5193, 0
  %v5195 = vsel %vm5194, %v5193, 0
  %v5196 = vshrl.u32 %v5195, 5
  %v5197 = vand.u32 %v5195, 31
  %v5198 = vsub.s32 32, %v5197
  %v5199 = vshrl.u32 683565275, %v5198
  %v5200 = vshll.u32 683565275, %v5197
  %v5201 = vshrl.u32 2475754826, %v5198
  %v5202 = vor.u32 %v5200, %v5201
  %v5203 = vshll.u32 2475754826, %v5197
  %v5204 = vshrl.u32 2131351028, %v5198
  %v5205 = vor.u32 %v5203, %v5204
  %v5206 = vshll.u32 2131351028, %v5197
  %v5207 = vshrl.u32 2102212464, %v5198
  %v5208 = vor.u32 %v5206, %v5207
  %v5209 = vshll.u32 2102212464, %v5197
  %v5210 = vshrl.u32 920167782, %v5198
  %v5211 = vor.u32 %v5209, %v5210
  %v5212 = vshll.u32 920167782, %v5197
  %v5213 = vshrl.u32 1326507024, %v5198
  %v5214 = vor.u32 %v5212, %v5213
  %vm5215 = vcmp.lt.s32.totalorder %v5196, 1
  %vm5216 = vcmp.lt.s32.totalorder %v5196, 2
  %vm5217 = vcmp.lt.s32.totalorder %v5196, 3
  %vm5218 = vcmp.lt.s32.totalorder %v5196, 4
  %v5219 = vsel %vm5215, %v5199, %v5202
  %v5220 = vsel %vm5218, %v5208, 2102212464
  %v5221 = vsel %vm5217, %v5205, %v5220
  %v5222 = vsel %vm5216, %v5219, %v5221
  %v5223 = vsel %vm5215, %v5202, %v5205
  %v5224 = vsel %vm5218, %v5211, 920167782
  %v5225 = vsel %vm5217, %v5208, %v5224
  %v5226 = vsel %vm5216, %v5223, %v5225
  %v5227 = vsel %vm5215, %v5205, %v5208
  %v5228 = vsel %vm5218, %v5214, 1326507024
  %v5229 = vsel %vm5217, %v5211, %v5228
  %v5230 = vsel %vm5216, %v5227, %v5229
  %v5231 = vshll.u32 %v5191, 8
  %v5232 = vmul.u32.u64.compose %v5231, %v5230
  %v5233 = vextract.low.u32 %v5232
  %v5234 = vextract.high.u32 %v5232
  %v5235 = vmul.u32.u64.compose %v5231, %v5226
  %v5236 = vextract.low.u32 %v5235
  %v5237 = vextract.high.u32 %v5235
  %v5238 = vmul.u32 %v5231, %v5222
  %v5239 = vadd.s32 %v5234, %v5236
  %vm5240 = vc.u32 %v5234, %v5236
  %v5241 = vadd.s32 %v5237, 1
  %v5242 = vsel %vm5240, %v5241, %v5237
  %v5243 = vadd.s32 %v5238, %v5242
  %v5244 = vadd.s32 %v5243, 536870912
  %v5245 = vshrl.u32 %v5244, 30
  %v5246 = vshll.u32 %v5245, 30
  %v5247 = vsub.s32 %v5243, %v5246
  %vm5248 = vcmp.lt.s32.totalorder %v5247, 0
  %v5249 = vsub.s32 0, %v5247
  %v5250 = vsel %vm5248, %v5249, %v5247
  %v5251 = vclz %v5250
  %v5252 = vsub.s32 %v5251, 2
  %vm5253 = vcmp.gt.s32.totalorder 0, %v5252
  %v5254 = vsel %vm5253, 0, %v5252
  %v5255 = vsub.s32 32, %v5254
  %v5256 = vshll.u32 %v5247, %v5254
  %v5257 = vshrl.u32 %v5239, %v5255
  %v5258 = vor.u32 %v5256, %v5257
  %v5259 = vsub.s32 4294967266, %v5254
  %v5260 = vadd.s32 %v5259, 127
  %v5261 = vshll.u32 %v5260, 23
  %v5262 = vor.u32 4788187, %v5261
  %v5263 = vand.u32 2147483647, %v5262
  %v5265 = vcvt.s32.f32 %v5258
  %v5266 = vmul.f32 %v5265, %v5263
  %v5267 = vxor.u32 %v5266, 2147483648
  %v5268 = vsel %vm5185, %v5267, %v5266
  %v5269 = vsub.s32 4, %v5245
  %v5270 = vsel %vm5185, %v5269, %v5245
  %v5271 = vsel %vm5184, %v1211, %v5268
  %v5272 = vsel %vm5184, 0, %v5270
  %v5273 = vcosq.f32.pop %v5271
  %v5274 = vsinq.f32.pop %v5271
  %vm5275 = vweird.f32 %v1211
  %v5276 = vand.u32 %v5272, 3
  %vm5277 = vcmp.lt.s32.totalorder %v5276, 2
  %vm5278 = vcmp.eq.s32.totalorder %v5276, 0
  %v5279 = vxor.u32 %v5274, 2147483648
  %v5280 = vsel %vm5278, %v5273, %v5279
  %vm5281 = vcmp.eq.s32.totalorder %v5276, 2
  %v5282 = vxor.u32 %v5273, 2147483648
  %v5283 = vsel %vm5281, %v5282, %v5274
  %v5284 = vsel %vm5277, %v5280, %v5283
  %v5285 = vsel %vm5275, nan, %v5284
  %v5286 = vand.u32 2147483647, %v1212
  %vm5287 = vcmp.le.f32.partialorder %v5286, 0.7853982
  %vm5288 = vcmp.lt.s32.totalorder %v1212, 0
  %v5289 = vand.u32 %v1212, 2139095040
  %v5290 = vshrl.u32 %v5289, 23
  %v5291 = vsub.s32 %v5290, 127
  %v5292 = vand.u32 2147483647, %v1212
  %v5293 = vand.u32 %v5292, 8388607
  %v5294 = vor.u32 %v5293, 8388608
  %v5295 = vsub.s32 0, %v5294
  %v5296 = vadd.s32 %v5291, 1
  %vm5297 = vcmp.gt.s32.totalorder %v5296, 0
  %v5298 = vsel %vm5297, %v5296, 0
  %v5299 = vshrl.u32 %v5298, 5
  %v5300 = vand.u32 %v5298, 31
  %v5301 = vsub.s32 32, %v5300
  %v5302 = vshrl.u32 683565275, %v5301
  %v5303 = vshll.u32 683565275, %v5300
  %v5304 = vshrl.u32 2475754826, %v5301
  %v5305 = vor.u32 %v5303, %v5304
  %v5306 = vshll.u32 2475754826, %v5300
  %v5307 = vshrl.u32 2131351028, %v5301
  %v5308 = vor.u32 %v5306, %v5307
  %v5309 = vshll.u32 2131351028, %v5300
  %v5310 = vshrl.u32 2102212464, %v5301
  %v5311 = vor.u32 %v5309, %v5310
  %v5312 = vshll.u32 2102212464, %v5300
  %v5313 = vshrl.u32 920167782, %v5301
  %v5314 = vor.u32 %v5312, %v5313
  %v5315 = vshll.u32 920167782, %v5300
  %v5316 = vshrl.u32 1326507024, %v5301
  %v5317 = vor.u32 %v5315, %v5316
  %vm5318 = vcmp.lt.s32.totalorder %v5299, 1
  %vm5319 = vcmp.lt.s32.totalorder %v5299, 2
  %vm5320 = vcmp.lt.s32.totalorder %v5299, 3
  %vm5321 = vcmp.lt.s32.totalorder %v5299, 4
  %v5322 = vsel %vm5318, %v5302, %v5305
  %v5323 = vsel %vm5321, %v5311, 2102212464
  %v5324 = vsel %vm5320, %v5308, %v5323
  %v5325 = vsel %vm5319, %v5322, %v5324
  %v5326 = vsel %vm5318, %v5305, %v5308
  %v5327 = vsel %vm5321, %v5314, 920167782
  %v5328 = vsel %vm5320, %v5311, %v5327
  %v5329 = vsel %vm5319, %v5326, %v5328
  %v5330 = vsel %vm5318, %v5308, %v5311
  %v5331 = vsel %vm5321, %v5317, 1326507024
  %v5332 = vsel %vm5320, %v5314, %v5331
  %v5333 = vsel %vm5319, %v5330, %v5332
  %v5334 = vshll.u32 %v5294, 8
  %v5335 = vmul.u32.u64.compose %v5334, %v5333
  %v5336 = vextract.low.u32 %v5335
  %v5337 = vextract.high.u32 %v5335
  %v5338 = vmul.u32.u64.compose %v5334, %v5329
  %v5339 = vextract.low.u32 %v5338
  %v5340 = vextract.high.u32 %v5338
  %v5341 = vmul.u32 %v5334, %v5325
  %v5342 = vadd.s32 %v5337, %v5339
  %vm5343 = vc.u32 %v5337, %v5339
  %v5344 = vadd.s32 %v5340, 1
  %v5345 = vsel %vm5343, %v5344, %v5340
  %v5346 = vadd.s32 %v5341, %v5345
  %v5347 = vadd.s32 %v5346, 536870912
  %v5348 = vshrl.u32 %v5347, 30
  %v5349 = vshll.u32 %v5348, 30
  %v5350 = vsub.s32 %v5346, %v5349
  %vm5351 = vcmp.lt.s32.totalorder %v5350, 0
  %v5352 = vsub.s32 0, %v5350
  %v5353 = vsel %vm5351, %v5352, %v5350
  %v5354 = vclz %v5353
  %v5355 = vsub.s32 %v5354, 2
  %vm5356 = vcmp.gt.s32.totalorder 0, %v5355
  %v5357 = vsel %vm5356, 0, %v5355
  %v5358 = vsub.s32 32, %v5357
  %v5359 = vshll.u32 %v5350, %v5357
  %v5360 = vshrl.u32 %v5342, %v5358
  %v5361 = vor.u32 %v5359, %v5360
  %v5362 = vsub.s32 4294967266, %v5357
  %v5363 = vadd.s32 %v5362, 127
  %v5364 = vshll.u32 %v5363, 23
  %v5365 = vor.u32 4788187, %v5364
  %v5366 = vand.u32 2147483647, %v5365
  %v5368 = vcvt.s32.f32 %v5361
  %v5369 = vmul.f32 %v5368, %v5366
  %v5370 = vxor.u32 %v5369, 2147483648
  %v5371 = vsel %vm5288, %v5370, %v5369
  %v5372 = vsub.s32 4, %v5348
  %v5373 = vsel %vm5288, %v5372, %v5348
  %v5374 = vsel %vm5287, %v1212, %v5371
  %v5375 = vsel %vm5287, 0, %v5373
  %v5376 = vcosq.f32.pop %v5374
  %v5377 = vsinq.f32.pop %v5374
  %vm5378 = vweird.f32 %v1212
  %v5379 = vand.u32 %v5375, 3
  %vm5380 = vcmp.lt.s32.totalorder %v5379, 2
  %vm5381 = vcmp.eq.s32.totalorder %v5379, 0
  %v5382 = vxor.u32 %v5377, 2147483648
  %v5383 = vsel %vm5381, %v5376, %v5382
  %vm5384 = vcmp.eq.s32.totalorder %v5379, 2
  %v5385 = vxor.u32 %v5376, 2147483648
  %v5386 = vsel %vm5384, %v5385, %v5377
  %v5387 = vsel %vm5380, %v5383, %v5386
  %v5388 = vsel %vm5378, nan, %v5387
  %v5389 = vand.u32 2147483647, %v1213
  %vm5390 = vcmp.le.f32.partialorder %v5389, 0.7853982
  %vm5391 = vcmp.lt.s32.totalorder %v1213, 0
  %v5392 = vand.u32 %v1213, 2139095040
  %v5393 = vshrl.u32 %v5392, 23
  %v5394 = vsub.s32 %v5393, 127
  %v5395 = vand.u32 2147483647, %v1213
  %v5396 = vand.u32 %v5395, 8388607
  %v5397 = vor.u32 %v5396, 8388608
  %v5398 = vsub.s32 0, %v5397
  %v5399 = vadd.s32 %v5394, 1
  %vm5400 = vcmp.gt.s32.totalorder %v5399, 0
  %v5401 = vsel %vm5400, %v5399, 0
  %v5402 = vshrl.u32 %v5401, 5
  %v5403 = vand.u32 %v5401, 31
  %v5404 = vsub.s32 32, %v5403
  %v5405 = vshrl.u32 683565275, %v5404
  %v5406 = vshll.u32 683565275, %v5403
  %v5407 = vshrl.u32 2475754826, %v5404
  %v5408 = vor.u32 %v5406, %v5407
  %v5409 = vshll.u32 2475754826, %v5403
  %v5410 = vshrl.u32 2131351028, %v5404
  %v5411 = vor.u32 %v5409, %v5410
  %v5412 = vshll.u32 2131351028, %v5403
  %v5413 = vshrl.u32 2102212464, %v5404
  %v5414 = vor.u32 %v5412, %v5413
  %v5415 = vshll.u32 2102212464, %v5403
  %v5416 = vshrl.u32 920167782, %v5404
  %v5417 = vor.u32 %v5415, %v5416
  %v5418 = vshll.u32 920167782, %v5403
  %v5419 = vshrl.u32 1326507024, %v5404
  %v5420 = vor.u32 %v5418, %v5419
  %vm5421 = vcmp.lt.s32.totalorder %v5402, 1
  %vm5422 = vcmp.lt.s32.totalorder %v5402, 2
  %vm5423 = vcmp.lt.s32.totalorder %v5402, 3
  %vm5424 = vcmp.lt.s32.totalorder %v5402, 4
  %v5425 = vsel %vm5421, %v5405, %v5408
  %v5426 = vsel %vm5424, %v5414, 2102212464
  %v5427 = vsel %vm5423, %v5411, %v5426
  %v5428 = vsel %vm5422, %v5425, %v5427
  %v5429 = vsel %vm5421, %v5408, %v5411
  %v5430 = vsel %vm5424, %v5417, 920167782
  %v5431 = vsel %vm5423, %v5414, %v5430
  %v5432 = vsel %vm5422, %v5429, %v5431
  %v5433 = vsel %vm5421, %v5411, %v5414
  %v5434 = vsel %vm5424, %v5420, 1326507024
  %v5435 = vsel %vm5423, %v5417, %v5434
  %v5436 = vsel %vm5422, %v5433, %v5435
  %v5437 = vshll.u32 %v5397, 8
  %v5438 = vmul.u32.u64.compose %v5437, %v5436
  %v5439 = vextract.low.u32 %v5438
  %v5440 = vextract.high.u32 %v5438
  %v5441 = vmul.u32.u64.compose %v5437, %v5432
  %v5442 = vextract.low.u32 %v5441
  %v5443 = vextract.high.u32 %v5441
  %v5444 = vmul.u32 %v5437, %v5428
  %v5445 = vadd.s32 %v5440, %v5442
  %vm5446 = vc.u32 %v5440, %v5442
  %v5447 = vadd.s32 %v5443, 1
  %v5448 = vsel %vm5446, %v5447, %v5443
  %v5449 = vadd.s32 %v5444, %v5448
  %v5450 = vadd.s32 %v5449, 536870912
  %v5451 = vshrl.u32 %v5450, 30
  %v5452 = vshll.u32 %v5451, 30
  %v5453 = vsub.s32 %v5449, %v5452
  %vm5454 = vcmp.lt.s32.totalorder %v5453, 0
  %v5455 = vsub.s32 0, %v5453
  %v5456 = vsel %vm5454, %v5455, %v5453
  %v5457 = vclz %v5456
  %v5458 = vsub.s32 %v5457, 2
  %vm5459 = vcmp.gt.s32.totalorder 0, %v5458
  %v5460 = vsel %vm5459, 0, %v5458
  %v5461 = vsub.s32 32, %v5460
  %v5462 = vshll.u32 %v5453, %v5460
  %v5463 = vshrl.u32 %v5445, %v5461
  %v5464 = vor.u32 %v5462, %v5463
  %v5465 = vsub.s32 4294967266, %v5460
  %v5466 = vadd.s32 %v5465, 127
  %v5467 = vshll.u32 %v5466, 23
  %v5468 = vor.u32 4788187, %v5467
  %v5469 = vand.u32 2147483647, %v5468
  %v5471 = vcvt.s32.f32 %v5464
  %v5472 = vmul.f32 %v5471, %v5469
  %v5473 = vxor.u32 %v5472, 2147483648
  %v5474 = vsel %vm5391, %v5473, %v5472
  %v5475 = vsub.s32 4, %v5451
  %v5476 = vsel %vm5391, %v5475, %v5451
  %v5477 = vsel %vm5390, %v1213, %v5474
  %v5478 = vsel %vm5390, 0, %v5476
  %v5479 = vcosq.f32.pop %v5477
  %v5480 = vsinq.f32.pop %v5477
  %vm5481 = vweird.f32 %v1213
  %v5482 = vand.u32 %v5478, 3
  %vm5483 = vcmp.lt.s32.totalorder %v5482, 2
  %vm5484 = vcmp.eq.s32.totalorder %v5482, 0
  %v5485 = vxor.u32 %v5480, 2147483648
  %v5486 = vsel %vm5484, %v5479, %v5485
  %vm5487 = vcmp.eq.s32.totalorder %v5482, 2
  %v5488 = vxor.u32 %v5479, 2147483648
  %v5489 = vsel %vm5487, %v5488, %v5480
  %v5490 = vsel %vm5483, %v5486, %v5489
  %v5491 = vsel %vm5481, nan, %v5490
  %v5492 = vand.u32 2147483647, %v1214
  %vm5493 = vcmp.le.f32.partialorder %v5492, 0.7853982
  %vm5494 = vcmp.lt.s32.totalorder %v1214, 0
  %v5495 = vand.u32 %v1214, 2139095040
  %v5496 = vshrl.u32 %v5495, 23
  %v5497 = vsub.s32 %v5496, 127
  %v5498 = vand.u32 2147483647, %v1214
  %v5499 = vand.u32 %v5498, 8388607
  %v5500 = vor.u32 %v5499, 8388608
  %v5501 = vsub.s32 0, %v5500
  %v5502 = vadd.s32 %v5497, 1
  %vm5503 = vcmp.gt.s32.totalorder %v5502, 0
  %v5504 = vsel %vm5503, %v5502, 0
  %v5505 = vshrl.u32 %v5504, 5
  %v5506 = vand.u32 %v5504, 31
  %v5507 = vsub.s32 32, %v5506
  %v5508 = vshrl.u32 683565275, %v5507
  %v5509 = vshll.u32 683565275, %v5506
  %v5510 = vshrl.u32 2475754826, %v5507
  %v5511 = vor.u32 %v5509, %v5510
  %v5512 = vshll.u32 2475754826, %v5506
  %v5513 = vshrl.u32 2131351028, %v5507
  %v5514 = vor.u32 %v5512, %v5513
  %v5515 = vshll.u32 2131351028, %v5506
  %v5516 = vshrl.u32 2102212464, %v5507
  %v5517 = vor.u32 %v5515, %v5516
  %v5518 = vshll.u32 2102212464, %v5506
  %v5519 = vshrl.u32 920167782, %v5507
  %v5520 = vor.u32 %v5518, %v5519
  %v5521 = vshll.u32 920167782, %v5506
  %v5522 = vshrl.u32 1326507024, %v5507
  %v5523 = vor.u32 %v5521, %v5522
  %vm5524 = vcmp.lt.s32.totalorder %v5505, 1
  %vm5525 = vcmp.lt.s32.totalorder %v5505, 2
  %vm5526 = vcmp.lt.s32.totalorder %v5505, 3
  %vm5527 = vcmp.lt.s32.totalorder %v5505, 4
  %v5528 = vsel %vm5524, %v5508, %v5511
  %v5529 = vsel %vm5527, %v5517, 2102212464
  %v5530 = vsel %vm5526, %v5514, %v5529
  %v5531 = vsel %vm5525, %v5528, %v5530
  %v5532 = vsel %vm5524, %v5511, %v5514
  %v5533 = vsel %vm5527, %v5520, 920167782
  %v5534 = vsel %vm5526, %v5517, %v5533
  %v5535 = vsel %vm5525, %v5532, %v5534
  %v5536 = vsel %vm5524, %v5514, %v5517
  %v5537 = vsel %vm5527, %v5523, 1326507024
  %v5538 = vsel %vm5526, %v5520, %v5537
  %v5539 = vsel %vm5525, %v5536, %v5538
  %v5540 = vshll.u32 %v5500, 8
  %v5541 = vmul.u32.u64.compose %v5540, %v5539
  %v5542 = vextract.low.u32 %v5541
  %v5543 = vextract.high.u32 %v5541
  %v5544 = vmul.u32.u64.compose %v5540, %v5535
  %v5545 = vextract.low.u32 %v5544
  %v5546 = vextract.high.u32 %v5544
  %v5547 = vmul.u32 %v5540, %v5531
  %v5548 = vadd.s32 %v5543, %v5545
  %vm5549 = vc.u32 %v5543, %v5545
  %v5550 = vadd.s32 %v5546, 1
  %v5551 = vsel %vm5549, %v5550, %v5546
  %v5552 = vadd.s32 %v5547, %v5551
  %v5553 = vadd.s32 %v5552, 536870912
  %v5554 = vshrl.u32 %v5553, 30
  %v5555 = vshll.u32 %v5554, 30
  %v5556 = vsub.s32 %v5552, %v5555
  %vm5557 = vcmp.lt.s32.totalorder %v5556, 0
  %v5558 = vsub.s32 0, %v5556
  %v5559 = vsel %vm5557, %v5558, %v5556
  %v5560 = vclz %v5559
  %v5561 = vsub.s32 %v5560, 2
  %vm5562 = vcmp.gt.s32.totalorder 0, %v5561
  %v5563 = vsel %vm5562, 0, %v5561
  %v5564 = vsub.s32 32, %v5563
  %v5565 = vshll.u32 %v5556, %v5563
  %v5566 = vshrl.u32 %v5548, %v5564
  %v5567 = vor.u32 %v5565, %v5566
  %v5568 = vsub.s32 4294967266, %v5563
  %v5569 = vadd.s32 %v5568, 127
  %v5570 = vshll.u32 %v5569, 23
  %v5571 = vor.u32 4788187, %v5570
  %v5572 = vand.u32 2147483647, %v5571
  %v5574 = vcvt.s32.f32 %v5567
  %v5575 = vmul.f32 %v5574, %v5572
  %v5576 = vxor.u32 %v5575, 2147483648
  %v5577 = vsel %vm5494, %v5576, %v5575
  %v5578 = vsub.s32 4, %v5554
  %v5579 = vsel %vm5494, %v5578, %v5554
  %v5580 = vsel %vm5493, %v1214, %v5577
  %v5581 = vsel %vm5493, 0, %v5579
  %v5582 = vcosq.f32.pop %v5580
  %v5583 = vsinq.f32.pop %v5580
  %vm5584 = vweird.f32 %v1214
  %v5585 = vand.u32 %v5581, 3
  %vm5586 = vcmp.lt.s32.totalorder %v5585, 2
  %vm5587 = vcmp.eq.s32.totalorder %v5585, 0
  %v5588 = vxor.u32 %v5583, 2147483648
  %v5589 = vsel %vm5587, %v5582, %v5588
  %vm5590 = vcmp.eq.s32.totalorder %v5585, 2
  %v5591 = vxor.u32 %v5582, 2147483648
  %v5592 = vsel %vm5590, %v5591, %v5583
  %v5593 = vsel %vm5586, %v5589, %v5592
  %v5594 = vsel %vm5584, nan, %v5593
  %v5595 = vand.u32 2147483647, %v1215
  %vm5596 = vcmp.le.f32.partialorder %v5595, 0.7853982
  %vm5597 = vcmp.lt.s32.totalorder %v1215, 0
  %v5598 = vand.u32 %v1215, 2139095040
  %v5599 = vshrl.u32 %v5598, 23
  %v5600 = vsub.s32 %v5599, 127
  %v5601 = vand.u32 2147483647, %v1215
  %v5602 = vand.u32 %v5601, 8388607
  %v5603 = vor.u32 %v5602, 8388608
  %v5604 = vsub.s32 0, %v5603
  %v5605 = vadd.s32 %v5600, 1
  %vm5606 = vcmp.gt.s32.totalorder %v5605, 0
  %v5607 = vsel %vm5606, %v5605, 0
  %v5608 = vshrl.u32 %v5607, 5
  %v5609 = vand.u32 %v5607, 31
  %v5610 = vsub.s32 32, %v5609
  %v5611 = vshrl.u32 683565275, %v5610
  %v5612 = vshll.u32 683565275, %v5609
  %v5613 = vshrl.u32 2475754826, %v5610
  %v5614 = vor.u32 %v5612, %v5613
  %v5615 = vshll.u32 2475754826, %v5609
  %v5616 = vshrl.u32 2131351028, %v5610
  %v5617 = vor.u32 %v5615, %v5616
  %v5618 = vshll.u32 2131351028, %v5609
  %v5619 = vshrl.u32 2102212464, %v5610
  %v5620 = vor.u32 %v5618, %v5619
  %v5621 = vshll.u32 2102212464, %v5609
  %v5622 = vshrl.u32 920167782, %v5610
  %v5623 = vor.u32 %v5621, %v5622
  %v5624 = vshll.u32 920167782, %v5609
  %v5625 = vshrl.u32 1326507024, %v5610
  %v5626 = vor.u32 %v5624, %v5625
  %vm5627 = vcmp.lt.s32.totalorder %v5608, 1
  %vm5628 = vcmp.lt.s32.totalorder %v5608, 2
  %vm5629 = vcmp.lt.s32.totalorder %v5608, 3
  %vm5630 = vcmp.lt.s32.totalorder %v5608, 4
  %v5631 = vsel %vm5627, %v5611, %v5614
  %v5632 = vsel %vm5630, %v5620, 2102212464
  %v5633 = vsel %vm5629, %v5617, %v5632
  %v5634 = vsel %vm5628, %v5631, %v5633
  %v5635 = vsel %vm5627, %v5614, %v5617
  %v5636 = vsel %vm5630, %v5623, 920167782
  %v5637 = vsel %vm5629, %v5620, %v5636
  %v5638 = vsel %vm5628, %v5635, %v5637
  %v5639 = vsel %vm5627, %v5617, %v5620
  %v5640 = vsel %vm5630, %v5626, 1326507024
  %v5641 = vsel %vm5629, %v5623, %v5640
  %v5642 = vsel %vm5628, %v5639, %v5641
  %v5643 = vshll.u32 %v5603, 8
  %v5644 = vmul.u32.u64.compose %v5643, %v5642
  %v5645 = vextract.low.u32 %v5644
  %v5646 = vextract.high.u32 %v5644
  %v5647 = vmul.u32.u64.compose %v5643, %v5638
  %v5648 = vextract.low.u32 %v5647
  %v5649 = vextract.high.u32 %v5647
  %v5650 = vmul.u32 %v5643, %v5634
  %v5651 = vadd.s32 %v5646, %v5648
  %vm5652 = vc.u32 %v5646, %v5648
  %v5653 = vadd.s32 %v5649, 1
  %v5654 = vsel %vm5652, %v5653, %v5649
  %v5655 = vadd.s32 %v5650, %v5654
  %v5656 = vadd.s32 %v5655, 536870912
  %v5657 = vshrl.u32 %v5656, 30
  %v5658 = vshll.u32 %v5657, 30
  %v5659 = vsub.s32 %v5655, %v5658
  %vm5660 = vcmp.lt.s32.totalorder %v5659, 0
  %v5661 = vsub.s32 0, %v5659
  %v5662 = vsel %vm5660, %v5661, %v5659
  %v5663 = vclz %v5662
  %v5664 = vsub.s32 %v5663, 2
  %vm5665 = vcmp.gt.s32.totalorder 0, %v5664
  %v5666 = vsel %vm5665, 0, %v5664
  %v5667 = vsub.s32 32, %v5666
  %v5668 = vshll.u32 %v5659, %v5666
  %v5669 = vshrl.u32 %v5651, %v5667
  %v5670 = vor.u32 %v5668, %v5669
  %v5671 = vsub.s32 4294967266, %v5666
  %v5672 = vadd.s32 %v5671, 127
  %v5673 = vshll.u32 %v5672, 23
  %v5674 = vor.u32 4788187, %v5673
  %v5675 = vand.u32 2147483647, %v5674
  %v5677 = vcvt.s32.f32 %v5670
  %v5678 = vmul.f32 %v5677, %v5675
  %v5679 = vxor.u32 %v5678, 2147483648
  %v5680 = vsel %vm5597, %v5679, %v5678
  %v5681 = vsub.s32 4, %v5657
  %v5682 = vsel %vm5597, %v5681, %v5657
  %v5683 = vsel %vm5596, %v1215, %v5680
  %v5684 = vsel %vm5596, 0, %v5682
  %v5685 = vcosq.f32.pop %v5683
  %v5686 = vsinq.f32.pop %v5683
  %vm5687 = vweird.f32 %v1215
  %v5688 = vand.u32 %v5684, 3
  %vm5689 = vcmp.lt.s32.totalorder %v5688, 2
  %vm5690 = vcmp.eq.s32.totalorder %v5688, 0
  %v5691 = vxor.u32 %v5686, 2147483648
  %v5692 = vsel %vm5690, %v5685, %v5691
  %vm5693 = vcmp.eq.s32.totalorder %v5688, 2
  %v5694 = vxor.u32 %v5685, 2147483648
  %v5695 = vsel %vm5693, %v5694, %v5686
  %v5696 = vsel %vm5689, %v5692, %v5695
  %v5697 = vsel %vm5687, nan, %v5696
  %v5698 = vand.u32 2147483647, %v1216
  %vm5699 = vcmp.le.f32.partialorder %v5698, 0.7853982
  %vm5700 = vcmp.lt.s32.totalorder %v1216, 0
  %v5701 = vand.u32 %v1216, 2139095040
  %v5702 = vshrl.u32 %v5701, 23
  %v5703 = vsub.s32 %v5702, 127
  %v5704 = vand.u32 2147483647, %v1216
  %v5705 = vand.u32 %v5704, 8388607
  %v5706 = vor.u32 %v5705, 8388608
  %v5707 = vsub.s32 0, %v5706
  %v5708 = vadd.s32 %v5703, 1
  %vm5709 = vcmp.gt.s32.totalorder %v5708, 0
  %v5710 = vsel %vm5709, %v5708, 0
  %v5711 = vshrl.u32 %v5710, 5
  %v5712 = vand.u32 %v5710, 31
  %v5713 = vsub.s32 32, %v5712
  %v5714 = vshrl.u32 683565275, %v5713
  %v5715 = vshll.u32 683565275, %v5712
  %v5716 = vshrl.u32 2475754826, %v5713
  %v5717 = vor.u32 %v5715, %v5716
  %v5718 = vshll.u32 2475754826, %v5712
  %v5719 = vshrl.u32 2131351028, %v5713
  %v5720 = vor.u32 %v5718, %v5719
  %v5721 = vshll.u32 2131351028, %v5712
  %v5722 = vshrl.u32 2102212464, %v5713
  %v5723 = vor.u32 %v5721, %v5722
  %v5724 = vshll.u32 2102212464, %v5712
  %v5725 = vshrl.u32 920167782, %v5713
  %v5726 = vor.u32 %v5724, %v5725
  %v5727 = vshll.u32 920167782, %v5712
  %v5728 = vshrl.u32 1326507024, %v5713
  %v5729 = vor.u32 %v5727, %v5728
  %vm5730 = vcmp.lt.s32.totalorder %v5711, 1
  %vm5731 = vcmp.lt.s32.totalorder %v5711, 2
  %vm5732 = vcmp.lt.s32.totalorder %v5711, 3
  %vm5733 = vcmp.lt.s32.totalorder %v5711, 4
  %v5734 = vsel %vm5730, %v5714, %v5717
  %v5735 = vsel %vm5733, %v5723, 2102212464
  %v5736 = vsel %vm5732, %v5720, %v5735
  %v5737 = vsel %vm5731, %v5734, %v5736
  %v5738 = vsel %vm5730, %v5717, %v5720
  %v5739 = vsel %vm5733, %v5726, 920167782
  %v5740 = vsel %vm5732, %v5723, %v5739
  %v5741 = vsel %vm5731, %v5738, %v5740
  %v5742 = vsel %vm5730, %v5720, %v5723
  %v5743 = vsel %vm5733, %v5729, 1326507024
  %v5744 = vsel %vm5732, %v5726, %v5743
  %v5745 = vsel %vm5731, %v5742, %v5744
  %v5746 = vshll.u32 %v5706, 8
  %v5747 = vmul.u32.u64.compose %v5746, %v5745
  %v5748 = vextract.low.u32 %v5747
  %v5749 = vextract.high.u32 %v5747
  %v5750 = vmul.u32.u64.compose %v5746, %v5741
  %v5751 = vextract.low.u32 %v5750
  %v5752 = vextract.high.u32 %v5750
  %v5753 = vmul.u32 %v5746, %v5737
  %v5754 = vadd.s32 %v5749, %v5751
  %vm5755 = vc.u32 %v5749, %v5751
  %v5756 = vadd.s32 %v5752, 1
  %v5757 = vsel %vm5755, %v5756, %v5752
  %v5758 = vadd.s32 %v5753, %v5757
  %v5759 = vadd.s32 %v5758, 536870912
  %v5760 = vshrl.u32 %v5759, 30
  %v5761 = vshll.u32 %v5760, 30
  %v5762 = vsub.s32 %v5758, %v5761
  %vm5763 = vcmp.lt.s32.totalorder %v5762, 0
  %v5764 = vsub.s32 0, %v5762
  %v5765 = vsel %vm5763, %v5764, %v5762
  %v5766 = vclz %v5765
  %v5767 = vsub.s32 %v5766, 2
  %vm5768 = vcmp.gt.s32.totalorder 0, %v5767
  %v5769 = vsel %vm5768, 0, %v5767
  %v5770 = vsub.s32 32, %v5769
  %v5771 = vshll.u32 %v5762, %v5769
  %v5772 = vshrl.u32 %v5754, %v5770
  %v5773 = vor.u32 %v5771, %v5772
  %v5774 = vsub.s32 4294967266, %v5769
  %v5775 = vadd.s32 %v5774, 127
  %v5776 = vshll.u32 %v5775, 23
  %v5777 = vor.u32 4788187, %v5776
  %v5778 = vand.u32 2147483647, %v5777
  %v5780 = vcvt.s32.f32 %v5773
  %v5781 = vmul.f32 %v5780, %v5778
  %v5782 = vxor.u32 %v5781, 2147483648
  %v5783 = vsel %vm5700, %v5782, %v5781
  %v5784 = vsub.s32 4, %v5760
  %v5785 = vsel %vm5700, %v5784, %v5760
  %v5786 = vsel %vm5699, %v1216, %v5783
  %v5787 = vsel %vm5699, 0, %v5785
  %v5788 = vcosq.f32.pop %v5786
  %v5789 = vsinq.f32.pop %v5786
  %vm5790 = vweird.f32 %v1216
  %v5791 = vand.u32 %v5787, 3
  %vm5792 = vcmp.lt.s32.totalorder %v5791, 2
  %vm5793 = vcmp.eq.s32.totalorder %v5791, 0
  %v5794 = vxor.u32 %v5789, 2147483648
  %v5795 = vsel %vm5793, %v5788, %v5794
  %vm5796 = vcmp.eq.s32.totalorder %v5791, 2
  %v5797 = vxor.u32 %v5788, 2147483648
  %v5798 = vsel %vm5796, %v5797, %v5789
  %v5799 = vsel %vm5792, %v5795, %v5798
  %v5800 = vsel %vm5790, nan, %v5799
  %v5801 = vand.u32 2147483647, %v1217
  %vm5802 = vcmp.le.f32.partialorder %v5801, 0.7853982
  %vm5803 = vcmp.lt.s32.totalorder %v1217, 0
  %v5804 = vand.u32 %v1217, 2139095040
  %v5805 = vshrl.u32 %v5804, 23
  %v5806 = vsub.s32 %v5805, 127
  %v5807 = vand.u32 2147483647, %v1217
  %v5808 = vand.u32 %v5807, 8388607
  %v5809 = vor.u32 %v5808, 8388608
  %v5810 = vsub.s32 0, %v5809
  %v5811 = vadd.s32 %v5806, 1
  %vm5812 = vcmp.gt.s32.totalorder %v5811, 0
  %v5813 = vsel %vm5812, %v5811, 0
  %v5814 = vshrl.u32 %v5813, 5
  %v5815 = vand.u32 %v5813, 31
  %v5816 = vsub.s32 32, %v5815
  %v5817 = vshrl.u32 683565275, %v5816
  %v5818 = vshll.u32 683565275, %v5815
  %v5819 = vshrl.u32 2475754826, %v5816
  %v5820 = vor.u32 %v5818, %v5819
  %v5821 = vshll.u32 2475754826, %v5815
  %v5822 = vshrl.u32 2131351028, %v5816
  %v5823 = vor.u32 %v5821, %v5822
  %v5824 = vshll.u32 2131351028, %v5815
  %v5825 = vshrl.u32 2102212464, %v5816
  %v5826 = vor.u32 %v5824, %v5825
  %v5827 = vshll.u32 2102212464, %v5815
  %v5828 = vshrl.u32 920167782, %v5816
  %v5829 = vor.u32 %v5827, %v5828
  %v5830 = vshll.u32 920167782, %v5815
  %v5831 = vshrl.u32 1326507024, %v5816
  %v5832 = vor.u32 %v5830, %v5831
  %vm5833 = vcmp.lt.s32.totalorder %v5814, 1
  %vm5834 = vcmp.lt.s32.totalorder %v5814, 2
  %vm5835 = vcmp.lt.s32.totalorder %v5814, 3
  %vm5836 = vcmp.lt.s32.totalorder %v5814, 4
  %v5837 = vsel %vm5833, %v5817, %v5820
  %v5838 = vsel %vm5836, %v5826, 2102212464
  %v5839 = vsel %vm5835, %v5823, %v5838
  %v5840 = vsel %vm5834, %v5837, %v5839
  %v5841 = vsel %vm5833, %v5820, %v5823
  %v5842 = vsel %vm5836, %v5829, 920167782
  %v5843 = vsel %vm5835, %v5826, %v5842
  %v5844 = vsel %vm5834, %v5841, %v5843
  %v5845 = vsel %vm5833, %v5823, %v5826
  %v5846 = vsel %vm5836, %v5832, 1326507024
  %v5847 = vsel %vm5835, %v5829, %v5846
  %v5848 = vsel %vm5834, %v5845, %v5847
  %v5849 = vshll.u32 %v5809, 8
  %v5850 = vmul.u32.u64.compose %v5849, %v5848
  %v5851 = vextract.low.u32 %v5850
  %v5852 = vextract.high.u32 %v5850
  %v5853 = vmul.u32.u64.compose %v5849, %v5844
  %v5854 = vextract.low.u32 %v5853
  %v5855 = vextract.high.u32 %v5853
  %v5856 = vmul.u32 %v5849, %v5840
  %v5857 = vadd.s32 %v5852, %v5854
  %vm5858 = vc.u32 %v5852, %v5854
  %v5859 = vadd.s32 %v5855, 1
  %v5860 = vsel %vm5858, %v5859, %v5855
  %v5861 = vadd.s32 %v5856, %v5860
  %v5862 = vadd.s32 %v5861, 536870912
  %v5863 = vshrl.u32 %v5862, 30
  %v5864 = vshll.u32 %v5863, 30
  %v5865 = vsub.s32 %v5861, %v5864
  %vm5866 = vcmp.lt.s32.totalorder %v5865, 0
  %v5867 = vsub.s32 0, %v5865
  %v5868 = vsel %vm5866, %v5867, %v5865
  %v5869 = vclz %v5868
  %v5870 = vsub.s32 %v5869, 2
  %vm5871 = vcmp.gt.s32.totalorder 0, %v5870
  %v5872 = vsel %vm5871, 0, %v5870
  %v5873 = vsub.s32 32, %v5872
  %v5874 = vshll.u32 %v5865, %v5872
  %v5875 = vshrl.u32 %v5857, %v5873
  %v5876 = vor.u32 %v5874, %v5875
  %v5877 = vsub.s32 4294967266, %v5872
  %v5878 = vadd.s32 %v5877, 127
  %v5879 = vshll.u32 %v5878, 23
  %v5880 = vor.u32 4788187, %v5879
  %v5881 = vand.u32 2147483647, %v5880
  %v5883 = vcvt.s32.f32 %v5876
  %v5884 = vmul.f32 %v5883, %v5881
  %v5885 = vxor.u32 %v5884, 2147483648
  %v5886 = vsel %vm5803, %v5885, %v5884
  %v5887 = vsub.s32 4, %v5863
  %v5888 = vsel %vm5803, %v5887, %v5863
  %v5889 = vsel %vm5802, %v1217, %v5886
  %v5890 = vsel %vm5802, 0, %v5888
  %v5891 = vcosq.f32.pop %v5889
  %v5892 = vsinq.f32.pop %v5889
  %vm5893 = vweird.f32 %v1217
  %v5894 = vand.u32 %v5890, 3
  %vm5895 = vcmp.lt.s32.totalorder %v5894, 2
  %vm5896 = vcmp.eq.s32.totalorder %v5894, 0
  %v5897 = vxor.u32 %v5892, 2147483648
  %v5898 = vsel %vm5896, %v5891, %v5897
  %vm5899 = vcmp.eq.s32.totalorder %v5894, 2
  %v5900 = vxor.u32 %v5891, 2147483648
  %v5901 = vsel %vm5899, %v5900, %v5892
  %v5902 = vsel %vm5895, %v5898, %v5901
  %v5903 = vsel %vm5893, nan, %v5902
  %v5904 = vand.u32 2147483647, %v1218
  %vm5905 = vcmp.le.f32.partialorder %v5904, 0.7853982
  %vm5906 = vcmp.lt.s32.totalorder %v1218, 0
  %v5907 = vand.u32 %v1218, 2139095040
  %v5908 = vshrl.u32 %v5907, 23
  %v5909 = vsub.s32 %v5908, 127
  %v5910 = vand.u32 2147483647, %v1218
  %v5911 = vand.u32 %v5910, 8388607
  %v5912 = vor.u32 %v5911, 8388608
  %v5913 = vsub.s32 0, %v5912
  %v5914 = vadd.s32 %v5909, 1
  %vm5915 = vcmp.gt.s32.totalorder %v5914, 0
  %v5916 = vsel %vm5915, %v5914, 0
  %v5917 = vshrl.u32 %v5916, 5
  %v5918 = vand.u32 %v5916, 31
  %v5919 = vsub.s32 32, %v5918
  %v5920 = vshrl.u32 683565275, %v5919
  %v5921 = vshll.u32 683565275, %v5918
  %v5922 = vshrl.u32 2475754826, %v5919
  %v5923 = vor.u32 %v5921, %v5922
  %v5924 = vshll.u32 2475754826, %v5918
  %v5925 = vshrl.u32 2131351028, %v5919
  %v5926 = vor.u32 %v5924, %v5925
  %v5927 = vshll.u32 2131351028, %v5918
  %v5928 = vshrl.u32 2102212464, %v5919
  %v5929 = vor.u32 %v5927, %v5928
  %v5930 = vshll.u32 2102212464, %v5918
  %v5931 = vshrl.u32 920167782, %v5919
  %v5932 = vor.u32 %v5930, %v5931
  %v5933 = vshll.u32 920167782, %v5918
  %v5934 = vshrl.u32 1326507024, %v5919
  %v5935 = vor.u32 %v5933, %v5934
  %vm5936 = vcmp.lt.s32.totalorder %v5917, 1
  %vm5937 = vcmp.lt.s32.totalorder %v5917, 2
  %vm5938 = vcmp.lt.s32.totalorder %v5917, 3
  %vm5939 = vcmp.lt.s32.totalorder %v5917, 4
  %v5940 = vsel %vm5936, %v5920, %v5923
  %v5941 = vsel %vm5939, %v5929, 2102212464
  %v5942 = vsel %vm5938, %v5926, %v5941
  %v5943 = vsel %vm5937, %v5940, %v5942
  %v5944 = vsel %vm5936, %v5923, %v5926
  %v5945 = vsel %vm5939, %v5932, 920167782
  %v5946 = vsel %vm5938, %v5929, %v5945
  %v5947 = vsel %vm5937, %v5944, %v5946
  %v5948 = vsel %vm5936, %v5926, %v5929
  %v5949 = vsel %vm5939, %v5935, 1326507024
  %v5950 = vsel %vm5938, %v5932, %v5949
  %v5951 = vsel %vm5937, %v5948, %v5950
  %v5952 = vshll.u32 %v5912, 8
  %v5953 = vmul.u32.u64.compose %v5952, %v5951
  %v5954 = vextract.low.u32 %v5953
  %v5955 = vextract.high.u32 %v5953
  %v5956 = vmul.u32.u64.compose %v5952, %v5947
  %v5957 = vextract.low.u32 %v5956
  %v5958 = vextract.high.u32 %v5956
  %v5959 = vmul.u32 %v5952, %v5943
  %v5960 = vadd.s32 %v5955, %v5957
  %vm5961 = vc.u32 %v5955, %v5957
  %v5962 = vadd.s32 %v5958, 1
  %v5963 = vsel %vm5961, %v5962, %v5958
  %v5964 = vadd.s32 %v5959, %v5963
  %v5965 = vadd.s32 %v5964, 536870912
  %v5966 = vshrl.u32 %v5965, 30
  %v5967 = vshll.u32 %v5966, 30
  %v5968 = vsub.s32 %v5964, %v5967
  %vm5969 = vcmp.lt.s32.totalorder %v5968, 0
  %v5970 = vsub.s32 0, %v5968
  %v5971 = vsel %vm5969, %v5970, %v5968
  %v5972 = vclz %v5971
  %v5973 = vsub.s32 %v5972, 2
  %vm5974 = vcmp.gt.s32.totalorder 0, %v5973
  %v5975 = vsel %vm5974, 0, %v5973
  %v5976 = vsub.s32 32, %v5975
  %v5977 = vshll.u32 %v5968, %v5975
  %v5978 = vshrl.u32 %v5960, %v5976
  %v5979 = vor.u32 %v5977, %v5978
  %v5980 = vsub.s32 4294967266, %v5975
  %v5981 = vadd.s32 %v5980, 127
  %v5982 = vshll.u32 %v5981, 23
  %v5983 = vor.u32 4788187, %v5982
  %v5984 = vand.u32 2147483647, %v5983
  %v5986 = vcvt.s32.f32 %v5979
  %v5987 = vmul.f32 %v5986, %v5984
  %v5988 = vxor.u32 %v5987, 2147483648
  %v5989 = vsel %vm5906, %v5988, %v5987
  %v5990 = vsub.s32 4, %v5966
  %v5991 = vsel %vm5906, %v5990, %v5966
  %v5992 = vsel %vm5905, %v1218, %v5989
  %v5993 = vsel %vm5905, 0, %v5991
  %v5994 = vcosq.f32.pop %v5992
  %v5995 = vsinq.f32.pop %v5992
  %vm5996 = vweird.f32 %v1218
  %v5997 = vand.u32 %v5993, 3
  %vm5998 = vcmp.lt.s32.totalorder %v5997, 2
  %vm5999 = vcmp.eq.s32.totalorder %v5997, 0
  %v6000 = vxor.u32 %v5995, 2147483648
  %v6001 = vsel %vm5999, %v5994, %v6000
  %vm6002 = vcmp.eq.s32.totalorder %v5997, 2
  %v6003 = vxor.u32 %v5994, 2147483648
  %v6004 = vsel %vm6002, %v6003, %v5995
  %v6005 = vsel %vm5998, %v6001, %v6004
  %v6006 = vsel %vm5996, nan, %v6005
  %v6007 = vand.u32 2147483647, %v1219
  %vm6008 = vcmp.le.f32.partialorder %v6007, 0.7853982
  %vm6009 = vcmp.lt.s32.totalorder %v1219, 0
  %v6010 = vand.u32 %v1219, 2139095040
  %v6011 = vshrl.u32 %v6010, 23
  %v6012 = vsub.s32 %v6011, 127
  %v6013 = vand.u32 2147483647, %v1219
  %v6014 = vand.u32 %v6013, 8388607
  %v6015 = vor.u32 %v6014, 8388608
  %v6016 = vsub.s32 0, %v6015
  %v6017 = vadd.s32 %v6012, 1
  %vm6018 = vcmp.gt.s32.totalorder %v6017, 0
  %v6019 = vsel %vm6018, %v6017, 0
  %v6020 = vshrl.u32 %v6019, 5
  %v6021 = vand.u32 %v6019, 31
  %v6022 = vsub.s32 32, %v6021
  %v6023 = vshrl.u32 683565275, %v6022
  %v6024 = vshll.u32 683565275, %v6021
  %v6025 = vshrl.u32 2475754826, %v6022
  %v6026 = vor.u32 %v6024, %v6025
  %v6027 = vshll.u32 2475754826, %v6021
  %v6028 = vshrl.u32 2131351028, %v6022
  %v6029 = vor.u32 %v6027, %v6028
  %v6030 = vshll.u32 2131351028, %v6021
  %v6031 = vshrl.u32 2102212464, %v6022
  %v6032 = vor.u32 %v6030, %v6031
  %v6033 = vshll.u32 2102212464, %v6021
  %v6034 = vshrl.u32 920167782, %v6022
  %v6035 = vor.u32 %v6033, %v6034
  %v6036 = vshll.u32 920167782, %v6021
  %v6037 = vshrl.u32 1326507024, %v6022
  %v6038 = vor.u32 %v6036, %v6037
  %vm6039 = vcmp.lt.s32.totalorder %v6020, 1
  %vm6040 = vcmp.lt.s32.totalorder %v6020, 2
  %vm6041 = vcmp.lt.s32.totalorder %v6020, 3
  %vm6042 = vcmp.lt.s32.totalorder %v6020, 4
  %v6043 = vsel %vm6039, %v6023, %v6026
  %v6044 = vsel %vm6042, %v6032, 2102212464
  %v6045 = vsel %vm6041, %v6029, %v6044
  %v6046 = vsel %vm6040, %v6043, %v6045
  %v6047 = vsel %vm6039, %v6026, %v6029
  %v6048 = vsel %vm6042, %v6035, 920167782
  %v6049 = vsel %vm6041, %v6032, %v6048
  %v6050 = vsel %vm6040, %v6047, %v6049
  %v6051 = vsel %vm6039, %v6029, %v6032
  %v6052 = vsel %vm6042, %v6038, 1326507024
  %v6053 = vsel %vm6041, %v6035, %v6052
  %v6054 = vsel %vm6040, %v6051, %v6053
  %v6055 = vshll.u32 %v6015, 8
  %v6056 = vmul.u32.u64.compose %v6055, %v6054
  %v6057 = vextract.low.u32 %v6056
  %v6058 = vextract.high.u32 %v6056
  %v6059 = vmul.u32.u64.compose %v6055, %v6050
  %v6060 = vextract.low.u32 %v6059
  %v6061 = vextract.high.u32 %v6059
  %v6062 = vmul.u32 %v6055, %v6046
  %v6063 = vadd.s32 %v6058, %v6060
  %vm6064 = vc.u32 %v6058, %v6060
  %v6065 = vadd.s32 %v6061, 1
  %v6066 = vsel %vm6064, %v6065, %v6061
  %v6067 = vadd.s32 %v6062, %v6066
  %v6068 = vadd.s32 %v6067, 536870912
  %v6069 = vshrl.u32 %v6068, 30
  %v6070 = vshll.u32 %v6069, 30
  %v6071 = vsub.s32 %v6067, %v6070
  %vm6072 = vcmp.lt.s32.totalorder %v6071, 0
  %v6073 = vsub.s32 0, %v6071
  %v6074 = vsel %vm6072, %v6073, %v6071
  %v6075 = vclz %v6074
  %v6076 = vsub.s32 %v6075, 2
  %vm6077 = vcmp.gt.s32.totalorder 0, %v6076
  %v6078 = vsel %vm6077, 0, %v6076
  %v6079 = vsub.s32 32, %v6078
  %v6080 = vshll.u32 %v6071, %v6078
  %v6081 = vshrl.u32 %v6063, %v6079
  %v6082 = vor.u32 %v6080, %v6081
  %v6083 = vsub.s32 4294967266, %v6078
  %v6084 = vadd.s32 %v6083, 127
  %v6085 = vshll.u32 %v6084, 23
  %v6086 = vor.u32 4788187, %v6085
  %v6087 = vand.u32 2147483647, %v6086
  %v6089 = vcvt.s32.f32 %v6082
  %v6090 = vmul.f32 %v6089, %v6087
  %v6091 = vxor.u32 %v6090, 2147483648
  %v6092 = vsel %vm6009, %v6091, %v6090
  %v6093 = vsub.s32 4, %v6069
  %v6094 = vsel %vm6009, %v6093, %v6069
  %v6095 = vsel %vm6008, %v1219, %v6092
  %v6096 = vsel %vm6008, 0, %v6094
  %v6097 = vcosq.f32.pop %v6095
  %v6098 = vsinq.f32.pop %v6095
  %vm6099 = vweird.f32 %v1219
  %v6100 = vand.u32 %v6096, 3
  %vm6101 = vcmp.lt.s32.totalorder %v6100, 2
  %vm6102 = vcmp.eq.s32.totalorder %v6100, 0
  %v6103 = vxor.u32 %v6098, 2147483648
  %v6104 = vsel %vm6102, %v6097, %v6103
  %vm6105 = vcmp.eq.s32.totalorder %v6100, 2
  %v6106 = vxor.u32 %v6097, 2147483648
  %v6107 = vsel %vm6105, %v6106, %v6098
  %v6108 = vsel %vm6101, %v6104, %v6107
  %v6109 = vsel %vm6099, nan, %v6108
  %v6110 = vand.u32 2147483647, %v1220
  %vm6111 = vcmp.le.f32.partialorder %v6110, 0.7853982
  %vm6112 = vcmp.lt.s32.totalorder %v1220, 0
  %v6113 = vand.u32 %v1220, 2139095040
  %v6114 = vshrl.u32 %v6113, 23
  %v6115 = vsub.s32 %v6114, 127
  %v6116 = vand.u32 2147483647, %v1220
  %v6117 = vand.u32 %v6116, 8388607
  %v6118 = vor.u32 %v6117, 8388608
  %v6119 = vsub.s32 0, %v6118
  %v6120 = vadd.s32 %v6115, 1
  %vm6121 = vcmp.gt.s32.totalorder %v6120, 0
  %v6122 = vsel %vm6121, %v6120, 0
  %v6123 = vshrl.u32 %v6122, 5
  %v6124 = vand.u32 %v6122, 31
  %v6125 = vsub.s32 32, %v6124
  %v6126 = vshrl.u32 683565275, %v6125
  %v6127 = vshll.u32 683565275, %v6124
  %v6128 = vshrl.u32 2475754826, %v6125
  %v6129 = vor.u32 %v6127, %v6128
  %v6130 = vshll.u32 2475754826, %v6124
  %v6131 = vshrl.u32 2131351028, %v6125
  %v6132 = vor.u32 %v6130, %v6131
  %v6133 = vshll.u32 2131351028, %v6124
  %v6134 = vshrl.u32 2102212464, %v6125
  %v6135 = vor.u32 %v6133, %v6134
  %v6136 = vshll.u32 2102212464, %v6124
  %v6137 = vshrl.u32 920167782, %v6125
  %v6138 = vor.u32 %v6136, %v6137
  %v6139 = vshll.u32 920167782, %v6124
  %v6140 = vshrl.u32 1326507024, %v6125
  %v6141 = vor.u32 %v6139, %v6140
  %vm6142 = vcmp.lt.s32.totalorder %v6123, 1
  %vm6143 = vcmp.lt.s32.totalorder %v6123, 2
  %vm6144 = vcmp.lt.s32.totalorder %v6123, 3
  %vm6145 = vcmp.lt.s32.totalorder %v6123, 4
  %v6146 = vsel %vm6142, %v6126, %v6129
  %v6147 = vsel %vm6145, %v6135, 2102212464
  %v6148 = vsel %vm6144, %v6132, %v6147
  %v6149 = vsel %vm6143, %v6146, %v6148
  %v6150 = vsel %vm6142, %v6129, %v6132
  %v6151 = vsel %vm6145, %v6138, 920167782
  %v6152 = vsel %vm6144, %v6135, %v6151
  %v6153 = vsel %vm6143, %v6150, %v6152
  %v6154 = vsel %vm6142, %v6132, %v6135
  %v6155 = vsel %vm6145, %v6141, 1326507024
  %v6156 = vsel %vm6144, %v6138, %v6155
  %v6157 = vsel %vm6143, %v6154, %v6156
  %v6158 = vshll.u32 %v6118, 8
  %v6159 = vmul.u32.u64.compose %v6158, %v6157
  %v6160 = vextract.low.u32 %v6159
  %v6161 = vextract.high.u32 %v6159
  %v6162 = vmul.u32.u64.compose %v6158, %v6153
  %v6163 = vextract.low.u32 %v6162
  %v6164 = vextract.high.u32 %v6162
  %v6165 = vmul.u32 %v6158, %v6149
  %v6166 = vadd.s32 %v6161, %v6163
  %vm6167 = vc.u32 %v6161, %v6163
  %v6168 = vadd.s32 %v6164, 1
  %v6169 = vsel %vm6167, %v6168, %v6164
  %v6170 = vadd.s32 %v6165, %v6169
  %v6171 = vadd.s32 %v6170, 536870912
  %v6172 = vshrl.u32 %v6171, 30
  %v6173 = vshll.u32 %v6172, 30
  %v6174 = vsub.s32 %v6170, %v6173
  %vm6175 = vcmp.lt.s32.totalorder %v6174, 0
  %v6176 = vsub.s32 0, %v6174
  %v6177 = vsel %vm6175, %v6176, %v6174
  %v6178 = vclz %v6177
  %v6179 = vsub.s32 %v6178, 2
  %vm6180 = vcmp.gt.s32.totalorder 0, %v6179
  %v6181 = vsel %vm6180, 0, %v6179
  %v6182 = vsub.s32 32, %v6181
  %v6183 = vshll.u32 %v6174, %v6181
  %v6184 = vshrl.u32 %v6166, %v6182
  %v6185 = vor.u32 %v6183, %v6184
  %v6186 = vsub.s32 4294967266, %v6181
  %v6187 = vadd.s32 %v6186, 127
  %v6188 = vshll.u32 %v6187, 23
  %v6189 = vor.u32 4788187, %v6188
  %v6190 = vand.u32 2147483647, %v6189
  %v6192 = vcvt.s32.f32 %v6185
  %v6193 = vmul.f32 %v6192, %v6190
  %v6194 = vxor.u32 %v6193, 2147483648
  %v6195 = vsel %vm6112, %v6194, %v6193
  %v6196 = vsub.s32 4, %v6172
  %v6197 = vsel %vm6112, %v6196, %v6172
  %v6198 = vsel %vm6111, %v1220, %v6195
  %v6199 = vsel %vm6111, 0, %v6197
  %v6200 = vcosq.f32.pop %v6198
  %v6201 = vsinq.f32.pop %v6198
  %vm6202 = vweird.f32 %v1220
  %v6203 = vand.u32 %v6199, 3
  %vm6204 = vcmp.lt.s32.totalorder %v6203, 2
  %vm6205 = vcmp.eq.s32.totalorder %v6203, 0
  %v6206 = vxor.u32 %v6201, 2147483648
  %v6207 = vsel %vm6205, %v6200, %v6206
  %vm6208 = vcmp.eq.s32.totalorder %v6203, 2
  %v6209 = vxor.u32 %v6200, 2147483648
  %v6210 = vsel %vm6208, %v6209, %v6201
  %v6211 = vsel %vm6204, %v6207, %v6210
  %v6212 = vsel %vm6202, nan, %v6211
  %v6213 = vand.u32 2147483647, %v1221
  %vm6214 = vcmp.le.f32.partialorder %v6213, 0.7853982
  %vm6215 = vcmp.lt.s32.totalorder %v1221, 0
  %v6216 = vand.u32 %v1221, 2139095040
  %v6217 = vshrl.u32 %v6216, 23
  %v6218 = vsub.s32 %v6217, 127
  %v6219 = vand.u32 2147483647, %v1221
  %v6220 = vand.u32 %v6219, 8388607
  %v6221 = vor.u32 %v6220, 8388608
  %v6222 = vsub.s32 0, %v6221
  %v6223 = vadd.s32 %v6218, 1
  %vm6224 = vcmp.gt.s32.totalorder %v6223, 0
  %v6225 = vsel %vm6224, %v6223, 0
  %v6226 = vshrl.u32 %v6225, 5
  %v6227 = vand.u32 %v6225, 31
  %v6228 = vsub.s32 32, %v6227
  %v6229 = vshrl.u32 683565275, %v6228
  %v6230 = vshll.u32 683565275, %v6227
  %v6231 = vshrl.u32 2475754826, %v6228
  %v6232 = vor.u32 %v6230, %v6231
  %v6233 = vshll.u32 2475754826, %v6227
  %v6234 = vshrl.u32 2131351028, %v6228
  %v6235 = vor.u32 %v6233, %v6234
  %v6236 = vshll.u32 2131351028, %v6227
  %v6237 = vshrl.u32 2102212464, %v6228
  %v6238 = vor.u32 %v6236, %v6237
  %v6239 = vshll.u32 2102212464, %v6227
  %v6240 = vshrl.u32 920167782, %v6228
  %v6241 = vor.u32 %v6239, %v6240
  %v6242 = vshll.u32 920167782, %v6227
  %v6243 = vshrl.u32 1326507024, %v6228
  %v6244 = vor.u32 %v6242, %v6243
  %vm6245 = vcmp.lt.s32.totalorder %v6226, 1
  %vm6246 = vcmp.lt.s32.totalorder %v6226, 2
  %vm6247 = vcmp.lt.s32.totalorder %v6226, 3
  %vm6248 = vcmp.lt.s32.totalorder %v6226, 4
  %v6249 = vsel %vm6245, %v6229, %v6232
  %v6250 = vsel %vm6248, %v6238, 2102212464
  %v6251 = vsel %vm6247, %v6235, %v6250
  %v6252 = vsel %vm6246, %v6249, %v6251
  %v6253 = vsel %vm6245, %v6232, %v6235
  %v6254 = vsel %vm6248, %v6241, 920167782
  %v6255 = vsel %vm6247, %v6238, %v6254
  %v6256 = vsel %vm6246, %v6253, %v6255
  %v6257 = vsel %vm6245, %v6235, %v6238
  %v6258 = vsel %vm6248, %v6244, 1326507024
  %v6259 = vsel %vm6247, %v6241, %v6258
  %v6260 = vsel %vm6246, %v6257, %v6259
  %v6261 = vshll.u32 %v6221, 8
  %v6262 = vmul.u32.u64.compose %v6261, %v6260
  %v6263 = vextract.low.u32 %v6262
  %v6264 = vextract.high.u32 %v6262
  %v6265 = vmul.u32.u64.compose %v6261, %v6256
  %v6266 = vextract.low.u32 %v6265
  %v6267 = vextract.high.u32 %v6265
  %v6268 = vmul.u32 %v6261, %v6252
  %v6269 = vadd.s32 %v6264, %v6266
  %vm6270 = vc.u32 %v6264, %v6266
  %v6271 = vadd.s32 %v6267, 1
  %v6272 = vsel %vm6270, %v6271, %v6267
  %v6273 = vadd.s32 %v6268, %v6272
  %v6274 = vadd.s32 %v6273, 536870912
  %v6275 = vshrl.u32 %v6274, 30
  %v6276 = vshll.u32 %v6275, 30
  %v6277 = vsub.s32 %v6273, %v6276
  %vm6278 = vcmp.lt.s32.totalorder %v6277, 0
  %v6279 = vsub.s32 0, %v6277
  %v6280 = vsel %vm6278, %v6279, %v6277
  %v6281 = vclz %v6280
  %v6282 = vsub.s32 %v6281, 2
  %vm6283 = vcmp.gt.s32.totalorder 0, %v6282
  %v6284 = vsel %vm6283, 0, %v6282
  %v6285 = vsub.s32 32, %v6284
  %v6286 = vshll.u32 %v6277, %v6284
  %v6287 = vshrl.u32 %v6269, %v6285
  %v6288 = vor.u32 %v6286, %v6287
  %v6289 = vsub.s32 4294967266, %v6284
  %v6290 = vadd.s32 %v6289, 127
  %v6291 = vshll.u32 %v6290, 23
  %v6292 = vor.u32 4788187, %v6291
  %v6293 = vand.u32 2147483647, %v6292
  %v6295 = vcvt.s32.f32 %v6288
  %v6296 = vmul.f32 %v6295, %v6293
  %v6297 = vxor.u32 %v6296, 2147483648
  %v6298 = vsel %vm6215, %v6297, %v6296
  %v6299 = vsub.s32 4, %v6275
  %v6300 = vsel %vm6215, %v6299, %v6275
  %v6301 = vsel %vm6214, %v1221, %v6298
  %v6302 = vsel %vm6214, 0, %v6300
  %v6303 = vcosq.f32.pop %v6301
  %v6304 = vsinq.f32.pop %v6301
  %vm6305 = vweird.f32 %v1221
  %v6306 = vand.u32 %v6302, 3
  %vm6307 = vcmp.lt.s32.totalorder %v6306, 2
  %vm6308 = vcmp.eq.s32.totalorder %v6306, 0
  %v6309 = vxor.u32 %v6304, 2147483648
  %v6310 = vsel %vm6308, %v6303, %v6309
  %vm6311 = vcmp.eq.s32.totalorder %v6306, 2
  %v6312 = vxor.u32 %v6303, 2147483648
  %v6313 = vsel %vm6311, %v6312, %v6304
  %v6314 = vsel %vm6307, %v6310, %v6313
  %v6315 = vsel %vm6305, nan, %v6314
  %v6316 = vand.u32 2147483647, %v1222
  %vm6317 = vcmp.le.f32.partialorder %v6316, 0.7853982
  %vm6318 = vcmp.lt.s32.totalorder %v1222, 0
  %v6319 = vand.u32 %v1222, 2139095040
  %v6320 = vshrl.u32 %v6319, 23
  %v6321 = vsub.s32 %v6320, 127
  %v6322 = vand.u32 2147483647, %v1222
  %v6323 = vand.u32 %v6322, 8388607
  %v6324 = vor.u32 %v6323, 8388608
  %v6325 = vsub.s32 0, %v6324
  %v6326 = vadd.s32 %v6321, 1
  %vm6327 = vcmp.gt.s32.totalorder %v6326, 0
  %v6328 = vsel %vm6327, %v6326, 0
  %v6329 = vshrl.u32 %v6328, 5
  %v6330 = vand.u32 %v6328, 31
  %v6331 = vsub.s32 32, %v6330
  %v6332 = vshrl.u32 683565275, %v6331
  %v6333 = vshll.u32 683565275, %v6330
  %v6334 = vshrl.u32 2475754826, %v6331
  %v6335 = vor.u32 %v6333, %v6334
  %v6336 = vshll.u32 2475754826, %v6330
  %v6337 = vshrl.u32 2131351028, %v6331
  %v6338 = vor.u32 %v6336, %v6337
  %v6339 = vshll.u32 2131351028, %v6330
  %v6340 = vshrl.u32 2102212464, %v6331
  %v6341 = vor.u32 %v6339, %v6340
  %v6342 = vshll.u32 2102212464, %v6330
  %v6343 = vshrl.u32 920167782, %v6331
  %v6344 = vor.u32 %v6342, %v6343
  %v6345 = vshll.u32 920167782, %v6330
  %v6346 = vshrl.u32 1326507024, %v6331
  %v6347 = vor.u32 %v6345, %v6346
  %vm6348 = vcmp.lt.s32.totalorder %v6329, 1
  %vm6349 = vcmp.lt.s32.totalorder %v6329, 2
  %vm6350 = vcmp.lt.s32.totalorder %v6329, 3
  %vm6351 = vcmp.lt.s32.totalorder %v6329, 4
  %v6352 = vsel %vm6348, %v6332, %v6335
  %v6353 = vsel %vm6351, %v6341, 2102212464
  %v6354 = vsel %vm6350, %v6338, %v6353
  %v6355 = vsel %vm6349, %v6352, %v6354
  %v6356 = vsel %vm6348, %v6335, %v6338
  %v6357 = vsel %vm6351, %v6344, 920167782
  %v6358 = vsel %vm6350, %v6341, %v6357
  %v6359 = vsel %vm6349, %v6356, %v6358
  %v6360 = vsel %vm6348, %v6338, %v6341
  %v6361 = vsel %vm6351, %v6347, 1326507024
  %v6362 = vsel %vm6350, %v6344, %v6361
  %v6363 = vsel %vm6349, %v6360, %v6362
  %v6364 = vshll.u32 %v6324, 8
  %v6365 = vmul.u32.u64.compose %v6364, %v6363
  %v6366 = vextract.low.u32 %v6365
  %v6367 = vextract.high.u32 %v6365
  %v6368 = vmul.u32.u64.compose %v6364, %v6359
  %v6369 = vextract.low.u32 %v6368
  %v6370 = vextract.high.u32 %v6368
  %v6371 = vmul.u32 %v6364, %v6355
  %v6372 = vadd.s32 %v6367, %v6369
  %vm6373 = vc.u32 %v6367, %v6369
  %v6374 = vadd.s32 %v6370, 1
  %v6375 = vsel %vm6373, %v6374, %v6370
  %v6376 = vadd.s32 %v6371, %v6375
  %v6377 = vadd.s32 %v6376, 536870912
  %v6378 = vshrl.u32 %v6377, 30
  %v6379 = vshll.u32 %v6378, 30
  %v6380 = vsub.s32 %v6376, %v6379
  %vm6381 = vcmp.lt.s32.totalorder %v6380, 0
  %v6382 = vsub.s32 0, %v6380
  %v6383 = vsel %vm6381, %v6382, %v6380
  %v6384 = vclz %v6383
  %v6385 = vsub.s32 %v6384, 2
  %vm6386 = vcmp.gt.s32.totalorder 0, %v6385
  %v6387 = vsel %vm6386, 0, %v6385
  %v6388 = vsub.s32 32, %v6387
  %v6389 = vshll.u32 %v6380, %v6387
  %v6390 = vshrl.u32 %v6372, %v6388
  %v6391 = vor.u32 %v6389, %v6390
  %v6392 = vsub.s32 4294967266, %v6387
  %v6393 = vadd.s32 %v6392, 127
  %v6394 = vshll.u32 %v6393, 23
  %v6395 = vor.u32 4788187, %v6394
  %v6396 = vand.u32 2147483647, %v6395
  %v6398 = vcvt.s32.f32 %v6391
  %v6399 = vmul.f32 %v6398, %v6396
  %v6400 = vxor.u32 %v6399, 2147483648
  %v6401 = vsel %vm6318, %v6400, %v6399
  %v6402 = vsub.s32 4, %v6378
  %v6403 = vsel %vm6318, %v6402, %v6378
  %v6404 = vsel %vm6317, %v1222, %v6401
  %v6405 = vsel %vm6317, 0, %v6403
  %v6406 = vcosq.f32.pop %v6404
  %v6407 = vsinq.f32.pop %v6404
  %vm6408 = vweird.f32 %v1222
  %v6409 = vand.u32 %v6405, 3
  %vm6410 = vcmp.lt.s32.totalorder %v6409, 2
  %vm6411 = vcmp.eq.s32.totalorder %v6409, 0
  %v6412 = vxor.u32 %v6407, 2147483648
  %v6413 = vsel %vm6411, %v6406, %v6412
  %vm6414 = vcmp.eq.s32.totalorder %v6409, 2
  %v6415 = vxor.u32 %v6406, 2147483648
  %v6416 = vsel %vm6414, %v6415, %v6407
  %v6417 = vsel %vm6410, %v6413, %v6416
  %v6418 = vsel %vm6408, nan, %v6417
  %v6419 = vand.u32 2147483647, %v1223
  %vm6420 = vcmp.le.f32.partialorder %v6419, 0.7853982
  %vm6421 = vcmp.lt.s32.totalorder %v1223, 0
  %v6422 = vand.u32 %v1223, 2139095040
  %v6423 = vshrl.u32 %v6422, 23
  %v6424 = vsub.s32 %v6423, 127
  %v6425 = vand.u32 2147483647, %v1223
  %v6426 = vand.u32 %v6425, 8388607
  %v6427 = vor.u32 %v6426, 8388608
  %v6428 = vsub.s32 0, %v6427
  %v6429 = vadd.s32 %v6424, 1
  %vm6430 = vcmp.gt.s32.totalorder %v6429, 0
  %v6431 = vsel %vm6430, %v6429, 0
  %v6432 = vshrl.u32 %v6431, 5
  %v6433 = vand.u32 %v6431, 31
  %v6434 = vsub.s32 32, %v6433
  %v6435 = vshrl.u32 683565275, %v6434
  %v6436 = vshll.u32 683565275, %v6433
  %v6437 = vshrl.u32 2475754826, %v6434
  %v6438 = vor.u32 %v6436, %v6437
  %v6439 = vshll.u32 2475754826, %v6433
  %v6440 = vshrl.u32 2131351028, %v6434
  %v6441 = vor.u32 %v6439, %v6440
  %v6442 = vshll.u32 2131351028, %v6433
  %v6443 = vshrl.u32 2102212464, %v6434
  %v6444 = vor.u32 %v6442, %v6443
  %v6445 = vshll.u32 2102212464, %v6433
  %v6446 = vshrl.u32 920167782, %v6434
  %v6447 = vor.u32 %v6445, %v6446
  %v6448 = vshll.u32 920167782, %v6433
  %v6449 = vshrl.u32 1326507024, %v6434
  %v6450 = vor.u32 %v6448, %v6449
  %vm6451 = vcmp.lt.s32.totalorder %v6432, 1
  %vm6452 = vcmp.lt.s32.totalorder %v6432, 2
  %vm6453 = vcmp.lt.s32.totalorder %v6432, 3
  %vm6454 = vcmp.lt.s32.totalorder %v6432, 4
  %v6455 = vsel %vm6451, %v6435, %v6438
  %v6456 = vsel %vm6454, %v6444, 2102212464
  %v6457 = vsel %vm6453, %v6441, %v6456
  %v6458 = vsel %vm6452, %v6455, %v6457
  %v6459 = vsel %vm6451, %v6438, %v6441
  %v6460 = vsel %vm6454, %v6447, 920167782
  %v6461 = vsel %vm6453, %v6444, %v6460
  %v6462 = vsel %vm6452, %v6459, %v6461
  %v6463 = vsel %vm6451, %v6441, %v6444
  %v6464 = vsel %vm6454, %v6450, 1326507024
  %v6465 = vsel %vm6453, %v6447, %v6464
  %v6466 = vsel %vm6452, %v6463, %v6465
  %v6467 = vshll.u32 %v6427, 8
  %v6468 = vmul.u32.u64.compose %v6467, %v6466
  %v6469 = vextract.low.u32 %v6468
  %v6470 = vextract.high.u32 %v6468
  %v6471 = vmul.u32.u64.compose %v6467, %v6462
  %v6472 = vextract.low.u32 %v6471
  %v6473 = vextract.high.u32 %v6471
  %v6474 = vmul.u32 %v6467, %v6458
  %v6475 = vadd.s32 %v6470, %v6472
  %vm6476 = vc.u32 %v6470, %v6472
  %v6477 = vadd.s32 %v6473, 1
  %v6478 = vsel %vm6476, %v6477, %v6473
  %v6479 = vadd.s32 %v6474, %v6478
  %v6480 = vadd.s32 %v6479, 536870912
  %v6481 = vshrl.u32 %v6480, 30
  %v6482 = vshll.u32 %v6481, 30
  %v6483 = vsub.s32 %v6479, %v6482
  %vm6484 = vcmp.lt.s32.totalorder %v6483, 0
  %v6485 = vsub.s32 0, %v6483
  %v6486 = vsel %vm6484, %v6485, %v6483
  %v6487 = vclz %v6486
  %v6488 = vsub.s32 %v6487, 2
  %vm6489 = vcmp.gt.s32.totalorder 0, %v6488
  %v6490 = vsel %vm6489, 0, %v6488
  %v6491 = vsub.s32 32, %v6490
  %v6492 = vshll.u32 %v6483, %v6490
  %v6493 = vshrl.u32 %v6475, %v6491
  %v6494 = vor.u32 %v6492, %v6493
  %v6495 = vsub.s32 4294967266, %v6490
  %v6496 = vadd.s32 %v6495, 127
  %v6497 = vshll.u32 %v6496, 23
  %v6498 = vor.u32 4788187, %v6497
  %v6499 = vand.u32 2147483647, %v6498
  %v6501 = vcvt.s32.f32 %v6494
  %v6502 = vmul.f32 %v6501, %v6499
  %v6503 = vxor.u32 %v6502, 2147483648
  %v6504 = vsel %vm6421, %v6503, %v6502
  %v6505 = vsub.s32 4, %v6481
  %v6506 = vsel %vm6421, %v6505, %v6481
  %v6507 = vsel %vm6420, %v1223, %v6504
  %v6508 = vsel %vm6420, 0, %v6506
  %v6509 = vcosq.f32.pop %v6507
  %v6510 = vsinq.f32.pop %v6507
  %vm6511 = vweird.f32 %v1223
  %v6512 = vand.u32 %v6508, 3
  %vm6513 = vcmp.lt.s32.totalorder %v6512, 2
  %vm6514 = vcmp.eq.s32.totalorder %v6512, 0
  %v6515 = vxor.u32 %v6510, 2147483648
  %v6516 = vsel %vm6514, %v6509, %v6515
  %vm6517 = vcmp.eq.s32.totalorder %v6512, 2
  %v6518 = vxor.u32 %v6509, 2147483648
  %v6519 = vsel %vm6517, %v6518, %v6510
  %v6520 = vsel %vm6513, %v6516, %v6519
  %v6521 = vsel %vm6511, nan, %v6520
  %v6522 = vand.u32 2147483647, %v1224
  %vm6523 = vcmp.le.f32.partialorder %v6522, 0.7853982
  %vm6524 = vcmp.lt.s32.totalorder %v1224, 0
  %v6525 = vand.u32 %v1224, 2139095040
  %v6526 = vshrl.u32 %v6525, 23
  %v6527 = vsub.s32 %v6526, 127
  %v6528 = vand.u32 2147483647, %v1224
  %v6529 = vand.u32 %v6528, 8388607
  %v6530 = vor.u32 %v6529, 8388608
  %v6531 = vsub.s32 0, %v6530
  %v6532 = vadd.s32 %v6527, 1
  %vm6533 = vcmp.gt.s32.totalorder %v6532, 0
  %v6534 = vsel %vm6533, %v6532, 0
  %v6535 = vshrl.u32 %v6534, 5
  %v6536 = vand.u32 %v6534, 31
  %v6537 = vsub.s32 32, %v6536
  %v6538 = vshrl.u32 683565275, %v6537
  %v6539 = vshll.u32 683565275, %v6536
  %v6540 = vshrl.u32 2475754826, %v6537
  %v6541 = vor.u32 %v6539, %v6540
  %v6542 = vshll.u32 2475754826, %v6536
  %v6543 = vshrl.u32 2131351028, %v6537
  %v6544 = vor.u32 %v6542, %v6543
  %v6545 = vshll.u32 2131351028, %v6536
  %v6546 = vshrl.u32 2102212464, %v6537
  %v6547 = vor.u32 %v6545, %v6546
  %v6548 = vshll.u32 2102212464, %v6536
  %v6549 = vshrl.u32 920167782, %v6537
  %v6550 = vor.u32 %v6548, %v6549
  %v6551 = vshll.u32 920167782, %v6536
  %v6552 = vshrl.u32 1326507024, %v6537
  %v6553 = vor.u32 %v6551, %v6552
  %vm6554 = vcmp.lt.s32.totalorder %v6535, 1
  %vm6555 = vcmp.lt.s32.totalorder %v6535, 2
  %vm6556 = vcmp.lt.s32.totalorder %v6535, 3
  %vm6557 = vcmp.lt.s32.totalorder %v6535, 4
  %v6558 = vsel %vm6554, %v6538, %v6541
  %v6559 = vsel %vm6557, %v6547, 2102212464
  %v6560 = vsel %vm6556, %v6544, %v6559
  %v6561 = vsel %vm6555, %v6558, %v6560
  %v6562 = vsel %vm6554, %v6541, %v6544
  %v6563 = vsel %vm6557, %v6550, 920167782
  %v6564 = vsel %vm6556, %v6547, %v6563
  %v6565 = vsel %vm6555, %v6562, %v6564
  %v6566 = vsel %vm6554, %v6544, %v6547
  %v6567 = vsel %vm6557, %v6553, 1326507024
  %v6568 = vsel %vm6556, %v6550, %v6567
  %v6569 = vsel %vm6555, %v6566, %v6568
  %v6570 = vshll.u32 %v6530, 8
  %v6571 = vmul.u32.u64.compose %v6570, %v6569
  %v6572 = vextract.low.u32 %v6571
  %v6573 = vextract.high.u32 %v6571
  %v6574 = vmul.u32.u64.compose %v6570, %v6565
  %v6575 = vextract.low.u32 %v6574
  %v6576 = vextract.high.u32 %v6574
  %v6577 = vmul.u32 %v6570, %v6561
  %v6578 = vadd.s32 %v6573, %v6575
  %vm6579 = vc.u32 %v6573, %v6575
  %v6580 = vadd.s32 %v6576, 1
  %v6581 = vsel %vm6579, %v6580, %v6576
  %v6582 = vadd.s32 %v6577, %v6581
  %v6583 = vadd.s32 %v6582, 536870912
  %v6584 = vshrl.u32 %v6583, 30
  %v6585 = vshll.u32 %v6584, 30
  %v6586 = vsub.s32 %v6582, %v6585
  %vm6587 = vcmp.lt.s32.totalorder %v6586, 0
  %v6588 = vsub.s32 0, %v6586
  %v6589 = vsel %vm6587, %v6588, %v6586
  %v6590 = vclz %v6589
  %v6591 = vsub.s32 %v6590, 2
  %vm6592 = vcmp.gt.s32.totalorder 0, %v6591
  %v6593 = vsel %vm6592, 0, %v6591
  %v6594 = vsub.s32 32, %v6593
  %v6595 = vshll.u32 %v6586, %v6593
  %v6596 = vshrl.u32 %v6578, %v6594
  %v6597 = vor.u32 %v6595, %v6596
  %v6598 = vsub.s32 4294967266, %v6593
  %v6599 = vadd.s32 %v6598, 127
  %v6600 = vshll.u32 %v6599, 23
  %v6601 = vor.u32 4788187, %v6600
  %v6602 = vand.u32 2147483647, %v6601
  %v6604 = vcvt.s32.f32 %v6597
  %v6605 = vmul.f32 %v6604, %v6602
  %v6606 = vxor.u32 %v6605, 2147483648
  %v6607 = vsel %vm6524, %v6606, %v6605
  %v6608 = vsub.s32 4, %v6584
  %v6609 = vsel %vm6524, %v6608, %v6584
  %v6610 = vsel %vm6523, %v1224, %v6607
  %v6611 = vsel %vm6523, 0, %v6609
  %v6612 = vcosq.f32.pop %v6610
  %v6613 = vsinq.f32.pop %v6610
  %vm6614 = vweird.f32 %v1224
  %v6615 = vand.u32 %v6611, 3
  %vm6616 = vcmp.lt.s32.totalorder %v6615, 2
  %vm6617 = vcmp.eq.s32.totalorder %v6615, 0
  %v6618 = vxor.u32 %v6613, 2147483648
  %v6619 = vsel %vm6617, %v6612, %v6618
  %vm6620 = vcmp.eq.s32.totalorder %v6615, 2
  %v6621 = vxor.u32 %v6612, 2147483648
  %v6622 = vsel %vm6620, %v6621, %v6613
  %v6623 = vsel %vm6616, %v6619, %v6622
  %v6624 = vsel %vm6614, nan, %v6623
  %v6625 = vand.u32 2147483647, %v1225
  %vm6626 = vcmp.le.f32.partialorder %v6625, 0.7853982
  %vm6627 = vcmp.lt.s32.totalorder %v1225, 0
  %v6628 = vand.u32 %v1225, 2139095040
  %v6629 = vshrl.u32 %v6628, 23
  %v6630 = vsub.s32 %v6629, 127
  %v6631 = vand.u32 2147483647, %v1225
  %v6632 = vand.u32 %v6631, 8388607
  %v6633 = vor.u32 %v6632, 8388608
  %v6634 = vsub.s32 0, %v6633
  %v6635 = vadd.s32 %v6630, 1
  %vm6636 = vcmp.gt.s32.totalorder %v6635, 0
  %v6637 = vsel %vm6636, %v6635, 0
  %v6638 = vshrl.u32 %v6637, 5
  %v6639 = vand.u32 %v6637, 31
  %v6640 = vsub.s32 32, %v6639
  %v6641 = vshrl.u32 683565275, %v6640
  %v6642 = vshll.u32 683565275, %v6639
  %v6643 = vshrl.u32 2475754826, %v6640
  %v6644 = vor.u32 %v6642, %v6643
  %v6645 = vshll.u32 2475754826, %v6639
  %v6646 = vshrl.u32 2131351028, %v6640
  %v6647 = vor.u32 %v6645, %v6646
  %v6648 = vshll.u32 2131351028, %v6639
  %v6649 = vshrl.u32 2102212464, %v6640
  %v6650 = vor.u32 %v6648, %v6649
  %v6651 = vshll.u32 2102212464, %v6639
  %v6652 = vshrl.u32 920167782, %v6640
  %v6653 = vor.u32 %v6651, %v6652
  %v6654 = vshll.u32 920167782, %v6639
  %v6655 = vshrl.u32 1326507024, %v6640
  %v6656 = vor.u32 %v6654, %v6655
  %vm6657 = vcmp.lt.s32.totalorder %v6638, 1
  %vm6658 = vcmp.lt.s32.totalorder %v6638, 2
  %vm6659 = vcmp.lt.s32.totalorder %v6638, 3
  %vm6660 = vcmp.lt.s32.totalorder %v6638, 4
  %v6661 = vsel %vm6657, %v6641, %v6644
  %v6662 = vsel %vm6660, %v6650, 2102212464
  %v6663 = vsel %vm6659, %v6647, %v6662
  %v6664 = vsel %vm6658, %v6661, %v6663
  %v6665 = vsel %vm6657, %v6644, %v6647
  %v6666 = vsel %vm6660, %v6653, 920167782
  %v6667 = vsel %vm6659, %v6650, %v6666
  %v6668 = vsel %vm6658, %v6665, %v6667
  %v6669 = vsel %vm6657, %v6647, %v6650
  %v6670 = vsel %vm6660, %v6656, 1326507024
  %v6671 = vsel %vm6659, %v6653, %v6670
  %v6672 = vsel %vm6658, %v6669, %v6671
  %v6673 = vshll.u32 %v6633, 8
  %v6674 = vmul.u32.u64.compose %v6673, %v6672
  %v6675 = vextract.low.u32 %v6674
  %v6676 = vextract.high.u32 %v6674
  %v6677 = vmul.u32.u64.compose %v6673, %v6668
  %v6678 = vextract.low.u32 %v6677
  %v6679 = vextract.high.u32 %v6677
  %v6680 = vmul.u32 %v6673, %v6664
  %v6681 = vadd.s32 %v6676, %v6678
  %vm6682 = vc.u32 %v6676, %v6678
  %v6683 = vadd.s32 %v6679, 1
  %v6684 = vsel %vm6682, %v6683, %v6679
  %v6685 = vadd.s32 %v6680, %v6684
  %v6686 = vadd.s32 %v6685, 536870912
  %v6687 = vshrl.u32 %v6686, 30
  %v6688 = vshll.u32 %v6687, 30
  %v6689 = vsub.s32 %v6685, %v6688
  %vm6690 = vcmp.lt.s32.totalorder %v6689, 0
  %v6691 = vsub.s32 0, %v6689
  %v6692 = vsel %vm6690, %v6691, %v6689
  %v6693 = vclz %v6692
  %v6694 = vsub.s32 %v6693, 2
  %vm6695 = vcmp.gt.s32.totalorder 0, %v6694
  %v6696 = vsel %vm6695, 0, %v6694
  %v6697 = vsub.s32 32, %v6696
  %v6698 = vshll.u32 %v6689, %v6696
  %v6699 = vshrl.u32 %v6681, %v6697
  %v6700 = vor.u32 %v6698, %v6699
  %v6701 = vsub.s32 4294967266, %v6696
  %v6702 = vadd.s32 %v6701, 127
  %v6703 = vshll.u32 %v6702, 23
  %v6704 = vor.u32 4788187, %v6703
  %v6705 = vand.u32 2147483647, %v6704
  %v6707 = vcvt.s32.f32 %v6700
  %v6708 = vmul.f32 %v6707, %v6705
  %v6709 = vxor.u32 %v6708, 2147483648
  %v6710 = vsel %vm6627, %v6709, %v6708
  %v6711 = vsub.s32 4, %v6687
  %v6712 = vsel %vm6627, %v6711, %v6687
  %v6713 = vsel %vm6626, %v1225, %v6710
  %v6714 = vsel %vm6626, 0, %v6712
  %v6715 = vcosq.f32.pop %v6713
  %v6716 = vsinq.f32.pop %v6713
  %vm6717 = vweird.f32 %v1225
  %v6718 = vand.u32 %v6714, 3
  %vm6719 = vcmp.lt.s32.totalorder %v6718, 2
  %vm6720 = vcmp.eq.s32.totalorder %v6718, 0
  %v6721 = vxor.u32 %v6716, 2147483648
  %v6722 = vsel %vm6720, %v6715, %v6721
  %vm6723 = vcmp.eq.s32.totalorder %v6718, 2
  %v6724 = vxor.u32 %v6715, 2147483648
  %v6725 = vsel %vm6723, %v6724, %v6716
  %v6726 = vsel %vm6719, %v6722, %v6725
  %v6727 = vsel %vm6717, nan, %v6726
  %v6728 = vand.u32 2147483647, %v1226
  %vm6729 = vcmp.le.f32.partialorder %v6728, 0.7853982
  %vm6730 = vcmp.lt.s32.totalorder %v1226, 0
  %v6731 = vand.u32 %v1226, 2139095040
  %v6732 = vshrl.u32 %v6731, 23
  %v6733 = vsub.s32 %v6732, 127
  %v6734 = vand.u32 2147483647, %v1226
  %v6735 = vand.u32 %v6734, 8388607
  %v6736 = vor.u32 %v6735, 8388608
  %v6737 = vsub.s32 0, %v6736
  %v6738 = vadd.s32 %v6733, 1
  %vm6739 = vcmp.gt.s32.totalorder %v6738, 0
  %v6740 = vsel %vm6739, %v6738, 0
  %v6741 = vshrl.u32 %v6740, 5
  %v6742 = vand.u32 %v6740, 31
  %v6743 = vsub.s32 32, %v6742
  %v6744 = vshrl.u32 683565275, %v6743
  %v6745 = vshll.u32 683565275, %v6742
  %v6746 = vshrl.u32 2475754826, %v6743
  %v6747 = vor.u32 %v6745, %v6746
  %v6748 = vshll.u32 2475754826, %v6742
  %v6749 = vshrl.u32 2131351028, %v6743
  %v6750 = vor.u32 %v6748, %v6749
  %v6751 = vshll.u32 2131351028, %v6742
  %v6752 = vshrl.u32 2102212464, %v6743
  %v6753 = vor.u32 %v6751, %v6752
  %v6754 = vshll.u32 2102212464, %v6742
  %v6755 = vshrl.u32 920167782, %v6743
  %v6756 = vor.u32 %v6754, %v6755
  %v6757 = vshll.u32 920167782, %v6742
  %v6758 = vshrl.u32 1326507024, %v6743
  %v6759 = vor.u32 %v6757, %v6758
  %vm6760 = vcmp.lt.s32.totalorder %v6741, 1
  %vm6761 = vcmp.lt.s32.totalorder %v6741, 2
  %vm6762 = vcmp.lt.s32.totalorder %v6741, 3
  %vm6763 = vcmp.lt.s32.totalorder %v6741, 4
  %v6764 = vsel %vm6760, %v6744, %v6747
  %v6765 = vsel %vm6763, %v6753, 2102212464
  %v6766 = vsel %vm6762, %v6750, %v6765
  %v6767 = vsel %vm6761, %v6764, %v6766
  %v6768 = vsel %vm6760, %v6747, %v6750
  %v6769 = vsel %vm6763, %v6756, 920167782
  %v6770 = vsel %vm6762, %v6753, %v6769
  %v6771 = vsel %vm6761, %v6768, %v6770
  %v6772 = vsel %vm6760, %v6750, %v6753
  %v6773 = vsel %vm6763, %v6759, 1326507024
  %v6774 = vsel %vm6762, %v6756, %v6773
  %v6775 = vsel %vm6761, %v6772, %v6774
  %v6776 = vshll.u32 %v6736, 8
  %v6777 = vmul.u32.u64.compose %v6776, %v6775
  %v6778 = vextract.low.u32 %v6777
  %v6779 = vextract.high.u32 %v6777
  %v6780 = vmul.u32.u64.compose %v6776, %v6771
  %v6781 = vextract.low.u32 %v6780
  %v6782 = vextract.high.u32 %v6780
  %v6783 = vmul.u32 %v6776, %v6767
  %v6784 = vadd.s32 %v6779, %v6781
  %vm6785 = vc.u32 %v6779, %v6781
  %v6786 = vadd.s32 %v6782, 1
  %v6787 = vsel %vm6785, %v6786, %v6782
  %v6788 = vadd.s32 %v6783, %v6787
  %v6789 = vadd.s32 %v6788, 536870912
  %v6790 = vshrl.u32 %v6789, 30
  %v6791 = vshll.u32 %v6790, 30
  %v6792 = vsub.s32 %v6788, %v6791
  %vm6793 = vcmp.lt.s32.totalorder %v6792, 0
  %v6794 = vsub.s32 0, %v6792
  %v6795 = vsel %vm6793, %v6794, %v6792
  %v6796 = vclz %v6795
  %v6797 = vsub.s32 %v6796, 2
  %vm6798 = vcmp.gt.s32.totalorder 0, %v6797
  %v6799 = vsel %vm6798, 0, %v6797
  %v6800 = vsub.s32 32, %v6799
  %v6801 = vshll.u32 %v6792, %v6799
  %v6802 = vshrl.u32 %v6784, %v6800
  %v6803 = vor.u32 %v6801, %v6802
  %v6804 = vsub.s32 4294967266, %v6799
  %v6805 = vadd.s32 %v6804, 127
  %v6806 = vshll.u32 %v6805, 23
  %v6807 = vor.u32 4788187, %v6806
  %v6808 = vand.u32 2147483647, %v6807
  %v6810 = vcvt.s32.f32 %v6803
  %v6811 = vmul.f32 %v6810, %v6808
  %v6812 = vxor.u32 %v6811, 2147483648
  %v6813 = vsel %vm6730, %v6812, %v6811
  %v6814 = vsub.s32 4, %v6790
  %v6815 = vsel %vm6730, %v6814, %v6790
  %v6816 = vsel %vm6729, %v1226, %v6813
  %v6817 = vsel %vm6729, 0, %v6815
  %v6818 = vcosq.f32.pop %v6816
  %v6819 = vsinq.f32.pop %v6816
  %vm6820 = vweird.f32 %v1226
  %v6821 = vand.u32 %v6817, 3
  %vm6822 = vcmp.lt.s32.totalorder %v6821, 2
  %vm6823 = vcmp.eq.s32.totalorder %v6821, 0
  %v6824 = vxor.u32 %v6819, 2147483648
  %v6825 = vsel %vm6823, %v6818, %v6824
  %vm6826 = vcmp.eq.s32.totalorder %v6821, 2
  %v6827 = vxor.u32 %v6818, 2147483648
  %v6828 = vsel %vm6826, %v6827, %v6819
  %v6829 = vsel %vm6822, %v6825, %v6828
  %v6830 = vsel %vm6820, nan, %v6829
  %v6831 = vand.u32 2147483647, %v1227
  %vm6832 = vcmp.le.f32.partialorder %v6831, 0.7853982
  %vm6833 = vcmp.lt.s32.totalorder %v1227, 0
  %v6834 = vand.u32 %v1227, 2139095040
  %v6835 = vshrl.u32 %v6834, 23
  %v6836 = vsub.s32 %v6835, 127
  %v6837 = vand.u32 2147483647, %v1227
  %v6838 = vand.u32 %v6837, 8388607
  %v6839 = vor.u32 %v6838, 8388608
  %v6840 = vsub.s32 0, %v6839
  %v6841 = vadd.s32 %v6836, 1
  %vm6842 = vcmp.gt.s32.totalorder %v6841, 0
  %v6843 = vsel %vm6842, %v6841, 0
  %v6844 = vshrl.u32 %v6843, 5
  %v6845 = vand.u32 %v6843, 31
  %v6846 = vsub.s32 32, %v6845
  %v6847 = vshrl.u32 683565275, %v6846
  %v6848 = vshll.u32 683565275, %v6845
  %v6849 = vshrl.u32 2475754826, %v6846
  %v6850 = vor.u32 %v6848, %v6849
  %v6851 = vshll.u32 2475754826, %v6845
  %v6852 = vshrl.u32 2131351028, %v6846
  %v6853 = vor.u32 %v6851, %v6852
  %v6854 = vshll.u32 2131351028, %v6845
  %v6855 = vshrl.u32 2102212464, %v6846
  %v6856 = vor.u32 %v6854, %v6855
  %v6857 = vshll.u32 2102212464, %v6845
  %v6858 = vshrl.u32 920167782, %v6846
  %v6859 = vor.u32 %v6857, %v6858
  %v6860 = vshll.u32 920167782, %v6845
  %v6861 = vshrl.u32 1326507024, %v6846
  %v6862 = vor.u32 %v6860, %v6861
  %vm6863 = vcmp.lt.s32.totalorder %v6844, 1
  %vm6864 = vcmp.lt.s32.totalorder %v6844, 2
  %vm6865 = vcmp.lt.s32.totalorder %v6844, 3
  %vm6866 = vcmp.lt.s32.totalorder %v6844, 4
  %v6867 = vsel %vm6863, %v6847, %v6850
  %v6868 = vsel %vm6866, %v6856, 2102212464
  %v6869 = vsel %vm6865, %v6853, %v6868
  %v6870 = vsel %vm6864, %v6867, %v6869
  %v6871 = vsel %vm6863, %v6850, %v6853
  %v6872 = vsel %vm6866, %v6859, 920167782
  %v6873 = vsel %vm6865, %v6856, %v6872
  %v6874 = vsel %vm6864, %v6871, %v6873
  %v6875 = vsel %vm6863, %v6853, %v6856
  %v6876 = vsel %vm6866, %v6862, 1326507024
  %v6877 = vsel %vm6865, %v6859, %v6876
  %v6878 = vsel %vm6864, %v6875, %v6877
  %v6879 = vshll.u32 %v6839, 8
  %v6880 = vmul.u32.u64.compose %v6879, %v6878
  %v6881 = vextract.low.u32 %v6880
  %v6882 = vextract.high.u32 %v6880
  %v6883 = vmul.u32.u64.compose %v6879, %v6874
  %v6884 = vextract.low.u32 %v6883
  %v6885 = vextract.high.u32 %v6883
  %v6886 = vmul.u32 %v6879, %v6870
  %v6887 = vadd.s32 %v6882, %v6884
  %vm6888 = vc.u32 %v6882, %v6884
  %v6889 = vadd.s32 %v6885, 1
  %v6890 = vsel %vm6888, %v6889, %v6885
  %v6891 = vadd.s32 %v6886, %v6890
  %v6892 = vadd.s32 %v6891, 536870912
  %v6893 = vshrl.u32 %v6892, 30
  %v6894 = vshll.u32 %v6893, 30
  %v6895 = vsub.s32 %v6891, %v6894
  %vm6896 = vcmp.lt.s32.totalorder %v6895, 0
  %v6897 = vsub.s32 0, %v6895
  %v6898 = vsel %vm6896, %v6897, %v6895
  %v6899 = vclz %v6898
  %v6900 = vsub.s32 %v6899, 2
  %vm6901 = vcmp.gt.s32.totalorder 0, %v6900
  %v6902 = vsel %vm6901, 0, %v6900
  %v6903 = vsub.s32 32, %v6902
  %v6904 = vshll.u32 %v6895, %v6902
  %v6905 = vshrl.u32 %v6887, %v6903
  %v6906 = vor.u32 %v6904, %v6905
  %v6907 = vsub.s32 4294967266, %v6902
  %v6908 = vadd.s32 %v6907, 127
  %v6909 = vshll.u32 %v6908, 23
  %v6910 = vor.u32 4788187, %v6909
  %v6911 = vand.u32 2147483647, %v6910
  %v6913 = vcvt.s32.f32 %v6906
  %v6914 = vmul.f32 %v6913, %v6911
  %v6915 = vxor.u32 %v6914, 2147483648
  %v6916 = vsel %vm6833, %v6915, %v6914
  %v6917 = vsub.s32 4, %v6893
  %v6918 = vsel %vm6833, %v6917, %v6893
  %v6919 = vsel %vm6832, %v1227, %v6916
  %v6920 = vsel %vm6832, 0, %v6918
  %v6921 = vcosq.f32.pop %v6919
  %v6922 = vsinq.f32.pop %v6919
  %vm6923 = vweird.f32 %v1227
  %v6924 = vand.u32 %v6920, 3
  %vm6925 = vcmp.lt.s32.totalorder %v6924, 2
  %vm6926 = vcmp.eq.s32.totalorder %v6924, 0
  %v6927 = vxor.u32 %v6922, 2147483648
  %v6928 = vsel %vm6926, %v6921, %v6927
  %vm6929 = vcmp.eq.s32.totalorder %v6924, 2
  %v6930 = vxor.u32 %v6921, 2147483648
  %v6931 = vsel %vm6929, %v6930, %v6922
  %v6932 = vsel %vm6925, %v6928, %v6931
  %v6933 = vsel %vm6923, nan, %v6932
  %v6934 = vand.u32 2147483647, %v1228
  %vm6935 = vcmp.le.f32.partialorder %v6934, 0.7853982
  %vm6936 = vcmp.lt.s32.totalorder %v1228, 0
  %v6937 = vand.u32 %v1228, 2139095040
  %v6938 = vshrl.u32 %v6937, 23
  %v6939 = vsub.s32 %v6938, 127
  %v6940 = vand.u32 2147483647, %v1228
  %v6941 = vand.u32 %v6940, 8388607
  %v6942 = vor.u32 %v6941, 8388608
  %v6943 = vsub.s32 0, %v6942
  %v6944 = vadd.s32 %v6939, 1
  %vm6945 = vcmp.gt.s32.totalorder %v6944, 0
  %v6946 = vsel %vm6945, %v6944, 0
  %v6947 = vshrl.u32 %v6946, 5
  %v6948 = vand.u32 %v6946, 31
  %v6949 = vsub.s32 32, %v6948
  %v6950 = vshrl.u32 683565275, %v6949
  %v6951 = vshll.u32 683565275, %v6948
  %v6952 = vshrl.u32 2475754826, %v6949
  %v6953 = vor.u32 %v6951, %v6952
  %v6954 = vshll.u32 2475754826, %v6948
  %v6955 = vshrl.u32 2131351028, %v6949
  %v6956 = vor.u32 %v6954, %v6955
  %v6957 = vshll.u32 2131351028, %v6948
  %v6958 = vshrl.u32 2102212464, %v6949
  %v6959 = vor.u32 %v6957, %v6958
  %v6960 = vshll.u32 2102212464, %v6948
  %v6961 = vshrl.u32 920167782, %v6949
  %v6962 = vor.u32 %v6960, %v6961
  %v6963 = vshll.u32 920167782, %v6948
  %v6964 = vshrl.u32 1326507024, %v6949
  %v6965 = vor.u32 %v6963, %v6964
  %vm6966 = vcmp.lt.s32.totalorder %v6947, 1
  %vm6967 = vcmp.lt.s32.totalorder %v6947, 2
  %vm6968 = vcmp.lt.s32.totalorder %v6947, 3
  %vm6969 = vcmp.lt.s32.totalorder %v6947, 4
  %v6970 = vsel %vm6966, %v6950, %v6953
  %v6971 = vsel %vm6969, %v6959, 2102212464
  %v6972 = vsel %vm6968, %v6956, %v6971
  %v6973 = vsel %vm6967, %v6970, %v6972
  %v6974 = vsel %vm6966, %v6953, %v6956
  %v6975 = vsel %vm6969, %v6962, 920167782
  %v6976 = vsel %vm6968, %v6959, %v6975
  %v6977 = vsel %vm6967, %v6974, %v6976
  %v6978 = vsel %vm6966, %v6956, %v6959
  %v6979 = vsel %vm6969, %v6965, 1326507024
  %v6980 = vsel %vm6968, %v6962, %v6979
  %v6981 = vsel %vm6967, %v6978, %v6980
  %v6982 = vshll.u32 %v6942, 8
  %v6983 = vmul.u32.u64.compose %v6982, %v6981
  %v6984 = vextract.low.u32 %v6983
  %v6985 = vextract.high.u32 %v6983
  %v6986 = vmul.u32.u64.compose %v6982, %v6977
  %v6987 = vextract.low.u32 %v6986
  %v6988 = vextract.high.u32 %v6986
  %v6989 = vmul.u32 %v6982, %v6973
  %v6990 = vadd.s32 %v6985, %v6987
  %vm6991 = vc.u32 %v6985, %v6987
  %v6992 = vadd.s32 %v6988, 1
  %v6993 = vsel %vm6991, %v6992, %v6988
  %v6994 = vadd.s32 %v6989, %v6993
  %v6995 = vadd.s32 %v6994, 536870912
  %v6996 = vshrl.u32 %v6995, 30
  %v6997 = vshll.u32 %v6996, 30
  %v6998 = vsub.s32 %v6994, %v6997
  %vm6999 = vcmp.lt.s32.totalorder %v6998, 0
  %v7000 = vsub.s32 0, %v6998
  %v7001 = vsel %vm6999, %v7000, %v6998
  %v7002 = vclz %v7001
  %v7003 = vsub.s32 %v7002, 2
  %vm7004 = vcmp.gt.s32.totalorder 0, %v7003
  %v7005 = vsel %vm7004, 0, %v7003
  %v7006 = vsub.s32 32, %v7005
  %v7007 = vshll.u32 %v6998, %v7005
  %v7008 = vshrl.u32 %v6990, %v7006
  %v7009 = vor.u32 %v7007, %v7008
  %v7010 = vsub.s32 4294967266, %v7005
  %v7011 = vadd.s32 %v7010, 127
  %v7012 = vshll.u32 %v7011, 23
  %v7013 = vor.u32 4788187, %v7012
  %v7014 = vand.u32 2147483647, %v7013
  %v7016 = vcvt.s32.f32 %v7009
  %v7017 = vmul.f32 %v7016, %v7014
  %v7018 = vxor.u32 %v7017, 2147483648
  %v7019 = vsel %vm6936, %v7018, %v7017
  %v7020 = vsub.s32 4, %v6996
  %v7021 = vsel %vm6936, %v7020, %v6996
  %v7022 = vsel %vm6935, %v1228, %v7019
  %v7023 = vsel %vm6935, 0, %v7021
  %v7024 = vcosq.f32.pop %v7022
  %v7025 = vsinq.f32.pop %v7022
  %vm7026 = vweird.f32 %v1228
  %v7027 = vand.u32 %v7023, 3
  %vm7028 = vcmp.lt.s32.totalorder %v7027, 2
  %vm7029 = vcmp.eq.s32.totalorder %v7027, 0
  %v7030 = vxor.u32 %v7025, 2147483648
  %v7031 = vsel %vm7029, %v7024, %v7030
  %vm7032 = vcmp.eq.s32.totalorder %v7027, 2
  %v7033 = vxor.u32 %v7024, 2147483648
  %v7034 = vsel %vm7032, %v7033, %v7025
  %v7035 = vsel %vm7028, %v7031, %v7034
  %v7036 = vsel %vm7026, nan, %v7035
  %v7037 = vand.u32 2147483647, %v1229
  %vm7038 = vcmp.le.f32.partialorder %v7037, 0.7853982
  %vm7039 = vcmp.lt.s32.totalorder %v1229, 0
  %v7040 = vand.u32 %v1229, 2139095040
  %v7041 = vshrl.u32 %v7040, 23
  %v7042 = vsub.s32 %v7041, 127
  %v7043 = vand.u32 2147483647, %v1229
  %v7044 = vand.u32 %v7043, 8388607
  %v7045 = vor.u32 %v7044, 8388608
  %v7046 = vsub.s32 0, %v7045
  %v7047 = vadd.s32 %v7042, 1
  %vm7048 = vcmp.gt.s32.totalorder %v7047, 0
  %v7049 = vsel %vm7048, %v7047, 0
  %v7050 = vshrl.u32 %v7049, 5
  %v7051 = vand.u32 %v7049, 31
  %v7052 = vsub.s32 32, %v7051
  %v7053 = vshrl.u32 683565275, %v7052
  %v7054 = vshll.u32 683565275, %v7051
  %v7055 = vshrl.u32 2475754826, %v7052
  %v7056 = vor.u32 %v7054, %v7055
  %v7057 = vshll.u32 2475754826, %v7051
  %v7058 = vshrl.u32 2131351028, %v7052
  %v7059 = vor.u32 %v7057, %v7058
  %v7060 = vshll.u32 2131351028, %v7051
  %v7061 = vshrl.u32 2102212464, %v7052
  %v7062 = vor.u32 %v7060, %v7061
  %v7063 = vshll.u32 2102212464, %v7051
  %v7064 = vshrl.u32 920167782, %v7052
  %v7065 = vor.u32 %v7063, %v7064
  %v7066 = vshll.u32 920167782, %v7051
  %v7067 = vshrl.u32 1326507024, %v7052
  %v7068 = vor.u32 %v7066, %v7067
  %vm7069 = vcmp.lt.s32.totalorder %v7050, 1
  %vm7070 = vcmp.lt.s32.totalorder %v7050, 2
  %vm7071 = vcmp.lt.s32.totalorder %v7050, 3
  %vm7072 = vcmp.lt.s32.totalorder %v7050, 4
  %v7073 = vsel %vm7069, %v7053, %v7056
  %v7074 = vsel %vm7072, %v7062, 2102212464
  %v7075 = vsel %vm7071, %v7059, %v7074
  %v7076 = vsel %vm7070, %v7073, %v7075
  %v7077 = vsel %vm7069, %v7056, %v7059
  %v7078 = vsel %vm7072, %v7065, 920167782
  %v7079 = vsel %vm7071, %v7062, %v7078
  %v7080 = vsel %vm7070, %v7077, %v7079
  %v7081 = vsel %vm7069, %v7059, %v7062
  %v7082 = vsel %vm7072, %v7068, 1326507024
  %v7083 = vsel %vm7071, %v7065, %v7082
  %v7084 = vsel %vm7070, %v7081, %v7083
  %v7085 = vshll.u32 %v7045, 8
  %v7086 = vmul.u32.u64.compose %v7085, %v7084
  %v7087 = vextract.low.u32 %v7086
  %v7088 = vextract.high.u32 %v7086
  %v7089 = vmul.u32.u64.compose %v7085, %v7080
  %v7090 = vextract.low.u32 %v7089
  %v7091 = vextract.high.u32 %v7089
  %v7092 = vmul.u32 %v7085, %v7076
  %v7093 = vadd.s32 %v7088, %v7090
  %vm7094 = vc.u32 %v7088, %v7090
  %v7095 = vadd.s32 %v7091, 1
  %v7096 = vsel %vm7094, %v7095, %v7091
  %v7097 = vadd.s32 %v7092, %v7096
  %v7098 = vadd.s32 %v7097, 536870912
  %v7099 = vshrl.u32 %v7098, 30
  %v7100 = vshll.u32 %v7099, 30
  %v7101 = vsub.s32 %v7097, %v7100
  %vm7102 = vcmp.lt.s32.totalorder %v7101, 0
  %v7103 = vsub.s32 0, %v7101
  %v7104 = vsel %vm7102, %v7103, %v7101
  %v7105 = vclz %v7104
  %v7106 = vsub.s32 %v7105, 2
  %vm7107 = vcmp.gt.s32.totalorder 0, %v7106
  %v7108 = vsel %vm7107, 0, %v7106
  %v7109 = vsub.s32 32, %v7108
  %v7110 = vshll.u32 %v7101, %v7108
  %v7111 = vshrl.u32 %v7093, %v7109
  %v7112 = vor.u32 %v7110, %v7111
  %v7113 = vsub.s32 4294967266, %v7108
  %v7114 = vadd.s32 %v7113, 127
  %v7115 = vshll.u32 %v7114, 23
  %v7116 = vor.u32 4788187, %v7115
  %v7117 = vand.u32 2147483647, %v7116
  %v7119 = vcvt.s32.f32 %v7112
  %v7120 = vmul.f32 %v7119, %v7117
  %v7121 = vxor.u32 %v7120, 2147483648
  %v7122 = vsel %vm7039, %v7121, %v7120
  %v7123 = vsub.s32 4, %v7099
  %v7124 = vsel %vm7039, %v7123, %v7099
  %v7125 = vsel %vm7038, %v1229, %v7122
  %v7126 = vsel %vm7038, 0, %v7124
  %v7127 = vcosq.f32.pop %v7125
  %v7128 = vsinq.f32.pop %v7125
  %vm7129 = vweird.f32 %v1229
  %v7130 = vand.u32 %v7126, 3
  %vm7131 = vcmp.lt.s32.totalorder %v7130, 2
  %vm7132 = vcmp.eq.s32.totalorder %v7130, 0
  %v7133 = vxor.u32 %v7128, 2147483648
  %v7134 = vsel %vm7132, %v7127, %v7133
  %vm7135 = vcmp.eq.s32.totalorder %v7130, 2
  %v7136 = vxor.u32 %v7127, 2147483648
  %v7137 = vsel %vm7135, %v7136, %v7128
  %v7138 = vsel %vm7131, %v7134, %v7137
  %v7139 = vsel %vm7129, nan, %v7138
  %v7140 = vand.u32 2147483647, %v1230
  %vm7141 = vcmp.le.f32.partialorder %v7140, 0.7853982
  %vm7142 = vcmp.lt.s32.totalorder %v1230, 0
  %v7143 = vand.u32 %v1230, 2139095040
  %v7144 = vshrl.u32 %v7143, 23
  %v7145 = vsub.s32 %v7144, 127
  %v7146 = vand.u32 2147483647, %v1230
  %v7147 = vand.u32 %v7146, 8388607
  %v7148 = vor.u32 %v7147, 8388608
  %v7149 = vsub.s32 0, %v7148
  %v7150 = vadd.s32 %v7145, 1
  %vm7151 = vcmp.gt.s32.totalorder %v7150, 0
  %v7152 = vsel %vm7151, %v7150, 0
  %v7153 = vshrl.u32 %v7152, 5
  %v7154 = vand.u32 %v7152, 31
  %v7155 = vsub.s32 32, %v7154
  %v7156 = vshrl.u32 683565275, %v7155
  %v7157 = vshll.u32 683565275, %v7154
  %v7158 = vshrl.u32 2475754826, %v7155
  %v7159 = vor.u32 %v7157, %v7158
  %v7160 = vshll.u32 2475754826, %v7154
  %v7161 = vshrl.u32 2131351028, %v7155
  %v7162 = vor.u32 %v7160, %v7161
  %v7163 = vshll.u32 2131351028, %v7154
  %v7164 = vshrl.u32 2102212464, %v7155
  %v7165 = vor.u32 %v7163, %v7164
  %v7166 = vshll.u32 2102212464, %v7154
  %v7167 = vshrl.u32 920167782, %v7155
  %v7168 = vor.u32 %v7166, %v7167
  %v7169 = vshll.u32 920167782, %v7154
  %v7170 = vshrl.u32 1326507024, %v7155
  %v7171 = vor.u32 %v7169, %v7170
  %vm7172 = vcmp.lt.s32.totalorder %v7153, 1
  %vm7173 = vcmp.lt.s32.totalorder %v7153, 2
  %vm7174 = vcmp.lt.s32.totalorder %v7153, 3
  %vm7175 = vcmp.lt.s32.totalorder %v7153, 4
  %v7176 = vsel %vm7172, %v7156, %v7159
  %v7177 = vsel %vm7175, %v7165, 2102212464
  %v7178 = vsel %vm7174, %v7162, %v7177
  %v7179 = vsel %vm7173, %v7176, %v7178
  %v7180 = vsel %vm7172, %v7159, %v7162
  %v7181 = vsel %vm7175, %v7168, 920167782
  %v7182 = vsel %vm7174, %v7165, %v7181
  %v7183 = vsel %vm7173, %v7180, %v7182
  %v7184 = vsel %vm7172, %v7162, %v7165
  %v7185 = vsel %vm7175, %v7171, 1326507024
  %v7186 = vsel %vm7174, %v7168, %v7185
  %v7187 = vsel %vm7173, %v7184, %v7186
  %v7188 = vshll.u32 %v7148, 8
  %v7189 = vmul.u32.u64.compose %v7188, %v7187
  %v7190 = vextract.low.u32 %v7189
  %v7191 = vextract.high.u32 %v7189
  %v7192 = vmul.u32.u64.compose %v7188, %v7183
  %v7193 = vextract.low.u32 %v7192
  %v7194 = vextract.high.u32 %v7192
  %v7195 = vmul.u32 %v7188, %v7179
  %v7196 = vadd.s32 %v7191, %v7193
  %vm7197 = vc.u32 %v7191, %v7193
  %v7198 = vadd.s32 %v7194, 1
  %v7199 = vsel %vm7197, %v7198, %v7194
  %v7200 = vadd.s32 %v7195, %v7199
  %v7201 = vadd.s32 %v7200, 536870912
  %v7202 = vshrl.u32 %v7201, 30
  %v7203 = vshll.u32 %v7202, 30
  %v7204 = vsub.s32 %v7200, %v7203
  %vm7205 = vcmp.lt.s32.totalorder %v7204, 0
  %v7206 = vsub.s32 0, %v7204
  %v7207 = vsel %vm7205, %v7206, %v7204
  %v7208 = vclz %v7207
  %v7209 = vsub.s32 %v7208, 2
  %vm7210 = vcmp.gt.s32.totalorder 0, %v7209
  %v7211 = vsel %vm7210, 0, %v7209
  %v7212 = vsub.s32 32, %v7211
  %v7213 = vshll.u32 %v7204, %v7211
  %v7214 = vshrl.u32 %v7196, %v7212
  %v7215 = vor.u32 %v7213, %v7214
  %v7216 = vsub.s32 4294967266, %v7211
  %v7217 = vadd.s32 %v7216, 127
  %v7218 = vshll.u32 %v7217, 23
  %v7219 = vor.u32 4788187, %v7218
  %v7220 = vand.u32 2147483647, %v7219
  %v7222 = vcvt.s32.f32 %v7215
  %v7223 = vmul.f32 %v7222, %v7220
  %v7224 = vxor.u32 %v7223, 2147483648
  %v7225 = vsel %vm7142, %v7224, %v7223
  %v7226 = vsub.s32 4, %v7202
  %v7227 = vsel %vm7142, %v7226, %v7202
  %v7228 = vsel %vm7141, %v1230, %v7225
  %v7229 = vsel %vm7141, 0, %v7227
  %v7230 = vcosq.f32.pop %v7228
  %v7231 = vsinq.f32.pop %v7228
  %vm7232 = vweird.f32 %v1230
  %v7233 = vand.u32 %v7229, 3
  %vm7234 = vcmp.lt.s32.totalorder %v7233, 2
  %vm7235 = vcmp.eq.s32.totalorder %v7233, 0
  %v7236 = vxor.u32 %v7231, 2147483648
  %v7237 = vsel %vm7235, %v7230, %v7236
  %vm7238 = vcmp.eq.s32.totalorder %v7233, 2
  %v7239 = vxor.u32 %v7230, 2147483648
  %v7240 = vsel %vm7238, %v7239, %v7231
  %v7241 = vsel %vm7234, %v7237, %v7240
  %v7242 = vsel %vm7232, nan, %v7241
  %v7243 = vand.u32 2147483647, %v1231
  %vm7244 = vcmp.le.f32.partialorder %v7243, 0.7853982
  %vm7245 = vcmp.lt.s32.totalorder %v1231, 0
  %v7246 = vand.u32 %v1231, 2139095040
  %v7247 = vshrl.u32 %v7246, 23
  %v7248 = vsub.s32 %v7247, 127
  %v7249 = vand.u32 2147483647, %v1231
  %v7250 = vand.u32 %v7249, 8388607
  %v7251 = vor.u32 %v7250, 8388608
  %v7252 = vsub.s32 0, %v7251
  %v7253 = vadd.s32 %v7248, 1
  %vm7254 = vcmp.gt.s32.totalorder %v7253, 0
  %v7255 = vsel %vm7254, %v7253, 0
  %v7256 = vshrl.u32 %v7255, 5
  %v7257 = vand.u32 %v7255, 31
  %v7258 = vsub.s32 32, %v7257
  %v7259 = vshrl.u32 683565275, %v7258
  %v7260 = vshll.u32 683565275, %v7257
  %v7261 = vshrl.u32 2475754826, %v7258
  %v7262 = vor.u32 %v7260, %v7261
  %v7263 = vshll.u32 2475754826, %v7257
  %v7264 = vshrl.u32 2131351028, %v7258
  %v7265 = vor.u32 %v7263, %v7264
  %v7266 = vshll.u32 2131351028, %v7257
  %v7267 = vshrl.u32 2102212464, %v7258
  %v7268 = vor.u32 %v7266, %v7267
  %v7269 = vshll.u32 2102212464, %v7257
  %v7270 = vshrl.u32 920167782, %v7258
  %v7271 = vor.u32 %v7269, %v7270
  %v7272 = vshll.u32 920167782, %v7257
  %v7273 = vshrl.u32 1326507024, %v7258
  %v7274 = vor.u32 %v7272, %v7273
  %vm7275 = vcmp.lt.s32.totalorder %v7256, 1
  %vm7276 = vcmp.lt.s32.totalorder %v7256, 2
  %vm7277 = vcmp.lt.s32.totalorder %v7256, 3
  %vm7278 = vcmp.lt.s32.totalorder %v7256, 4
  %v7279 = vsel %vm7275, %v7259, %v7262
  %v7280 = vsel %vm7278, %v7268, 2102212464
  %v7281 = vsel %vm7277, %v7265, %v7280
  %v7282 = vsel %vm7276, %v7279, %v7281
  %v7283 = vsel %vm7275, %v7262, %v7265
  %v7284 = vsel %vm7278, %v7271, 920167782
  %v7285 = vsel %vm7277, %v7268, %v7284
  %v7286 = vsel %vm7276, %v7283, %v7285
  %v7287 = vsel %vm7275, %v7265, %v7268
  %v7288 = vsel %vm7278, %v7274, 1326507024
  %v7289 = vsel %vm7277, %v7271, %v7288
  %v7290 = vsel %vm7276, %v7287, %v7289
  %v7291 = vshll.u32 %v7251, 8
  %v7292 = vmul.u32.u64.compose %v7291, %v7290
  %v7293 = vextract.low.u32 %v7292
  %v7294 = vextract.high.u32 %v7292
  %v7295 = vmul.u32.u64.compose %v7291, %v7286
  %v7296 = vextract.low.u32 %v7295
  %v7297 = vextract.high.u32 %v7295
  %v7298 = vmul.u32 %v7291, %v7282
  %v7299 = vadd.s32 %v7294, %v7296
  %vm7300 = vc.u32 %v7294, %v7296
  %v7301 = vadd.s32 %v7297, 1
  %v7302 = vsel %vm7300, %v7301, %v7297
  %v7303 = vadd.s32 %v7298, %v7302
  %v7304 = vadd.s32 %v7303, 536870912
  %v7305 = vshrl.u32 %v7304, 30
  %v7306 = vshll.u32 %v7305, 30
  %v7307 = vsub.s32 %v7303, %v7306
  %vm7308 = vcmp.lt.s32.totalorder %v7307, 0
  %v7309 = vsub.s32 0, %v7307
  %v7310 = vsel %vm7308, %v7309, %v7307
  %v7311 = vclz %v7310
  %v7312 = vsub.s32 %v7311, 2
  %vm7313 = vcmp.gt.s32.totalorder 0, %v7312
  %v7314 = vsel %vm7313, 0, %v7312
  %v7315 = vsub.s32 32, %v7314
  %v7316 = vshll.u32 %v7307, %v7314
  %v7317 = vshrl.u32 %v7299, %v7315
  %v7318 = vor.u32 %v7316, %v7317
  %v7319 = vsub.s32 4294967266, %v7314
  %v7320 = vadd.s32 %v7319, 127
  %v7321 = vshll.u32 %v7320, 23
  %v7322 = vor.u32 4788187, %v7321
  %v7323 = vand.u32 2147483647, %v7322
  %v7325 = vcvt.s32.f32 %v7318
  %v7326 = vmul.f32 %v7325, %v7323
  %v7327 = vxor.u32 %v7326, 2147483648
  %v7328 = vsel %vm7245, %v7327, %v7326
  %v7329 = vsub.s32 4, %v7305
  %v7330 = vsel %vm7245, %v7329, %v7305
  %v7331 = vsel %vm7244, %v1231, %v7328
  %v7332 = vsel %vm7244, 0, %v7330
  %v7333 = vcosq.f32.pop %v7331
  %v7334 = vsinq.f32.pop %v7331
  %vm7335 = vweird.f32 %v1231
  %v7336 = vand.u32 %v7332, 3
  %vm7337 = vcmp.lt.s32.totalorder %v7336, 2
  %vm7338 = vcmp.eq.s32.totalorder %v7336, 0
  %v7339 = vxor.u32 %v7334, 2147483648
  %v7340 = vsel %vm7338, %v7333, %v7339
  %vm7341 = vcmp.eq.s32.totalorder %v7336, 2
  %v7342 = vxor.u32 %v7333, 2147483648
  %v7343 = vsel %vm7341, %v7342, %v7334
  %v7344 = vsel %vm7337, %v7340, %v7343
  %v7345 = vsel %vm7335, nan, %v7344
  %v7346 = vand.u32 2147483647, %v1232
  %vm7347 = vcmp.le.f32.partialorder %v7346, 0.7853982
  %vm7348 = vcmp.lt.s32.totalorder %v1232, 0
  %v7349 = vand.u32 %v1232, 2139095040
  %v7350 = vshrl.u32 %v7349, 23
  %v7351 = vsub.s32 %v7350, 127
  %v7352 = vand.u32 2147483647, %v1232
  %v7353 = vand.u32 %v7352, 8388607
  %v7354 = vor.u32 %v7353, 8388608
  %v7355 = vsub.s32 0, %v7354
  %v7356 = vadd.s32 %v7351, 1
  %vm7357 = vcmp.gt.s32.totalorder %v7356, 0
  %v7358 = vsel %vm7357, %v7356, 0
  %v7359 = vshrl.u32 %v7358, 5
  %v7360 = vand.u32 %v7358, 31
  %v7361 = vsub.s32 32, %v7360
  %v7362 = vshrl.u32 683565275, %v7361
  %v7363 = vshll.u32 683565275, %v7360
  %v7364 = vshrl.u32 2475754826, %v7361
  %v7365 = vor.u32 %v7363, %v7364
  %v7366 = vshll.u32 2475754826, %v7360
  %v7367 = vshrl.u32 2131351028, %v7361
  %v7368 = vor.u32 %v7366, %v7367
  %v7369 = vshll.u32 2131351028, %v7360
  %v7370 = vshrl.u32 2102212464, %v7361
  %v7371 = vor.u32 %v7369, %v7370
  %v7372 = vshll.u32 2102212464, %v7360
  %v7373 = vshrl.u32 920167782, %v7361
  %v7374 = vor.u32 %v7372, %v7373
  %v7375 = vshll.u32 920167782, %v7360
  %v7376 = vshrl.u32 1326507024, %v7361
  %v7377 = vor.u32 %v7375, %v7376
  %vm7378 = vcmp.lt.s32.totalorder %v7359, 1
  %vm7379 = vcmp.lt.s32.totalorder %v7359, 2
  %vm7380 = vcmp.lt.s32.totalorder %v7359, 3
  %vm7381 = vcmp.lt.s32.totalorder %v7359, 4
  %v7382 = vsel %vm7378, %v7362, %v7365
  %v7383 = vsel %vm7381, %v7371, 2102212464
  %v7384 = vsel %vm7380, %v7368, %v7383
  %v7385 = vsel %vm7379, %v7382, %v7384
  %v7386 = vsel %vm7378, %v7365, %v7368
  %v7387 = vsel %vm7381, %v7374, 920167782
  %v7388 = vsel %vm7380, %v7371, %v7387
  %v7389 = vsel %vm7379, %v7386, %v7388
  %v7390 = vsel %vm7378, %v7368, %v7371
  %v7391 = vsel %vm7381, %v7377, 1326507024
  %v7392 = vsel %vm7380, %v7374, %v7391
  %v7393 = vsel %vm7379, %v7390, %v7392
  %v7394 = vshll.u32 %v7354, 8
  %v7395 = vmul.u32.u64.compose %v7394, %v7393
  %v7396 = vextract.low.u32 %v7395
  %v7397 = vextract.high.u32 %v7395
  %v7398 = vmul.u32.u64.compose %v7394, %v7389
  %v7399 = vextract.low.u32 %v7398
  %v7400 = vextract.high.u32 %v7398
  %v7401 = vmul.u32 %v7394, %v7385
  %v7402 = vadd.s32 %v7397, %v7399
  %vm7403 = vc.u32 %v7397, %v7399
  %v7404 = vadd.s32 %v7400, 1
  %v7405 = vsel %vm7403, %v7404, %v7400
  %v7406 = vadd.s32 %v7401, %v7405
  %v7407 = vadd.s32 %v7406, 536870912
  %v7408 = vshrl.u32 %v7407, 30
  %v7409 = vshll.u32 %v7408, 30
  %v7410 = vsub.s32 %v7406, %v7409
  %vm7411 = vcmp.lt.s32.totalorder %v7410, 0
  %v7412 = vsub.s32 0, %v7410
  %v7413 = vsel %vm7411, %v7412, %v7410
  %v7414 = vclz %v7413
  %v7415 = vsub.s32 %v7414, 2
  %vm7416 = vcmp.gt.s32.totalorder 0, %v7415
  %v7417 = vsel %vm7416, 0, %v7415
  %v7418 = vsub.s32 32, %v7417
  %v7419 = vshll.u32 %v7410, %v7417
  %v7420 = vshrl.u32 %v7402, %v7418
  %v7421 = vor.u32 %v7419, %v7420
  %v7422 = vsub.s32 4294967266, %v7417
  %v7423 = vadd.s32 %v7422, 127
  %v7424 = vshll.u32 %v7423, 23
  %v7425 = vor.u32 4788187, %v7424
  %v7426 = vand.u32 2147483647, %v7425
  %v7428 = vcvt.s32.f32 %v7421
  %v7429 = vmul.f32 %v7428, %v7426
  %v7430 = vxor.u32 %v7429, 2147483648
  %v7431 = vsel %vm7348, %v7430, %v7429
  %v7432 = vsub.s32 4, %v7408
  %v7433 = vsel %vm7348, %v7432, %v7408
  %v7434 = vsel %vm7347, %v1232, %v7431
  %v7435 = vsel %vm7347, 0, %v7433
  %v7436 = vcosq.f32.pop %v7434
  %v7437 = vsinq.f32.pop %v7434
  %vm7438 = vweird.f32 %v1232
  %v7439 = vand.u32 %v7435, 3
  %vm7440 = vcmp.lt.s32.totalorder %v7439, 2
  %vm7441 = vcmp.eq.s32.totalorder %v7439, 0
  %v7442 = vxor.u32 %v7437, 2147483648
  %v7443 = vsel %vm7441, %v7436, %v7442
  %vm7444 = vcmp.eq.s32.totalorder %v7439, 2
  %v7445 = vxor.u32 %v7436, 2147483648
  %v7446 = vsel %vm7444, %v7445, %v7437
  %v7447 = vsel %vm7440, %v7443, %v7446
  %v7448 = vsel %vm7438, nan, %v7447
  %v7449 = vand.u32 2147483647, %v1233
  %vm7450 = vcmp.le.f32.partialorder %v7449, 0.7853982
  %vm7451 = vcmp.lt.s32.totalorder %v1233, 0
  %v7452 = vand.u32 %v1233, 2139095040
  %v7453 = vshrl.u32 %v7452, 23
  %v7454 = vsub.s32 %v7453, 127
  %v7455 = vand.u32 2147483647, %v1233
  %v7456 = vand.u32 %v7455, 8388607
  %v7457 = vor.u32 %v7456, 8388608
  %v7458 = vsub.s32 0, %v7457
  %v7459 = vadd.s32 %v7454, 1
  %vm7460 = vcmp.gt.s32.totalorder %v7459, 0
  %v7461 = vsel %vm7460, %v7459, 0
  %v7462 = vshrl.u32 %v7461, 5
  %v7463 = vand.u32 %v7461, 31
  %v7464 = vsub.s32 32, %v7463
  %v7465 = vshrl.u32 683565275, %v7464
  %v7466 = vshll.u32 683565275, %v7463
  %v7467 = vshrl.u32 2475754826, %v7464
  %v7468 = vor.u32 %v7466, %v7467
  %v7469 = vshll.u32 2475754826, %v7463
  %v7470 = vshrl.u32 2131351028, %v7464
  %v7471 = vor.u32 %v7469, %v7470
  %v7472 = vshll.u32 2131351028, %v7463
  %v7473 = vshrl.u32 2102212464, %v7464
  %v7474 = vor.u32 %v7472, %v7473
  %v7475 = vshll.u32 2102212464, %v7463
  %v7476 = vshrl.u32 920167782, %v7464
  %v7477 = vor.u32 %v7475, %v7476
  %v7478 = vshll.u32 920167782, %v7463
  %v7479 = vshrl.u32 1326507024, %v7464
  %v7480 = vor.u32 %v7478, %v7479
  %vm7481 = vcmp.lt.s32.totalorder %v7462, 1
  %vm7482 = vcmp.lt.s32.totalorder %v7462, 2
  %vm7483 = vcmp.lt.s32.totalorder %v7462, 3
  %vm7484 = vcmp.lt.s32.totalorder %v7462, 4
  %v7485 = vsel %vm7481, %v7465, %v7468
  %v7486 = vsel %vm7484, %v7474, 2102212464
  %v7487 = vsel %vm7483, %v7471, %v7486
  %v7488 = vsel %vm7482, %v7485, %v7487
  %v7489 = vsel %vm7481, %v7468, %v7471
  %v7490 = vsel %vm7484, %v7477, 920167782
  %v7491 = vsel %vm7483, %v7474, %v7490
  %v7492 = vsel %vm7482, %v7489, %v7491
  %v7493 = vsel %vm7481, %v7471, %v7474
  %v7494 = vsel %vm7484, %v7480, 1326507024
  %v7495 = vsel %vm7483, %v7477, %v7494
  %v7496 = vsel %vm7482, %v7493, %v7495
  %v7497 = vshll.u32 %v7457, 8
  %v7498 = vmul.u32.u64.compose %v7497, %v7496
  %v7499 = vextract.low.u32 %v7498
  %v7500 = vextract.high.u32 %v7498
  %v7501 = vmul.u32.u64.compose %v7497, %v7492
  %v7502 = vextract.low.u32 %v7501
  %v7503 = vextract.high.u32 %v7501
  %v7504 = vmul.u32 %v7497, %v7488
  %v7505 = vadd.s32 %v7500, %v7502
  %vm7506 = vc.u32 %v7500, %v7502
  %v7507 = vadd.s32 %v7503, 1
  %v7508 = vsel %vm7506, %v7507, %v7503
  %v7509 = vadd.s32 %v7504, %v7508
  %v7510 = vadd.s32 %v7509, 536870912
  %v7511 = vshrl.u32 %v7510, 30
  %v7512 = vshll.u32 %v7511, 30
  %v7513 = vsub.s32 %v7509, %v7512
  %vm7514 = vcmp.lt.s32.totalorder %v7513, 0
  %v7515 = vsub.s32 0, %v7513
  %v7516 = vsel %vm7514, %v7515, %v7513
  %v7517 = vclz %v7516
  %v7518 = vsub.s32 %v7517, 2
  %vm7519 = vcmp.gt.s32.totalorder 0, %v7518
  %v7520 = vsel %vm7519, 0, %v7518
  %v7521 = vsub.s32 32, %v7520
  %v7522 = vshll.u32 %v7513, %v7520
  %v7523 = vshrl.u32 %v7505, %v7521
  %v7524 = vor.u32 %v7522, %v7523
  %v7525 = vsub.s32 4294967266, %v7520
  %v7526 = vadd.s32 %v7525, 127
  %v7527 = vshll.u32 %v7526, 23
  %v7528 = vor.u32 4788187, %v7527
  %v7529 = vand.u32 2147483647, %v7528
  %v7531 = vcvt.s32.f32 %v7524
  %v7532 = vmul.f32 %v7531, %v7529
  %v7533 = vxor.u32 %v7532, 2147483648
  %v7534 = vsel %vm7451, %v7533, %v7532
  %v7535 = vsub.s32 4, %v7511
  %v7536 = vsel %vm7451, %v7535, %v7511
  %v7537 = vsel %vm7450, %v1233, %v7534
  %v7538 = vsel %vm7450, 0, %v7536
  %v7539 = vcosq.f32.pop %v7537
  %v7540 = vsinq.f32.pop %v7537
  %vm7541 = vweird.f32 %v1233
  %v7542 = vand.u32 %v7538, 3
  %vm7543 = vcmp.lt.s32.totalorder %v7542, 2
  %vm7544 = vcmp.eq.s32.totalorder %v7542, 0
  %v7545 = vxor.u32 %v7540, 2147483648
  %v7546 = vsel %vm7544, %v7539, %v7545
  %vm7547 = vcmp.eq.s32.totalorder %v7542, 2
  %v7548 = vxor.u32 %v7539, 2147483648
  %v7549 = vsel %vm7547, %v7548, %v7540
  %v7550 = vsel %vm7543, %v7546, %v7549
  %v7551 = vsel %vm7541, nan, %v7550
  %v7552 = vand.u32 2147483647, %v1234
  %vm7553 = vcmp.le.f32.partialorder %v7552, 0.7853982
  %vm7554 = vcmp.lt.s32.totalorder %v1234, 0
  %v7555 = vand.u32 %v1234, 2139095040
  %v7556 = vshrl.u32 %v7555, 23
  %v7557 = vsub.s32 %v7556, 127
  %v7558 = vand.u32 2147483647, %v1234
  %v7559 = vand.u32 %v7558, 8388607
  %v7560 = vor.u32 %v7559, 8388608
  %v7561 = vsub.s32 0, %v7560
  %v7562 = vadd.s32 %v7557, 1
  %vm7563 = vcmp.gt.s32.totalorder %v7562, 0
  %v7564 = vsel %vm7563, %v7562, 0
  %v7565 = vshrl.u32 %v7564, 5
  %v7566 = vand.u32 %v7564, 31
  %v7567 = vsub.s32 32, %v7566
  %v7568 = vshrl.u32 683565275, %v7567
  %v7569 = vshll.u32 683565275, %v7566
  %v7570 = vshrl.u32 2475754826, %v7567
  %v7571 = vor.u32 %v7569, %v7570
  %v7572 = vshll.u32 2475754826, %v7566
  %v7573 = vshrl.u32 2131351028, %v7567
  %v7574 = vor.u32 %v7572, %v7573
  %v7575 = vshll.u32 2131351028, %v7566
  %v7576 = vshrl.u32 2102212464, %v7567
  %v7577 = vor.u32 %v7575, %v7576
  %v7578 = vshll.u32 2102212464, %v7566
  %v7579 = vshrl.u32 920167782, %v7567
  %v7580 = vor.u32 %v7578, %v7579
  %v7581 = vshll.u32 920167782, %v7566
  %v7582 = vshrl.u32 1326507024, %v7567
  %v7583 = vor.u32 %v7581, %v7582
  %vm7584 = vcmp.lt.s32.totalorder %v7565, 1
  %vm7585 = vcmp.lt.s32.totalorder %v7565, 2
  %vm7586 = vcmp.lt.s32.totalorder %v7565, 3
  %vm7587 = vcmp.lt.s32.totalorder %v7565, 4
  %v7588 = vsel %vm7584, %v7568, %v7571
  %v7589 = vsel %vm7587, %v7577, 2102212464
  %v7590 = vsel %vm7586, %v7574, %v7589
  %v7591 = vsel %vm7585, %v7588, %v7590
  %v7592 = vsel %vm7584, %v7571, %v7574
  %v7593 = vsel %vm7587, %v7580, 920167782
  %v7594 = vsel %vm7586, %v7577, %v7593
  %v7595 = vsel %vm7585, %v7592, %v7594
  %v7596 = vsel %vm7584, %v7574, %v7577
  %v7597 = vsel %vm7587, %v7583, 1326507024
  %v7598 = vsel %vm7586, %v7580, %v7597
  %v7599 = vsel %vm7585, %v7596, %v7598
  %v7600 = vshll.u32 %v7560, 8
  %v7601 = vmul.u32.u64.compose %v7600, %v7599
  %v7602 = vextract.low.u32 %v7601
  %v7603 = vextract.high.u32 %v7601
  %v7604 = vmul.u32.u64.compose %v7600, %v7595
  %v7605 = vextract.low.u32 %v7604
  %v7606 = vextract.high.u32 %v7604
  %v7607 = vmul.u32 %v7600, %v7591
  %v7608 = vadd.s32 %v7603, %v7605
  %vm7609 = vc.u32 %v7603, %v7605
  %v7610 = vadd.s32 %v7606, 1
  %v7611 = vsel %vm7609, %v7610, %v7606
  %v7612 = vadd.s32 %v7607, %v7611
  %v7613 = vadd.s32 %v7612, 536870912
  %v7614 = vshrl.u32 %v7613, 30
  %v7615 = vshll.u32 %v7614, 30
  %v7616 = vsub.s32 %v7612, %v7615
  %vm7617 = vcmp.lt.s32.totalorder %v7616, 0
  %v7618 = vsub.s32 0, %v7616
  %v7619 = vsel %vm7617, %v7618, %v7616
  %v7620 = vclz %v7619
  %v7621 = vsub.s32 %v7620, 2
  %vm7622 = vcmp.gt.s32.totalorder 0, %v7621
  %v7623 = vsel %vm7622, 0, %v7621
  %v7624 = vsub.s32 32, %v7623
  %v7625 = vshll.u32 %v7616, %v7623
  %v7626 = vshrl.u32 %v7608, %v7624
  %v7627 = vor.u32 %v7625, %v7626
  %v7628 = vsub.s32 4294967266, %v7623
  %v7629 = vadd.s32 %v7628, 127
  %v7630 = vshll.u32 %v7629, 23
  %v7631 = vor.u32 4788187, %v7630
  %v7632 = vand.u32 2147483647, %v7631
  %v7634 = vcvt.s32.f32 %v7627
  %v7635 = vmul.f32 %v7634, %v7632
  %v7636 = vxor.u32 %v7635, 2147483648
  %v7637 = vsel %vm7554, %v7636, %v7635
  %v7638 = vsub.s32 4, %v7614
  %v7639 = vsel %vm7554, %v7638, %v7614
  %v7640 = vsel %vm7553, %v1234, %v7637
  %v7641 = vsel %vm7553, 0, %v7639
  %v7642 = vcosq.f32.pop %v7640
  %v7643 = vsinq.f32.pop %v7640
  %vm7644 = vweird.f32 %v1234
  %v7645 = vand.u32 %v7641, 3
  %vm7646 = vcmp.lt.s32.totalorder %v7645, 2
  %vm7647 = vcmp.eq.s32.totalorder %v7645, 0
  %v7648 = vxor.u32 %v7643, 2147483648
  %v7649 = vsel %vm7647, %v7642, %v7648
  %vm7650 = vcmp.eq.s32.totalorder %v7645, 2
  %v7651 = vxor.u32 %v7642, 2147483648
  %v7652 = vsel %vm7650, %v7651, %v7643
  %v7653 = vsel %vm7646, %v7649, %v7652
  %v7654 = vsel %vm7644, nan, %v7653
  %v7655 = vand.u32 2147483647, %v1235
  %vm7656 = vcmp.le.f32.partialorder %v7655, 0.7853982
  %vm7657 = vcmp.lt.s32.totalorder %v1235, 0
  %v7658 = vand.u32 %v1235, 2139095040
  %v7659 = vshrl.u32 %v7658, 23
  %v7660 = vsub.s32 %v7659, 127
  %v7661 = vand.u32 2147483647, %v1235
  %v7662 = vand.u32 %v7661, 8388607
  %v7663 = vor.u32 %v7662, 8388608
  %v7664 = vsub.s32 0, %v7663
  %v7665 = vadd.s32 %v7660, 1
  %vm7666 = vcmp.gt.s32.totalorder %v7665, 0
  %v7667 = vsel %vm7666, %v7665, 0
  %v7668 = vshrl.u32 %v7667, 5
  %v7669 = vand.u32 %v7667, 31
  %v7670 = vsub.s32 32, %v7669
  %v7671 = vshrl.u32 683565275, %v7670
  %v7672 = vshll.u32 683565275, %v7669
  %v7673 = vshrl.u32 2475754826, %v7670
  %v7674 = vor.u32 %v7672, %v7673
  %v7675 = vshll.u32 2475754826, %v7669
  %v7676 = vshrl.u32 2131351028, %v7670
  %v7677 = vor.u32 %v7675, %v7676
  %v7678 = vshll.u32 2131351028, %v7669
  %v7679 = vshrl.u32 2102212464, %v7670
  %v7680 = vor.u32 %v7678, %v7679
  %v7681 = vshll.u32 2102212464, %v7669
  %v7682 = vshrl.u32 920167782, %v7670
  %v7683 = vor.u32 %v7681, %v7682
  %v7684 = vshll.u32 920167782, %v7669
  %v7685 = vshrl.u32 1326507024, %v7670
  %v7686 = vor.u32 %v7684, %v7685
  %vm7687 = vcmp.lt.s32.totalorder %v7668, 1
  %vm7688 = vcmp.lt.s32.totalorder %v7668, 2
  %vm7689 = vcmp.lt.s32.totalorder %v7668, 3
  %vm7690 = vcmp.lt.s32.totalorder %v7668, 4
  %v7691 = vsel %vm7687, %v7671, %v7674
  %v7692 = vsel %vm7690, %v7680, 2102212464
  %v7693 = vsel %vm7689, %v7677, %v7692
  %v7694 = vsel %vm7688, %v7691, %v7693
  %v7695 = vsel %vm7687, %v7674, %v7677
  %v7696 = vsel %vm7690, %v7683, 920167782
  %v7697 = vsel %vm7689, %v7680, %v7696
  %v7698 = vsel %vm7688, %v7695, %v7697
  %v7699 = vsel %vm7687, %v7677, %v7680
  %v7700 = vsel %vm7690, %v7686, 1326507024
  %v7701 = vsel %vm7689, %v7683, %v7700
  %v7702 = vsel %vm7688, %v7699, %v7701
  %v7703 = vshll.u32 %v7663, 8
  %v7704 = vmul.u32.u64.compose %v7703, %v7702
  %v7705 = vextract.low.u32 %v7704
  %v7706 = vextract.high.u32 %v7704
  %v7707 = vmul.u32.u64.compose %v7703, %v7698
  %v7708 = vextract.low.u32 %v7707
  %v7709 = vextract.high.u32 %v7707
  %v7710 = vmul.u32 %v7703, %v7694
  %v7711 = vadd.s32 %v7706, %v7708
  %vm7712 = vc.u32 %v7706, %v7708
  %v7713 = vadd.s32 %v7709, 1
  %v7714 = vsel %vm7712, %v7713, %v7709
  %v7715 = vadd.s32 %v7710, %v7714
  %v7716 = vadd.s32 %v7715, 536870912
  %v7717 = vshrl.u32 %v7716, 30
  %v7718 = vshll.u32 %v7717, 30
  %v7719 = vsub.s32 %v7715, %v7718
  %vm7720 = vcmp.lt.s32.totalorder %v7719, 0
  %v7721 = vsub.s32 0, %v7719
  %v7722 = vsel %vm7720, %v7721, %v7719
  %v7723 = vclz %v7722
  %v7724 = vsub.s32 %v7723, 2
  %vm7725 = vcmp.gt.s32.totalorder 0, %v7724
  %v7726 = vsel %vm7725, 0, %v7724
  %v7727 = vsub.s32 32, %v7726
  %v7728 = vshll.u32 %v7719, %v7726
  %v7729 = vshrl.u32 %v7711, %v7727
  %v7730 = vor.u32 %v7728, %v7729
  %v7731 = vsub.s32 4294967266, %v7726
  %v7732 = vadd.s32 %v7731, 127
  %v7733 = vshll.u32 %v7732, 23
  %v7734 = vor.u32 4788187, %v7733
  %v7735 = vand.u32 2147483647, %v7734
  %v7737 = vcvt.s32.f32 %v7730
  %v7738 = vmul.f32 %v7737, %v7735
  %v7739 = vxor.u32 %v7738, 2147483648
  %v7740 = vsel %vm7657, %v7739, %v7738
  %v7741 = vsub.s32 4, %v7717
  %v7742 = vsel %vm7657, %v7741, %v7717
  %v7743 = vsel %vm7656, %v1235, %v7740
  %v7744 = vsel %vm7656, 0, %v7742
  %v7745 = vcosq.f32.pop %v7743
  %v7746 = vsinq.f32.pop %v7743
  %vm7747 = vweird.f32 %v1235
  %v7748 = vand.u32 %v7744, 3
  %vm7749 = vcmp.lt.s32.totalorder %v7748, 2
  %vm7750 = vcmp.eq.s32.totalorder %v7748, 0
  %v7751 = vxor.u32 %v7746, 2147483648
  %v7752 = vsel %vm7750, %v7745, %v7751
  %vm7753 = vcmp.eq.s32.totalorder %v7748, 2
  %v7754 = vxor.u32 %v7745, 2147483648
  %v7755 = vsel %vm7753, %v7754, %v7746
  %v7756 = vsel %vm7749, %v7752, %v7755
  %v7757 = vsel %vm7747, nan, %v7756
  %v7758 = vand.u32 2147483647, %v1236
  %vm7759 = vcmp.le.f32.partialorder %v7758, 0.7853982
  %vm7760 = vcmp.lt.s32.totalorder %v1236, 0
  %v7761 = vand.u32 %v1236, 2139095040
  %v7762 = vshrl.u32 %v7761, 23
  %v7763 = vsub.s32 %v7762, 127
  %v7764 = vand.u32 2147483647, %v1236
  %v7765 = vand.u32 %v7764, 8388607
  %v7766 = vor.u32 %v7765, 8388608
  %v7767 = vsub.s32 0, %v7766
  %v7768 = vadd.s32 %v7763, 1
  %vm7769 = vcmp.gt.s32.totalorder %v7768, 0
  %v7770 = vsel %vm7769, %v7768, 0
  %v7771 = vshrl.u32 %v7770, 5
  %v7772 = vand.u32 %v7770, 31
  %v7773 = vsub.s32 32, %v7772
  %v7774 = vshrl.u32 683565275, %v7773
  %v7775 = vshll.u32 683565275, %v7772
  %v7776 = vshrl.u32 2475754826, %v7773
  %v7777 = vor.u32 %v7775, %v7776
  %v7778 = vshll.u32 2475754826, %v7772
  %v7779 = vshrl.u32 2131351028, %v7773
  %v7780 = vor.u32 %v7778, %v7779
  %v7781 = vshll.u32 2131351028, %v7772
  %v7782 = vshrl.u32 2102212464, %v7773
  %v7783 = vor.u32 %v7781, %v7782
  %v7784 = vshll.u32 2102212464, %v7772
  %v7785 = vshrl.u32 920167782, %v7773
  %v7786 = vor.u32 %v7784, %v7785
  %v7787 = vshll.u32 920167782, %v7772
  %v7788 = vshrl.u32 1326507024, %v7773
  %v7789 = vor.u32 %v7787, %v7788
  %vm7790 = vcmp.lt.s32.totalorder %v7771, 1
  %vm7791 = vcmp.lt.s32.totalorder %v7771, 2
  %vm7792 = vcmp.lt.s32.totalorder %v7771, 3
  %vm7793 = vcmp.lt.s32.totalorder %v7771, 4
  %v7794 = vsel %vm7790, %v7774, %v7777
  %v7795 = vsel %vm7793, %v7783, 2102212464
  %v7796 = vsel %vm7792, %v7780, %v7795
  %v7797 = vsel %vm7791, %v7794, %v7796
  %v7798 = vsel %vm7790, %v7777, %v7780
  %v7799 = vsel %vm7793, %v7786, 920167782
  %v7800 = vsel %vm7792, %v7783, %v7799
  %v7801 = vsel %vm7791, %v7798, %v7800
  %v7802 = vsel %vm7790, %v7780, %v7783
  %v7803 = vsel %vm7793, %v7789, 1326507024
  %v7804 = vsel %vm7792, %v7786, %v7803
  %v7805 = vsel %vm7791, %v7802, %v7804
  %v7806 = vshll.u32 %v7766, 8
  %v7807 = vmul.u32.u64.compose %v7806, %v7805
  %v7808 = vextract.low.u32 %v7807
  %v7809 = vextract.high.u32 %v7807
  %v7810 = vmul.u32.u64.compose %v7806, %v7801
  %v7811 = vextract.low.u32 %v7810
  %v7812 = vextract.high.u32 %v7810
  %v7813 = vmul.u32 %v7806, %v7797
  %v7814 = vadd.s32 %v7809, %v7811
  %vm7815 = vc.u32 %v7809, %v7811
  %v7816 = vadd.s32 %v7812, 1
  %v7817 = vsel %vm7815, %v7816, %v7812
  %v7818 = vadd.s32 %v7813, %v7817
  %v7819 = vadd.s32 %v7818, 536870912
  %v7820 = vshrl.u32 %v7819, 30
  %v7821 = vshll.u32 %v7820, 30
  %v7822 = vsub.s32 %v7818, %v7821
  %vm7823 = vcmp.lt.s32.totalorder %v7822, 0
  %v7824 = vsub.s32 0, %v7822
  %v7825 = vsel %vm7823, %v7824, %v7822
  %v7826 = vclz %v7825
  %v7827 = vsub.s32 %v7826, 2
  %vm7828 = vcmp.gt.s32.totalorder 0, %v7827
  %v7829 = vsel %vm7828, 0, %v7827
  %v7830 = vsub.s32 32, %v7829
  %v7831 = vshll.u32 %v7822, %v7829
  %v7832 = vshrl.u32 %v7814, %v7830
  %v7833 = vor.u32 %v7831, %v7832
  %v7834 = vsub.s32 4294967266, %v7829
  %v7835 = vadd.s32 %v7834, 127
  %v7836 = vshll.u32 %v7835, 23
  %v7837 = vor.u32 4788187, %v7836
  %v7838 = vand.u32 2147483647, %v7837
  %v7840 = vcvt.s32.f32 %v7833
  %v7841 = vmul.f32 %v7840, %v7838
  %v7842 = vxor.u32 %v7841, 2147483648
  %v7843 = vsel %vm7760, %v7842, %v7841
  %v7844 = vsub.s32 4, %v7820
  %v7845 = vsel %vm7760, %v7844, %v7820
  %v7846 = vsel %vm7759, %v1236, %v7843
  %v7847 = vsel %vm7759, 0, %v7845
  %v7848 = vcosq.f32.pop %v7846
  %v7849 = vsinq.f32.pop %v7846
  %vm7850 = vweird.f32 %v1236
  %v7851 = vand.u32 %v7847, 3
  %vm7852 = vcmp.lt.s32.totalorder %v7851, 2
  %vm7853 = vcmp.eq.s32.totalorder %v7851, 0
  %v7854 = vxor.u32 %v7849, 2147483648
  %v7855 = vsel %vm7853, %v7848, %v7854
  %vm7856 = vcmp.eq.s32.totalorder %v7851, 2
  %v7857 = vxor.u32 %v7848, 2147483648
  %v7858 = vsel %vm7856, %v7857, %v7849
  %v7859 = vsel %vm7852, %v7855, %v7858
  %v7860 = vsel %vm7850, nan, %v7859
  %7861 = vst.msk [vmem:[%s2] sm:$0xff] %vm1106, %v1340
  %7862 = vst.msk [vmem:[%s2 + $0x8] sm:$0xff] %vm1106, %v1444
  %7863 = vst.msk [vmem:[%s2 + $0x10] sm:$0xff] %vm1106, %v1548
  %7864 = vst.msk [vmem:[%s2 + $0x18] sm:$0xff] %vm1106, %v1652
  %7865 = vst.msk [vmem:[%s2 + $0x20] sm:$0xff] %vm1106, %v1756
  %7866 = vst.msk [vmem:[%s2 + $0x28] sm:$0xff] %vm1106, %v1860
  %7867 = vst.msk [vmem:[%s2 + $0x30] sm:$0xff] %vm1106, %v1964
  %7868 = vst.msk [vmem:[%s2 + $0x38] sm:$0xff] %vm1106, %v2068
  %7869 = vst.msk [vmem:[%s2 + $0x40] sm:$0xff] %vm1106, %v2172
  %7870 = vst.msk [vmem:[%s2 + $0x48] sm:$0xff] %vm1106, %v2276
  %7871 = vst.msk [vmem:[%s2 + $0x50] sm:$0xff] %vm1106, %v2380
  %7872 = vst.msk [vmem:[%s2 + $0x58] sm:$0xff] %vm1106, %v2484
  %7873 = vst.msk [vmem:[%s2 + $0x60] sm:$0xff] %vm1106, %v2588
  %7874 = vst.msk [vmem:[%s2 + $0x68] sm:$0xff] %vm1106, %v2692
  %7875 = vst.msk [vmem:[%s2 + $0x70] sm:$0xff] %vm1106, %v2796
  %7876 = vst.msk [vmem:[%s2 + $0x78] sm:$0xff] %vm1106, %v2900
  %7877 = vst.msk [vmem:[%s2 + $0x80] sm:$0xff] %vm1106, %v3004
  %7878 = vst.msk [vmem:[%s2 + $0x88] sm:$0xff] %vm1106, %v3108
  %7879 = vst.msk [vmem:[%s2 + $0x90] sm:$0xff] %vm1106, %v3212
  %7880 = vst.msk [vmem:[%s2 + $0x98] sm:$0xff] %vm1106, %v3316
  %7881 = vst.msk [vmem:[%s2 + $0xa0] sm:$0xff] %vm1106, %v3420
  %7882 = vst.msk [vmem:[%s2 + $0xa8] sm:$0xff] %vm1106, %v3524
  %7883 = vst.msk [vmem:[%s2 + $0xb0] sm:$0xff] %vm1106, %v3628
  %7884 = vst.msk [vmem:[%s2 + $0xb8] sm:$0xff] %vm1106, %v3732
  %7885 = vst.msk [vmem:[%s2 + $0xc0] sm:$0xff] %vm1106, %v3836
  %7886 = vst.msk [vmem:[%s2 + $0xc8] sm:$0xff] %vm1106, %v3940
  %7887 = vst.msk [vmem:[%s2 + $0xd0] sm:$0xff] %vm1106, %v4044
  %7888 = vst.msk [vmem:[%s2 + $0xd8] sm:$0xff] %vm1106, %v4148
  %7889 = vst.msk [vmem:[%s2 + $0xe0] sm:$0xff] %vm1106, %v4252
  %7890 = vst.msk [vmem:[%s2 + $0xe8] sm:$0xff] %vm1106, %v4356
  %7891 = vst.msk [vmem:[%s2 + $0xf0] sm:$0xff] %vm1106, %v4460
  %7892 = vst.msk [vmem:[%s2 + $0xf8] sm:$0xff] %vm1106, %v4564
  %7925 = vrot.lane.b32.xlu0 %v4667, 8
  %v7926 = vpop.permute.xlu0 %7925
  %7927 = vrot.lane.b32.xlu0 %v4770, 8
  %v7928 = vpop.permute.xlu0 %7927
  %7929 = vrot.lane.b32.xlu0 %v4873, 8
  %v7930 = vpop.permute.xlu0 %7929
  %7931 = vrot.lane.b32.xlu0 %v4976, 8
  %v7932 = vpop.permute.xlu0 %7931
  %7933 = vrot.lane.b32.xlu0 %v5079, 8
  %v7934 = vpop.permute.xlu0 %7933
  %7935 = vrot.lane.b32.xlu0 %v5182, 8
  %v7936 = vpop.permute.xlu0 %7935
  %7937 = vrot.lane.b32.xlu0 %v5285, 8
  %v7938 = vpop.permute.xlu0 %7937
  %7939 = vrot.lane.b32.xlu0 %v5388, 8
  %v7940 = vpop.permute.xlu0 %7939
  %7941 = vrot.lane.b32.xlu0 %v5491, 8
  %v7942 = vpop.permute.xlu0 %7941
  %7943 = vrot.lane.b32.xlu0 %v5594, 8
  %v7944 = vpop.permute.xlu0 %7943
  %7945 = vrot.lane.b32.xlu0 %v5697, 8
  %v7946 = vpop.permute.xlu0 %7945
  %7947 = vrot.lane.b32.xlu0 %v5800, 8
  %v7948 = vpop.permute.xlu0 %7947
  %7949 = vrot.lane.b32.xlu0 %v5903, 8
  %v7950 = vpop.permute.xlu0 %7949
  %7951 = vrot.lane.b32.xlu0 %v6006, 8
  %v7952 = vpop.permute.xlu0 %7951
  %7953 = vrot.lane.b32.xlu0 %v6109, 8
  %v7954 = vpop.permute.xlu0 %7953
  %7955 = vrot.lane.b32.xlu0 %v6212, 8
  %v7956 = vpop.permute.xlu0 %7955
  %7957 = vrot.lane.b32.xlu0 %v6315, 8
  %v7958 = vpop.permute.xlu0 %7957
  %7959 = vrot.lane.b32.xlu0 %v6418, 8
  %v7960 = vpop.permute.xlu0 %7959
  %7961 = vrot.lane.b32.xlu0 %v6521, 8
  %v7962 = vpop.permute.xlu0 %7961
  %7963 = vrot.lane.b32.xlu0 %v6624, 8
  %v7964 = vpop.permute.xlu0 %7963
  %7965 = vrot.lane.b32.xlu0 %v6727, 8
  %v7966 = vpop.permute.xlu0 %7965
  %7967 = vrot.lane.b32.xlu0 %v6830, 8
  %v7968 = vpop.permute.xlu0 %7967
  %7969 = vrot.lane.b32.xlu0 %v6933, 8
  %v7970 = vpop.permute.xlu0 %7969
  %7971 = vrot.lane.b32.xlu0 %v7036, 8
  %v7972 = vpop.permute.xlu0 %7971
  %7973 = vrot.lane.b32.xlu0 %v7139, 8
  %v7974 = vpop.permute.xlu0 %7973
  %7975 = vrot.lane.b32.xlu0 %v7242, 8
  %v7976 = vpop.permute.xlu0 %7975
  %7977 = vrot.lane.b32.xlu0 %v7345, 8
  %v7978 = vpop.permute.xlu0 %7977
  %7979 = vrot.lane.b32.xlu0 %v7448, 8
  %v7980 = vpop.permute.xlu0 %7979
  %7981 = vrot.lane.b32.xlu0 %v7551, 8
  %v7982 = vpop.permute.xlu0 %7981
  %7983 = vrot.lane.b32.xlu0 %v7654, 8
  %v7984 = vpop.permute.xlu0 %7983
  %7985 = vrot.lane.b32.xlu0 %v7757, 8
  %v7986 = vpop.permute.xlu0 %7985
  %7987 = vrot.lane.b32.xlu0 %v7860, 8
  %v7988 = vpop.permute.xlu0 %7987
  %vm8021 = vcmask 130112
  %8022 = vst.msk [vmem:[%s2] sm:$0xff] %vm8021, %v7926
  %8023 = vst.msk [vmem:[%s2 + $0x8] sm:$0xff] %vm8021, %v7928
  %8024 = vst.msk [vmem:[%s2 + $0x10] sm:$0xff] %vm8021, %v7930
  %8025 = vst.msk [vmem:[%s2 + $0x18] sm:$0xff] %vm8021, %v7932
  %8026 = vst.msk [vmem:[%s2 + $0x20] sm:$0xff] %vm8021, %v7934
  %8027 = vst.msk [vmem:[%s2 + $0x28] sm:$0xff] %vm8021, %v7936
  %8028 = vst.msk [vmem:[%s2 + $0x30] sm:$0xff] %vm8021, %v7938
  %8029 = vst.msk [vmem:[%s2 + $0x38] sm:$0xff] %vm8021, %v7940
  %8030 = vst.msk [vmem:[%s2 + $0x40] sm:$0xff] %vm8021, %v7942
  %8031 = vst.msk [vmem:[%s2 + $0x48] sm:$0xff] %vm8021, %v7944
  %8032 = vst.msk [vmem:[%s2 + $0x50] sm:$0xff] %vm8021, %v7946
  %8033 = vst.msk [vmem:[%s2 + $0x58] sm:$0xff] %vm8021, %v7948
  %8034 = vst.msk [vmem:[%s2 + $0x60] sm:$0xff] %vm8021, %v7950
  %8035 = vst.msk [vmem:[%s2 + $0x68] sm:$0xff] %vm8021, %v7952
  %8036 = vst.msk [vmem:[%s2 + $0x70] sm:$0xff] %vm8021, %v7954
  %8037 = vst.msk [vmem:[%s2 + $0x78] sm:$0xff] %vm8021, %v7956
  %8038 = vst.msk [vmem:[%s2 + $0x80] sm:$0xff] %vm8021, %v7958
  %8039 = vst.msk [vmem:[%s2 + $0x88] sm:$0xff] %vm8021, %v7960
  %8040 = vst.msk [vmem:[%s2 + $0x90] sm:$0xff] %vm8021, %v7962
  %8041 = vst.msk [vmem:[%s2 + $0x98] sm:$0xff] %vm8021, %v7964
  %8042 = vst.msk [vmem:[%s2 + $0xa0] sm:$0xff] %vm8021, %v7966
  %8043 = vst.msk [vmem:[%s2 + $0xa8] sm:$0xff] %vm8021, %v7968
  %8044 = vst.msk [vmem:[%s2 + $0xb0] sm:$0xff] %vm8021, %v7970
  %8045 = vst.msk [vmem:[%s2 + $0xb8] sm:$0xff] %vm8021, %v7972
  %8046 = vst.msk [vmem:[%s2 + $0xc0] sm:$0xff] %vm8021, %v7974
  %8047 = vst.msk [vmem:[%s2 + $0xc8] sm:$0xff] %vm8021, %v7976
  %8048 = vst.msk [vmem:[%s2 + $0xd0] sm:$0xff] %vm8021, %v7978
  %8049 = vst.msk [vmem:[%s2 + $0xd8] sm:$0xff] %vm8021, %v7980
  %8050 = vst.msk [vmem:[%s2 + $0xe0] sm:$0xff] %vm8021, %v7982
  %8051 = vst.msk [vmem:[%s2 + $0xe8] sm:$0xff] %vm8021, %v7984
  %8052 = vst.msk [vmem:[%s2 + $0xf0] sm:$0xff] %vm8021, %v7986
  %8053 = vst.msk [vmem:[%s2 + $0xf8] sm:$0xff] %vm8021, %v7988
  %8054 = vrot.lane.b32.xlu0 %v11, 16
  %v8055 = vpop.permute.xlu0 %8054
  %8056 = vrot.lane.b32.xlu0 %v12, 16
  %v8057 = vpop.permute.xlu0 %8056
  %8058 = vrot.lane.b32.xlu0 %v13, 16
  %v8059 = vpop.permute.xlu0 %8058
  %8060 = vrot.lane.b32.xlu0 %v14, 16
  %v8061 = vpop.permute.xlu0 %8060
  %8062 = vrot.lane.b32.xlu0 %v15, 16
  %v8063 = vpop.permute.xlu0 %8062
  %8064 = vrot.lane.b32.xlu0 %v16, 16
  %v8065 = vpop.permute.xlu0 %8064
  %8066 = vrot.lane.b32.xlu0 %v17, 16
  %v8067 = vpop.permute.xlu0 %8066
  %8068 = vrot.lane.b32.xlu0 %v18, 16
  %v8069 = vpop.permute.xlu0 %8068
  %8070 = vrot.lane.b32.xlu0 %v19, 16
  %v8071 = vpop.permute.xlu0 %8070
  %8072 = vrot.lane.b32.xlu0 %v20, 16
  %v8073 = vpop.permute.xlu0 %8072
  %8074 = vrot.lane.b32.xlu0 %v21, 16
  %v8075 = vpop.permute.xlu0 %8074
  %8076 = vrot.lane.b32.xlu0 %v22, 16
  %v8077 = vpop.permute.xlu0 %8076
  %8078 = vrot.lane.b32.xlu0 %v23, 16
  %v8079 = vpop.permute.xlu0 %8078
  %8080 = vrot.lane.b32.xlu0 %v24, 16
  %v8081 = vpop.permute.xlu0 %8080
  %8082 = vrot.lane.b32.xlu0 %v25, 16
  %v8083 = vpop.permute.xlu0 %8082
  %8084 = vrot.lane.b32.xlu0 %v26, 16
  %v8085 = vpop.permute.xlu0 %8084
  %8086 = vrot.lane.b32.xlu0 %v27, 16
  %v8087 = vpop.permute.xlu0 %8086
  %8088 = vrot.lane.b32.xlu0 %v28, 16
  %v8089 = vpop.permute.xlu0 %8088
  %8090 = vrot.lane.b32.xlu0 %v29, 16
  %v8091 = vpop.permute.xlu0 %8090
  %8092 = vrot.lane.b32.xlu0 %v30, 16
  %v8093 = vpop.permute.xlu0 %8092
  %8094 = vrot.lane.b32.xlu0 %v31, 16
  %v8095 = vpop.permute.xlu0 %8094
  %8096 = vrot.lane.b32.xlu0 %v32, 16
  %v8097 = vpop.permute.xlu0 %8096
  %8098 = vrot.lane.b32.xlu0 %v33, 16
  %v8099 = vpop.permute.xlu0 %8098
  %8100 = vrot.lane.b32.xlu0 %v34, 16
  %v8101 = vpop.permute.xlu0 %8100
  %8102 = vrot.lane.b32.xlu0 %v35, 16
  %v8103 = vpop.permute.xlu0 %8102
  %8104 = vrot.lane.b32.xlu0 %v36, 16
  %v8105 = vpop.permute.xlu0 %8104
  %8106 = vrot.lane.b32.xlu0 %v37, 16
  %v8107 = vpop.permute.xlu0 %8106
  %8108 = vrot.lane.b32.xlu0 %v38, 16
  %v8109 = vpop.permute.xlu0 %8108
  %8110 = vrot.lane.b32.xlu0 %v39, 16
  %v8111 = vpop.permute.xlu0 %8110
  %8112 = vrot.lane.b32.xlu0 %v40, 16
  %v8113 = vpop.permute.xlu0 %8112
  %8114 = vrot.lane.b32.xlu0 %v41, 16
  %v8115 = vpop.permute.xlu0 %8114
  %8116 = vrot.lane.b32.xlu0 %v42, 16
  %v8117 = vpop.permute.xlu0 %8116
  %vm8150 = vcmask 138368
  %8151 = vst.msk [vmem:[%s2] sm:$0xff] %vm8150, %v8055
  %8152 = vst.msk [vmem:[%s2 + $0x8] sm:$0xff] %vm8150, %v8057
  %8153 = vst.msk [vmem:[%s2 + $0x10] sm:$0xff] %vm8150, %v8059
  %8154 = vst.msk [vmem:[%s2 + $0x18] sm:$0xff] %vm8150, %v8061
  %8155 = vst.msk [vmem:[%s2 + $0x20] sm:$0xff] %vm8150, %v8063
  %8156 = vst.msk [vmem:[%s2 + $0x28] sm:$0xff] %vm8150, %v8065
  %8157 = vst.msk [vmem:[%s2 + $0x30] sm:$0xff] %vm8150, %v8067
  %8158 = vst.msk [vmem:[%s2 + $0x38] sm:$0xff] %vm8150, %v8069
  %8159 = vst.msk [vmem:[%s2 + $0x40] sm:$0xff] %vm8150, %v8071
  %8160 = vst.msk [vmem:[%s2 + $0x48] sm:$0xff] %vm8150, %v8073
  %8161 = vst.msk [vmem:[%s2 + $0x50] sm:$0xff] %vm8150, %v8075
  %8162 = vst.msk [vmem:[%s2 + $0x58] sm:$0xff] %vm8150, %v8077
  %8163 = vst.msk [vmem:[%s2 + $0x60] sm:$0xff] %vm8150, %v8079
  %8164 = vst.msk [vmem:[%s2 + $0x68] sm:$0xff] %vm8150, %v8081
  %8165 = vst.msk [vmem:[%s2 + $0x70] sm:$0xff] %vm8150, %v8083
  %8166 = vst.msk [vmem:[%s2 + $0x78] sm:$0xff] %vm8150, %v8085
  %8167 = vst.msk [vmem:[%s2 + $0x80] sm:$0xff] %vm8150, %v8087
  %8168 = vst.msk [vmem:[%s2 + $0x88] sm:$0xff] %vm8150, %v8089
  %8169 = vst.msk [vmem:[%s2 + $0x90] sm:$0xff] %vm8150, %v8091
  %8170 = vst.msk [vmem:[%s2 + $0x98] sm:$0xff] %vm8150, %v8093
  %8171 = vst.msk [vmem:[%s2 + $0xa0] sm:$0xff] %vm8150, %v8095
  %8172 = vst.msk [vmem:[%s2 + $0xa8] sm:$0xff] %vm8150, %v8097
  %8173 = vst.msk [vmem:[%s2 + $0xb0] sm:$0xff] %vm8150, %v8099
  %8174 = vst.msk [vmem:[%s2 + $0xb8] sm:$0xff] %vm8150, %v8101
  %8175 = vst.msk [vmem:[%s2 + $0xc0] sm:$0xff] %vm8150, %v8103
  %8176 = vst.msk [vmem:[%s2 + $0xc8] sm:$0xff] %vm8150, %v8105
  %8177 = vst.msk [vmem:[%s2 + $0xd0] sm:$0xff] %vm8150, %v8107
  %8178 = vst.msk [vmem:[%s2 + $0xd8] sm:$0xff] %vm8150, %v8109
  %8179 = vst.msk [vmem:[%s2 + $0xe0] sm:$0xff] %vm8150, %v8111
  %8180 = vst.msk [vmem:[%s2 + $0xe8] sm:$0xff] %vm8150, %v8113
  %8181 = vst.msk [vmem:[%s2 + $0xf0] sm:$0xff] %vm8150, %v8115
  %8182 = vst.msk [vmem:[%s2 + $0xf8] sm:$0xff] %vm8150, %v8117
  %8215 = vrot.lane.b32.xlu0 %v1340, 9
  %v8216 = vpop.permute.xlu0 %8215
  %8217 = vrot.lane.b32.xlu0 %v1444, 9
  %v8218 = vpop.permute.xlu0 %8217
  %8219 = vrot.lane.b32.xlu0 %v1548, 9
  %v8220 = vpop.permute.xlu0 %8219
  %8221 = vrot.lane.b32.xlu0 %v1652, 9
  %v8222 = vpop.permute.xlu0 %8221
  %8223 = vrot.lane.b32.xlu0 %v1756, 9
  %v8224 = vpop.permute.xlu0 %8223
  %8225 = vrot.lane.b32.xlu0 %v1860, 9
  %v8226 = vpop.permute.xlu0 %8225
  %8227 = vrot.lane.b32.xlu0 %v1964, 9
  %v8228 = vpop.permute.xlu0 %8227
  %8229 = vrot.lane.b32.xlu0 %v2068, 9
  %v8230 = vpop.permute.xlu0 %8229
  %8231 = vrot.lane.b32.xlu0 %v2172, 9
  %v8232 = vpop.permute.xlu0 %8231
  %8233 = vrot.lane.b32.xlu0 %v2276, 9
  %v8234 = vpop.permute.xlu0 %8233
  %8235 = vrot.lane.b32.xlu0 %v2380, 9
  %v8236 = vpop.permute.xlu0 %8235
  %8237 = vrot.lane.b32.xlu0 %v2484, 9
  %v8238 = vpop.permute.xlu0 %8237
  %8239 = vrot.lane.b32.xlu0 %v2588, 9
  %v8240 = vpop.permute.xlu0 %8239
  %8241 = vrot.lane.b32.xlu0 %v2692, 9
  %v8242 = vpop.permute.xlu0 %8241
  %8243 = vrot.lane.b32.xlu0 %v2796, 9
  %v8244 = vpop.permute.xlu0 %8243
  %8245 = vrot.lane.b32.xlu0 %v2900, 9
  %v8246 = vpop.permute.xlu0 %8245
  %8247 = vrot.lane.b32.xlu0 %v3004, 9
  %v8248 = vpop.permute.xlu0 %8247
  %8249 = vrot.lane.b32.xlu0 %v3108, 9
  %v8250 = vpop.permute.xlu0 %8249
  %8251 = vrot.lane.b32.xlu0 %v3212, 9
  %v8252 = vpop.permute.xlu0 %8251
  %8253 = vrot.lane.b32.xlu0 %v3316, 9
  %v8254 = vpop.permute.xlu0 %8253
  %8255 = vrot.lane.b32.xlu0 %v3420, 9
  %v8256 = vpop.permute.xlu0 %8255
  %8257 = vrot.lane.b32.xlu0 %v3524, 9
  %v8258 = vpop.permute.xlu0 %8257
  %8259 = vrot.lane.b32.xlu0 %v3628, 9
  %v8260 = vpop.permute.xlu0 %8259
  %8261 = vrot.lane.b32.xlu0 %v3732, 9
  %v8262 = vpop.permute.xlu0 %8261
  %8263 = vrot.lane.b32.xlu0 %v3836, 9
  %v8264 = vpop.permute.xlu0 %8263
  %8265 = vrot.lane.b32.xlu0 %v3940, 9
  %v8266 = vpop.permute.xlu0 %8265
  %8267 = vrot.lane.b32.xlu0 %v4044, 9
  %v8268 = vpop.permute.xlu0 %8267
  %8269 = vrot.lane.b32.xlu0 %v4148, 9
  %v8270 = vpop.permute.xlu0 %8269
  %8271 = vrot.lane.b32.xlu0 %v4252, 9
  %v8272 = vpop.permute.xlu0 %8271
  %8273 = vrot.lane.b32.xlu0 %v4356, 9
  %v8274 = vpop.permute.xlu0 %8273
  %8275 = vrot.lane.b32.xlu0 %v4460, 9
  %v8276 = vpop.permute.xlu0 %8275
  %8277 = vrot.lane.b32.xlu0 %v4564, 9
  %v8278 = vpop.permute.xlu0 %8277
  %vm8311 = vcmask 203912
  %8312 = vst.msk [vmem:[%s2] sm:$0xff] %vm8311, %v8216
  %8313 = vst.msk [vmem:[%s2 + $0x8] sm:$0xff] %vm8311, %v8218
  %8314 = vst.msk [vmem:[%s2 + $0x10] sm:$0xff] %vm8311, %v8220
  %8315 = vst.msk [vmem:[%s2 + $0x18] sm:$0xff] %vm8311, %v8222
  %8316 = vst.msk [vmem:[%s2 + $0x20] sm:$0xff] %vm8311, %v8224
  %8317 = vst.msk [vmem:[%s2 + $0x28] sm:$0xff] %vm8311, %v8226
  %8318 = vst.msk [vmem:[%s2 + $0x30] sm:$0xff] %vm8311, %v8228
  %8319 = vst.msk [vmem:[%s2 + $0x38] sm:$0xff] %vm8311, %v8230
  %8320 = vst.msk [vmem:[%s2 + $0x40] sm:$0xff] %vm8311, %v8232
  %8321 = vst.msk [vmem:[%s2 + $0x48] sm:$0xff] %vm8311, %v8234
  %8322 = vst.msk [vmem:[%s2 + $0x50] sm:$0xff] %vm8311, %v8236
  %8323 = vst.msk [vmem:[%s2 + $0x58] sm:$0xff] %vm8311, %v8238
  %8324 = vst.msk [vmem:[%s2 + $0x60] sm:$0xff] %vm8311, %v8240
  %8325 = vst.msk [vmem:[%s2 + $0x68] sm:$0xff] %vm8311, %v8242
  %8326 = vst.msk [vmem:[%s2 + $0x70] sm:$0xff] %vm8311, %v8244
  %8327 = vst.msk [vmem:[%s2 + $0x78] sm:$0xff] %vm8311, %v8246
  %8328 = vst.msk [vmem:[%s2 + $0x80] sm:$0xff] %vm8311, %v8248
  %8329 = vst.msk [vmem:[%s2 + $0x88] sm:$0xff] %vm8311, %v8250
  %8330 = vst.msk [vmem:[%s2 + $0x90] sm:$0xff] %vm8311, %v8252
  %8331 = vst.msk [vmem:[%s2 + $0x98] sm:$0xff] %vm8311, %v8254
  %8332 = vst.msk [vmem:[%s2 + $0xa0] sm:$0xff] %vm8311, %v8256
  %8333 = vst.msk [vmem:[%s2 + $0xa8] sm:$0xff] %vm8311, %v8258
  %8334 = vst.msk [vmem:[%s2 + $0xb0] sm:$0xff] %vm8311, %v8260
  %8335 = vst.msk [vmem:[%s2 + $0xb8] sm:$0xff] %vm8311, %v8262
  %8336 = vst.msk [vmem:[%s2 + $0xc0] sm:$0xff] %vm8311, %v8264
  %8337 = vst.msk [vmem:[%s2 + $0xc8] sm:$0xff] %vm8311, %v8266
  %8338 = vst.msk [vmem:[%s2 + $0xd0] sm:$0xff] %vm8311, %v8268
  %8339 = vst.msk [vmem:[%s2 + $0xd8] sm:$0xff] %vm8311, %v8270
  %8340 = vst.msk [vmem:[%s2 + $0xe0] sm:$0xff] %vm8311, %v8272
  %8341 = vst.msk [vmem:[%s2 + $0xe8] sm:$0xff] %vm8311, %v8274
  %8342 = vst.msk [vmem:[%s2 + $0xf0] sm:$0xff] %vm8311, %v8276
  %8343 = vst.msk [vmem:[%s2 + $0xf8] sm:$0xff] %vm8311, %v8278
  %8344 = vrot.lane.b32.xlu0 %v4667, 17
  %v8345 = vpop.permute.xlu0 %8344
  %8346 = vrot.lane.b32.xlu0 %v4770, 17
  %v8347 = vpop.permute.xlu0 %8346
  %8348 = vrot.lane.b32.xlu0 %v4873, 17
  %v8349 = vpop.permute.xlu0 %8348
  %8350 = vrot.lane.b32.xlu0 %v4976, 17
  %v8351 = vpop.permute.xlu0 %8350
  %8352 = vrot.lane.b32.xlu0 %v5079, 17
  %v8353 = vpop.permute.xlu0 %8352
  %8354 = vrot.lane.b32.xlu0 %v5182, 17
  %v8355 = vpop.permute.xlu0 %8354
  %8356 = vrot.lane.b32.xlu0 %v5285, 17
  %v8357 = vpop.permute.xlu0 %8356
  %8358 = vrot.lane.b32.xlu0 %v5388, 17
  %v8359 = vpop.permute.xlu0 %8358
  %8360 = vrot.lane.b32.xlu0 %v5491, 17
  %v8361 = vpop.permute.xlu0 %8360
  %8362 = vrot.lane.b32.xlu0 %v5594, 17
  %v8363 = vpop.permute.xlu0 %8362
  %8364 = vrot.lane.b32.xlu0 %v5697, 17
  %v8365 = vpop.permute.xlu0 %8364
  %8366 = vrot.lane.b32.xlu0 %v5800, 17
  %v8367 = vpop.permute.xlu0 %8366
  %8368 = vrot.lane.b32.xlu0 %v5903, 17
  %v8369 = vpop.permute.xlu0 %8368
  %8370 = vrot.lane.b32.xlu0 %v6006, 17
  %v8371 = vpop.permute.xlu0 %8370
  %8372 = vrot.lane.b32.xlu0 %v6109, 17
  %v8373 = vpop.permute.xlu0 %8372
  %8374 = vrot.lane.b32.xlu0 %v6212, 17
  %v8375 = vpop.permute.xlu0 %8374
  %8376 = vrot.lane.b32.xlu0 %v6315, 17
  %v8377 = vpop.permute.xlu0 %8376
  %8378 = vrot.lane.b32.xlu0 %v6418, 17
  %v8379 = vpop.permute.xlu0 %8378
  %8380 = vrot.lane.b32.xlu0 %v6521, 17
  %v8381 = vpop.permute.xlu0 %8380
  %8382 = vrot.lane.b32.xlu0 %v6624, 17
  %v8383 = vpop.permute.xlu0 %8382
  %8384 = vrot.lane.b32.xlu0 %v6727, 17
  %v8385 = vpop.permute.xlu0 %8384
  %8386 = vrot.lane.b32.xlu0 %v6830, 17
  %v8387 = vpop.permute.xlu0 %8386
  %8388 = vrot.lane.b32.xlu0 %v6933, 17
  %v8389 = vpop.permute.xlu0 %8388
  %8390 = vrot.lane.b32.xlu0 %v7036, 17
  %v8391 = vpop.permute.xlu0 %8390
  %8392 = vrot.lane.b32.xlu0 %v7139, 17
  %v8393 = vpop.permute.xlu0 %8392
  %8394 = vrot.lane.b32.xlu0 %v7242, 17
  %v8395 = vpop.permute.xlu0 %8394
  %8396 = vrot.lane.b32.xlu0 %v7345, 17
  %v8397 = vpop.permute.xlu0 %8396
  %8398 = vrot.lane.b32.xlu0 %v7448, 17
  %v8399 = vpop.permute.xlu0 %8398
  %8400 = vrot.lane.b32.xlu0 %v7551, 17
  %v8401 = vpop.permute.xlu0 %8400
  %8402 = vrot.lane.b32.xlu0 %v7654, 17
  %v8403 = vpop.permute.xlu0 %8402
  %8404 = vrot.lane.b32.xlu0 %v7757, 17
  %v8405 = vpop.permute.xlu0 %8404
  %8406 = vrot.lane.b32.xlu0 %v7860, 17
  %v8407 = vpop.permute.xlu0 %8406
  %vm8440 = vcmask 269512
  %8441 = vst.msk [vmem:[%s2] sm:$0xff] %vm8440, %v8345
  %8442 = vst.msk [vmem:[%s2 + $0x8] sm:$0xff] %vm8440, %v8347
  %8443 = vst.msk [vmem:[%s2 + $0x10] sm:$0xff] %vm8440, %v8349
  %8444 = vst.msk [vmem:[%s2 + $0x18] sm:$0xff] %vm8440, %v8351
  %8445 = vst.msk [vmem:[%s2 + $0x20] sm:$0xff] %vm8440, %v8353
  %8446 = vst.msk [vmem:[%s2 + $0x28] sm:$0xff] %vm8440, %v8355
  %8447 = vst.msk [vmem:[%s2 + $0x30] sm:$0xff] %vm8440, %v8357
  %8448 = vst.msk [vmem:[%s2 + $0x38] sm:$0xff] %vm8440, %v8359
  %8449 = vst.msk [vmem:[%s2 + $0x40] sm:$0xff] %vm8440, %v8361
  %8450 = vst.msk [vmem:[%s2 + $0x48] sm:$0xff] %vm8440, %v8363
  %8451 = vst.msk [vmem:[%s2 + $0x50] sm:$0xff] %vm8440, %v8365
  %8452 = vst.msk [vmem:[%s2 + $0x58] sm:$0xff] %vm8440, %v8367
  %8453 = vst.msk [vmem:[%s2 + $0x60] sm:$0xff] %vm8440, %v8369
  %8454 = vst.msk [vmem:[%s2 + $0x68] sm:$0xff] %vm8440, %v8371
  %8455 = vst.msk [vmem:[%s2 + $0x70] sm:$0xff] %vm8440, %v8373
  %8456 = vst.msk [vmem:[%s2 + $0x78] sm:$0xff] %vm8440, %v8375
  %8457 = vst.msk [vmem:[%s2 + $0x80] sm:$0xff] %vm8440, %v8377
  %8458 = vst.msk [vmem:[%s2 + $0x88] sm:$0xff] %vm8440, %v8379
  %8459 = vst.msk [vmem:[%s2 + $0x90] sm:$0xff] %vm8440, %v8381
  %8460 = vst.msk [vmem:[%s2 + $0x98] sm:$0xff] %vm8440, %v8383
  %8461 = vst.msk [vmem:[%s2 + $0xa0] sm:$0xff] %vm8440, %v8385
  %8462 = vst.msk [vmem:[%s2 + $0xa8] sm:$0xff] %vm8440, %v8387
  %8463 = vst.msk [vmem:[%s2 + $0xb0] sm:$0xff] %vm8440, %v8389
  %8464 = vst.msk [vmem:[%s2 + $0xb8] sm:$0xff] %vm8440, %v8391
  %8465 = vst.msk [vmem:[%s2 + $0xc0] sm:$0xff] %vm8440, %v8393
  %8466 = vst.msk [vmem:[%s2 + $0xc8] sm:$0xff] %vm8440, %v8395
  %8467 = vst.msk [vmem:[%s2 + $0xd0] sm:$0xff] %vm8440, %v8397
  %8468 = vst.msk [vmem:[%s2 + $0xd8] sm:$0xff] %vm8440, %v8399
  %8469 = vst.msk [vmem:[%s2 + $0xe0] sm:$0xff] %vm8440, %v8401
  %8470 = vst.msk [vmem:[%s2 + $0xe8] sm:$0xff] %vm8440, %v8403
  %8471 = vst.msk [vmem:[%s2 + $0xf0] sm:$0xff] %vm8440, %v8405
  %8472 = vst.msk [vmem:[%s2 + $0xf8] sm:$0xff] %vm8440, %v8407
  %8473 = vrot.lane.b32.xlu0 %v11, 32
  %v8474 = vpop.permute.xlu0 %8473
  %8475 = vrot.lane.b32.xlu0 %v12, 32
  %v8476 = vpop.permute.xlu0 %8475
  %8477 = vrot.lane.b32.xlu0 %v13, 32
  %v8478 = vpop.permute.xlu0 %8477
  %8479 = vrot.lane.b32.xlu0 %v14, 32
  %v8480 = vpop.permute.xlu0 %8479
  %8481 = vrot.lane.b32.xlu0 %v15, 32
  %v8482 = vpop.permute.xlu0 %8481
  %8483 = vrot.lane.b32.xlu0 %v16, 32
  %v8484 = vpop.permute.xlu0 %8483
  %8485 = vrot.lane.b32.xlu0 %v17, 32
  %v8486 = vpop.permute.xlu0 %8485
  %8487 = vrot.lane.b32.xlu0 %v18, 32
  %v8488 = vpop.permute.xlu0 %8487
  %8489 = vrot.lane.b32.xlu0 %v19, 32
  %v8490 = vpop.permute.xlu0 %8489
  %8491 = vrot.lane.b32.xlu0 %v20, 32
  %v8492 = vpop.permute.xlu0 %8491
  %8493 = vrot.lane.b32.xlu0 %v21, 32
  %v8494 = vpop.permute.xlu0 %8493
  %8495 = vrot.lane.b32.xlu0 %v22, 32
  %v8496 = vpop.permute.xlu0 %8495
  %8497 = vrot.lane.b32.xlu0 %v23, 32
  %v8498 = vpop.permute.xlu0 %8497
  %8499 = vrot.lane.b32.xlu0 %v24, 32
  %v8500 = vpop.permute.xlu0 %8499
  %8501 = vrot.lane.b32.xlu0 %v25, 32
  %v8502 = vpop.permute.xlu0 %8501
  %8503 = vrot.lane.b32.xlu0 %v26, 32
  %v8504 = vpop.permute.xlu0 %8503
  %8505 = vrot.lane.b32.xlu0 %v27, 32
  %v8506 = vpop.permute.xlu0 %8505
  %8507 = vrot.lane.b32.xlu0 %v28, 32
  %v8508 = vpop.permute.xlu0 %8507
  %8509 = vrot.lane.b32.xlu0 %v29, 32
  %v8510 = vpop.permute.xlu0 %8509
  %8511 = vrot.lane.b32.xlu0 %v30, 32
  %v8512 = vpop.permute.xlu0 %8511
  %8513 = vrot.lane.b32.xlu0 %v31, 32
  %v8514 = vpop.permute.xlu0 %8513
  %8515 = vrot.lane.b32.xlu0 %v32, 32
  %v8516 = vpop.permute.xlu0 %8515
  %8517 = vrot.lane.b32.xlu0 %v33, 32
  %v8518 = vpop.permute.xlu0 %8517
  %8519 = vrot.lane.b32.xlu0 %v34, 32
  %v8520 = vpop.permute.xlu0 %8519
  %8521 = vrot.lane.b32.xlu0 %v35, 32
  %v8522 = vpop.permute.xlu0 %8521
  %8523 = vrot.lane.b32.xlu0 %v36, 32
  %v8524 = vpop.permute.xlu0 %8523
  %8525 = vrot.lane.b32.xlu0 %v37, 32
  %v8526 = vpop.permute.xlu0 %8525
  %8527 = vrot.lane.b32.xlu0 %v38, 32
  %v8528 = vpop.permute.xlu0 %8527
  %8529 = vrot.lane.b32.xlu0 %v39, 32
  %v8530 = vpop.permute.xlu0 %8529
  %8531 = vrot.lane.b32.xlu0 %v40, 32
  %v8532 = vpop.permute.xlu0 %8531
  %8533 = vrot.lane.b32.xlu0 %v41, 32
  %v8534 = vpop.permute.xlu0 %8533
  %8535 = vrot.lane.b32.xlu0 %v42, 32
  %v8536 = vpop.permute.xlu0 %8535
  %vm8569 = vcmask 277768
  %8570 = vst.msk [vmem:[%s2] sm:$0xff] %vm8569, %v8474
  %8571 = vst.msk [vmem:[%s2 + $0x8] sm:$0xff] %vm8569, %v8476
  %8572 = vst.msk [vmem:[%s2 + $0x10] sm:$0xff] %vm8569, %v8478
  %8573 = vst.msk [vmem:[%s2 + $0x18] sm:$0xff] %vm8569, %v8480
  %8574 = vst.msk [vmem:[%s2 + $0x20] sm:$0xff] %vm8569, %v8482
  %8575 = vst.msk [vmem:[%s2 + $0x28] sm:$0xff] %vm8569, %v8484
  %8576 = vst.msk [vmem:[%s2 + $0x30] sm:$0xff] %vm8569, %v8486
  %8577 = vst.msk [vmem:[%s2 + $0x38] sm:$0xff] %vm8569, %v8488
  %8578 = vst.msk [vmem:[%s2 + $0x40] sm:$0xff] %vm8569, %v8490
  %8579 = vst.msk [vmem:[%s2 + $0x48] sm:$0xff] %vm8569, %v8492
  %8580 = vst.msk [vmem:[%s2 + $0x50] sm:$0xff] %vm8569, %v8494
  %8581 = vst.msk [vmem:[%s2 + $0x58] sm:$0xff] %vm8569, %v8496
  %8582 = vst.msk [vmem:[%s2 + $0x60] sm:$0xff] %vm8569, %v8498
  %8583 = vst.msk [vmem:[%s2 + $0x68] sm:$0xff] %vm8569, %v8500
  %8584 = vst.msk [vmem:[%s2 + $0x70] sm:$0xff] %vm8569, %v8502
  %8585 = vst.msk [vmem:[%s2 + $0x78] sm:$0xff] %vm8569, %v8504
  %8586 = vst.msk [vmem:[%s2 + $0x80] sm:$0xff] %vm8569, %v8506
  %8587 = vst.msk [vmem:[%s2 + $0x88] sm:$0xff] %vm8569, %v8508
  %8588 = vst.msk [vmem:[%s2 + $0x90] sm:$0xff] %vm8569, %v8510
  %8589 = vst.msk [vmem:[%s2 + $0x98] sm:$0xff] %vm8569, %v8512
  %8590 = vst.msk [vmem:[%s2 + $0xa0] sm:$0xff] %vm8569, %v8514
  %8591 = vst.msk [vmem:[%s2 + $0xa8] sm:$0xff] %vm8569, %v8516
  %8592 = vst.msk [vmem:[%s2 + $0xb0] sm:$0xff] %vm8569, %v8518
  %8593 = vst.msk [vmem:[%s2 + $0xb8] sm:$0xff] %vm8569, %v8520
  %8594 = vst.msk [vmem:[%s2 + $0xc0] sm:$0xff] %vm8569, %v8522
  %8595 = vst.msk [vmem:[%s2 + $0xc8] sm:$0xff] %vm8569, %v8524
  %8596 = vst.msk [vmem:[%s2 + $0xd0] sm:$0xff] %vm8569, %v8526
  %8597 = vst.msk [vmem:[%s2 + $0xd8] sm:$0xff] %vm8569, %v8528
  %8598 = vst.msk [vmem:[%s2 + $0xe0] sm:$0xff] %vm8569, %v8530
  %8599 = vst.msk [vmem:[%s2 + $0xe8] sm:$0xff] %vm8569, %v8532
  %8600 = vst.msk [vmem:[%s2 + $0xf0] sm:$0xff] %vm8569, %v8534
  %8601 = vst.msk [vmem:[%s2 + $0xf8] sm:$0xff] %vm8569, %v8536
  %8602 = vrot.lane.b32.xlu0 %v1340, 18
  %v8603 = vpop.permute.xlu0 %8602
  %8604 = vrot.lane.b32.xlu0 %v1444, 18
  %v8605 = vpop.permute.xlu0 %8604
  %8606 = vrot.lane.b32.xlu0 %v1548, 18
  %v8607 = vpop.permute.xlu0 %8606
  %8608 = vrot.lane.b32.xlu0 %v1652, 18
  %v8609 = vpop.permute.xlu0 %8608
  %8610 = vrot.lane.b32.xlu0 %v1756, 18
  %v8611 = vpop.permute.xlu0 %8610
  %8612 = vrot.lane.b32.xlu0 %v1860, 18
  %v8613 = vpop.permute.xlu0 %8612
  %8614 = vrot.lane.b32.xlu0 %v1964, 18
  %v8615 = vpop.permute.xlu0 %8614
  %8616 = vrot.lane.b32.xlu0 %v2068, 18
  %v8617 = vpop.permute.xlu0 %8616
  %8618 = vrot.lane.b32.xlu0 %v2172, 18
  %v8619 = vpop.permute.xlu0 %8618
  %8620 = vrot.lane.b32.xlu0 %v2276, 18
  %v8621 = vpop.permute.xlu0 %8620
  %8622 = vrot.lane.b32.xlu0 %v2380, 18
  %v8623 = vpop.permute.xlu0 %8622
  %8624 = vrot.lane.b32.xlu0 %v2484, 18
  %v8625 = vpop.permute.xlu0 %8624
  %8626 = vrot.lane.b32.xlu0 %v2588, 18
  %v8627 = vpop.permute.xlu0 %8626
  %8628 = vrot.lane.b32.xlu0 %v2692, 18
  %v8629 = vpop.permute.xlu0 %8628
  %8630 = vrot.lane.b32.xlu0 %v2796, 18
  %v8631 = vpop.permute.xlu0 %8630
  %8632 = vrot.lane.b32.xlu0 %v2900, 18
  %v8633 = vpop.permute.xlu0 %8632
  %8634 = vrot.lane.b32.xlu0 %v3004, 18
  %v8635 = vpop.permute.xlu0 %8634
  %8636 = vrot.lane.b32.xlu0 %v3108, 18
  %v8637 = vpop.permute.xlu0 %8636
  %8638 = vrot.lane.b32.xlu0 %v3212, 18
  %v8639 = vpop.permute.xlu0 %8638
  %8640 = vrot.lane.b32.xlu0 %v3316, 18
  %v8641 = vpop.permute.xlu0 %8640
  %8642 = vrot.lane.b32.xlu0 %v3420, 18
  %v8643 = vpop.permute.xlu0 %8642
  %8644 = vrot.lane.b32.xlu0 %v3524, 18
  %v8645 = vpop.permute.xlu0 %8644
  %8646 = vrot.lane.b32.xlu0 %v3628, 18
  %v8647 = vpop.permute.xlu0 %8646
  %8648 = vrot.lane.b32.xlu0 %v3732, 18
  %v8649 = vpop.permute.xlu0 %8648
  %8650 = vrot.lane.b32.xlu0 %v3836, 18
  %v8651 = vpop.permute.xlu0 %8650
  %8652 = vrot.lane.b32.xlu0 %v3940, 18
  %v8653 = vpop.permute.xlu0 %8652
  %8654 = vrot.lane.b32.xlu0 %v4044, 18
  %v8655 = vpop.permute.xlu0 %8654
  %8656 = vrot.lane.b32.xlu0 %v4148, 18
  %v8657 = vpop.permute.xlu0 %8656
  %8658 = vrot.lane.b32.xlu0 %v4252, 18
  %v8659 = vpop.permute.xlu0 %8658
  %8660 = vrot.lane.b32.xlu0 %v4356, 18
  %v8661 = vpop.permute.xlu0 %8660
  %8662 = vrot.lane.b32.xlu0 %v4460, 18
  %v8663 = vpop.permute.xlu0 %8662
  %8664 = vrot.lane.b32.xlu0 %v4564, 18
  %v8665 = vpop.permute.xlu0 %8664
  %vm8698 = vcmask 343312
  %8699 = vst.msk [vmem:[%s2] sm:$0xff] %vm8698, %v8603
  %8700 = vst.msk [vmem:[%s2 + $0x8] sm:$0xff] %vm8698, %v8605
  %8701 = vst.msk [vmem:[%s2 + $0x10] sm:$0xff] %vm8698, %v8607
  %8702 = vst.msk [vmem:[%s2 + $0x18] sm:$0xff] %vm8698, %v8609
  %8703 = vst.msk [vmem:[%s2 + $0x20] sm:$0xff] %vm8698, %v8611
  %8704 = vst.msk [vmem:[%s2 + $0x28] sm:$0xff] %vm8698, %v8613
  %8705 = vst.msk [vmem:[%s2 + $0x30] sm:$0xff] %vm8698, %v8615
  %8706 = vst.msk [vmem:[%s2 + $0x38] sm:$0xff] %vm8698, %v8617
  %8707 = vst.msk [vmem:[%s2 + $0x40] sm:$0xff] %vm8698, %v8619
  %8708 = vst.msk [vmem:[%s2 + $0x48] sm:$0xff] %vm8698, %v8621
  %8709 = vst.msk [vmem:[%s2 + $0x50] sm:$0xff] %vm8698, %v8623
  %8710 = vst.msk [vmem:[%s2 + $0x58] sm:$0xff] %vm8698, %v8625
  %8711 = vst.msk [vmem:[%s2 + $0x60] sm:$0xff] %vm8698, %v8627
  %8712 = vst.msk [vmem:[%s2 + $0x68] sm:$0xff] %vm8698, %v8629
  %8713 = vst.msk [vmem:[%s2 + $0x70] sm:$0xff] %vm8698, %v8631
  %8714 = vst.msk [vmem:[%s2 + $0x78] sm:$0xff] %vm8698, %v8633
  %8715 = vst.msk [vmem:[%s2 + $0x80] sm:$0xff] %vm8698, %v8635
  %8716 = vst.msk [vmem:[%s2 + $0x88] sm:$0xff] %vm8698, %v8637
  %8717 = vst.msk [vmem:[%s2 + $0x90] sm:$0xff] %vm8698, %v8639
  %8718 = vst.msk [vmem:[%s2 + $0x98] sm:$0xff] %vm8698, %v8641
  %8719 = vst.msk [vmem:[%s2 + $0xa0] sm:$0xff] %vm8698, %v8643
  %8720 = vst.msk [vmem:[%s2 + $0xa8] sm:$0xff] %vm8698, %v8645
  %8721 = vst.msk [vmem:[%s2 + $0xb0] sm:$0xff] %vm8698, %v8647
  %8722 = vst.msk [vmem:[%s2 + $0xb8] sm:$0xff] %vm8698, %v8649
  %8723 = vst.msk [vmem:[%s2 + $0xc0] sm:$0xff] %vm8698, %v8651
  %8724 = vst.msk [vmem:[%s2 + $0xc8] sm:$0xff] %vm8698, %v8653
  %8725 = vst.msk [vmem:[%s2 + $0xd0] sm:$0xff] %vm8698, %v8655
  %8726 = vst.msk [vmem:[%s2 + $0xd8] sm:$0xff] %vm8698, %v8657
  %8727 = vst.msk [vmem:[%s2 + $0xe0] sm:$0xff] %vm8698, %v8659
  %8728 = vst.msk [vmem:[%s2 + $0xe8] sm:$0xff] %vm8698, %v8661
  %8729 = vst.msk [vmem:[%s2 + $0xf0] sm:$0xff] %vm8698, %v8663
  %8730 = vst.msk [vmem:[%s2 + $0xf8] sm:$0xff] %vm8698, %v8665
  %8731 = vrot.lane.b32.xlu0 %v4667, 26
  %v8732 = vpop.permute.xlu0 %8731
  %8733 = vrot.lane.b32.xlu0 %v4770, 26
  %v8734 = vpop.permute.xlu0 %8733
  %8735 = vrot.lane.b32.xlu0 %v4873, 26
  %v8736 = vpop.permute.xlu0 %8735
  %8737 = vrot.lane.b32.xlu0 %v4976, 26
  %v8738 = vpop.permute.xlu0 %8737
  %8739 = vrot.lane.b32.xlu0 %v5079, 26
  %v8740 = vpop.permute.xlu0 %8739
  %8741 = vrot.lane.b32.xlu0 %v5182, 26
  %v8742 = vpop.permute.xlu0 %8741
  %8743 = vrot.lane.b32.xlu0 %v5285, 26
  %v8744 = vpop.permute.xlu0 %8743
  %8745 = vrot.lane.b32.xlu0 %v5388, 26
  %v8746 = vpop.permute.xlu0 %8745
  %8747 = vrot.lane.b32.xlu0 %v5491, 26
  %v8748 = vpop.permute.xlu0 %8747
  %8749 = vrot.lane.b32.xlu0 %v5594, 26
  %v8750 = vpop.permute.xlu0 %8749
  %8751 = vrot.lane.b32.xlu0 %v5697, 26
  %v8752 = vpop.permute.xlu0 %8751
  %8753 = vrot.lane.b32.xlu0 %v5800, 26
  %v8754 = vpop.permute.xlu0 %8753
  %8755 = vrot.lane.b32.xlu0 %v5903, 26
  %v8756 = vpop.permute.xlu0 %8755
  %8757 = vrot.lane.b32.xlu0 %v6006, 26
  %v8758 = vpop.permute.xlu0 %8757
  %8759 = vrot.lane.b32.xlu0 %v6109, 26
  %v8760 = vpop.permute.xlu0 %8759
  %8761 = vrot.lane.b32.xlu0 %v6212, 26
  %v8762 = vpop.permute.xlu0 %8761
  %8763 = vrot.lane.b32.xlu0 %v6315, 26
  %v8764 = vpop.permute.xlu0 %8763
  %8765 = vrot.lane.b32.xlu0 %v6418, 26
  %v8766 = vpop.permute.xlu0 %8765
  %8767 = vrot.lane.b32.xlu0 %v6521, 26
  %v8768 = vpop.permute.xlu0 %8767
  %8769 = vrot.lane.b32.xlu0 %v6624, 26
  %v8770 = vpop.permute.xlu0 %8769
  %8771 = vrot.lane.b32.xlu0 %v6727, 26
  %v8772 = vpop.permute.xlu0 %8771
  %8773 = vrot.lane.b32.xlu0 %v6830, 26
  %v8774 = vpop.permute.xlu0 %8773
  %8775 = vrot.lane.b32.xlu0 %v6933, 26
  %v8776 = vpop.permute.xlu0 %8775
  %8777 = vrot.lane.b32.xlu0 %v7036, 26
  %v8778 = vpop.permute.xlu0 %8777
  %8779 = vrot.lane.b32.xlu0 %v7139, 26
  %v8780 = vpop.permute.xlu0 %8779
  %8781 = vrot.lane.b32.xlu0 %v7242, 26
  %v8782 = vpop.permute.xlu0 %8781
  %8783 = vrot.lane.b32.xlu0 %v7345, 26
  %v8784 = vpop.permute.xlu0 %8783
  %8785 = vrot.lane.b32.xlu0 %v7448, 26
  %v8786 = vpop.permute.xlu0 %8785
  %8787 = vrot.lane.b32.xlu0 %v7551, 26
  %v8788 = vpop.permute.xlu0 %8787
  %8789 = vrot.lane.b32.xlu0 %v7654, 26
  %v8790 = vpop.permute.xlu0 %8789
  %8791 = vrot.lane.b32.xlu0 %v7757, 26
  %v8792 = vpop.permute.xlu0 %8791
  %8793 = vrot.lane.b32.xlu0 %v7860, 26
  %v8794 = vpop.permute.xlu0 %8793
  %vm8827 = vcmask 408912
  %8828 = vst.msk [vmem:[%s2] sm:$0xff] %vm8827, %v8732
  %8829 = vst.msk [vmem:[%s2 + $0x8] sm:$0xff] %vm8827, %v8734
  %8830 = vst.msk [vmem:[%s2 + $0x10] sm:$0xff] %vm8827, %v8736
  %8831 = vst.msk [vmem:[%s2 + $0x18] sm:$0xff] %vm8827, %v8738
  %8832 = vst.msk [vmem:[%s2 + $0x20] sm:$0xff] %vm8827, %v8740
  %8833 = vst.msk [vmem:[%s2 + $0x28] sm:$0xff] %vm8827, %v8742
  %8834 = vst.msk [vmem:[%s2 + $0x30] sm:$0xff] %vm8827, %v8744
  %8835 = vst.msk [vmem:[%s2 + $0x38] sm:$0xff] %vm8827, %v8746
  %8836 = vst.msk [vmem:[%s2 + $0x40] sm:$0xff] %vm8827, %v8748
  %8837 = vst.msk [vmem:[%s2 + $0x48] sm:$0xff] %vm8827, %v8750
  %8838 = vst.msk [vmem:[%s2 + $0x50] sm:$0xff] %vm8827, %v8752
  %8839 = vst.msk [vmem:[%s2 + $0x58] sm:$0xff] %vm8827, %v8754
  %8840 = vst.msk [vmem:[%s2 + $0x60] sm:$0xff] %vm8827, %v8756
  %8841 = vst.msk [vmem:[%s2 + $0x68] sm:$0xff] %vm8827, %v8758
  %8842 = vst.msk [vmem:[%s2 + $0x70] sm:$0xff] %vm8827, %v8760
  %8843 = vst.msk [vmem:[%s2 + $0x78] sm:$0xff] %vm8827, %v8762
  %8844 = vst.msk [vmem:[%s2 + $0x80] sm:$0xff] %vm8827, %v8764
  %8845 = vst.msk [vmem:[%s2 + $0x88] sm:$0xff] %vm8827, %v8766
  %8846 = vst.msk [vmem:[%s2 + $0x90] sm:$0xff] %vm8827, %v8768
  %8847 = vst.msk [vmem:[%s2 + $0x98] sm:$0xff] %vm8827, %v8770
  %8848 = vst.msk [vmem:[%s2 + $0xa0] sm:$0xff] %vm8827, %v8772
  %8849 = vst.msk [vmem:[%s2 + $0xa8] sm:$0xff] %vm8827, %v8774
  %8850 = vst.msk [vmem:[%s2 + $0xb0] sm:$0xff] %vm8827, %v8776
  %8851 = vst.msk [vmem:[%s2 + $0xb8] sm:$0xff] %vm8827, %v8778
  %8852 = vst.msk [vmem:[%s2 + $0xc0] sm:$0xff] %vm8827, %v8780
  %8853 = vst.msk [vmem:[%s2 + $0xc8] sm:$0xff] %vm8827, %v8782
  %8854 = vst.msk [vmem:[%s2 + $0xd0] sm:$0xff] %vm8827, %v8784
  %8855 = vst.msk [vmem:[%s2 + $0xd8] sm:$0xff] %vm8827, %v8786
  %8856 = vst.msk [vmem:[%s2 + $0xe0] sm:$0xff] %vm8827, %v8788
  %8857 = vst.msk [vmem:[%s2 + $0xe8] sm:$0xff] %vm8827, %v8790
  %8858 = vst.msk [vmem:[%s2 + $0xf0] sm:$0xff] %vm8827, %v8792
  %8859 = vst.msk [vmem:[%s2 + $0xf8] sm:$0xff] %vm8827, %v8794
  %8860 = vrot.lane.b32.xlu0 %v11, 48
  %v8861 = vpop.permute.xlu0 %8860
  %8862 = vrot.lane.b32.xlu0 %v12, 48
  %v8863 = vpop.permute.xlu0 %8862
  %8864 = vrot.lane.b32.xlu0 %v13, 48
  %v8865 = vpop.permute.xlu0 %8864
  %8866 = vrot.lane.b32.xlu0 %v14, 48
  %v8867 = vpop.permute.xlu0 %8866
  %8868 = vrot.lane.b32.xlu0 %v15, 48
  %v8869 = vpop.permute.xlu0 %8868
  %8870 = vrot.lane.b32.xlu0 %v16, 48
  %v8871 = vpop.permute.xlu0 %8870
  %8872 = vrot.lane.b32.xlu0 %v17, 48
  %v8873 = vpop.permute.xlu0 %8872
  %8874 = vrot.lane.b32.xlu0 %v18, 48
  %v8875 = vpop.permute.xlu0 %8874
  %8876 = vrot.lane.b32.xlu0 %v19, 48
  %v8877 = vpop.permute.xlu0 %8876
  %8878 = vrot.lane.b32.xlu0 %v20, 48
  %v8879 = vpop.permute.xlu0 %8878
  %8880 = vrot.lane.b32.xlu0 %v21, 48
  %v8881 = vpop.permute.xlu0 %8880
  %8882 = vrot.lane.b32.xlu0 %v22, 48
  %v8883 = vpop.permute.xlu0 %8882
  %8884 = vrot.lane.b32.xlu0 %v23, 48
  %v8885 = vpop.permute.xlu0 %8884
  %8886 = vrot.lane.b32.xlu0 %v24, 48
  %v8887 = vpop.permute.xlu0 %8886
  %8888 = vrot.lane.b32.xlu0 %v25, 48
  %v8889 = vpop.permute.xlu0 %8888
  %8890 = vrot.lane.b32.xlu0 %v26, 48
  %v8891 = vpop.permute.xlu0 %8890
  %8892 = vrot.lane.b32.xlu0 %v27, 48
  %v8893 = vpop.permute.xlu0 %8892
  %8894 = vrot.lane.b32.xlu0 %v28, 48
  %v8895 = vpop.permute.xlu0 %8894
  %8896 = vrot.lane.b32.xlu0 %v29, 48
  %v8897 = vpop.permute.xlu0 %8896
  %8898 = vrot.lane.b32.xlu0 %v30, 48
  %v8899 = vpop.permute.xlu0 %8898
  %8900 = vrot.lane.b32.xlu0 %v31, 48
  %v8901 = vpop.permute.xlu0 %8900
  %8902 = vrot.lane.b32.xlu0 %v32, 48
  %v8903 = vpop.permute.xlu0 %8902
  %8904 = vrot.lane.b32.xlu0 %v33, 48
  %v8905 = vpop.permute.xlu0 %8904
  %8906 = vrot.lane.b32.xlu0 %v34, 48
  %v8907 = vpop.permute.xlu0 %8906
  %8908 = vrot.lane.b32.xlu0 %v35, 48
  %v8909 = vpop.permute.xlu0 %8908
  %8910 = vrot.lane.b32.xlu0 %v36, 48
  %v8911 = vpop.permute.xlu0 %8910
  %8912 = vrot.lane.b32.xlu0 %v37, 48
  %v8913 = vpop.permute.xlu0 %8912
  %8914 = vrot.lane.b32.xlu0 %v38, 48
  %v8915 = vpop.permute.xlu0 %8914
  %8916 = vrot.lane.b32.xlu0 %v39, 48
  %v8917 = vpop.permute.xlu0 %8916
  %8918 = vrot.lane.b32.xlu0 %v40, 48
  %v8919 = vpop.permute.xlu0 %8918
  %8920 = vrot.lane.b32.xlu0 %v41, 48
  %v8921 = vpop.permute.xlu0 %8920
  %8922 = vrot.lane.b32.xlu0 %v42, 48
  %v8923 = vpop.permute.xlu0 %8922
  %vm8956 = vcmask 417168
  %8957 = vst.msk [vmem:[%s2] sm:$0xff] %vm8956, %v8861
  %8958 = vst.msk [vmem:[%s2 + $0x8] sm:$0xff] %vm8956, %v8863
  %8959 = vst.msk [vmem:[%s2 + $0x10] sm:$0xff] %vm8956, %v8865
  %8960 = vst.msk [vmem:[%s2 + $0x18] sm:$0xff] %vm8956, %v8867
  %8961 = vst.msk [vmem:[%s2 + $0x20] sm:$0xff] %vm8956, %v8869
  %8962 = vst.msk [vmem:[%s2 + $0x28] sm:$0xff] %vm8956, %v8871
  %8963 = vst.msk [vmem:[%s2 + $0x30] sm:$0xff] %vm8956, %v8873
  %8964 = vst.msk [vmem:[%s2 + $0x38] sm:$0xff] %vm8956, %v8875
  %8965 = vst.msk [vmem:[%s2 + $0x40] sm:$0xff] %vm8956, %v8877
  %8966 = vst.msk [vmem:[%s2 + $0x48] sm:$0xff] %vm8956, %v8879
  %8967 = vst.msk [vmem:[%s2 + $0x50] sm:$0xff] %vm8956, %v8881
  %8968 = vst.msk [vmem:[%s2 + $0x58] sm:$0xff] %vm8956, %v8883
  %8969 = vst.msk [vmem:[%s2 + $0x60] sm:$0xff] %vm8956, %v8885
  %8970 = vst.msk [vmem:[%s2 + $0x68] sm:$0xff] %vm8956, %v8887
  %8971 = vst.msk [vmem:[%s2 + $0x70] sm:$0xff] %vm8956, %v8889
  %8972 = vst.msk [vmem:[%s2 + $0x78] sm:$0xff] %vm8956, %v8891
  %8973 = vst.msk [vmem:[%s2 + $0x80] sm:$0xff] %vm8956, %v8893
  %8974 = vst.msk [vmem:[%s2 + $0x88] sm:$0xff] %vm8956, %v8895
  %8975 = vst.msk [vmem:[%s2 + $0x90] sm:$0xff] %vm8956, %v8897
  %8976 = vst.msk [vmem:[%s2 + $0x98] sm:$0xff] %vm8956, %v8899
  %8977 = vst.msk [vmem:[%s2 + $0xa0] sm:$0xff] %vm8956, %v8901
  %8978 = vst.msk [vmem:[%s2 + $0xa8] sm:$0xff] %vm8956, %v8903
  %8979 = vst.msk [vmem:[%s2 + $0xb0] sm:$0xff] %vm8956, %v8905
  %8980 = vst.msk [vmem:[%s2 + $0xb8] sm:$0xff] %vm8956, %v8907
  %8981 = vst.msk [vmem:[%s2 + $0xc0] sm:$0xff] %vm8956, %v8909
  %8982 = vst.msk [vmem:[%s2 + $0xc8] sm:$0xff] %vm8956, %v8911
  %8983 = vst.msk [vmem:[%s2 + $0xd0] sm:$0xff] %vm8956, %v8913
  %8984 = vst.msk [vmem:[%s2 + $0xd8] sm:$0xff] %vm8956, %v8915
  %8985 = vst.msk [vmem:[%s2 + $0xe0] sm:$0xff] %vm8956, %v8917
  %8986 = vst.msk [vmem:[%s2 + $0xe8] sm:$0xff] %vm8956, %v8919
  %8987 = vst.msk [vmem:[%s2 + $0xf0] sm:$0xff] %vm8956, %v8921
  %8988 = vst.msk [vmem:[%s2 + $0xf8] sm:$0xff] %vm8956, %v8923
  %8989 = vrot.lane.b32.xlu0 %v1340, 27
  %v8990 = vpop.permute.xlu0 %8989
  %8991 = vrot.lane.b32.xlu0 %v1444, 27
  %v8992 = vpop.permute.xlu0 %8991
  %8993 = vrot.lane.b32.xlu0 %v1548, 27
  %v8994 = vpop.permute.xlu0 %8993
  %8995 = vrot.lane.b32.xlu0 %v1652, 27
  %v8996 = vpop.permute.xlu0 %8995
  %8997 = vrot.lane.b32.xlu0 %v1756, 27
  %v8998 = vpop.permute.xlu0 %8997
  %8999 = vrot.lane.b32.xlu0 %v1860, 27
  %v9000 = vpop.permute.xlu0 %8999
  %9001 = vrot.lane.b32.xlu0 %v1964, 27
  %v9002 = vpop.permute.xlu0 %9001
  %9003 = vrot.lane.b32.xlu0 %v2068, 27
  %v9004 = vpop.permute.xlu0 %9003
  %9005 = vrot.lane.b32.xlu0 %v2172, 27
  %v9006 = vpop.permute.xlu0 %9005
  %9007 = vrot.lane.b32.xlu0 %v2276, 27
  %v9008 = vpop.permute.xlu0 %9007
  %9009 = vrot.lane.b32.xlu0 %v2380, 27
  %v9010 = vpop.permute.xlu0 %9009
  %9011 = vrot.lane.b32.xlu0 %v2484, 27
  %v9012 = vpop.permute.xlu0 %9011
  %9013 = vrot.lane.b32.xlu0 %v2588, 27
  %v9014 = vpop.permute.xlu0 %9013
  %9015 = vrot.lane.b32.xlu0 %v2692, 27
  %v9016 = vpop.permute.xlu0 %9015
  %9017 = vrot.lane.b32.xlu0 %v2796, 27
  %v9018 = vpop.permute.xlu0 %9017
  %9019 = vrot.lane.b32.xlu0 %v2900, 27
  %v9020 = vpop.permute.xlu0 %9019
  %9021 = vrot.lane.b32.xlu0 %v3004, 27
  %v9022 = vpop.permute.xlu0 %9021
  %9023 = vrot.lane.b32.xlu0 %v3108, 27
  %v9024 = vpop.permute.xlu0 %9023
  %9025 = vrot.lane.b32.xlu0 %v3212, 27
  %v9026 = vpop.permute.xlu0 %9025
  %9027 = vrot.lane.b32.xlu0 %v3316, 27
  %v9028 = vpop.permute.xlu0 %9027
  %9029 = vrot.lane.b32.xlu0 %v3420, 27
  %v9030 = vpop.permute.xlu0 %9029
  %9031 = vrot.lane.b32.xlu0 %v3524, 27
  %v9032 = vpop.permute.xlu0 %9031
  %9033 = vrot.lane.b32.xlu0 %v3628, 27
  %v9034 = vpop.permute.xlu0 %9033
  %9035 = vrot.lane.b32.xlu0 %v3732, 27
  %v9036 = vpop.permute.xlu0 %9035
  %9037 = vrot.lane.b32.xlu0 %v3836, 27
  %v9038 = vpop.permute.xlu0 %9037
  %9039 = vrot.lane.b32.xlu0 %v3940, 27
  %v9040 = vpop.permute.xlu0 %9039
  %9041 = vrot.lane.b32.xlu0 %v4044, 27
  %v9042 = vpop.permute.xlu0 %9041
  %9043 = vrot.lane.b32.xlu0 %v4148, 27
  %v9044 = vpop.permute.xlu0 %9043
  %9045 = vrot.lane.b32.xlu0 %v4252, 27
  %v9046 = vpop.permute.xlu0 %9045
  %9047 = vrot.lane.b32.xlu0 %v4356, 27
  %v9048 = vpop.permute.xlu0 %9047
  %9049 = vrot.lane.b32.xlu0 %v4460, 27
  %v9050 = vpop.permute.xlu0 %9049
  %9051 = vrot.lane.b32.xlu0 %v4564, 27
  %v9052 = vpop.permute.xlu0 %9051
  %vm9085 = vcmask 482712
  %9086 = vst.msk [vmem:[%s2] sm:$0xff] %vm9085, %v8990
  %9087 = vst.msk [vmem:[%s2 + $0x8] sm:$0xff] %vm9085, %v8992
  %9088 = vst.msk [vmem:[%s2 + $0x10] sm:$0xff] %vm9085, %v8994
  %9089 = vst.msk [vmem:[%s2 + $0x18] sm:$0xff] %vm9085, %v8996
  %9090 = vst.msk [vmem:[%s2 + $0x20] sm:$0xff] %vm9085, %v8998
  %9091 = vst.msk [vmem:[%s2 + $0x28] sm:$0xff] %vm9085, %v9000
  %9092 = vst.msk [vmem:[%s2 + $0x30] sm:$0xff] %vm9085, %v9002
  %9093 = vst.msk [vmem:[%s2 + $0x38] sm:$0xff] %vm9085, %v9004
  %9094 = vst.msk [vmem:[%s2 + $0x40] sm:$0xff] %vm9085, %v9006
  %9095 = vst.msk [vmem:[%s2 + $0x48] sm:$0xff] %vm9085, %v9008
  %9096 = vst.msk [vmem:[%s2 + $0x50] sm:$0xff] %vm9085, %v9010
  %9097 = vst.msk [vmem:[%s2 + $0x58] sm:$0xff] %vm9085, %v9012
  %9098 = vst.msk [vmem:[%s2 + $0x60] sm:$0xff] %vm9085, %v9014
  %9099 = vst.msk [vmem:[%s2 + $0x68] sm:$0xff] %vm9085, %v9016
  %9100 = vst.msk [vmem:[%s2 + $0x70] sm:$0xff] %vm9085, %v9018
  %9101 = vst.msk [vmem:[%s2 + $0x78] sm:$0xff] %vm9085, %v9020
  %9102 = vst.msk [vmem:[%s2 + $0x80] sm:$0xff] %vm9085, %v9022
  %9103 = vst.msk [vmem:[%s2 + $0x88] sm:$0xff] %vm9085, %v9024
  %9104 = vst.msk [vmem:[%s2 + $0x90] sm:$0xff] %vm9085, %v9026
  %9105 = vst.msk [vmem:[%s2 + $0x98] sm:$0xff] %vm9085, %v9028
  %9106 = vst.msk [vmem:[%s2 + $0xa0] sm:$0xff] %vm9085, %v9030
  %9107 = vst.msk [vmem:[%s2 + $0xa8] sm:$0xff] %vm9085, %v9032
  %9108 = vst.msk [vmem:[%s2 + $0xb0] sm:$0xff] %vm9085, %v9034
  %9109 = vst.msk [vmem:[%s2 + $0xb8] sm:$0xff] %vm9085, %v9036
  %9110 = vst.msk [vmem:[%s2 + $0xc0] sm:$0xff] %vm9085, %v9038
  %9111 = vst.msk [vmem:[%s2 + $0xc8] sm:$0xff] %vm9085, %v9040
  %9112 = vst.msk [vmem:[%s2 + $0xd0] sm:$0xff] %vm9085, %v9042
  %9113 = vst.msk [vmem:[%s2 + $0xd8] sm:$0xff] %vm9085, %v9044
  %9114 = vst.msk [vmem:[%s2 + $0xe0] sm:$0xff] %vm9085, %v9046
  %9115 = vst.msk [vmem:[%s2 + $0xe8] sm:$0xff] %vm9085, %v9048
  %9116 = vst.msk [vmem:[%s2 + $0xf0] sm:$0xff] %vm9085, %v9050
  %9117 = vst.msk [vmem:[%s2 + $0xf8] sm:$0xff] %vm9085, %v9052
  %9118 = vrot.lane.b32.xlu0 %v4667, 35
  %v9119 = vpop.permute.xlu0 %9118
  %9120 = vrot.lane.b32.xlu0 %v4770, 35
  %v9121 = vpop.permute.xlu0 %9120
  %9122 = vrot.lane.b32.xlu0 %v4873, 35
  %v9123 = vpop.permute.xlu0 %9122
  %9124 = vrot.lane.b32.xlu0 %v4976, 35
  %v9125 = vpop.permute.xlu0 %9124
  %9126 = vrot.lane.b32.xlu0 %v5079, 35
  %v9127 = vpop.permute.xlu0 %9126
  %9128 = vrot.lane.b32.xlu0 %v5182, 35
  %v9129 = vpop.permute.xlu0 %9128
  %9130 = vrot.lane.b32.xlu0 %v5285, 35
  %v9131 = vpop.permute.xlu0 %9130
  %9132 = vrot.lane.b32.xlu0 %v5388, 35
  %v9133 = vpop.permute.xlu0 %9132
  %9134 = vrot.lane.b32.xlu0 %v5491, 35
  %v9135 = vpop.permute.xlu0 %9134
  %9136 = vrot.lane.b32.xlu0 %v5594, 35
  %v9137 = vpop.permute.xlu0 %9136
  %9138 = vrot.lane.b32.xlu0 %v5697, 35
  %v9139 = vpop.permute.xlu0 %9138
  %9140 = vrot.lane.b32.xlu0 %v5800, 35
  %v9141 = vpop.permute.xlu0 %9140
  %9142 = vrot.lane.b32.xlu0 %v5903, 35
  %v9143 = vpop.permute.xlu0 %9142
  %9144 = vrot.lane.b32.xlu0 %v6006, 35
  %v9145 = vpop.permute.xlu0 %9144
  %9146 = vrot.lane.b32.xlu0 %v6109, 35
  %v9147 = vpop.permute.xlu0 %9146
  %9148 = vrot.lane.b32.xlu0 %v6212, 35
  %v9149 = vpop.permute.xlu0 %9148
  %9150 = vrot.lane.b32.xlu0 %v6315, 35
  %v9151 = vpop.permute.xlu0 %9150
  %9152 = vrot.lane.b32.xlu0 %v6418, 35
  %v9153 = vpop.permute.xlu0 %9152
  %9154 = vrot.lane.b32.xlu0 %v6521, 35
  %v9155 = vpop.permute.xlu0 %9154
  %9156 = vrot.lane.b32.xlu0 %v6624, 35
  %v9157 = vpop.permute.xlu0 %9156
  %9158 = vrot.lane.b32.xlu0 %v6727, 35
  %v9159 = vpop.permute.xlu0 %9158
  %9160 = vrot.lane.b32.xlu0 %v6830, 35
  %v9161 = vpop.permute.xlu0 %9160
  %9162 = vrot.lane.b32.xlu0 %v6933, 35
  %v9163 = vpop.permute.xlu0 %9162
  %9164 = vrot.lane.b32.xlu0 %v7036, 35
  %v9165 = vpop.permute.xlu0 %9164
  %9166 = vrot.lane.b32.xlu0 %v7139, 35
  %v9167 = vpop.permute.xlu0 %9166
  %9168 = vrot.lane.b32.xlu0 %v7242, 35
  %v9169 = vpop.permute.xlu0 %9168
  %9170 = vrot.lane.b32.xlu0 %v7345, 35
  %v9171 = vpop.permute.xlu0 %9170
  %9172 = vrot.lane.b32.xlu0 %v7448, 35
  %v9173 = vpop.permute.xlu0 %9172
  %9174 = vrot.lane.b32.xlu0 %v7551, 35
  %v9175 = vpop.permute.xlu0 %9174
  %9176 = vrot.lane.b32.xlu0 %v7654, 35
  %v9177 = vpop.permute.xlu0 %9176
  %9178 = vrot.lane.b32.xlu0 %v7757, 35
  %v9179 = vpop.permute.xlu0 %9178
  %9180 = vrot.lane.b32.xlu0 %v7860, 35
  %v9181 = vpop.permute.xlu0 %9180
  %vm9214 = vcmask 548312
  %9215 = vst.msk [vmem:[%s2] sm:$0xff] %vm9214, %v9119
  %9216 = vst.msk [vmem:[%s2 + $0x8] sm:$0xff] %vm9214, %v9121
  %9217 = vst.msk [vmem:[%s2 + $0x10] sm:$0xff] %vm9214, %v9123
  %9218 = vst.msk [vmem:[%s2 + $0x18] sm:$0xff] %vm9214, %v9125
  %9219 = vst.msk [vmem:[%s2 + $0x20] sm:$0xff] %vm9214, %v9127
  %9220 = vst.msk [vmem:[%s2 + $0x28] sm:$0xff] %vm9214, %v9129
  %9221 = vst.msk [vmem:[%s2 + $0x30] sm:$0xff] %vm9214, %v9131
  %9222 = vst.msk [vmem:[%s2 + $0x38] sm:$0xff] %vm9214, %v9133
  %9223 = vst.msk [vmem:[%s2 + $0x40] sm:$0xff] %vm9214, %v9135
  %9224 = vst.msk [vmem:[%s2 + $0x48] sm:$0xff] %vm9214, %v9137
  %9225 = vst.msk [vmem:[%s2 + $0x50] sm:$0xff] %vm9214, %v9139
  %9226 = vst.msk [vmem:[%s2 + $0x58] sm:$0xff] %vm9214, %v9141
  %9227 = vst.msk [vmem:[%s2 + $0x60] sm:$0xff] %vm9214, %v9143
  %9228 = vst.msk [vmem:[%s2 + $0x68] sm:$0xff] %vm9214, %v9145
  %9229 = vst.msk [vmem:[%s2 + $0x70] sm:$0xff] %vm9214, %v9147
  %9230 = vst.msk [vmem:[%s2 + $0x78] sm:$0xff] %vm9214, %v9149
  %9231 = vst.msk [vmem:[%s2 + $0x80] sm:$0xff] %vm9214, %v9151
  %9232 = vst.msk [vmem:[%s2 + $0x88] sm:$0xff] %vm9214, %v9153
  %9233 = vst.msk [vmem:[%s2 + $0x90] sm:$0xff] %vm9214, %v9155
  %9234 = vst.msk [vmem:[%s2 + $0x98] sm:$0xff] %vm9214, %v9157
  %9235 = vst.msk [vmem:[%s2 + $0xa0] sm:$0xff] %vm9214, %v9159
  %9236 = vst.msk [vmem:[%s2 + $0xa8] sm:$0xff] %vm9214, %v9161
  %9237 = vst.msk [vmem:[%s2 + $0xb0] sm:$0xff] %vm9214, %v9163
  %9238 = vst.msk [vmem:[%s2 + $0xb8] sm:$0xff] %vm9214, %v9165
  %9239 = vst.msk [vmem:[%s2 + $0xc0] sm:$0xff] %vm9214, %v9167
  %9240 = vst.msk [vmem:[%s2 + $0xc8] sm:$0xff] %vm9214, %v9169
  %9241 = vst.msk [vmem:[%s2 + $0xd0] sm:$0xff] %vm9214, %v9171
  %9242 = vst.msk [vmem:[%s2 + $0xd8] sm:$0xff] %vm9214, %v9173
  %9243 = vst.msk [vmem:[%s2 + $0xe0] sm:$0xff] %vm9214, %v9175
  %9244 = vst.msk [vmem:[%s2 + $0xe8] sm:$0xff] %vm9214, %v9177
  %9245 = vst.msk [vmem:[%s2 + $0xf0] sm:$0xff] %vm9214, %v9179
  %9246 = vst.msk [vmem:[%s2 + $0xf8] sm:$0xff] %vm9214, %v9181
  %9247 = vrot.lane.b32.xlu0 %v11, 64
  %v9248 = vpop.permute.xlu0 %9247
  %9249 = vrot.lane.b32.xlu0 %v12, 64
  %v9250 = vpop.permute.xlu0 %9249
  %9251 = vrot.lane.b32.xlu0 %v13, 64
  %v9252 = vpop.permute.xlu0 %9251
  %9253 = vrot.lane.b32.xlu0 %v14, 64
  %v9254 = vpop.permute.xlu0 %9253
  %9255 = vrot.lane.b32.xlu0 %v15, 64
  %v9256 = vpop.permute.xlu0 %9255
  %9257 = vrot.lane.b32.xlu0 %v16, 64
  %v9258 = vpop.permute.xlu0 %9257
  %9259 = vrot.lane.b32.xlu0 %v17, 64
  %v9260 = vpop.permute.xlu0 %9259
  %9261 = vrot.lane.b32.xlu0 %v18, 64
  %v9262 = vpop.permute.xlu0 %9261
  %9263 = vrot.lane.b32.xlu0 %v19, 64
  %v9264 = vpop.permute.xlu0 %9263
  %9265 = vrot.lane.b32.xlu0 %v20, 64
  %v9266 = vpop.permute.xlu0 %9265
  %9267 = vrot.lane.b32.xlu0 %v21, 64
  %v9268 = vpop.permute.xlu0 %9267
  %9269 = vrot.lane.b32.xlu0 %v22, 64
  %v9270 = vpop.permute.xlu0 %9269
  %9271 = vrot.lane.b32.xlu0 %v23, 64
  %v9272 = vpop.permute.xlu0 %9271
  %9273 = vrot.lane.b32.xlu0 %v24, 64
  %v9274 = vpop.permute.xlu0 %9273
  %9275 = vrot.lane.b32.xlu0 %v25, 64
  %v9276 = vpop.permute.xlu0 %9275
  %9277 = vrot.lane.b32.xlu0 %v26, 64
  %v9278 = vpop.permute.xlu0 %9277
  %9279 = vrot.lane.b32.xlu0 %v27, 64
  %v9280 = vpop.permute.xlu0 %9279
  %9281 = vrot.lane.b32.xlu0 %v28, 64
  %v9282 = vpop.permute.xlu0 %9281
  %9283 = vrot.lane.b32.xlu0 %v29, 64
  %v9284 = vpop.permute.xlu0 %9283
  %9285 = vrot.lane.b32.xlu0 %v30, 64
  %v9286 = vpop.permute.xlu0 %9285
  %9287 = vrot.lane.b32.xlu0 %v31, 64
  %v9288 = vpop.permute.xlu0 %9287
  %9289 = vrot.lane.b32.xlu0 %v32, 64
  %v9290 = vpop.permute.xlu0 %9289
  %9291 = vrot.lane.b32.xlu0 %v33, 64
  %v9292 = vpop.permute.xlu0 %9291
  %9293 = vrot.lane.b32.xlu0 %v34, 64
  %v9294 = vpop.permute.xlu0 %9293
  %9295 = vrot.lane.b32.xlu0 %v35, 64
  %v9296 = vpop.permute.xlu0 %9295
  %9297 = vrot.lane.b32.xlu0 %v36, 64
  %v9298 = vpop.permute.xlu0 %9297
  %9299 = vrot.lane.b32.xlu0 %v37, 64
  %v9300 = vpop.permute.xlu0 %9299
  %9301 = vrot.lane.b32.xlu0 %v38, 64
  %v9302 = vpop.permute.xlu0 %9301
  %9303 = vrot.lane.b32.xlu0 %v39, 64
  %v9304 = vpop.permute.xlu0 %9303
  %9305 = vrot.lane.b32.xlu0 %v40, 64
  %v9306 = vpop.permute.xlu0 %9305
  %9307 = vrot.lane.b32.xlu0 %v41, 64
  %v9308 = vpop.permute.xlu0 %9307
  %9309 = vrot.lane.b32.xlu0 %v42, 64
  %v9310 = vpop.permute.xlu0 %9309
  %vm9343 = vcmask 556568
  %9344 = vst.msk [vmem:[%s2] sm:$0xff] %vm9343, %v9248
  %9345 = vst.msk [vmem:[%s2 + $0x8] sm:$0xff] %vm9343, %v9250
  %9346 = vst.msk [vmem:[%s2 + $0x10] sm:$0xff] %vm9343, %v9252
  %9347 = vst.msk [vmem:[%s2 + $0x18] sm:$0xff] %vm9343, %v9254
  %9348 = vst.msk [vmem:[%s2 + $0x20] sm:$0xff] %vm9343, %v9256
  %9349 = vst.msk [vmem:[%s2 + $0x28] sm:$0xff] %vm9343, %v9258
  %9350 = vst.msk [vmem:[%s2 + $0x30] sm:$0xff] %vm9343, %v9260
  %9351 = vst.msk [vmem:[%s2 + $0x38] sm:$0xff] %vm9343, %v9262
  %9352 = vst.msk [vmem:[%s2 + $0x40] sm:$0xff] %vm9343, %v9264
  %9353 = vst.msk [vmem:[%s2 + $0x48] sm:$0xff] %vm9343, %v9266
  %9354 = vst.msk [vmem:[%s2 + $0x50] sm:$0xff] %vm9343, %v9268
  %9355 = vst.msk [vmem:[%s2 + $0x58] sm:$0xff] %vm9343, %v9270
  %9356 = vst.msk [vmem:[%s2 + $0x60] sm:$0xff] %vm9343, %v9272
  %9357 = vst.msk [vmem:[%s2 + $0x68] sm:$0xff] %vm9343, %v9274
  %9358 = vst.msk [vmem:[%s2 + $0x70] sm:$0xff] %vm9343, %v9276
  %9359 = vst.msk [vmem:[%s2 + $0x78] sm:$0xff] %vm9343, %v9278
  %9360 = vst.msk [vmem:[%s2 + $0x80] sm:$0xff] %vm9343, %v9280
  %9361 = vst.msk [vmem:[%s2 + $0x88] sm:$0xff] %vm9343, %v9282
  %9362 = vst.msk [vmem:[%s2 + $0x90] sm:$0xff] %vm9343, %v9284
  %9363 = vst.msk [vmem:[%s2 + $0x98] sm:$0xff] %vm9343, %v9286
  %9364 = vst.msk [vmem:[%s2 + $0xa0] sm:$0xff] %vm9343, %v9288
  %9365 = vst.msk [vmem:[%s2 + $0xa8] sm:$0xff] %vm9343, %v9290
  %9366 = vst.msk [vmem:[%s2 + $0xb0] sm:$0xff] %vm9343, %v9292
  %9367 = vst.msk [vmem:[%s2 + $0xb8] sm:$0xff] %vm9343, %v9294
  %9368 = vst.msk [vmem:[%s2 + $0xc0] sm:$0xff] %vm9343, %v9296
  %9369 = vst.msk [vmem:[%s2 + $0xc8] sm:$0xff] %vm9343, %v9298
  %9370 = vst.msk [vmem:[%s2 + $0xd0] sm:$0xff] %vm9343, %v9300
  %9371 = vst.msk [vmem:[%s2 + $0xd8] sm:$0xff] %vm9343, %v9302
  %9372 = vst.msk [vmem:[%s2 + $0xe0] sm:$0xff] %vm9343, %v9304
  %9373 = vst.msk [vmem:[%s2 + $0xe8] sm:$0xff] %vm9343, %v9306
  %9374 = vst.msk [vmem:[%s2 + $0xf0] sm:$0xff] %vm9343, %v9308
  %9375 = vst.msk [vmem:[%s2 + $0xf8] sm:$0xff] %vm9343, %v9310
  // Predicated region
  $region10: #{tpu_custom_call.1} parent=0 // pred_check
    _
  $region11: #{tpu_custom_call.1} parent=0 // pred_check_branch
    %9377 = sbr.rel (0) target = $region13
  $region12: #{tpu_custom_call.1} parent=0 // pred_region
    _
  $region13: #{tpu_custom_call.1} parent=0 // pred_fallthru
    _
  // Predicated region
  $region14: #{tpu_custom_call.1} parent=0 // pred_check
    _
  $region15: #{tpu_custom_call.1} parent=0 // pred_check_branch
    %9379 = sbr.rel (0) target = $region17
  $region16: #{tpu_custom_call.1} parent=0 // pred_region
    _
  $region17: #{tpu_custom_call.1} parent=0 // pred_fallthru
    _

</llo_original>
